<compile_context>
chip_gen: v5e
topology: v5e:2x2
jax: 0.10.0
libtpu: 0.0.40
codegen_flags: <defaults>
</compile_context>

<pallas_src>
import functools

import jax
import jax.numpy as jnp
from jax import lax
from jax.experimental import pallas as pl
from jax.experimental.pallas import tpu as pltpu

_KS = 3              # D_kernel_size
_SLOPE = 0.01        # PyTorch nn.LeakyReLU default negative_slope


def _leaky(x):
    return jnp.where(x >= 0.0, x, _SLOPE * x)


def _stable_sigmoid(x):
    ez = jnp.exp(-jnp.abs(x))
    return jnp.where(x >= 0.0, 1.0 / (1.0 + ez), ez / (1.0 + ez))


# ------------------------------ kernel body ---------------------------------

def _disc_a_kernel(layers, b_tile, p1_ref,
                   w1_ref, b1_ref, w2_ref, b2_ref, w3_ref, b3_ref,
                   w4_ref, b4_ref, w5_ref, b5_ref,
                   out_ref, a1_ref, a2_ref, a3_ref, a4_ref):
    """Fused 5-layer conv net for B_TILE samples (grid axis = batch tiles).

    Activations live in flat (rows, C) VMEM scratch (rows = b*H*W + h*W + w),
    so every tap slice is a static (optionally sublane-strided) ref read.
    """
    w_refs = (w1_ref, w2_ref, w3_ref, w4_ref, w5_ref)
    b_refs = (b1_ref, b2_ref, b3_ref, b4_ref, b5_ref)
    a_refs = (a1_ref, a2_ref, a3_ref, a4_ref)

    # Zero the padded activation buffers (borders implement Conv2d padding=1;
    # interiors are fully overwritten below).  Done per step — see header note
    # on megacore safety; cost is ~4 vst per 25-row buffer.
    for l in range(1, 5):
        if layers[l]["pad"] > 0:
            a_refs[l - 1][...] = jnp.zeros_like(a_refs[l - 1])

    # ---- layer 1: XLA-precomputed im2col patches -> one matmul / sample ----
    g0 = layers[0]
    nxt = layers[1]
    w1 = w1_ref[...]                                  # (KS*KS*Cin, OC1)
    bias1 = b1_ref[...]                               # (1, OC1)
    dst_rows1 = nxt["Hin"] * nxt["Win"]
    for b in range(b_tile):
        z = jnp.dot(p1_ref[b], w1, preferred_element_type=jnp.float32) + bias1
        z = _leaky(z)
        if nxt["pad"] == 0:
            # Next layer's input buffer has exactly OH*OW rows per sample.
            a1_ref[b * dst_rows1:(b + 1) * dst_rows1, :] = z
        else:
            for oh in range(g0["OH"]):
                off = (b * dst_rows1
                       + (oh + nxt["pad"]) * nxt["Win"] + nxt["pad"])
                a1_ref[off:off + g0["OW"], :] = \
                    z[oh * g0["OW"]:(oh + 1) * g0["OW"], :]

    # ---- layers 2..5: 9-tap accumulation straight from VMEM activations ----
    for l in range(1, 5):
        g = layers[l]
        src = a_refs[l - 1]
        src_rows = g["Hin"] * g["Win"]
        bias = b_refs[l][...]                         # (1, OC)
        is_last = (l == 4)
        if not is_last:
            nxt = layers[l + 1]
            dst_rows = nxt["Hin"] * nxt["Win"]
        for b in range(b_tile):
            for oh in range(g["OH"]):
                acc = None
                for i in range(_KS):
                    base = b * src_rows + (oh * g["s"] + i) * g["Win"]
                    for j in range(_KS):
                        if g["s"] == 1:
                            lhs = src[base + j:base + j + g["OW"], :]
                        else:
                            lhs = src[pl.ds(base + j, g["OW"], stride=g["s"]), :]
                        wt = w_refs[l][i * _KS + j]   # (C, OC) tap weight
                        term = jnp.dot(lhs, wt,
                                       preferred_element_type=jnp.float32)
                        acc = term if acc is None else acc + term
                z = acc + bias                        # (OW, OC)
                if is_last:
                    sig = _stable_sigmoid(z)
                    out_ref[b, oh * g["OW"]:(oh + 1) * g["OW"], :] = \
                        sig.astype(out_ref.dtype)
                else:
                    z = _leaky(z)
                    off = (b * dst_rows
                           + (oh + nxt["pad"]) * nxt["Win"] + nxt["pad"])
                    a_refs[l][off:off + g["OW"], :] = z


# ------------------------------ JAX wrapper ----------------------------------

def _pick_b_tile(B):
    """Largest per-step batch tile (<=8) that still leaves >=2 grid steps."""
    if B < 2:
        return 1
    best = 1
    for bt in range(1, min(8, B // 2) + 1):
        if B % bt == 0:
            best = bt
    return best


def discriminator_a_forward(params, x, *, stride, factor, b_tile=None):
    """Forward pass matching PyTorch Discriminator_A. x: (B, 1, H, W) NCHW."""
    B, Cin, H0, W0 = x.shape
    assert Cin == 1, "Discriminator_A.conv1 expects a single input channel"

    strides = [stride, stride, stride, stride // factor, stride // factor]
    paddings = [0, 0, 0, 1, 1]

    # Static per-layer geometry.  Hin/Win are the stored-buffer spatial dims of
    # the layer's input (including that layer's own padding).
    layers = []
    H, W, C = H0, W0, Cin
    for l in range(5):
        s, p = strides[l], paddings[l]
        OC = params.weights[l].shape[0]
        Hin, Win = H + 2 * p, W + 2 * p
        OH = (Hin - _KS) // s + 1
        OW = (Win - _KS) // s + 1
        layers.append(dict(Hin=Hin, Win=Win, C=C, OC=OC, OH=OH, OW=OW,
                           s=s, pad=p))
        H, W, C = OH, OW, OC

    g0, gf = layers[0], layers[-1]
    P1 = g0["OH"] * g0["OW"]
    K1 = _KS * _KS * g0["C"]
    OHf, OWf, OCf = gf["OH"], gf["OW"], gf["OC"]
    assert OCf == 1

    # ---- layer-1 im2col hoisted to XLA: dense (B, P1, 9) patch tile ----
    s0 = g0["s"]
    x2 = x[:, 0, :, :]                                   # (B, H0, W0)
    taps = []
    for i in range(_KS):
        for j in range(_KS):
            taps.append(x2[:, i:i + (g0["OH"] - 1) * s0 + 1:s0,
                              j:j + (g0["OW"] - 1) * s0 + 1:s0])
    patches = jnp.stack(taps, axis=-1).reshape(B, P1, K1).astype(jnp.float32)

    if b_tile is None:
        b_tile = _pick_b_tile(B)
    assert B % b_tile == 0
    steps = B // b_tile

    def _full_spec(arr):
        nd = arr.ndim
        return pl.BlockSpec(arr.shape, lambda t: (0,) * nd)

    inputs = [patches, params.w1mat, params.bmats[0]]
    in_specs = [pl.BlockSpec((b_tile, P1, K1), lambda t: (t, 0, 0)),
                _full_spec(params.w1mat), _full_spec(params.bmats[0])]
    for l in range(1, 5):
        inputs += [params.wtaps[l], params.bmats[l]]
        in_specs += [_full_spec(params.wtaps[l]), _full_spec(params.bmats[l])]

    # Flat (rows, C) VMEM activations for layers 2..5 inputs (padded if the
    # consuming layer pads).  Total footprint is a few KiB.
    scratch = []
    for l in range(1, 5):
        g = layers[l]
        scratch.append(pltpu.VMEM((b_tile * g["Hin"] * g["Win"], g["C"]),
                                  jnp.float32))

    out = pl.pallas_call(
        functools.partial(_disc_a_kernel, layers, b_tile),
        out_shape=jax.ShapeDtypeStruct((B, OHf * OWf, OCf), jnp.float32),
        grid=(steps,),
        in_specs=in_specs,
        out_specs=pl.BlockSpec((b_tile, OHf * OWf, OCf), lambda t: (t, 0, 0)),
        scratch_shapes=scratch,
        compiler_params=pltpu.CompilerParams(
            dimension_semantics=("parallel",)),
    )(*inputs)

    # (B, OH*OW, 1) raster -> NCHW (valid because OC == 1).
    return out.reshape(B, 1, OHf, OWf)


# --------------------------- parameters (init) --------------------------------

class DiscriminatorAParams:
    """Deterministic in-script parameter init (shapes match nn.Conv2d).

    Holds the conv-layout weights (for the pure-JAX reference) plus the
    matmul-ready forms used by the fused kernel: layer-1 fully flattened
    (KH*KW*Cin, OC) and layers 2-5 split per tap as (KH*KW, C, OC); biases
    as (1, OC).  All hoisted out of the forward pass.
    """

    def __init__(self, key, n_feature, kernel_size, factor):
        chans = [
            (1, n_feature),
            (n_feature, n_feature * factor),
            (n_feature * factor, n_feature * factor ** 2),
            (n_feature * factor ** 2, n_feature * factor ** 3),
            (n_feature * factor ** 3, 1),
        ]
        self.weights, self.biases = [], []
        self.wtaps, self.bmats = [], []
        for cin, cout in chans:
            key, kw_, kb_ = jax.random.split(key, 3)
            fan_in = cin * kernel_size * kernel_size
            bound = 1.0 / (fan_in ** 0.5)
            w = jax.random.uniform(kw_, (cout, cin, kernel_size, kernel_size),
                                   minval=-bound, maxval=bound,
                                   dtype=jnp.float32)
            b = jax.random.uniform(kb_, (cout,), minval=-bound, maxval=bound,
                                   dtype=jnp.float32)
            self.weights.append(w)
            self.biases.append(b)
            # (OC, C, KH, KW) -> (KH, KW, C, OC) -> (KH*KW, C, OC):
            # tap t = i*KS + j holds the (C, OC) matmul weight for that tap.
            self.wtaps.append(w.transpose(2, 3, 1, 0)
                               .reshape(kernel_size * kernel_size, cin, cout))
            self.bmats.append(b.reshape(1, cout))
        # Layer 1 runs as a single matmul over precomputed patches.
        self.w1mat = self.wtaps[0].reshape(
            kernel_size * kernel_size * chans[0][0], chans[0][1])


# ------------------------- reference (pure JAX) -------------------------------

def _ref_forward(params, x, *, stride, factor):
    strides = [stride, stride, stride, stride // factor, stride // factor]
    paddings = [0, 0, 0, 1, 1]
    acts = ["leaky_relu", "leaky_relu", "leaky_relu", "leaky_relu", "sigmoid"]
    for w, b, s, p, a in zip(params.weights, params.biases, strides, paddings,
                             acts):
        x = lax.conv_general_dilated(
            x, w, window_strides=(s, s), padding=[(p, p), (p, p)],
            dimension_numbers=("NCHW", "OIHW", "NCHW"))
        x = x + b.reshape(1, -1, 1, 1)
        if a == "leaky_relu":
            x = jnp.where(x >= 0, x, 0.01 * x)
        else:
            x = jax.nn.sigmoid(x)
    return x


# ----------------------------------- main -------------------------------------

if __name__ == "__main__":
    # Config: conv1 in_channels=1, n_feature=4, D_kernel_size=3, D_stride=2,
    # factor=2.  Input 32x32 so the three stride-2 valid convs stay well-formed.
    n_feature, kernel_size, stride, factor = 4, 3, 2, 2

    key = jax.random.PRNGKey(0)
    key, kx = jax.random.split(key)
    x = jax.random.normal(kx, (2, 1, 32, 32), dtype=jnp.float32)  # NCHW

    params = DiscriminatorAParams(key, n_feature, kernel_size, factor)

    fwd = jax.jit(functools.partial(discriminator_a_forward, params,
                                    stride=stride, factor=factor))
    y = jax.block_until_ready(fwd(x))

    y_ref = jax.block_until_ready(
        _ref_forward(params, x, stride=stride, factor=factor))
    assert y.shape == y_ref.shape, (y.shape, y_ref.shape)
    assert jnp.allclose(y, y_ref, atol=1e-5, rtol=1e-5), "mismatch vs reference"

    print("KERNEL_OK")
</pallas_src>

<mosaic_0001>
module attributes {stable_mosaic.version = 11 : i64} {
  func.func @_disc_a_kernel(%arg0: i32, %arg1: memref<1x225x9xf32, #tpu.memory_space<vmem>>, %arg2: memref<9x4xf32, #tpu.memory_space<vmem>>, %arg3: memref<1x4xf32, #tpu.memory_space<vmem>>, %arg4: memref<9x4x8xf32, #tpu.memory_space<vmem>>, %arg5: memref<1x8xf32, #tpu.memory_space<vmem>>, %arg6: memref<9x8x16xf32, #tpu.memory_space<vmem>>, %arg7: memref<1x16xf32, #tpu.memory_space<vmem>>, %arg8: memref<9x16x32xf32, #tpu.memory_space<vmem>>, %arg9: memref<1x32xf32, #tpu.memory_space<vmem>>, %arg10: memref<9x32x1xf32, #tpu.memory_space<vmem>>, %arg11: memref<1x1xf32, #tpu.memory_space<vmem>>, %arg12: memref<1x9x1xf32, #tpu.memory_space<vmem>>, %arg13: memref<225x4xf32, #tpu.memory_space<vmem>>, %arg14: memref<49x8xf32, #tpu.memory_space<vmem>>, %arg15: memref<25x16xf32, #tpu.memory_space<vmem>>, %arg16: memref<25x32xf32, #tpu.memory_space<vmem>>) attributes {dimension_semantics = [#tpu.dimension_semantics<parallel>], iteration_bounds = array<i64: 2>, scalar_prefetch = 0 : i64, scratch_operands = 4 : i64, tpu.core_type = #tpu.core_type<tc>, window_params = [{transform_indices = @transform_0, window_bounds = array<i64: 1, 225, 9>}, {pipeline_mode = #tpu.pipeline_mode<synchronous>, transform_indices = @transform_1, window_bounds = array<i64: 9, 4>}, {pipeline_mode = #tpu.pipeline_mode<synchronous>, transform_indices = @transform_2, window_bounds = array<i64: 1, 4>}, {pipeline_mode = #tpu.pipeline_mode<synchronous>, transform_indices = @transform_3, window_bounds = array<i64: 9, 4, 8>}, {pipeline_mode = #tpu.pipeline_mode<synchronous>, transform_indices = @transform_4, window_bounds = array<i64: 1, 8>}, {pipeline_mode = #tpu.pipeline_mode<synchronous>, transform_indices = @transform_5, window_bounds = array<i64: 9, 8, 16>}, {pipeline_mode = #tpu.pipeline_mode<synchronous>, transform_indices = @transform_6, window_bounds = array<i64: 1, 16>}, {pipeline_mode = #tpu.pipeline_mode<synchronous>, transform_indices = @transform_7, window_bounds = array<i64: 9, 16, 32>}, {pipeline_mode = #tpu.pipeline_mode<synchronous>, transform_indices = @transform_8, window_bounds = array<i64: 1, 32>}, {pipeline_mode = #tpu.pipeline_mode<synchronous>, transform_indices = @transform_9, window_bounds = array<i64: 9, 32, 1>}, {pipeline_mode = #tpu.pipeline_mode<synchronous>, transform_indices = @transform_10, window_bounds = array<i64: 1, 1>}, {transform_indices = @transform_11, window_bounds = array<i64: 1, 9, 1>}]} {
    %cst = arith.constant 0.000000e+00 : f32
    %0 = vector.broadcast %cst : f32 to vector<25x16xf32>
    %c0 = arith.constant 0 : index
    %c0_0 = arith.constant 0 : index
    %1 = vector.load %arg15[%c0, %c0_0] : memref<25x16xf32, #tpu.memory_space<vmem>>, vector<25x16xf32>
    tpu.vector_store %arg15[%c0, %c0_0], %0 {strides = array<i32>} : memref<25x16xf32, #tpu.memory_space<vmem>>, vector<25x16xf32>,
    %cst_1 = arith.constant 0.000000e+00 : f32
    %2 = vector.broadcast %cst_1 : f32 to vector<25x32xf32>
    %c0_2 = arith.constant 0 : index
    %c0_3 = arith.constant 0 : index
    %3 = vector.load %arg16[%c0_2, %c0_3] : memref<25x32xf32, #tpu.memory_space<vmem>>, vector<25x32xf32>
    tpu.vector_store %arg16[%c0_2, %c0_3], %2 {strides = array<i32>} : memref<25x32xf32, #tpu.memory_space<vmem>>, vector<25x32xf32>,
    %c0_4 = arith.constant 0 : index
    %c0_5 = arith.constant 0 : index
    %4 = vector.load %arg2[%c0_4, %c0_5] : memref<9x4xf32, #tpu.memory_space<vmem>>, vector<9x4xf32>
    %c0_6 = arith.constant 0 : index
    %c0_7 = arith.constant 0 : index
    %5 = vector.load %arg3[%c0_6, %c0_7] : memref<1x4xf32, #tpu.memory_space<vmem>>, vector<1x4xf32>
    %c0_8 = arith.constant 0 : index
    %c0_9 = arith.constant 0 : index
    %c0_10 = arith.constant 0 : index
    %6 = vector.load %arg1[%c0_8, %c0_9, %c0_10] : memref<1x225x9xf32, #tpu.memory_space<vmem>>, vector<1x225x9xf32>
    %7 = vector.shape_cast %6 : vector<1x225x9xf32> to vector<225x9xf32>
    %cst_11 = arith.constant dense<0.000000e+00> : vector<225x4xf32>
    %8 = tpu.matmul %7, %4, %cst_11 {dimension_numbers = #tpu.dot_dimension_numbers<[1], [0], [0], [1], [0, 0, 1, 1], [], []>} : vector<225x9xf32>, vector<9x4xf32>, vector<225x4xf32> -> vector<225x4xf32>
    %9 = vector.broadcast %5 : vector<1x4xf32> to vector<225x4xf32>
    %10 = arith.addf %8, %9 : vector<225x4xf32>
    %cst_12 = arith.constant 0.000000e+00 : f32
    %11 = vector.broadcast %cst_12 : f32 to vector<225x4xf32>
    %12 = arith.cmpf oge, %10, %11 : vector<225x4xf32>
    %cst_13 = arith.constant 0.00999999977 : f32
    %13 = vector.broadcast %cst_13 : f32 to vector<225x4xf32>
    %14 = arith.mulf %13, %10 : vector<225x4xf32>
    %15 = arith.select %12, %10, %14 : vector<225x4xi1>, vector<225x4xf32>
    %c0_14 = arith.constant 0 : index
    %c0_15 = arith.constant 0 : index
    %16 = vector.load %arg13[%c0_14, %c0_15] : memref<225x4xf32, #tpu.memory_space<vmem>>, vector<225x4xf32>
    tpu.vector_store %arg13[%c0_14, %c0_15], %15 {strides = array<i32>} : memref<225x4xf32, #tpu.memory_space<vmem>>, vector<225x4xf32>,
    %c0_16 = arith.constant 0 : index
    %c0_17 = arith.constant 0 : index
    %17 = vector.load %arg5[%c0_16, %c0_17] : memref<1x8xf32, #tpu.memory_space<vmem>>, vector<1x8xf32>
    %c0_18 = arith.constant 0 : index
    %c0_19 = arith.constant 0 : index
    %18 = tpu.strided_load %arg13[%c0_18, %c0_19] {strides = array<i32: 2, 1>} : memref<225x4xf32, #tpu.memory_space<vmem>>, vector<7x4xf32>
    %c0_20 = arith.constant 0 : index
    %c0_21 = arith.constant 0 : index
    %c0_22 = arith.constant 0 : index
    %19 = vector.load %arg4[%c0_20, %c0_21, %c0_22] : memref<9x4x8xf32, #tpu.memory_space<vmem>>, vector<1x4x8xf32>
    %20 = vector.shape_cast %19 : vector<1x4x8xf32> to vector<4x8xf32>
    %cst_23 = arith.constant dense<0.000000e+00> : vector<7x8xf32>
    %21 = tpu.matmul %18, %20, %cst_23 {dimension_numbers = #tpu.dot_dimension_numbers<[1], [0], [0], [1], [0, 0, 1, 1], [], []>} : vector<7x4xf32>, vector<4x8xf32>, vector<7x8xf32> -> vector<7x8xf32>
    %c1 = arith.constant 1 : index
    %c0_24 = arith.constant 0 : index
    %22 = tpu.strided_load %arg13[%c1, %c0_24] {strides = array<i32: 2, 1>} : memref<225x4xf32, #tpu.memory_space<vmem>>, vector<7x4xf32>
    %c1_25 = arith.constant 1 : index
    %c0_26 = arith.constant 0 : index
    %c0_27 = arith.constant 0 : index
    %23 = vector.load %arg4[%c1_25, %c0_26, %c0_27] : memref<9x4x8xf32, #tpu.memory_space<vmem>>, vector<1x4x8xf32>
    %24 = vector.shape_cast %23 : vector<1x4x8xf32> to vector<4x8xf32>
    %cst_28 = arith.constant dense<0.000000e+00> : vector<7x8xf32>
    %25 = tpu.matmul %22, %24, %cst_28 {dimension_numbers = #tpu.dot_dimension_numbers<[1], [0], [0], [1], [0, 0, 1, 1], [], []>} : vector<7x4xf32>, vector<4x8xf32>, vector<7x8xf32> -> vector<7x8xf32>
    %26 = arith.addf %21, %25 : vector<7x8xf32>
    %c2 = arith.constant 2 : index
    %c0_29 = arith.constant 0 : index
    %27 = tpu.strided_load %arg13[%c2, %c0_29] {strides = array<i32: 2, 1>} : memref<225x4xf32, #tpu.memory_space<vmem>>, vector<7x4xf32>
    %c2_30 = arith.constant 2 : index
    %c0_31 = arith.constant 0 : index
    %c0_32 = arith.constant 0 : index
    %28 = vector.load %arg4[%c2_30, %c0_31, %c0_32] : memref<9x4x8xf32, #tpu.memory_space<vmem>>, vector<1x4x8xf32>
    %29 = vector.shape_cast %28 : vector<1x4x8xf32> to vector<4x8xf32>
    %cst_33 = arith.constant dense<0.000000e+00> : vector<7x8xf32>
    %30 = tpu.matmul %27, %29, %cst_33 {dimension_numbers = #tpu.dot_dimension_numbers<[1], [0], [0], [1], [0, 0, 1, 1], [], []>} : vector<7x4xf32>, vector<4x8xf32>, vector<7x8xf32> -> vector<7x8xf32>
    %31 = arith.addf %26, %30 : vector<7x8xf32>
    %c15 = arith.constant 15 : index
    %c0_34 = arith.constant 0 : index
    %32 = tpu.strided_load %arg13[%c15, %c0_34] {strides = array<i32: 2, 1>} : memref<225x4xf32, #tpu.memory_space<vmem>>, vector<7x4xf32>
    %c3 = arith.constant 3 : index
    %c0_35 = arith.constant 0 : index
    %c0_36 = arith.constant 0 : index
    %33 = vector.load %arg4[%c3, %c0_35, %c0_36] : memref<9x4x8xf32, #tpu.memory_space<vmem>>, vector<1x4x8xf32>
    %34 = vector.shape_cast %33 : vector<1x4x8xf32> to vector<4x8xf32>
    %cst_37 = arith.constant dense<0.000000e+00> : vector<7x8xf32>
    %35 = tpu.matmul %32, %34, %cst_37 {dimension_numbers = #tpu.dot_dimension_numbers<[1], [0], [0], [1], [0, 0, 1, 1], [], []>} : vector<7x4xf32>, vector<4x8xf32>, vector<7x8xf32> -> vector<7x8xf32>
    %36 = arith.addf %31, %35 : vector<7x8xf32>
    %c16 = arith.constant 16 : index
    %c0_38 = arith.constant 0 : index
    %37 = tpu.strided_load %arg13[%c16, %c0_38] {strides = array<i32: 2, 1>} : memref<225x4xf32, #tpu.memory_space<vmem>>, vector<7x4xf32>
    %c4 = arith.constant 4 : index
    %c0_39 = arith.constant 0 : index
    %c0_40 = arith.constant 0 : index
    %38 = vector.load %arg4[%c4, %c0_39, %c0_40] : memref<9x4x8xf32, #tpu.memory_space<vmem>>, vector<1x4x8xf32>
    %39 = vector.shape_cast %38 : vector<1x4x8xf32> to vector<4x8xf32>
    %cst_41 = arith.constant dense<0.000000e+00> : vector<7x8xf32>
    %40 = tpu.matmul %37, %39, %cst_41 {dimension_numbers = #tpu.dot_dimension_numbers<[1], [0], [0], [1], [0, 0, 1, 1], [], []>} : vector<7x4xf32>, vector<4x8xf32>, vector<7x8xf32> -> vector<7x8xf32>
    %41 = arith.addf %36, %40 : vector<7x8xf32>
    %c17 = arith.constant 17 : index
    %c0_42 = arith.constant 0 : index
    %42 = tpu.strided_load %arg13[%c17, %c0_42] {strides = array<i32: 2, 1>} : memref<225x4xf32, #tpu.memory_space<vmem>>, vector<7x4xf32>
    %c5 = arith.constant 5 : index
    %c0_43 = arith.constant 0 : index
    %c0_44 = arith.constant 0 : index
    %43 = vector.load %arg4[%c5, %c0_43, %c0_44] : memref<9x4x8xf32, #tpu.memory_space<vmem>>, vector<1x4x8xf32>
    %44 = vector.shape_cast %43 : vector<1x4x8xf32> to vector<4x8xf32>
    %cst_45 = arith.constant dense<0.000000e+00> : vector<7x8xf32>
    %45 = tpu.matmul %42, %44, %cst_45 {dimension_numbers = #tpu.dot_dimension_numbers<[1], [0], [0], [1], [0, 0, 1, 1], [], []>} : vector<7x4xf32>, vector<4x8xf32>, vector<7x8xf32> -> vector<7x8xf32>
    %46 = arith.addf %41, %45 : vector<7x8xf32>
    %c30 = arith.constant 30 : index
    %c0_46 = arith.constant 0 : index
    %47 = tpu.strided_load %arg13[%c30, %c0_46] {strides = array<i32: 2, 1>} : memref<225x4xf32, #tpu.memory_space<vmem>>, vector<7x4xf32>
    %c6 = arith.constant 6 : index
    %c0_47 = arith.constant 0 : index
    %c0_48 = arith.constant 0 : index
    %48 = vector.load %arg4[%c6, %c0_47, %c0_48] : memref<9x4x8xf32, #tpu.memory_space<vmem>>, vector<1x4x8xf32>
    %49 = vector.shape_cast %48 : vector<1x4x8xf32> to vector<4x8xf32>
    %cst_49 = arith.constant dense<0.000000e+00> : vector<7x8xf32>
    %50 = tpu.matmul %47, %49, %cst_49 {dimension_numbers = #tpu.dot_dimension_numbers<[1], [0], [0], [1], [0, 0, 1, 1], [], []>} : vector<7x4xf32>, vector<4x8xf32>, vector<7x8xf32> -> vector<7x8xf32>
    %51 = arith.addf %46, %50 : vector<7x8xf32>
    %c31 = arith.constant 31 : index
    %c0_50 = arith.constant 0 : index
    %52 = tpu.strided_load %arg13[%c31, %c0_50] {strides = array<i32: 2, 1>} : memref<225x4xf32, #tpu.memory_space<vmem>>, vector<7x4xf32>
    %c7 = arith.constant 7 : index
    %c0_51 = arith.constant 0 : index
    %c0_52 = arith.constant 0 : index
    %53 = vector.load %arg4[%c7, %c0_51, %c0_52] : memref<9x4x8xf32, #tpu.memory_space<vmem>>, vector<1x4x8xf32>
    %54 = vector.shape_cast %53 : vector<1x4x8xf32> to vector<4x8xf32>
    %cst_53 = arith.constant dense<0.000000e+00> : vector<7x8xf32>
    %55 = tpu.matmul %52, %54, %cst_53 {dimension_numbers = #tpu.dot_dimension_numbers<[1], [0], [0], [1], [0, 0, 1, 1], [], []>} : vector<7x4xf32>, vector<4x8xf32>, vector<7x8xf32> -> vector<7x8xf32>
    %56 = arith.addf %51, %55 : vector<7x8xf32>
    %c32 = arith.constant 32 : index
    %c0_54 = arith.constant 0 : index
    %57 = tpu.strided_load %arg13[%c32, %c0_54] {strides = array<i32: 2, 1>} : memref<225x4xf32, #tpu.memory_space<vmem>>, vector<7x4xf32>
    %c8 = arith.constant 8 : index
    %c0_55 = arith.constant 0 : index
    %c0_56 = arith.constant 0 : index
    %58 = vector.load %arg4[%c8, %c0_55, %c0_56] : memref<9x4x8xf32, #tpu.memory_space<vmem>>, vector<1x4x8xf32>
    %59 = vector.shape_cast %58 : vector<1x4x8xf32> to vector<4x8xf32>
    %cst_57 = arith.constant dense<0.000000e+00> : vector<7x8xf32>
    %60 = tpu.matmul %57, %59, %cst_57 {dimension_numbers = #tpu.dot_dimension_numbers<[1], [0], [0], [1], [0, 0, 1, 1], [], []>} : vector<7x4xf32>, vector<4x8xf32>, vector<7x8xf32> -> vector<7x8xf32>
    %61 = arith.addf %56, %60 : vector<7x8xf32>
    %62 = vector.broadcast %17 : vector<1x8xf32> to vector<7x8xf32>
    %63 = arith.addf %61, %62 : vector<7x8xf32>
    %cst_58 = arith.constant 0.000000e+00 : f32
    %64 = vector.broadcast %cst_58 : f32 to vector<7x8xf32>
    %65 = arith.cmpf oge, %63, %64 : vector<7x8xf32>
    %cst_59 = arith.constant 0.00999999977 : f32
    %66 = vector.broadcast %cst_59 : f32 to vector<7x8xf32>
    %67 = arith.mulf %66, %63 : vector<7x8xf32>
    %68 = arith.select %65, %63, %67 : vector<7x8xi1>, vector<7x8xf32>
    %c0_60 = arith.constant 0 : index
    %c0_61 = arith.constant 0 : index
    %69 = vector.load %arg14[%c0_60, %c0_61] : memref<49x8xf32, #tpu.memory_space<vmem>>, vector<7x8xf32>
    tpu.vector_store %arg14[%c0_60, %c0_61], %68 {strides = array<i32>} : memref<49x8xf32, #tpu.memory_space<vmem>>, vector<7x8xf32>,
    %c30_62 = arith.constant 30 : index
    %c0_63 = arith.constant 0 : index
    %70 = tpu.strided_load %arg13[%c30_62, %c0_63] {strides = array<i32: 2, 1>} : memref<225x4xf32, #tpu.memory_space<vmem>>, vector<7x4xf32>
    %c0_64 = arith.constant 0 : index
    %c0_65 = arith.constant 0 : index
    %c0_66 = arith.constant 0 : index
    %71 = vector.load %arg4[%c0_64, %c0_65, %c0_66] : memref<9x4x8xf32, #tpu.memory_space<vmem>>, vector<1x4x8xf32>
    %72 = vector.shape_cast %71 : vector<1x4x8xf32> to vector<4x8xf32>
    %cst_67 = arith.constant dense<0.000000e+00> : vector<7x8xf32>
    %73 = tpu.matmul %70, %72, %cst_67 {dimension_numbers = #tpu.dot_dimension_numbers<[1], [0], [0], [1], [0, 0, 1, 1], [], []>} : vector<7x4xf32>, vector<4x8xf32>, vector<7x8xf32> -> vector<7x8xf32>
    %c31_68 = arith.constant 31 : index
    %c0_69 = arith.constant 0 : index
    %74 = tpu.strided_load %arg13[%c31_68, %c0_69] {strides = array<i32: 2, 1>} : memref<225x4xf32, #tpu.memory_space<vmem>>, vector<7x4xf32>
    %c1_70 = arith.constant 1 : index
    %c0_71 = arith.constant 0 : index
    %c0_72 = arith.constant 0 : index
    %75 = vector.load %arg4[%c1_70, %c0_71, %c0_72] : memref<9x4x8xf32, #tpu.memory_space<vmem>>, vector<1x4x8xf32>
    %76 = vector.shape_cast %75 : vector<1x4x8xf32> to vector<4x8xf32>
    %cst_73 = arith.constant dense<0.000000e+00> : vector<7x8xf32>
    %77 = tpu.matmul %74, %76, %cst_73 {dimension_numbers = #tpu.dot_dimension_numbers<[1], [0], [0], [1], [0, 0, 1, 1], [], []>} : vector<7x4xf32>, vector<4x8xf32>, vector<7x8xf32> -> vector<7x8xf32>
    %78 = arith.addf %73, %77 : vector<7x8xf32>
    %c32_74 = arith.constant 32 : index
    %c0_75 = arith.constant 0 : index
    %79 = tpu.strided_load %arg13[%c32_74, %c0_75] {strides = array<i32: 2, 1>} : memref<225x4xf32, #tpu.memory_space<vmem>>, vector<7x4xf32>
    %c2_76 = arith.constant 2 : index
    %c0_77 = arith.constant 0 : index
    %c0_78 = arith.constant 0 : index
    %80 = vector.load %arg4[%c2_76, %c0_77, %c0_78] : memref<9x4x8xf32, #tpu.memory_space<vmem>>, vector<1x4x8xf32>
    %81 = vector.shape_cast %80 : vector<1x4x8xf32> to vector<4x8xf32>
    %cst_79 = arith.constant dense<0.000000e+00> : vector<7x8xf32>
    %82 = tpu.matmul %79, %81, %cst_79 {dimension_numbers = #tpu.dot_dimension_numbers<[1], [0], [0], [1], [0, 0, 1, 1], [], []>} : vector<7x4xf32>, vector<4x8xf32>, vector<7x8xf32> -> vector<7x8xf32>
    %83 = arith.addf %78, %82 : vector<7x8xf32>
    %c45 = arith.constant 45 : index
    %c0_80 = arith.constant 0 : index
    %84 = tpu.strided_load %arg13[%c45, %c0_80] {strides = array<i32: 2, 1>} : memref<225x4xf32, #tpu.memory_space<vmem>>, vector<7x4xf32>
    %c3_81 = arith.constant 3 : index
    %c0_82 = arith.constant 0 : index
    %c0_83 = arith.constant 0 : index
    %85 = vector.load %arg4[%c3_81, %c0_82, %c0_83] : memref<9x4x8xf32, #tpu.memory_space<vmem>>, vector<1x4x8xf32>
    %86 = vector.shape_cast %85 : vector<1x4x8xf32> to vector<4x8xf32>
    %cst_84 = arith.constant dense<0.000000e+00> : vector<7x8xf32>
    %87 = tpu.matmul %84, %86, %cst_84 {dimension_numbers = #tpu.dot_dimension_numbers<[1], [0], [0], [1], [0, 0, 1, 1], [], []>} : vector<7x4xf32>, vector<4x8xf32>, vector<7x8xf32> -> vector<7x8xf32>
    %88 = arith.addf %83, %87 : vector<7x8xf32>
    %c46 = arith.constant 46 : index
    %c0_85 = arith.constant 0 : index
    %89 = tpu.strided_load %arg13[%c46, %c0_85] {strides = array<i32: 2, 1>} : memref<225x4xf32, #tpu.memory_space<vmem>>, vector<7x4xf32>
    %c4_86 = arith.constant 4 : index
    %c0_87 = arith.constant 0 : index
    %c0_88 = arith.constant 0 : index
    %90 = vector.load %arg4[%c4_86, %c0_87, %c0_88] : memref<9x4x8xf32, #tpu.memory_space<vmem>>, vector<1x4x8xf32>
    %91 = vector.shape_cast %90 : vector<1x4x8xf32> to vector<4x8xf32>
    %cst_89 = arith.constant dense<0.000000e+00> : vector<7x8xf32>
    %92 = tpu.matmul %89, %91, %cst_89 {dimension_numbers = #tpu.dot_dimension_numbers<[1], [0], [0], [1], [0, 0, 1, 1], [], []>} : vector<7x4xf32>, vector<4x8xf32>, vector<7x8xf32> -> vector<7x8xf32>
    %93 = arith.addf %88, %92 : vector<7x8xf32>
    %c47 = arith.constant 47 : index
    %c0_90 = arith.constant 0 : index
    %94 = tpu.strided_load %arg13[%c47, %c0_90] {strides = array<i32: 2, 1>} : memref<225x4xf32, #tpu.memory_space<vmem>>, vector<7x4xf32>
    %c5_91 = arith.constant 5 : index
    %c0_92 = arith.constant 0 : index
    %c0_93 = arith.constant 0 : index
    %95 = vector.load %arg4[%c5_91, %c0_92, %c0_93] : memref<9x4x8xf32, #tpu.memory_space<vmem>>, vector<1x4x8xf32>
    %96 = vector.shape_cast %95 : vector<1x4x8xf32> to vector<4x8xf32>
    %cst_94 = arith.constant dense<0.000000e+00> : vector<7x8xf32>
    %97 = tpu.matmul %94, %96, %cst_94 {dimension_numbers = #tpu.dot_dimension_numbers<[1], [0], [0], [1], [0, 0, 1, 1], [], []>} : vector<7x4xf32>, vector<4x8xf32>, vector<7x8xf32> -> vector<7x8xf32>
    %98 = arith.addf %93, %97 : vector<7x8xf32>
    %c60 = arith.constant 60 : index
    %c0_95 = arith.constant 0 : index
    %99 = tpu.strided_load %arg13[%c60, %c0_95] {strides = array<i32: 2, 1>} : memref<225x4xf32, #tpu.memory_space<vmem>>, vector<7x4xf32>
    %c6_96 = arith.constant 6 : index
    %c0_97 = arith.constant 0 : index
    %c0_98 = arith.constant 0 : index
    %100 = vector.load %arg4[%c6_96, %c0_97, %c0_98] : memref<9x4x8xf32, #tpu.memory_space<vmem>>, vector<1x4x8xf32>
    %101 = vector.shape_cast %100 : vector<1x4x8xf32> to vector<4x8xf32>
    %cst_99 = arith.constant dense<0.000000e+00> : vector<7x8xf32>
    %102 = tpu.matmul %99, %101, %cst_99 {dimension_numbers = #tpu.dot_dimension_numbers<[1], [0], [0], [1], [0, 0, 1, 1], [], []>} : vector<7x4xf32>, vector<4x8xf32>, vector<7x8xf32> -> vector<7x8xf32>
    %103 = arith.addf %98, %102 : vector<7x8xf32>
    %c61 = arith.constant 61 : index
    %c0_100 = arith.constant 0 : index
    %104 = tpu.strided_load %arg13[%c61, %c0_100] {strides = array<i32: 2, 1>} : memref<225x4xf32, #tpu.memory_space<vmem>>, vector<7x4xf32>
    %c7_101 = arith.constant 7 : index
    %c0_102 = arith.constant 0 : index
    %c0_103 = arith.constant 0 : index
    %105 = vector.load %arg4[%c7_101, %c0_102, %c0_103] : memref<9x4x8xf32, #tpu.memory_space<vmem>>, vector<1x4x8xf32>
    %106 = vector.shape_cast %105 : vector<1x4x8xf32> to vector<4x8xf32>
    %cst_104 = arith.constant dense<0.000000e+00> : vector<7x8xf32>
    %107 = tpu.matmul %104, %106, %cst_104 {dimension_numbers = #tpu.dot_dimension_numbers<[1], [0], [0], [1], [0, 0, 1, 1], [], []>} : vector<7x4xf32>, vector<4x8xf32>, vector<7x8xf32> -> vector<7x8xf32>
    %108 = arith.addf %103, %107 : vector<7x8xf32>
    %c62 = arith.constant 62 : index
    %c0_105 = arith.constant 0 : index
    %109 = tpu.strided_load %arg13[%c62, %c0_105] {strides = array<i32: 2, 1>} : memref<225x4xf32, #tpu.memory_space<vmem>>, vector<7x4xf32>
    %c8_106 = arith.constant 8 : index
    %c0_107 = arith.constant 0 : index
    %c0_108 = arith.constant 0 : index
    %110 = vector.load %arg4[%c8_106, %c0_107, %c0_108] : memref<9x4x8xf32, #tpu.memory_space<vmem>>, vector<1x4x8xf32>
    %111 = vector.shape_cast %110 : vector<1x4x8xf32> to vector<4x8xf32>
    %cst_109 = arith.constant dense<0.000000e+00> : vector<7x8xf32>
    %112 = tpu.matmul %109, %111, %cst_109 {dimension_numbers = #tpu.dot_dimension_numbers<[1], [0], [0], [1], [0, 0, 1, 1], [], []>} : vector<7x4xf32>, vector<4x8xf32>, vector<7x8xf32> -> vector<7x8xf32>
    %113 = arith.addf %108, %112 : vector<7x8xf32>
    %114 = vector.broadcast %17 : vector<1x8xf32> to vector<7x8xf32>
    %115 = arith.addf %113, %114 : vector<7x8xf32>
    %cst_110 = arith.constant 0.000000e+00 : f32
    %116 = vector.broadcast %cst_110 : f32 to vector<7x8xf32>
    %117 = arith.cmpf oge, %115, %116 : vector<7x8xf32>
    %cst_111 = arith.constant 0.00999999977 : f32
    %118 = vector.broadcast %cst_111 : f32 to vector<7x8xf32>
    %119 = arith.mulf %118, %115 : vector<7x8xf32>
    %120 = arith.select %117, %115, %119 : vector<7x8xi1>, vector<7x8xf32>
    %c7_112 = arith.constant 7 : index
    %c0_113 = arith.constant 0 : index
    %121 = vector.load %arg14[%c7_112, %c0_113] : memref<49x8xf32, #tpu.memory_space<vmem>>, vector<7x8xf32>
    tpu.vector_store %arg14[%c7_112, %c0_113], %120 {strides = array<i32>} : memref<49x8xf32, #tpu.memory_space<vmem>>, vector<7x8xf32>,
    %c60_114 = arith.constant 60 : index
    %c0_115 = arith.constant 0 : index
    %122 = tpu.strided_load %arg13[%c60_114, %c0_115] {strides = array<i32: 2, 1>} : memref<225x4xf32, #tpu.memory_space<vmem>>, vector<7x4xf32>
    %c0_116 = arith.constant 0 : index
    %c0_117 = arith.constant 0 : index
    %c0_118 = arith.constant 0 : index
    %123 = vector.load %arg4[%c0_116, %c0_117, %c0_118] : memref<9x4x8xf32, #tpu.memory_space<vmem>>, vector<1x4x8xf32>
    %124 = vector.shape_cast %123 : vector<1x4x8xf32> to vector<4x8xf32>
    %cst_119 = arith.constant dense<0.000000e+00> : vector<7x8xf32>
    %125 = tpu.matmul %122, %124, %cst_119 {dimension_numbers = #tpu.dot_dimension_numbers<[1], [0], [0], [1], [0, 0, 1, 1], [], []>} : vector<7x4xf32>, vector<4x8xf32>, vector<7x8xf32> -> vector<7x8xf32>
    %c61_120 = arith.constant 61 : index
    %c0_121 = arith.constant 0 : index
    %126 = tpu.strided_load %arg13[%c61_120, %c0_121] {strides = array<i32: 2, 1>} : memref<225x4xf32, #tpu.memory_space<vmem>>, vector<7x4xf32>
    %c1_122 = arith.constant 1 : index
    %c0_123 = arith.constant 0 : index
    %c0_124 = arith.constant 0 : index
    %127 = vector.load %arg4[%c1_122, %c0_123, %c0_124] : memref<9x4x8xf32, #tpu.memory_space<vmem>>, vector<1x4x8xf32>
    %128 = vector.shape_cast %127 : vector<1x4x8xf32> to vector<4x8xf32>
    %cst_125 = arith.constant dense<0.000000e+00> : vector<7x8xf32>
    %129 = tpu.matmul %126, %128, %cst_125 {dimension_numbers = #tpu.dot_dimension_numbers<[1], [0], [0], [1], [0, 0, 1, 1], [], []>} : vector<7x4xf32>, vector<4x8xf32>, vector<7x8xf32> -> vector<7x8xf32>
    %130 = arith.addf %125, %129 : vector<7x8xf32>
    %c62_126 = arith.constant 62 : index
    %c0_127 = arith.constant 0 : index
    %131 = tpu.strided_load %arg13[%c62_126, %c0_127] {strides = array<i32: 2, 1>} : memref<225x4xf32, #tpu.memory_space<vmem>>, vector<7x4xf32>
    %c2_128 = arith.constant 2 : index
    %c0_129 = arith.constant 0 : index
    %c0_130 = arith.constant 0 : index
    %132 = vector.load %arg4[%c2_128, %c0_129, %c0_130] : memref<9x4x8xf32, #tpu.memory_space<vmem>>, vector<1x4x8xf32>
    %133 = vector.shape_cast %132 : vector<1x4x8xf32> to vector<4x8xf32>
    %cst_131 = arith.constant dense<0.000000e+00> : vector<7x8xf32>
    %134 = tpu.matmul %131, %133, %cst_131 {dimension_numbers = #tpu.dot_dimension_numbers<[1], [0], [0], [1], [0, 0, 1, 1], [], []>} : vector<7x4xf32>, vector<4x8xf32>, vector<7x8xf32> -> vector<7x8xf32>
    %135 = arith.addf %130, %134 : vector<7x8xf32>
    %c75 = arith.constant 75 : index
    %c0_132 = arith.constant 0 : index
    %136 = tpu.strided_load %arg13[%c75, %c0_132] {strides = array<i32: 2, 1>} : memref<225x4xf32, #tpu.memory_space<vmem>>, vector<7x4xf32>
    %c3_133 = arith.constant 3 : index
    %c0_134 = arith.constant 0 : index
    %c0_135 = arith.constant 0 : index
    %137 = vector.load %arg4[%c3_133, %c0_134, %c0_135] : memref<9x4x8xf32, #tpu.memory_space<vmem>>, vector<1x4x8xf32>
    %138 = vector.shape_cast %137 : vector<1x4x8xf32> to vector<4x8xf32>
    %cst_136 = arith.constant dense<0.000000e+00> : vector<7x8xf32>
    %139 = tpu.matmul %136, %138, %cst_136 {dimension_numbers = #tpu.dot_dimension_numbers<[1], [0], [0], [1], [0, 0, 1, 1], [], []>} : vector<7x4xf32>, vector<4x8xf32>, vector<7x8xf32> -> vector<7x8xf32>
    %140 = arith.addf %135, %139 : vector<7x8xf32>
    %c76 = arith.constant 76 : index
    %c0_137 = arith.constant 0 : index
    %141 = tpu.strided_load %arg13[%c76, %c0_137] {strides = array<i32: 2, 1>} : memref<225x4xf32, #tpu.memory_space<vmem>>, vector<7x4xf32>
    %c4_138 = arith.constant 4 : index
    %c0_139 = arith.constant 0 : index
    %c0_140 = arith.constant 0 : index
    %142 = vector.load %arg4[%c4_138, %c0_139, %c0_140] : memref<9x4x8xf32, #tpu.memory_space<vmem>>, vector<1x4x8xf32>
    %143 = vector.shape_cast %142 : vector<1x4x8xf32> to vector<4x8xf32>
    %cst_141 = arith.constant dense<0.000000e+00> : vector<7x8xf32>
    %144 = tpu.matmul %141, %143, %cst_141 {dimension_numbers = #tpu.dot_dimension_numbers<[1], [0], [0], [1], [0, 0, 1, 1], [], []>} : vector<7x4xf32>, vector<4x8xf32>, vector<7x8xf32> -> vector<7x8xf32>
    %145 = arith.addf %140, %144 : vector<7x8xf32>
    %c77 = arith.constant 77 : index
    %c0_142 = arith.constant 0 : index
    %146 = tpu.strided_load %arg13[%c77, %c0_142] {strides = array<i32: 2, 1>} : memref<225x4xf32, #tpu.memory_space<vmem>>, vector<7x4xf32>
    %c5_143 = arith.constant 5 : index
    %c0_144 = arith.constant 0 : index
    %c0_145 = arith.constant 0 : index
    %147 = vector.load %arg4[%c5_143, %c0_144, %c0_145] : memref<9x4x8xf32, #tpu.memory_space<vmem>>, vector<1x4x8xf32>
    %148 = vector.shape_cast %147 : vector<1x4x8xf32> to vector<4x8xf32>
    %cst_146 = arith.constant dense<0.000000e+00> : vector<7x8xf32>
    %149 = tpu.matmul %146, %148, %cst_146 {dimension_numbers = #tpu.dot_dimension_numbers<[1], [0], [0], [1], [0, 0, 1, 1], [], []>} : vector<7x4xf32>, vector<4x8xf32>, vector<7x8xf32> -> vector<7x8xf32>
    %150 = arith.addf %145, %149 : vector<7x8xf32>
    %c90 = arith.constant 90 : index
    %c0_147 = arith.constant 0 : index
    %151 = tpu.strided_load %arg13[%c90, %c0_147] {strides = array<i32: 2, 1>} : memref<225x4xf32, #tpu.memory_space<vmem>>, vector<7x4xf32>
    %c6_148 = arith.constant 6 : index
    %c0_149 = arith.constant 0 : index
    %c0_150 = arith.constant 0 : index
    %152 = vector.load %arg4[%c6_148, %c0_149, %c0_150] : memref<9x4x8xf32, #tpu.memory_space<vmem>>, vector<1x4x8xf32>
    %153 = vector.shape_cast %152 : vector<1x4x8xf32> to vector<4x8xf32>
    %cst_151 = arith.constant dense<0.000000e+00> : vector<7x8xf32>
    %154 = tpu.matmul %151, %153, %cst_151 {dimension_numbers = #tpu.dot_dimension_numbers<[1], [0], [0], [1], [0, 0, 1, 1], [], []>} : vector<7x4xf32>, vector<4x8xf32>, vector<7x8xf32> -> vector<7x8xf32>
    %155 = arith.addf %150, %154 : vector<7x8xf32>
    %c91 = arith.constant 91 : index
    %c0_152 = arith.constant 0 : index
    %156 = tpu.strided_load %arg13[%c91, %c0_152] {strides = array<i32: 2, 1>} : memref<225x4xf32, #tpu.memory_space<vmem>>, vector<7x4xf32>
    %c7_153 = arith.constant 7 : index
    %c0_154 = arith.constant 0 : index
    %c0_155 = arith.constant 0 : index
    %157 = vector.load %arg4[%c7_153, %c0_154, %c0_155] : memref<9x4x8xf32, #tpu.memory_space<vmem>>, vector<1x4x8xf32>
    %158 = vector.shape_cast %157 : vector<1x4x8xf32> to vector<4x8xf32>
    %cst_156 = arith.constant dense<0.000000e+00> : vector<7x8xf32>
    %159 = tpu.matmul %156, %158, %cst_156 {dimension_numbers = #tpu.dot_dimension_numbers<[1], [0], [0], [1], [0, 0, 1, 1], [], []>} : vector<7x4xf32>, vector<4x8xf32>, vector<7x8xf32> -> vector<7x8xf32>
    %160 = arith.addf %155, %159 : vector<7x8xf32>
    %c92 = arith.constant 92 : index
    %c0_157 = arith.constant 0 : index
    %161 = tpu.strided_load %arg13[%c92, %c0_157] {strides = array<i32: 2, 1>} : memref<225x4xf32, #tpu.memory_space<vmem>>, vector<7x4xf32>
    %c8_158 = arith.constant 8 : index
    %c0_159 = arith.constant 0 : index
    %c0_160 = arith.constant 0 : index
    %162 = vector.load %arg4[%c8_158, %c0_159, %c0_160] : memref<9x4x8xf32, #tpu.memory_space<vmem>>, vector<1x4x8xf32>
    %163 = vector.shape_cast %162 : vector<1x4x8xf32> to vector<4x8xf32>
    %cst_161 = arith.constant dense<0.000000e+00> : vector<7x8xf32>
    %164 = tpu.matmul %161, %163, %cst_161 {dimension_numbers = #tpu.dot_dimension_numbers<[1], [0], [0], [1], [0, 0, 1, 1], [], []>} : vector<7x4xf32>, vector<4x8xf32>, vector<7x8xf32> -> vector<7x8xf32>
    %165 = arith.addf %160, %164 : vector<7x8xf32>
    %166 = vector.broadcast %17 : vector<1x8xf32> to vector<7x8xf32>
    %167 = arith.addf %165, %166 : vector<7x8xf32>
    %cst_162 = arith.constant 0.000000e+00 : f32
    %168 = vector.broadcast %cst_162 : f32 to vector<7x8xf32>
    %169 = arith.cmpf oge, %167, %168 : vector<7x8xf32>
    %cst_163 = arith.constant 0.00999999977 : f32
    %170 = vector.broadcast %cst_163 : f32 to vector<7x8xf32>
    %171 = arith.mulf %170, %167 : vector<7x8xf32>
    %172 = arith.select %169, %167, %171 : vector<7x8xi1>, vector<7x8xf32>
    %c14 = arith.constant 14 : index
    %c0_164 = arith.constant 0 : index
    %173 = vector.load %arg14[%c14, %c0_164] : memref<49x8xf32, #tpu.memory_space<vmem>>, vector<7x8xf32>
    tpu.vector_store %arg14[%c14, %c0_164], %172 {strides = array<i32>} : memref<49x8xf32, #tpu.memory_space<vmem>>, vector<7x8xf32>,
    %c90_165 = arith.constant 90 : index
    %c0_166 = arith.constant 0 : index
    %174 = tpu.strided_load %arg13[%c90_165, %c0_166] {strides = array<i32: 2, 1>} : memref<225x4xf32, #tpu.memory_space<vmem>>, vector<7x4xf32>
    %c0_167 = arith.constant 0 : index
    %c0_168 = arith.constant 0 : index
    %c0_169 = arith.constant 0 : index
    %175 = vector.load %arg4[%c0_167, %c0_168, %c0_169] : memref<9x4x8xf32, #tpu.memory_space<vmem>>, vector<1x4x8xf32>
    %176 = vector.shape_cast %175 : vector<1x4x8xf32> to vector<4x8xf32>
    %cst_170 = arith.constant dense<0.000000e+00> : vector<7x8xf32>
    %177 = tpu.matmul %174, %176, %cst_170 {dimension_numbers = #tpu.dot_dimension_numbers<[1], [0], [0], [1], [0, 0, 1, 1], [], []>} : vector<7x4xf32>, vector<4x8xf32>, vector<7x8xf32> -> vector<7x8xf32>
    %c91_171 = arith.constant 91 : index
    %c0_172 = arith.constant 0 : index
    %178 = tpu.strided_load %arg13[%c91_171, %c0_172] {strides = array<i32: 2, 1>} : memref<225x4xf32, #tpu.memory_space<vmem>>, vector<7x4xf32>
    %c1_173 = arith.constant 1 : index
    %c0_174 = arith.constant 0 : index
    %c0_175 = arith.constant 0 : index
    %179 = vector.load %arg4[%c1_173, %c0_174, %c0_175] : memref<9x4x8xf32, #tpu.memory_space<vmem>>, vector<1x4x8xf32>
    %180 = vector.shape_cast %179 : vector<1x4x8xf32> to vector<4x8xf32>
    %cst_176 = arith.constant dense<0.000000e+00> : vector<7x8xf32>
    %181 = tpu.matmul %178, %180, %cst_176 {dimension_numbers = #tpu.dot_dimension_numbers<[1], [0], [0], [1], [0, 0, 1, 1], [], []>} : vector<7x4xf32>, vector<4x8xf32>, vector<7x8xf32> -> vector<7x8xf32>
    %182 = arith.addf %177, %181 : vector<7x8xf32>
    %c92_177 = arith.constant 92 : index
    %c0_178 = arith.constant 0 : index
    %183 = tpu.strided_load %arg13[%c92_177, %c0_178] {strides = array<i32: 2, 1>} : memref<225x4xf32, #tpu.memory_space<vmem>>, vector<7x4xf32>
    %c2_179 = arith.constant 2 : index
    %c0_180 = arith.constant 0 : index
    %c0_181 = arith.constant 0 : index
    %184 = vector.load %arg4[%c2_179, %c0_180, %c0_181] : memref<9x4x8xf32, #tpu.memory_space<vmem>>, vector<1x4x8xf32>
    %185 = vector.shape_cast %184 : vector<1x4x8xf32> to vector<4x8xf32>
    %cst_182 = arith.constant dense<0.000000e+00> : vector<7x8xf32>
    %186 = tpu.matmul %183, %185, %cst_182 {dimension_numbers = #tpu.dot_dimension_numbers<[1], [0], [0], [1], [0, 0, 1, 1], [], []>} : vector<7x4xf32>, vector<4x8xf32>, vector<7x8xf32> -> vector<7x8xf32>
    %187 = arith.addf %182, %186 : vector<7x8xf32>
    %c105 = arith.constant 105 : index
    %c0_183 = arith.constant 0 : index
    %188 = tpu.strided_load %arg13[%c105, %c0_183] {strides = array<i32: 2, 1>} : memref<225x4xf32, #tpu.memory_space<vmem>>, vector<7x4xf32>
    %c3_184 = arith.constant 3 : index
    %c0_185 = arith.constant 0 : index
    %c0_186 = arith.constant 0 : index
    %189 = vector.load %arg4[%c3_184, %c0_185, %c0_186] : memref<9x4x8xf32, #tpu.memory_space<vmem>>, vector<1x4x8xf32>
    %190 = vector.shape_cast %189 : vector<1x4x8xf32> to vector<4x8xf32>
    %cst_187 = arith.constant dense<0.000000e+00> : vector<7x8xf32>
    %191 = tpu.matmul %188, %190, %cst_187 {dimension_numbers = #tpu.dot_dimension_numbers<[1], [0], [0], [1], [0, 0, 1, 1], [], []>} : vector<7x4xf32>, vector<4x8xf32>, vector<7x8xf32> -> vector<7x8xf32>
    %192 = arith.addf %187, %191 : vector<7x8xf32>
    %c106 = arith.constant 106 : index
    %c0_188 = arith.constant 0 : index
    %193 = tpu.strided_load %arg13[%c106, %c0_188] {strides = array<i32: 2, 1>} : memref<225x4xf32, #tpu.memory_space<vmem>>, vector<7x4xf32>
    %c4_189 = arith.constant 4 : index
    %c0_190 = arith.constant 0 : index
    %c0_191 = arith.constant 0 : index
    %194 = vector.load %arg4[%c4_189, %c0_190, %c0_191] : memref<9x4x8xf32, #tpu.memory_space<vmem>>, vector<1x4x8xf32>
    %195 = vector.shape_cast %194 : vector<1x4x8xf32> to vector<4x8xf32>
    %cst_192 = arith.constant dense<0.000000e+00> : vector<7x8xf32>
    %196 = tpu.matmul %193, %195, %cst_192 {dimension_numbers = #tpu.dot_dimension_numbers<[1], [0], [0], [1], [0, 0, 1, 1], [], []>} : vector<7x4xf32>, vector<4x8xf32>, vector<7x8xf32> -> vector<7x8xf32>
    %197 = arith.addf %192, %196 : vector<7x8xf32>
    %c107 = arith.constant 107 : index
    %c0_193 = arith.constant 0 : index
    %198 = tpu.strided_load %arg13[%c107, %c0_193] {strides = array<i32: 2, 1>} : memref<225x4xf32, #tpu.memory_space<vmem>>, vector<7x4xf32>
    %c5_194 = arith.constant 5 : index
    %c0_195 = arith.constant 0 : index
    %c0_196 = arith.constant 0 : index
    %199 = vector.load %arg4[%c5_194, %c0_195, %c0_196] : memref<9x4x8xf32, #tpu.memory_space<vmem>>, vector<1x4x8xf32>
    %200 = vector.shape_cast %199 : vector<1x4x8xf32> to vector<4x8xf32>
    %cst_197 = arith.constant dense<0.000000e+00> : vector<7x8xf32>
    %201 = tpu.matmul %198, %200, %cst_197 {dimension_numbers = #tpu.dot_dimension_numbers<[1], [0], [0], [1], [0, 0, 1, 1], [], []>} : vector<7x4xf32>, vector<4x8xf32>, vector<7x8xf32> -> vector<7x8xf32>
    %202 = arith.addf %197, %201 : vector<7x8xf32>
    %c120 = arith.constant 120 : index
    %c0_198 = arith.constant 0 : index
    %203 = tpu.strided_load %arg13[%c120, %c0_198] {strides = array<i32: 2, 1>} : memref<225x4xf32, #tpu.memory_space<vmem>>, vector<7x4xf32>
    %c6_199 = arith.constant 6 : index
    %c0_200 = arith.constant 0 : index
    %c0_201 = arith.constant 0 : index
    %204 = vector.load %arg4[%c6_199, %c0_200, %c0_201] : memref<9x4x8xf32, #tpu.memory_space<vmem>>, vector<1x4x8xf32>
    %205 = vector.shape_cast %204 : vector<1x4x8xf32> to vector<4x8xf32>
    %cst_202 = arith.constant dense<0.000000e+00> : vector<7x8xf32>
    %206 = tpu.matmul %203, %205, %cst_202 {dimension_numbers = #tpu.dot_dimension_numbers<[1], [0], [0], [1], [0, 0, 1, 1], [], []>} : vector<7x4xf32>, vector<4x8xf32>, vector<7x8xf32> -> vector<7x8xf32>
    %207 = arith.addf %202, %206 : vector<7x8xf32>
    %c121 = arith.constant 121 : index
    %c0_203 = arith.constant 0 : index
    %208 = tpu.strided_load %arg13[%c121, %c0_203] {strides = array<i32: 2, 1>} : memref<225x4xf32, #tpu.memory_space<vmem>>, vector<7x4xf32>
    %c7_204 = arith.constant 7 : index
    %c0_205 = arith.constant 0 : index
    %c0_206 = arith.constant 0 : index
    %209 = vector.load %arg4[%c7_204, %c0_205, %c0_206] : memref<9x4x8xf32, #tpu.memory_space<vmem>>, vector<1x4x8xf32>
    %210 = vector.shape_cast %209 : vector<1x4x8xf32> to vector<4x8xf32>
    %cst_207 = arith.constant dense<0.000000e+00> : vector<7x8xf32>
    %211 = tpu.matmul %208, %210, %cst_207 {dimension_numbers = #tpu.dot_dimension_numbers<[1], [0], [0], [1], [0, 0, 1, 1], [], []>} : vector<7x4xf32>, vector<4x8xf32>, vector<7x8xf32> -> vector<7x8xf32>
    %212 = arith.addf %207, %211 : vector<7x8xf32>
    %c122 = arith.constant 122 : index
    %c0_208 = arith.constant 0 : index
    %213 = tpu.strided_load %arg13[%c122, %c0_208] {strides = array<i32: 2, 1>} : memref<225x4xf32, #tpu.memory_space<vmem>>, vector<7x4xf32>
    %c8_209 = arith.constant 8 : index
    %c0_210 = arith.constant 0 : index
    %c0_211 = arith.constant 0 : index
    %214 = vector.load %arg4[%c8_209, %c0_210, %c0_211] : memref<9x4x8xf32, #tpu.memory_space<vmem>>, vector<1x4x8xf32>
    %215 = vector.shape_cast %214 : vector<1x4x8xf32> to vector<4x8xf32>
    %cst_212 = arith.constant dense<0.000000e+00> : vector<7x8xf32>
    %216 = tpu.matmul %213, %215, %cst_212 {dimension_numbers = #tpu.dot_dimension_numbers<[1], [0], [0], [1], [0, 0, 1, 1], [], []>} : vector<7x4xf32>, vector<4x8xf32>, vector<7x8xf32> -> vector<7x8xf32>
    %217 = arith.addf %212, %216 : vector<7x8xf32>
    %218 = vector.broadcast %17 : vector<1x8xf32> to vector<7x8xf32>
    %219 = arith.addf %217, %218 : vector<7x8xf32>
    %cst_213 = arith.constant 0.000000e+00 : f32
    %220 = vector.broadcast %cst_213 : f32 to vector<7x8xf32>
    %221 = arith.cmpf oge, %219, %220 : vector<7x8xf32>
    %cst_214 = arith.constant 0.00999999977 : f32
    %222 = vector.broadcast %cst_214 : f32 to vector<7x8xf32>
    %223 = arith.mulf %222, %219 : vector<7x8xf32>
    %224 = arith.select %221, %219, %223 : vector<7x8xi1>, vector<7x8xf32>
    %c21 = arith.constant 21 : index
    %c0_215 = arith.constant 0 : index
    %225 = vector.load %arg14[%c21, %c0_215] : memref<49x8xf32, #tpu.memory_space<vmem>>, vector<7x8xf32>
    tpu.vector_store %arg14[%c21, %c0_215], %224 {strides = array<i32>} : memref<49x8xf32, #tpu.memory_space<vmem>>, vector<7x8xf32>,
    %c120_216 = arith.constant 120 : index
    %c0_217 = arith.constant 0 : index
    %226 = tpu.strided_load %arg13[%c120_216, %c0_217] {strides = array<i32: 2, 1>} : memref<225x4xf32, #tpu.memory_space<vmem>>, vector<7x4xf32>
    %c0_218 = arith.constant 0 : index
    %c0_219 = arith.constant 0 : index
    %c0_220 = arith.constant 0 : index
    %227 = vector.load %arg4[%c0_218, %c0_219, %c0_220] : memref<9x4x8xf32, #tpu.memory_space<vmem>>, vector<1x4x8xf32>
    %228 = vector.shape_cast %227 : vector<1x4x8xf32> to vector<4x8xf32>
    %cst_221 = arith.constant dense<0.000000e+00> : vector<7x8xf32>
    %229 = tpu.matmul %226, %228, %cst_221 {dimension_numbers = #tpu.dot_dimension_numbers<[1], [0], [0], [1], [0, 0, 1, 1], [], []>} : vector<7x4xf32>, vector<4x8xf32>, vector<7x8xf32> -> vector<7x8xf32>
    %c121_222 = arith.constant 121 : index
    %c0_223 = arith.constant 0 : index
    %230 = tpu.strided_load %arg13[%c121_222, %c0_223] {strides = array<i32: 2, 1>} : memref<225x4xf32, #tpu.memory_space<vmem>>, vector<7x4xf32>
    %c1_224 = arith.constant 1 : index
    %c0_225 = arith.constant 0 : index
    %c0_226 = arith.constant 0 : index
    %231 = vector.load %arg4[%c1_224, %c0_225, %c0_226] : memref<9x4x8xf32, #tpu.memory_space<vmem>>, vector<1x4x8xf32>
    %232 = vector.shape_cast %231 : vector<1x4x8xf32> to vector<4x8xf32>
    %cst_227 = arith.constant dense<0.000000e+00> : vector<7x8xf32>
    %233 = tpu.matmul %230, %232, %cst_227 {dimension_numbers = #tpu.dot_dimension_numbers<[1], [0], [0], [1], [0, 0, 1, 1], [], []>} : vector<7x4xf32>, vector<4x8xf32>, vector<7x8xf32> -> vector<7x8xf32>
    %234 = arith.addf %229, %233 : vector<7x8xf32>
    %c122_228 = arith.constant 122 : index
    %c0_229 = arith.constant 0 : index
    %235 = tpu.strided_load %arg13[%c122_228, %c0_229] {strides = array<i32: 2, 1>} : memref<225x4xf32, #tpu.memory_space<vmem>>, vector<7x4xf32>
    %c2_230 = arith.constant 2 : index
    %c0_231 = arith.constant 0 : index
    %c0_232 = arith.constant 0 : index
    %236 = vector.load %arg4[%c2_230, %c0_231, %c0_232] : memref<9x4x8xf32, #tpu.memory_space<vmem>>, vector<1x4x8xf32>
    %237 = vector.shape_cast %236 : vector<1x4x8xf32> to vector<4x8xf32>
    %cst_233 = arith.constant dense<0.000000e+00> : vector<7x8xf32>
    %238 = tpu.matmul %235, %237, %cst_233 {dimension_numbers = #tpu.dot_dimension_numbers<[1], [0], [0], [1], [0, 0, 1, 1], [], []>} : vector<7x4xf32>, vector<4x8xf32>, vector<7x8xf32> -> vector<7x8xf32>
    %239 = arith.addf %234, %238 : vector<7x8xf32>
    %c135 = arith.constant 135 : index
    %c0_234 = arith.constant 0 : index
    %240 = tpu.strided_load %arg13[%c135, %c0_234] {strides = array<i32: 2, 1>} : memref<225x4xf32, #tpu.memory_space<vmem>>, vector<7x4xf32>
    %c3_235 = arith.constant 3 : index
    %c0_236 = arith.constant 0 : index
    %c0_237 = arith.constant 0 : index
    %241 = vector.load %arg4[%c3_235, %c0_236, %c0_237] : memref<9x4x8xf32, #tpu.memory_space<vmem>>, vector<1x4x8xf32>
    %242 = vector.shape_cast %241 : vector<1x4x8xf32> to vector<4x8xf32>
    %cst_238 = arith.constant dense<0.000000e+00> : vector<7x8xf32>
    %243 = tpu.matmul %240, %242, %cst_238 {dimension_numbers = #tpu.dot_dimension_numbers<[1], [0], [0], [1], [0, 0, 1, 1], [], []>} : vector<7x4xf32>, vector<4x8xf32>, vector<7x8xf32> -> vector<7x8xf32>
    %244 = arith.addf %239, %243 : vector<7x8xf32>
    %c136 = arith.constant 136 : index
    %c0_239 = arith.constant 0 : index
    %245 = tpu.strided_load %arg13[%c136, %c0_239] {strides = array<i32: 2, 1>} : memref<225x4xf32, #tpu.memory_space<vmem>>, vector<7x4xf32>
    %c4_240 = arith.constant 4 : index
    %c0_241 = arith.constant 0 : index
    %c0_242 = arith.constant 0 : index
    %246 = vector.load %arg4[%c4_240, %c0_241, %c0_242] : memref<9x4x8xf32, #tpu.memory_space<vmem>>, vector<1x4x8xf32>
    %247 = vector.shape_cast %246 : vector<1x4x8xf32> to vector<4x8xf32>
    %cst_243 = arith.constant dense<0.000000e+00> : vector<7x8xf32>
    %248 = tpu.matmul %245, %247, %cst_243 {dimension_numbers = #tpu.dot_dimension_numbers<[1], [0], [0], [1], [0, 0, 1, 1], [], []>} : vector<7x4xf32>, vector<4x8xf32>, vector<7x8xf32> -> vector<7x8xf32>
    %249 = arith.addf %244, %248 : vector<7x8xf32>
    %c137 = arith.constant 137 : index
    %c0_244 = arith.constant 0 : index
    %250 = tpu.strided_load %arg13[%c137, %c0_244] {strides = array<i32: 2, 1>} : memref<225x4xf32, #tpu.memory_space<vmem>>, vector<7x4xf32>
    %c5_245 = arith.constant 5 : index
    %c0_246 = arith.constant 0 : index
    %c0_247 = arith.constant 0 : index
    %251 = vector.load %arg4[%c5_245, %c0_246, %c0_247] : memref<9x4x8xf32, #tpu.memory_space<vmem>>, vector<1x4x8xf32>
    %252 = vector.shape_cast %251 : vector<1x4x8xf32> to vector<4x8xf32>
    %cst_248 = arith.constant dense<0.000000e+00> : vector<7x8xf32>
    %253 = tpu.matmul %250, %252, %cst_248 {dimension_numbers = #tpu.dot_dimension_numbers<[1], [0], [0], [1], [0, 0, 1, 1], [], []>} : vector<7x4xf32>, vector<4x8xf32>, vector<7x8xf32> -> vector<7x8xf32>
    %254 = arith.addf %249, %253 : vector<7x8xf32>
    %c150 = arith.constant 150 : index
    %c0_249 = arith.constant 0 : index
    %255 = tpu.strided_load %arg13[%c150, %c0_249] {strides = array<i32: 2, 1>} : memref<225x4xf32, #tpu.memory_space<vmem>>, vector<7x4xf32>
    %c6_250 = arith.constant 6 : index
    %c0_251 = arith.constant 0 : index
    %c0_252 = arith.constant 0 : index
    %256 = vector.load %arg4[%c6_250, %c0_251, %c0_252] : memref<9x4x8xf32, #tpu.memory_space<vmem>>, vector<1x4x8xf32>
    %257 = vector.shape_cast %256 : vector<1x4x8xf32> to vector<4x8xf32>
    %cst_253 = arith.constant dense<0.000000e+00> : vector<7x8xf32>
    %258 = tpu.matmul %255, %257, %cst_253 {dimension_numbers = #tpu.dot_dimension_numbers<[1], [0], [0], [1], [0, 0, 1, 1], [], []>} : vector<7x4xf32>, vector<4x8xf32>, vector<7x8xf32> -> vector<7x8xf32>
    %259 = arith.addf %254, %258 : vector<7x8xf32>
    %c151 = arith.constant 151 : index
    %c0_254 = arith.constant 0 : index
    %260 = tpu.strided_load %arg13[%c151, %c0_254] {strides = array<i32: 2, 1>} : memref<225x4xf32, #tpu.memory_space<vmem>>, vector<7x4xf32>
    %c7_255 = arith.constant 7 : index
    %c0_256 = arith.constant 0 : index
    %c0_257 = arith.constant 0 : index
    %261 = vector.load %arg4[%c7_255, %c0_256, %c0_257] : memref<9x4x8xf32, #tpu.memory_space<vmem>>, vector<1x4x8xf32>
    %262 = vector.shape_cast %261 : vector<1x4x8xf32> to vector<4x8xf32>
    %cst_258 = arith.constant dense<0.000000e+00> : vector<7x8xf32>
    %263 = tpu.matmul %260, %262, %cst_258 {dimension_numbers = #tpu.dot_dimension_numbers<[1], [0], [0], [1], [0, 0, 1, 1], [], []>} : vector<7x4xf32>, vector<4x8xf32>, vector<7x8xf32> -> vector<7x8xf32>
    %264 = arith.addf %259, %263 : vector<7x8xf32>
    %c152 = arith.constant 152 : index
    %c0_259 = arith.constant 0 : index
    %265 = tpu.strided_load %arg13[%c152, %c0_259] {strides = array<i32: 2, 1>} : memref<225x4xf32, #tpu.memory_space<vmem>>, vector<7x4xf32>
    %c8_260 = arith.constant 8 : index
    %c0_261 = arith.constant 0 : index
    %c0_262 = arith.constant 0 : index
    %266 = vector.load %arg4[%c8_260, %c0_261, %c0_262] : memref<9x4x8xf32, #tpu.memory_space<vmem>>, vector<1x4x8xf32>
    %267 = vector.shape_cast %266 : vector<1x4x8xf32> to vector<4x8xf32>
    %cst_263 = arith.constant dense<0.000000e+00> : vector<7x8xf32>
    %268 = tpu.matmul %265, %267, %cst_263 {dimension_numbers = #tpu.dot_dimension_numbers<[1], [0], [0], [1], [0, 0, 1, 1], [], []>} : vector<7x4xf32>, vector<4x8xf32>, vector<7x8xf32> -> vector<7x8xf32>
    %269 = arith.addf %264, %268 : vector<7x8xf32>
    %270 = vector.broadcast %17 : vector<1x8xf32> to vector<7x8xf32>
    %271 = arith.addf %269, %270 : vector<7x8xf32>
    %cst_264 = arith.constant 0.000000e+00 : f32
    %272 = vector.broadcast %cst_264 : f32 to vector<7x8xf32>
    %273 = arith.cmpf oge, %271, %272 : vector<7x8xf32>
    %cst_265 = arith.constant 0.00999999977 : f32
    %274 = vector.broadcast %cst_265 : f32 to vector<7x8xf32>
    %275 = arith.mulf %274, %271 : vector<7x8xf32>
    %276 = arith.select %273, %271, %275 : vector<7x8xi1>, vector<7x8xf32>
    %c28 = arith.constant 28 : index
    %c0_266 = arith.constant 0 : index
    %277 = vector.load %arg14[%c28, %c0_266] : memref<49x8xf32, #tpu.memory_space<vmem>>, vector<7x8xf32>
    tpu.vector_store %arg14[%c28, %c0_266], %276 {strides = array<i32>} : memref<49x8xf32, #tpu.memory_space<vmem>>, vector<7x8xf32>,
    %c150_267 = arith.constant 150 : index
    %c0_268 = arith.constant 0 : index
    %278 = tpu.strided_load %arg13[%c150_267, %c0_268] {strides = array<i32: 2, 1>} : memref<225x4xf32, #tpu.memory_space<vmem>>, vector<7x4xf32>
    %c0_269 = arith.constant 0 : index
    %c0_270 = arith.constant 0 : index
    %c0_271 = arith.constant 0 : index
    %279 = vector.load %arg4[%c0_269, %c0_270, %c0_271] : memref<9x4x8xf32, #tpu.memory_space<vmem>>, vector<1x4x8xf32>
    %280 = vector.shape_cast %279 : vector<1x4x8xf32> to vector<4x8xf32>
    %cst_272 = arith.constant dense<0.000000e+00> : vector<7x8xf32>
    %281 = tpu.matmul %278, %280, %cst_272 {dimension_numbers = #tpu.dot_dimension_numbers<[1], [0], [0], [1], [0, 0, 1, 1], [], []>} : vector<7x4xf32>, vector<4x8xf32>, vector<7x8xf32> -> vector<7x8xf32>
    %c151_273 = arith.constant 151 : index
    %c0_274 = arith.constant 0 : index
    %282 = tpu.strided_load %arg13[%c151_273, %c0_274] {strides = array<i32: 2, 1>} : memref<225x4xf32, #tpu.memory_space<vmem>>, vector<7x4xf32>
    %c1_275 = arith.constant 1 : index
    %c0_276 = arith.constant 0 : index
    %c0_277 = arith.constant 0 : index
    %283 = vector.load %arg4[%c1_275, %c0_276, %c0_277] : memref<9x4x8xf32, #tpu.memory_space<vmem>>, vector<1x4x8xf32>
    %284 = vector.shape_cast %283 : vector<1x4x8xf32> to vector<4x8xf32>
    %cst_278 = arith.constant dense<0.000000e+00> : vector<7x8xf32>
    %285 = tpu.matmul %282, %284, %cst_278 {dimension_numbers = #tpu.dot_dimension_numbers<[1], [0], [0], [1], [0, 0, 1, 1], [], []>} : vector<7x4xf32>, vector<4x8xf32>, vector<7x8xf32> -> vector<7x8xf32>
    %286 = arith.addf %281, %285 : vector<7x8xf32>
    %c152_279 = arith.constant 152 : index
    %c0_280 = arith.constant 0 : index
    %287 = tpu.strided_load %arg13[%c152_279, %c0_280] {strides = array<i32: 2, 1>} : memref<225x4xf32, #tpu.memory_space<vmem>>, vector<7x4xf32>
    %c2_281 = arith.constant 2 : index
    %c0_282 = arith.constant 0 : index
    %c0_283 = arith.constant 0 : index
    %288 = vector.load %arg4[%c2_281, %c0_282, %c0_283] : memref<9x4x8xf32, #tpu.memory_space<vmem>>, vector<1x4x8xf32>
    %289 = vector.shape_cast %288 : vector<1x4x8xf32> to vector<4x8xf32>
    %cst_284 = arith.constant dense<0.000000e+00> : vector<7x8xf32>
    %290 = tpu.matmul %287, %289, %cst_284 {dimension_numbers = #tpu.dot_dimension_numbers<[1], [0], [0], [1], [0, 0, 1, 1], [], []>} : vector<7x4xf32>, vector<4x8xf32>, vector<7x8xf32> -> vector<7x8xf32>
    %291 = arith.addf %286, %290 : vector<7x8xf32>
    %c165 = arith.constant 165 : index
    %c0_285 = arith.constant 0 : index
    %292 = tpu.strided_load %arg13[%c165, %c0_285] {strides = array<i32: 2, 1>} : memref<225x4xf32, #tpu.memory_space<vmem>>, vector<7x4xf32>
    %c3_286 = arith.constant 3 : index
    %c0_287 = arith.constant 0 : index
    %c0_288 = arith.constant 0 : index
    %293 = vector.load %arg4[%c3_286, %c0_287, %c0_288] : memref<9x4x8xf32, #tpu.memory_space<vmem>>, vector<1x4x8xf32>
    %294 = vector.shape_cast %293 : vector<1x4x8xf32> to vector<4x8xf32>
    %cst_289 = arith.constant dense<0.000000e+00> : vector<7x8xf32>
    %295 = tpu.matmul %292, %294, %cst_289 {dimension_numbers = #tpu.dot_dimension_numbers<[1], [0], [0], [1], [0, 0, 1, 1], [], []>} : vector<7x4xf32>, vector<4x8xf32>, vector<7x8xf32> -> vector<7x8xf32>
    %296 = arith.addf %291, %295 : vector<7x8xf32>
    %c166 = arith.constant 166 : index
    %c0_290 = arith.constant 0 : index
    %297 = tpu.strided_load %arg13[%c166, %c0_290] {strides = array<i32: 2, 1>} : memref<225x4xf32, #tpu.memory_space<vmem>>, vector<7x4xf32>
    %c4_291 = arith.constant 4 : index
    %c0_292 = arith.constant 0 : index
    %c0_293 = arith.constant 0 : index
    %298 = vector.load %arg4[%c4_291, %c0_292, %c0_293] : memref<9x4x8xf32, #tpu.memory_space<vmem>>, vector<1x4x8xf32>
    %299 = vector.shape_cast %298 : vector<1x4x8xf32> to vector<4x8xf32>
    %cst_294 = arith.constant dense<0.000000e+00> : vector<7x8xf32>
    %300 = tpu.matmul %297, %299, %cst_294 {dimension_numbers = #tpu.dot_dimension_numbers<[1], [0], [0], [1], [0, 0, 1, 1], [], []>} : vector<7x4xf32>, vector<4x8xf32>, vector<7x8xf32> -> vector<7x8xf32>
    %301 = arith.addf %296, %300 : vector<7x8xf32>
    %c167 = arith.constant 167 : index
    %c0_295 = arith.constant 0 : index
    %302 = tpu.strided_load %arg13[%c167, %c0_295] {strides = array<i32: 2, 1>} : memref<225x4xf32, #tpu.memory_space<vmem>>, vector<7x4xf32>
    %c5_296 = arith.constant 5 : index
    %c0_297 = arith.constant 0 : index
    %c0_298 = arith.constant 0 : index
    %303 = vector.load %arg4[%c5_296, %c0_297, %c0_298] : memref<9x4x8xf32, #tpu.memory_space<vmem>>, vector<1x4x8xf32>
    %304 = vector.shape_cast %303 : vector<1x4x8xf32> to vector<4x8xf32>
    %cst_299 = arith.constant dense<0.000000e+00> : vector<7x8xf32>
    %305 = tpu.matmul %302, %304, %cst_299 {dimension_numbers = #tpu.dot_dimension_numbers<[1], [0], [0], [1], [0, 0, 1, 1], [], []>} : vector<7x4xf32>, vector<4x8xf32>, vector<7x8xf32> -> vector<7x8xf32>
    %306 = arith.addf %301, %305 : vector<7x8xf32>
    %c180 = arith.constant 180 : index
    %c0_300 = arith.constant 0 : index
    %307 = tpu.strided_load %arg13[%c180, %c0_300] {strides = array<i32: 2, 1>} : memref<225x4xf32, #tpu.memory_space<vmem>>, vector<7x4xf32>
    %c6_301 = arith.constant 6 : index
    %c0_302 = arith.constant 0 : index
    %c0_303 = arith.constant 0 : index
    %308 = vector.load %arg4[%c6_301, %c0_302, %c0_303] : memref<9x4x8xf32, #tpu.memory_space<vmem>>, vector<1x4x8xf32>
    %309 = vector.shape_cast %308 : vector<1x4x8xf32> to vector<4x8xf32>
    %cst_304 = arith.constant dense<0.000000e+00> : vector<7x8xf32>
    %310 = tpu.matmul %307, %309, %cst_304 {dimension_numbers = #tpu.dot_dimension_numbers<[1], [0], [0], [1], [0, 0, 1, 1], [], []>} : vector<7x4xf32>, vector<4x8xf32>, vector<7x8xf32> -> vector<7x8xf32>
    %311 = arith.addf %306, %310 : vector<7x8xf32>
    %c181 = arith.constant 181 : index
    %c0_305 = arith.constant 0 : index
    %312 = tpu.strided_load %arg13[%c181, %c0_305] {strides = array<i32: 2, 1>} : memref<225x4xf32, #tpu.memory_space<vmem>>, vector<7x4xf32>
    %c7_306 = arith.constant 7 : index
    %c0_307 = arith.constant 0 : index
    %c0_308 = arith.constant 0 : index
    %313 = vector.load %arg4[%c7_306, %c0_307, %c0_308] : memref<9x4x8xf32, #tpu.memory_space<vmem>>, vector<1x4x8xf32>
    %314 = vector.shape_cast %313 : vector<1x4x8xf32> to vector<4x8xf32>
    %cst_309 = arith.constant dense<0.000000e+00> : vector<7x8xf32>
    %315 = tpu.matmul %312, %314, %cst_309 {dimension_numbers = #tpu.dot_dimension_numbers<[1], [0], [0], [1], [0, 0, 1, 1], [], []>} : vector<7x4xf32>, vector<4x8xf32>, vector<7x8xf32> -> vector<7x8xf32>
    %316 = arith.addf %311, %315 : vector<7x8xf32>
    %c182 = arith.constant 182 : index
    %c0_310 = arith.constant 0 : index
    %317 = tpu.strided_load %arg13[%c182, %c0_310] {strides = array<i32: 2, 1>} : memref<225x4xf32, #tpu.memory_space<vmem>>, vector<7x4xf32>
    %c8_311 = arith.constant 8 : index
    %c0_312 = arith.constant 0 : index
    %c0_313 = arith.constant 0 : index
    %318 = vector.load %arg4[%c8_311, %c0_312, %c0_313] : memref<9x4x8xf32, #tpu.memory_space<vmem>>, vector<1x4x8xf32>
    %319 = vector.shape_cast %318 : vector<1x4x8xf32> to vector<4x8xf32>
    %cst_314 = arith.constant dense<0.000000e+00> : vector<7x8xf32>
    %320 = tpu.matmul %317, %319, %cst_314 {dimension_numbers = #tpu.dot_dimension_numbers<[1], [0], [0], [1], [0, 0, 1, 1], [], []>} : vector<7x4xf32>, vector<4x8xf32>, vector<7x8xf32> -> vector<7x8xf32>
    %321 = arith.addf %316, %320 : vector<7x8xf32>
    %322 = vector.broadcast %17 : vector<1x8xf32> to vector<7x8xf32>
    %323 = arith.addf %321, %322 : vector<7x8xf32>
    %cst_315 = arith.constant 0.000000e+00 : f32
    %324 = vector.broadcast %cst_315 : f32 to vector<7x8xf32>
    %325 = arith.cmpf oge, %323, %324 : vector<7x8xf32>
    %cst_316 = arith.constant 0.00999999977 : f32
    %326 = vector.broadcast %cst_316 : f32 to vector<7x8xf32>
    %327 = arith.mulf %326, %323 : vector<7x8xf32>
    %328 = arith.select %325, %323, %327 : vector<7x8xi1>, vector<7x8xf32>
    %c35 = arith.constant 35 : index
    %c0_317 = arith.constant 0 : index
    %329 = vector.load %arg14[%c35, %c0_317] : memref<49x8xf32, #tpu.memory_space<vmem>>, vector<7x8xf32>
    tpu.vector_store %arg14[%c35, %c0_317], %328 {strides = array<i32>} : memref<49x8xf32, #tpu.memory_space<vmem>>, vector<7x8xf32>,
    %c180_318 = arith.constant 180 : index
    %c0_319 = arith.constant 0 : index
    %330 = tpu.strided_load %arg13[%c180_318, %c0_319] {strides = array<i32: 2, 1>} : memref<225x4xf32, #tpu.memory_space<vmem>>, vector<7x4xf32>
    %c0_320 = arith.constant 0 : index
    %c0_321 = arith.constant 0 : index
    %c0_322 = arith.constant 0 : index
    %331 = vector.load %arg4[%c0_320, %c0_321, %c0_322] : memref<9x4x8xf32, #tpu.memory_space<vmem>>, vector<1x4x8xf32>
    %332 = vector.shape_cast %331 : vector<1x4x8xf32> to vector<4x8xf32>
    %cst_323 = arith.constant dense<0.000000e+00> : vector<7x8xf32>
    %333 = tpu.matmul %330, %332, %cst_323 {dimension_numbers = #tpu.dot_dimension_numbers<[1], [0], [0], [1], [0, 0, 1, 1], [], []>} : vector<7x4xf32>, vector<4x8xf32>, vector<7x8xf32> -> vector<7x8xf32>
    %c181_324 = arith.constant 181 : index
    %c0_325 = arith.constant 0 : index
    %334 = tpu.strided_load %arg13[%c181_324, %c0_325] {strides = array<i32: 2, 1>} : memref<225x4xf32, #tpu.memory_space<vmem>>, vector<7x4xf32>
    %c1_326 = arith.constant 1 : index
    %c0_327 = arith.constant 0 : index
    %c0_328 = arith.constant 0 : index
    %335 = vector.load %arg4[%c1_326, %c0_327, %c0_328] : memref<9x4x8xf32, #tpu.memory_space<vmem>>, vector<1x4x8xf32>
    %336 = vector.shape_cast %335 : vector<1x4x8xf32> to vector<4x8xf32>
    %cst_329 = arith.constant dense<0.000000e+00> : vector<7x8xf32>
    %337 = tpu.matmul %334, %336, %cst_329 {dimension_numbers = #tpu.dot_dimension_numbers<[1], [0], [0], [1], [0, 0, 1, 1], [], []>} : vector<7x4xf32>, vector<4x8xf32>, vector<7x8xf32> -> vector<7x8xf32>
    %338 = arith.addf %333, %337 : vector<7x8xf32>
    %c182_330 = arith.constant 182 : index
    %c0_331 = arith.constant 0 : index
    %339 = tpu.strided_load %arg13[%c182_330, %c0_331] {strides = array<i32: 2, 1>} : memref<225x4xf32, #tpu.memory_space<vmem>>, vector<7x4xf32>
    %c2_332 = arith.constant 2 : index
    %c0_333 = arith.constant 0 : index
    %c0_334 = arith.constant 0 : index
    %340 = vector.load %arg4[%c2_332, %c0_333, %c0_334] : memref<9x4x8xf32, #tpu.memory_space<vmem>>, vector<1x4x8xf32>
    %341 = vector.shape_cast %340 : vector<1x4x8xf32> to vector<4x8xf32>
    %cst_335 = arith.constant dense<0.000000e+00> : vector<7x8xf32>
    %342 = tpu.matmul %339, %341, %cst_335 {dimension_numbers = #tpu.dot_dimension_numbers<[1], [0], [0], [1], [0, 0, 1, 1], [], []>} : vector<7x4xf32>, vector<4x8xf32>, vector<7x8xf32> -> vector<7x8xf32>
    %343 = arith.addf %338, %342 : vector<7x8xf32>
    %c195 = arith.constant 195 : index
    %c0_336 = arith.constant 0 : index
    %344 = tpu.strided_load %arg13[%c195, %c0_336] {strides = array<i32: 2, 1>} : memref<225x4xf32, #tpu.memory_space<vmem>>, vector<7x4xf32>
    %c3_337 = arith.constant 3 : index
    %c0_338 = arith.constant 0 : index
    %c0_339 = arith.constant 0 : index
    %345 = vector.load %arg4[%c3_337, %c0_338, %c0_339] : memref<9x4x8xf32, #tpu.memory_space<vmem>>, vector<1x4x8xf32>
    %346 = vector.shape_cast %345 : vector<1x4x8xf32> to vector<4x8xf32>
    %cst_340 = arith.constant dense<0.000000e+00> : vector<7x8xf32>
    %347 = tpu.matmul %344, %346, %cst_340 {dimension_numbers = #tpu.dot_dimension_numbers<[1], [0], [0], [1], [0, 0, 1, 1], [], []>} : vector<7x4xf32>, vector<4x8xf32>, vector<7x8xf32> -> vector<7x8xf32>
    %348 = arith.addf %343, %347 : vector<7x8xf32>
    %c196 = arith.constant 196 : index
    %c0_341 = arith.constant 0 : index
    %349 = tpu.strided_load %arg13[%c196, %c0_341] {strides = array<i32: 2, 1>} : memref<225x4xf32, #tpu.memory_space<vmem>>, vector<7x4xf32>
    %c4_342 = arith.constant 4 : index
    %c0_343 = arith.constant 0 : index
    %c0_344 = arith.constant 0 : index
    %350 = vector.load %arg4[%c4_342, %c0_343, %c0_344] : memref<9x4x8xf32, #tpu.memory_space<vmem>>, vector<1x4x8xf32>
    %351 = vector.shape_cast %350 : vector<1x4x8xf32> to vector<4x8xf32>
    %cst_345 = arith.constant dense<0.000000e+00> : vector<7x8xf32>
    %352 = tpu.matmul %349, %351, %cst_345 {dimension_numbers = #tpu.dot_dimension_numbers<[1], [0], [0], [1], [0, 0, 1, 1], [], []>} : vector<7x4xf32>, vector<4x8xf32>, vector<7x8xf32> -> vector<7x8xf32>
    %353 = arith.addf %348, %352 : vector<7x8xf32>
    %c197 = arith.constant 197 : index
    %c0_346 = arith.constant 0 : index
    %354 = tpu.strided_load %arg13[%c197, %c0_346] {strides = array<i32: 2, 1>} : memref<225x4xf32, #tpu.memory_space<vmem>>, vector<7x4xf32>
    %c5_347 = arith.constant 5 : index
    %c0_348 = arith.constant 0 : index
    %c0_349 = arith.constant 0 : index
    %355 = vector.load %arg4[%c5_347, %c0_348, %c0_349] : memref<9x4x8xf32, #tpu.memory_space<vmem>>, vector<1x4x8xf32>
    %356 = vector.shape_cast %355 : vector<1x4x8xf32> to vector<4x8xf32>
    %cst_350 = arith.constant dense<0.000000e+00> : vector<7x8xf32>
    %357 = tpu.matmul %354, %356, %cst_350 {dimension_numbers = #tpu.dot_dimension_numbers<[1], [0], [0], [1], [0, 0, 1, 1], [], []>} : vector<7x4xf32>, vector<4x8xf32>, vector<7x8xf32> -> vector<7x8xf32>
    %358 = arith.addf %353, %357 : vector<7x8xf32>
    %c210 = arith.constant 210 : index
    %c0_351 = arith.constant 0 : index
    %359 = tpu.strided_load %arg13[%c210, %c0_351] {strides = array<i32: 2, 1>} : memref<225x4xf32, #tpu.memory_space<vmem>>, vector<7x4xf32>
    %c6_352 = arith.constant 6 : index
    %c0_353 = arith.constant 0 : index
    %c0_354 = arith.constant 0 : index
    %360 = vector.load %arg4[%c6_352, %c0_353, %c0_354] : memref<9x4x8xf32, #tpu.memory_space<vmem>>, vector<1x4x8xf32>
    %361 = vector.shape_cast %360 : vector<1x4x8xf32> to vector<4x8xf32>
    %cst_355 = arith.constant dense<0.000000e+00> : vector<7x8xf32>
    %362 = tpu.matmul %359, %361, %cst_355 {dimension_numbers = #tpu.dot_dimension_numbers<[1], [0], [0], [1], [0, 0, 1, 1], [], []>} : vector<7x4xf32>, vector<4x8xf32>, vector<7x8xf32> -> vector<7x8xf32>
    %363 = arith.addf %358, %362 : vector<7x8xf32>
    %c211 = arith.constant 211 : index
    %c0_356 = arith.constant 0 : index
    %364 = tpu.strided_load %arg13[%c211, %c0_356] {strides = array<i32: 2, 1>} : memref<225x4xf32, #tpu.memory_space<vmem>>, vector<7x4xf32>
    %c7_357 = arith.constant 7 : index
    %c0_358 = arith.constant 0 : index
    %c0_359 = arith.constant 0 : index
    %365 = vector.load %arg4[%c7_357, %c0_358, %c0_359] : memref<9x4x8xf32, #tpu.memory_space<vmem>>, vector<1x4x8xf32>
    %366 = vector.shape_cast %365 : vector<1x4x8xf32> to vector<4x8xf32>
    %cst_360 = arith.constant dense<0.000000e+00> : vector<7x8xf32>
    %367 = tpu.matmul %364, %366, %cst_360 {dimension_numbers = #tpu.dot_dimension_numbers<[1], [0], [0], [1], [0, 0, 1, 1], [], []>} : vector<7x4xf32>, vector<4x8xf32>, vector<7x8xf32> -> vector<7x8xf32>
    %368 = arith.addf %363, %367 : vector<7x8xf32>
    %c212 = arith.constant 212 : index
    %c0_361 = arith.constant 0 : index
    %369 = tpu.strided_load %arg13[%c212, %c0_361] {strides = array<i32: 2, 1>} : memref<225x4xf32, #tpu.memory_space<vmem>>, vector<7x4xf32>
    %c8_362 = arith.constant 8 : index
    %c0_363 = arith.constant 0 : index
    %c0_364 = arith.constant 0 : index
    %370 = vector.load %arg4[%c8_362, %c0_363, %c0_364] : memref<9x4x8xf32, #tpu.memory_space<vmem>>, vector<1x4x8xf32>
    %371 = vector.shape_cast %370 : vector<1x4x8xf32> to vector<4x8xf32>
    %cst_365 = arith.constant dense<0.000000e+00> : vector<7x8xf32>
    %372 = tpu.matmul %369, %371, %cst_365 {dimension_numbers = #tpu.dot_dimension_numbers<[1], [0], [0], [1], [0, 0, 1, 1], [], []>} : vector<7x4xf32>, vector<4x8xf32>, vector<7x8xf32> -> vector<7x8xf32>
    %373 = arith.addf %368, %372 : vector<7x8xf32>
    %374 = vector.broadcast %17 : vector<1x8xf32> to vector<7x8xf32>
    %375 = arith.addf %373, %374 : vector<7x8xf32>
    %cst_366 = arith.constant 0.000000e+00 : f32
    %376 = vector.broadcast %cst_366 : f32 to vector<7x8xf32>
    %377 = arith.cmpf oge, %375, %376 : vector<7x8xf32>
    %cst_367 = arith.constant 0.00999999977 : f32
    %378 = vector.broadcast %cst_367 : f32 to vector<7x8xf32>
    %379 = arith.mulf %378, %375 : vector<7x8xf32>
    %380 = arith.select %377, %375, %379 : vector<7x8xi1>, vector<7x8xf32>
    %c42 = arith.constant 42 : index
    %c0_368 = arith.constant 0 : index
    %381 = vector.load %arg14[%c42, %c0_368] : memref<49x8xf32, #tpu.memory_space<vmem>>, vector<7x8xf32>
    tpu.vector_store %arg14[%c42, %c0_368], %380 {strides = array<i32>} : memref<49x8xf32, #tpu.memory_space<vmem>>, vector<7x8xf32>,
    %c0_369 = arith.constant 0 : index
    %c0_370 = arith.constant 0 : index
    %382 = vector.load %arg7[%c0_369, %c0_370] : memref<1x16xf32, #tpu.memory_space<vmem>>, vector<1x16xf32>
    %c0_371 = arith.constant 0 : index
    %c0_372 = arith.constant 0 : index
    %383 = tpu.strided_load %arg14[%c0_371, %c0_372] {strides = array<i32: 2, 1>} : memref<49x8xf32, #tpu.memory_space<vmem>>, vector<3x8xf32>
    %c0_373 = arith.constant 0 : index
    %c0_374 = arith.constant 0 : index
    %c0_375 = arith.constant 0 : index
    %384 = vector.load %arg6[%c0_373, %c0_374, %c0_375] : memref<9x8x16xf32, #tpu.memory_space<vmem>>, vector<1x8x16xf32>
    %385 = vector.shape_cast %384 : vector<1x8x16xf32> to vector<8x16xf32>
    %cst_376 = arith.constant dense<0.000000e+00> : vector<3x16xf32>
    %386 = tpu.matmul %383, %385, %cst_376 {dimension_numbers = #tpu.dot_dimension_numbers<[1], [0], [0], [1], [0, 0, 1, 1], [], []>} : vector<3x8xf32>, vector<8x16xf32>, vector<3x16xf32> -> vector<3x16xf32>
    %c1_377 = arith.constant 1 : index
    %c0_378 = arith.constant 0 : index
    %387 = tpu.strided_load %arg14[%c1_377, %c0_378] {strides = array<i32: 2, 1>} : memref<49x8xf32, #tpu.memory_space<vmem>>, vector<3x8xf32>
    %c1_379 = arith.constant 1 : index
    %c0_380 = arith.constant 0 : index
    %c0_381 = arith.constant 0 : index
    %388 = vector.load %arg6[%c1_379, %c0_380, %c0_381] : memref<9x8x16xf32, #tpu.memory_space<vmem>>, vector<1x8x16xf32>
    %389 = vector.shape_cast %388 : vector<1x8x16xf32> to vector<8x16xf32>
    %cst_382 = arith.constant dense<0.000000e+00> : vector<3x16xf32>
    %390 = tpu.matmul %387, %389, %cst_382 {dimension_numbers = #tpu.dot_dimension_numbers<[1], [0], [0], [1], [0, 0, 1, 1], [], []>} : vector<3x8xf32>, vector<8x16xf32>, vector<3x16xf32> -> vector<3x16xf32>
    %391 = arith.addf %386, %390 : vector<3x16xf32>
    %c2_383 = arith.constant 2 : index
    %c0_384 = arith.constant 0 : index
    %392 = tpu.strided_load %arg14[%c2_383, %c0_384] {strides = array<i32: 2, 1>} : memref<49x8xf32, #tpu.memory_space<vmem>>, vector<3x8xf32>
    %c2_385 = arith.constant 2 : index
    %c0_386 = arith.constant 0 : index
    %c0_387 = arith.constant 0 : index
    %393 = vector.load %arg6[%c2_385, %c0_386, %c0_387] : memref<9x8x16xf32, #tpu.memory_space<vmem>>, vector<1x8x16xf32>
    %394 = vector.shape_cast %393 : vector<1x8x16xf32> to vector<8x16xf32>
    %cst_388 = arith.constant dense<0.000000e+00> : vector<3x16xf32>
    %395 = tpu.matmul %392, %394, %cst_388 {dimension_numbers = #tpu.dot_dimension_numbers<[1], [0], [0], [1], [0, 0, 1, 1], [], []>} : vector<3x8xf32>, vector<8x16xf32>, vector<3x16xf32> -> vector<3x16xf32>
    %396 = arith.addf %391, %395 : vector<3x16xf32>
    %c7_389 = arith.constant 7 : index
    %c0_390 = arith.constant 0 : index
    %397 = tpu.strided_load %arg14[%c7_389, %c0_390] {strides = array<i32: 2, 1>} : memref<49x8xf32, #tpu.memory_space<vmem>>, vector<3x8xf32>
    %c3_391 = arith.constant 3 : index
    %c0_392 = arith.constant 0 : index
    %c0_393 = arith.constant 0 : index
    %398 = vector.load %arg6[%c3_391, %c0_392, %c0_393] : memref<9x8x16xf32, #tpu.memory_space<vmem>>, vector<1x8x16xf32>
    %399 = vector.shape_cast %398 : vector<1x8x16xf32> to vector<8x16xf32>
    %cst_394 = arith.constant dense<0.000000e+00> : vector<3x16xf32>
    %400 = tpu.matmul %397, %399, %cst_394 {dimension_numbers = #tpu.dot_dimension_numbers<[1], [0], [0], [1], [0, 0, 1, 1], [], []>} : vector<3x8xf32>, vector<8x16xf32>, vector<3x16xf32> -> vector<3x16xf32>
    %401 = arith.addf %396, %400 : vector<3x16xf32>
    %c8_395 = arith.constant 8 : index
    %c0_396 = arith.constant 0 : index
    %402 = tpu.strided_load %arg14[%c8_395, %c0_396] {strides = array<i32: 2, 1>} : memref<49x8xf32, #tpu.memory_space<vmem>>, vector<3x8xf32>
    %c4_397 = arith.constant 4 : index
    %c0_398 = arith.constant 0 : index
    %c0_399 = arith.constant 0 : index
    %403 = vector.load %arg6[%c4_397, %c0_398, %c0_399] : memref<9x8x16xf32, #tpu.memory_space<vmem>>, vector<1x8x16xf32>
    %404 = vector.shape_cast %403 : vector<1x8x16xf32> to vector<8x16xf32>
    %cst_400 = arith.constant dense<0.000000e+00> : vector<3x16xf32>
    %405 = tpu.matmul %402, %404, %cst_400 {dimension_numbers = #tpu.dot_dimension_numbers<[1], [0], [0], [1], [0, 0, 1, 1], [], []>} : vector<3x8xf32>, vector<8x16xf32>, vector<3x16xf32> -> vector<3x16xf32>
    %406 = arith.addf %401, %405 : vector<3x16xf32>
    %c9 = arith.constant 9 : index
    %c0_401 = arith.constant 0 : index
    %407 = tpu.strided_load %arg14[%c9, %c0_401] {strides = array<i32: 2, 1>} : memref<49x8xf32, #tpu.memory_space<vmem>>, vector<3x8xf32>
    %c5_402 = arith.constant 5 : index
    %c0_403 = arith.constant 0 : index
    %c0_404 = arith.constant 0 : index
    %408 = vector.load %arg6[%c5_402, %c0_403, %c0_404] : memref<9x8x16xf32, #tpu.memory_space<vmem>>, vector<1x8x16xf32>
    %409 = vector.shape_cast %408 : vector<1x8x16xf32> to vector<8x16xf32>
    %cst_405 = arith.constant dense<0.000000e+00> : vector<3x16xf32>
    %410 = tpu.matmul %407, %409, %cst_405 {dimension_numbers = #tpu.dot_dimension_numbers<[1], [0], [0], [1], [0, 0, 1, 1], [], []>} : vector<3x8xf32>, vector<8x16xf32>, vector<3x16xf32> -> vector<3x16xf32>
    %411 = arith.addf %406, %410 : vector<3x16xf32>
    %c14_406 = arith.constant 14 : index
    %c0_407 = arith.constant 0 : index
    %412 = tpu.strided_load %arg14[%c14_406, %c0_407] {strides = array<i32: 2, 1>} : memref<49x8xf32, #tpu.memory_space<vmem>>, vector<3x8xf32>
    %c6_408 = arith.constant 6 : index
    %c0_409 = arith.constant 0 : index
    %c0_410 = arith.constant 0 : index
    %413 = vector.load %arg6[%c6_408, %c0_409, %c0_410] : memref<9x8x16xf32, #tpu.memory_space<vmem>>, vector<1x8x16xf32>
    %414 = vector.shape_cast %413 : vector<1x8x16xf32> to vector<8x16xf32>
    %cst_411 = arith.constant dense<0.000000e+00> : vector<3x16xf32>
    %415 = tpu.matmul %412, %414, %cst_411 {dimension_numbers = #tpu.dot_dimension_numbers<[1], [0], [0], [1], [0, 0, 1, 1], [], []>} : vector<3x8xf32>, vector<8x16xf32>, vector<3x16xf32> -> vector<3x16xf32>
    %416 = arith.addf %411, %415 : vector<3x16xf32>
    %c15_412 = arith.constant 15 : index
    %c0_413 = arith.constant 0 : index
    %417 = tpu.strided_load %arg14[%c15_412, %c0_413] {strides = array<i32: 2, 1>} : memref<49x8xf32, #tpu.memory_space<vmem>>, vector<3x8xf32>
    %c7_414 = arith.constant 7 : index
    %c0_415 = arith.constant 0 : index
    %c0_416 = arith.constant 0 : index
    %418 = vector.load %arg6[%c7_414, %c0_415, %c0_416] : memref<9x8x16xf32, #tpu.memory_space<vmem>>, vector<1x8x16xf32>
    %419 = vector.shape_cast %418 : vector<1x8x16xf32> to vector<8x16xf32>
    %cst_417 = arith.constant dense<0.000000e+00> : vector<3x16xf32>
    %420 = tpu.matmul %417, %419, %cst_417 {dimension_numbers = #tpu.dot_dimension_numbers<[1], [0], [0], [1], [0, 0, 1, 1], [], []>} : vector<3x8xf32>, vector<8x16xf32>, vector<3x16xf32> -> vector<3x16xf32>
    %421 = arith.addf %416, %420 : vector<3x16xf32>
    %c16_418 = arith.constant 16 : index
    %c0_419 = arith.constant 0 : index
    %422 = tpu.strided_load %arg14[%c16_418, %c0_419] {strides = array<i32: 2, 1>} : memref<49x8xf32, #tpu.memory_space<vmem>>, vector<3x8xf32>
    %c8_420 = arith.constant 8 : index
    %c0_421 = arith.constant 0 : index
    %c0_422 = arith.constant 0 : index
    %423 = vector.load %arg6[%c8_420, %c0_421, %c0_422] : memref<9x8x16xf32, #tpu.memory_space<vmem>>, vector<1x8x16xf32>
    %424 = vector.shape_cast %423 : vector<1x8x16xf32> to vector<8x16xf32>
    %cst_423 = arith.constant dense<0.000000e+00> : vector<3x16xf32>
    %425 = tpu.matmul %422, %424, %cst_423 {dimension_numbers = #tpu.dot_dimension_numbers<[1], [0], [0], [1], [0, 0, 1, 1], [], []>} : vector<3x8xf32>, vector<8x16xf32>, vector<3x16xf32> -> vector<3x16xf32>
    %426 = arith.addf %421, %425 : vector<3x16xf32>
    %427 = vector.broadcast %382 : vector<1x16xf32> to vector<3x16xf32>
    %428 = arith.addf %426, %427 : vector<3x16xf32>
    %cst_424 = arith.constant 0.000000e+00 : f32
    %429 = vector.broadcast %cst_424 : f32 to vector<3x16xf32>
    %430 = arith.cmpf oge, %428, %429 : vector<3x16xf32>
    %cst_425 = arith.constant 0.00999999977 : f32
    %431 = vector.broadcast %cst_425 : f32 to vector<3x16xf32>
    %432 = arith.mulf %431, %428 : vector<3x16xf32>
    %433 = arith.select %430, %428, %432 : vector<3x16xi1>, vector<3x16xf32>
    %c6_426 = arith.constant 6 : index
    %c0_427 = arith.constant 0 : index
    %434 = vector.load %arg15[%c6_426, %c0_427] : memref<25x16xf32, #tpu.memory_space<vmem>>, vector<3x16xf32>
    tpu.vector_store %arg15[%c6_426, %c0_427], %433 {strides = array<i32>} : memref<25x16xf32, #tpu.memory_space<vmem>>, vector<3x16xf32>,
    %c14_428 = arith.constant 14 : index
    %c0_429 = arith.constant 0 : index
    %435 = tpu.strided_load %arg14[%c14_428, %c0_429] {strides = array<i32: 2, 1>} : memref<49x8xf32, #tpu.memory_space<vmem>>, vector<3x8xf32>
    %c0_430 = arith.constant 0 : index
    %c0_431 = arith.constant 0 : index
    %c0_432 = arith.constant 0 : index
    %436 = vector.load %arg6[%c0_430, %c0_431, %c0_432] : memref<9x8x16xf32, #tpu.memory_space<vmem>>, vector<1x8x16xf32>
    %437 = vector.shape_cast %436 : vector<1x8x16xf32> to vector<8x16xf32>
    %cst_433 = arith.constant dense<0.000000e+00> : vector<3x16xf32>
    %438 = tpu.matmul %435, %437, %cst_433 {dimension_numbers = #tpu.dot_dimension_numbers<[1], [0], [0], [1], [0, 0, 1, 1], [], []>} : vector<3x8xf32>, vector<8x16xf32>, vector<3x16xf32> -> vector<3x16xf32>
    %c15_434 = arith.constant 15 : index
    %c0_435 = arith.constant 0 : index
    %439 = tpu.strided_load %arg14[%c15_434, %c0_435] {strides = array<i32: 2, 1>} : memref<49x8xf32, #tpu.memory_space<vmem>>, vector<3x8xf32>
    %c1_436 = arith.constant 1 : index
    %c0_437 = arith.constant 0 : index
    %c0_438 = arith.constant 0 : index
    %440 = vector.load %arg6[%c1_436, %c0_437, %c0_438] : memref<9x8x16xf32, #tpu.memory_space<vmem>>, vector<1x8x16xf32>
    %441 = vector.shape_cast %440 : vector<1x8x16xf32> to vector<8x16xf32>
    %cst_439 = arith.constant dense<0.000000e+00> : vector<3x16xf32>
    %442 = tpu.matmul %439, %441, %cst_439 {dimension_numbers = #tpu.dot_dimension_numbers<[1], [0], [0], [1], [0, 0, 1, 1], [], []>} : vector<3x8xf32>, vector<8x16xf32>, vector<3x16xf32> -> vector<3x16xf32>
    %443 = arith.addf %438, %442 : vector<3x16xf32>
    %c16_440 = arith.constant 16 : index
    %c0_441 = arith.constant 0 : index
    %444 = tpu.strided_load %arg14[%c16_440, %c0_441] {strides = array<i32: 2, 1>} : memref<49x8xf32, #tpu.memory_space<vmem>>, vector<3x8xf32>
    %c2_442 = arith.constant 2 : index
    %c0_443 = arith.constant 0 : index
    %c0_444 = arith.constant 0 : index
    %445 = vector.load %arg6[%c2_442, %c0_443, %c0_444] : memref<9x8x16xf32, #tpu.memory_space<vmem>>, vector<1x8x16xf32>
    %446 = vector.shape_cast %445 : vector<1x8x16xf32> to vector<8x16xf32>
    %cst_445 = arith.constant dense<0.000000e+00> : vector<3x16xf32>
    %447 = tpu.matmul %444, %446, %cst_445 {dimension_numbers = #tpu.dot_dimension_numbers<[1], [0], [0], [1], [0, 0, 1, 1], [], []>} : vector<3x8xf32>, vector<8x16xf32>, vector<3x16xf32> -> vector<3x16xf32>
    %448 = arith.addf %443, %447 : vector<3x16xf32>
    %c21_446 = arith.constant 21 : index
    %c0_447 = arith.constant 0 : index
    %449 = tpu.strided_load %arg14[%c21_446, %c0_447] {strides = array<i32: 2, 1>} : memref<49x8xf32, #tpu.memory_space<vmem>>, vector<3x8xf32>
    %c3_448 = arith.constant 3 : index
    %c0_449 = arith.constant 0 : index
    %c0_450 = arith.constant 0 : index
    %450 = vector.load %arg6[%c3_448, %c0_449, %c0_450] : memref<9x8x16xf32, #tpu.memory_space<vmem>>, vector<1x8x16xf32>
    %451 = vector.shape_cast %450 : vector<1x8x16xf32> to vector<8x16xf32>
    %cst_451 = arith.constant dense<0.000000e+00> : vector<3x16xf32>
    %452 = tpu.matmul %449, %451, %cst_451 {dimension_numbers = #tpu.dot_dimension_numbers<[1], [0], [0], [1], [0, 0, 1, 1], [], []>} : vector<3x8xf32>, vector<8x16xf32>, vector<3x16xf32> -> vector<3x16xf32>
    %453 = arith.addf %448, %452 : vector<3x16xf32>
    %c22 = arith.constant 22 : index
    %c0_452 = arith.constant 0 : index
    %454 = tpu.strided_load %arg14[%c22, %c0_452] {strides = array<i32: 2, 1>} : memref<49x8xf32, #tpu.memory_space<vmem>>, vector<3x8xf32>
    %c4_453 = arith.constant 4 : index
    %c0_454 = arith.constant 0 : index
    %c0_455 = arith.constant 0 : index
    %455 = vector.load %arg6[%c4_453, %c0_454, %c0_455] : memref<9x8x16xf32, #tpu.memory_space<vmem>>, vector<1x8x16xf32>
    %456 = vector.shape_cast %455 : vector<1x8x16xf32> to vector<8x16xf32>
    %cst_456 = arith.constant dense<0.000000e+00> : vector<3x16xf32>
    %457 = tpu.matmul %454, %456, %cst_456 {dimension_numbers = #tpu.dot_dimension_numbers<[1], [0], [0], [1], [0, 0, 1, 1], [], []>} : vector<3x8xf32>, vector<8x16xf32>, vector<3x16xf32> -> vector<3x16xf32>
    %458 = arith.addf %453, %457 : vector<3x16xf32>
    %c23 = arith.constant 23 : index
    %c0_457 = arith.constant 0 : index
    %459 = tpu.strided_load %arg14[%c23, %c0_457] {strides = array<i32: 2, 1>} : memref<49x8xf32, #tpu.memory_space<vmem>>, vector<3x8xf32>
    %c5_458 = arith.constant 5 : index
    %c0_459 = arith.constant 0 : index
    %c0_460 = arith.constant 0 : index
    %460 = vector.load %arg6[%c5_458, %c0_459, %c0_460] : memref<9x8x16xf32, #tpu.memory_space<vmem>>, vector<1x8x16xf32>
    %461 = vector.shape_cast %460 : vector<1x8x16xf32> to vector<8x16xf32>
    %cst_461 = arith.constant dense<0.000000e+00> : vector<3x16xf32>
    %462 = tpu.matmul %459, %461, %cst_461 {dimension_numbers = #tpu.dot_dimension_numbers<[1], [0], [0], [1], [0, 0, 1, 1], [], []>} : vector<3x8xf32>, vector<8x16xf32>, vector<3x16xf32> -> vector<3x16xf32>
    %463 = arith.addf %458, %462 : vector<3x16xf32>
    %c28_462 = arith.constant 28 : index
    %c0_463 = arith.constant 0 : index
    %464 = tpu.strided_load %arg14[%c28_462, %c0_463] {strides = array<i32: 2, 1>} : memref<49x8xf32, #tpu.memory_space<vmem>>, vector<3x8xf32>
    %c6_464 = arith.constant 6 : index
    %c0_465 = arith.constant 0 : index
    %c0_466 = arith.constant 0 : index
    %465 = vector.load %arg6[%c6_464, %c0_465, %c0_466] : memref<9x8x16xf32, #tpu.memory_space<vmem>>, vector<1x8x16xf32>
    %466 = vector.shape_cast %465 : vector<1x8x16xf32> to vector<8x16xf32>
    %cst_467 = arith.constant dense<0.000000e+00> : vector<3x16xf32>
    %467 = tpu.matmul %464, %466, %cst_467 {dimension_numbers = #tpu.dot_dimension_numbers<[1], [0], [0], [1], [0, 0, 1, 1], [], []>} : vector<3x8xf32>, vector<8x16xf32>, vector<3x16xf32> -> vector<3x16xf32>
    %468 = arith.addf %463, %467 : vector<3x16xf32>
    %c29 = arith.constant 29 : index
    %c0_468 = arith.constant 0 : index
    %469 = tpu.strided_load %arg14[%c29, %c0_468] {strides = array<i32: 2, 1>} : memref<49x8xf32, #tpu.memory_space<vmem>>, vector<3x8xf32>
    %c7_469 = arith.constant 7 : index
    %c0_470 = arith.constant 0 : index
    %c0_471 = arith.constant 0 : index
    %470 = vector.load %arg6[%c7_469, %c0_470, %c0_471] : memref<9x8x16xf32, #tpu.memory_space<vmem>>, vector<1x8x16xf32>
    %471 = vector.shape_cast %470 : vector<1x8x16xf32> to vector<8x16xf32>
    %cst_472 = arith.constant dense<0.000000e+00> : vector<3x16xf32>
    %472 = tpu.matmul %469, %471, %cst_472 {dimension_numbers = #tpu.dot_dimension_numbers<[1], [0], [0], [1], [0, 0, 1, 1], [], []>} : vector<3x8xf32>, vector<8x16xf32>, vector<3x16xf32> -> vector<3x16xf32>
    %473 = arith.addf %468, %472 : vector<3x16xf32>
    %c30_473 = arith.constant 30 : index
    %c0_474 = arith.constant 0 : index
    %474 = tpu.strided_load %arg14[%c30_473, %c0_474] {strides = array<i32: 2, 1>} : memref<49x8xf32, #tpu.memory_space<vmem>>, vector<3x8xf32>
    %c8_475 = arith.constant 8 : index
    %c0_476 = arith.constant 0 : index
    %c0_477 = arith.constant 0 : index
    %475 = vector.load %arg6[%c8_475, %c0_476, %c0_477] : memref<9x8x16xf32, #tpu.memory_space<vmem>>, vector<1x8x16xf32>
    %476 = vector.shape_cast %475 : vector<1x8x16xf32> to vector<8x16xf32>
    %cst_478 = arith.constant dense<0.000000e+00> : vector<3x16xf32>
    %477 = tpu.matmul %474, %476, %cst_478 {dimension_numbers = #tpu.dot_dimension_numbers<[1], [0], [0], [1], [0, 0, 1, 1], [], []>} : vector<3x8xf32>, vector<8x16xf32>, vector<3x16xf32> -> vector<3x16xf32>
    %478 = arith.addf %473, %477 : vector<3x16xf32>
    %479 = vector.broadcast %382 : vector<1x16xf32> to vector<3x16xf32>
    %480 = arith.addf %478, %479 : vector<3x16xf32>
    %cst_479 = arith.constant 0.000000e+00 : f32
    %481 = vector.broadcast %cst_479 : f32 to vector<3x16xf32>
    %482 = arith.cmpf oge, %480, %481 : vector<3x16xf32>
    %cst_480 = arith.constant 0.00999999977 : f32
    %483 = vector.broadcast %cst_480 : f32 to vector<3x16xf32>
    %484 = arith.mulf %483, %480 : vector<3x16xf32>
    %485 = arith.select %482, %480, %484 : vector<3x16xi1>, vector<3x16xf32>
    %c11 = arith.constant 11 : index
    %c0_481 = arith.constant 0 : index
    %486 = vector.load %arg15[%c11, %c0_481] : memref<25x16xf32, #tpu.memory_space<vmem>>, vector<3x16xf32>
    tpu.vector_store %arg15[%c11, %c0_481], %485 {strides = array<i32>} : memref<25x16xf32, #tpu.memory_space<vmem>>, vector<3x16xf32>,
    %c28_482 = arith.constant 28 : index
    %c0_483 = arith.constant 0 : index
    %487 = tpu.strided_load %arg14[%c28_482, %c0_483] {strides = array<i32: 2, 1>} : memref<49x8xf32, #tpu.memory_space<vmem>>, vector<3x8xf32>
    %c0_484 = arith.constant 0 : index
    %c0_485 = arith.constant 0 : index
    %c0_486 = arith.constant 0 : index
    %488 = vector.load %arg6[%c0_484, %c0_485, %c0_486] : memref<9x8x16xf32, #tpu.memory_space<vmem>>, vector<1x8x16xf32>
    %489 = vector.shape_cast %488 : vector<1x8x16xf32> to vector<8x16xf32>
    %cst_487 = arith.constant dense<0.000000e+00> : vector<3x16xf32>
    %490 = tpu.matmul %487, %489, %cst_487 {dimension_numbers = #tpu.dot_dimension_numbers<[1], [0], [0], [1], [0, 0, 1, 1], [], []>} : vector<3x8xf32>, vector<8x16xf32>, vector<3x16xf32> -> vector<3x16xf32>
    %c29_488 = arith.constant 29 : index
    %c0_489 = arith.constant 0 : index
    %491 = tpu.strided_load %arg14[%c29_488, %c0_489] {strides = array<i32: 2, 1>} : memref<49x8xf32, #tpu.memory_space<vmem>>, vector<3x8xf32>
    %c1_490 = arith.constant 1 : index
    %c0_491 = arith.constant 0 : index
    %c0_492 = arith.constant 0 : index
    %492 = vector.load %arg6[%c1_490, %c0_491, %c0_492] : memref<9x8x16xf32, #tpu.memory_space<vmem>>, vector<1x8x16xf32>
    %493 = vector.shape_cast %492 : vector<1x8x16xf32> to vector<8x16xf32>
    %cst_493 = arith.constant dense<0.000000e+00> : vector<3x16xf32>
    %494 = tpu.matmul %491, %493, %cst_493 {dimension_numbers = #tpu.dot_dimension_numbers<[1], [0], [0], [1], [0, 0, 1, 1], [], []>} : vector<3x8xf32>, vector<8x16xf32>, vector<3x16xf32> -> vector<3x16xf32>
    %495 = arith.addf %490, %494 : vector<3x16xf32>
    %c30_494 = arith.constant 30 : index
    %c0_495 = arith.constant 0 : index
    %496 = tpu.strided_load %arg14[%c30_494, %c0_495] {strides = array<i32: 2, 1>} : memref<49x8xf32, #tpu.memory_space<vmem>>, vector<3x8xf32>
    %c2_496 = arith.constant 2 : index
    %c0_497 = arith.constant 0 : index
    %c0_498 = arith.constant 0 : index
    %497 = vector.load %arg6[%c2_496, %c0_497, %c0_498] : memref<9x8x16xf32, #tpu.memory_space<vmem>>, vector<1x8x16xf32>
    %498 = vector.shape_cast %497 : vector<1x8x16xf32> to vector<8x16xf32>
    %cst_499 = arith.constant dense<0.000000e+00> : vector<3x16xf32>
    %499 = tpu.matmul %496, %498, %cst_499 {dimension_numbers = #tpu.dot_dimension_numbers<[1], [0], [0], [1], [0, 0, 1, 1], [], []>} : vector<3x8xf32>, vector<8x16xf32>, vector<3x16xf32> -> vector<3x16xf32>
    %500 = arith.addf %495, %499 : vector<3x16xf32>
    %c35_500 = arith.constant 35 : index
    %c0_501 = arith.constant 0 : index
    %501 = tpu.strided_load %arg14[%c35_500, %c0_501] {strides = array<i32: 2, 1>} : memref<49x8xf32, #tpu.memory_space<vmem>>, vector<3x8xf32>
    %c3_502 = arith.constant 3 : index
    %c0_503 = arith.constant 0 : index
    %c0_504 = arith.constant 0 : index
    %502 = vector.load %arg6[%c3_502, %c0_503, %c0_504] : memref<9x8x16xf32, #tpu.memory_space<vmem>>, vector<1x8x16xf32>
    %503 = vector.shape_cast %502 : vector<1x8x16xf32> to vector<8x16xf32>
    %cst_505 = arith.constant dense<0.000000e+00> : vector<3x16xf32>
    %504 = tpu.matmul %501, %503, %cst_505 {dimension_numbers = #tpu.dot_dimension_numbers<[1], [0], [0], [1], [0, 0, 1, 1], [], []>} : vector<3x8xf32>, vector<8x16xf32>, vector<3x16xf32> -> vector<3x16xf32>
    %505 = arith.addf %500, %504 : vector<3x16xf32>
    %c36 = arith.constant 36 : index
    %c0_506 = arith.constant 0 : index
    %506 = tpu.strided_load %arg14[%c36, %c0_506] {strides = array<i32: 2, 1>} : memref<49x8xf32, #tpu.memory_space<vmem>>, vector<3x8xf32>
    %c4_507 = arith.constant 4 : index
    %c0_508 = arith.constant 0 : index
    %c0_509 = arith.constant 0 : index
    %507 = vector.load %arg6[%c4_507, %c0_508, %c0_509] : memref<9x8x16xf32, #tpu.memory_space<vmem>>, vector<1x8x16xf32>
    %508 = vector.shape_cast %507 : vector<1x8x16xf32> to vector<8x16xf32>
    %cst_510 = arith.constant dense<0.000000e+00> : vector<3x16xf32>
    %509 = tpu.matmul %506, %508, %cst_510 {dimension_numbers = #tpu.dot_dimension_numbers<[1], [0], [0], [1], [0, 0, 1, 1], [], []>} : vector<3x8xf32>, vector<8x16xf32>, vector<3x16xf32> -> vector<3x16xf32>
    %510 = arith.addf %505, %509 : vector<3x16xf32>
    %c37 = arith.constant 37 : index
    %c0_511 = arith.constant 0 : index
    %511 = tpu.strided_load %arg14[%c37, %c0_511] {strides = array<i32: 2, 1>} : memref<49x8xf32, #tpu.memory_space<vmem>>, vector<3x8xf32>
    %c5_512 = arith.constant 5 : index
    %c0_513 = arith.constant 0 : index
    %c0_514 = arith.constant 0 : index
    %512 = vector.load %arg6[%c5_512, %c0_513, %c0_514] : memref<9x8x16xf32, #tpu.memory_space<vmem>>, vector<1x8x16xf32>
    %513 = vector.shape_cast %512 : vector<1x8x16xf32> to vector<8x16xf32>
    %cst_515 = arith.constant dense<0.000000e+00> : vector<3x16xf32>
    %514 = tpu.matmul %511, %513, %cst_515 {dimension_numbers = #tpu.dot_dimension_numbers<[1], [0], [0], [1], [0, 0, 1, 1], [], []>} : vector<3x8xf32>, vector<8x16xf32>, vector<3x16xf32> -> vector<3x16xf32>
    %515 = arith.addf %510, %514 : vector<3x16xf32>
    %c42_516 = arith.constant 42 : index
    %c0_517 = arith.constant 0 : index
    %516 = tpu.strided_load %arg14[%c42_516, %c0_517] {strides = array<i32: 2, 1>} : memref<49x8xf32, #tpu.memory_space<vmem>>, vector<3x8xf32>
    %c6_518 = arith.constant 6 : index
    %c0_519 = arith.constant 0 : index
    %c0_520 = arith.constant 0 : index
    %517 = vector.load %arg6[%c6_518, %c0_519, %c0_520] : memref<9x8x16xf32, #tpu.memory_space<vmem>>, vector<1x8x16xf32>
    %518 = vector.shape_cast %517 : vector<1x8x16xf32> to vector<8x16xf32>
    %cst_521 = arith.constant dense<0.000000e+00> : vector<3x16xf32>
    %519 = tpu.matmul %516, %518, %cst_521 {dimension_numbers = #tpu.dot_dimension_numbers<[1], [0], [0], [1], [0, 0, 1, 1], [], []>} : vector<3x8xf32>, vector<8x16xf32>, vector<3x16xf32> -> vector<3x16xf32>
    %520 = arith.addf %515, %519 : vector<3x16xf32>
    %c43 = arith.constant 43 : index
    %c0_522 = arith.constant 0 : index
    %521 = tpu.strided_load %arg14[%c43, %c0_522] {strides = array<i32: 2, 1>} : memref<49x8xf32, #tpu.memory_space<vmem>>, vector<3x8xf32>
    %c7_523 = arith.constant 7 : index
    %c0_524 = arith.constant 0 : index
    %c0_525 = arith.constant 0 : index
    %522 = vector.load %arg6[%c7_523, %c0_524, %c0_525] : memref<9x8x16xf32, #tpu.memory_space<vmem>>, vector<1x8x16xf32>
    %523 = vector.shape_cast %522 : vector<1x8x16xf32> to vector<8x16xf32>
    %cst_526 = arith.constant dense<0.000000e+00> : vector<3x16xf32>
    %524 = tpu.matmul %521, %523, %cst_526 {dimension_numbers = #tpu.dot_dimension_numbers<[1], [0], [0], [1], [0, 0, 1, 1], [], []>} : vector<3x8xf32>, vector<8x16xf32>, vector<3x16xf32> -> vector<3x16xf32>
    %525 = arith.addf %520, %524 : vector<3x16xf32>
    %c44 = arith.constant 44 : index
    %c0_527 = arith.constant 0 : index
    %526 = tpu.strided_load %arg14[%c44, %c0_527] {strides = array<i32: 2, 1>} : memref<49x8xf32, #tpu.memory_space<vmem>>, vector<3x8xf32>
    %c8_528 = arith.constant 8 : index
    %c0_529 = arith.constant 0 : index
    %c0_530 = arith.constant 0 : index
    %527 = vector.load %arg6[%c8_528, %c0_529, %c0_530] : memref<9x8x16xf32, #tpu.memory_space<vmem>>, vector<1x8x16xf32>
    %528 = vector.shape_cast %527 : vector<1x8x16xf32> to vector<8x16xf32>
    %cst_531 = arith.constant dense<0.000000e+00> : vector<3x16xf32>
    %529 = tpu.matmul %526, %528, %cst_531 {dimension_numbers = #tpu.dot_dimension_numbers<[1], [0], [0], [1], [0, 0, 1, 1], [], []>} : vector<3x8xf32>, vector<8x16xf32>, vector<3x16xf32> -> vector<3x16xf32>
    %530 = arith.addf %525, %529 : vector<3x16xf32>
    %531 = vector.broadcast %382 : vector<1x16xf32> to vector<3x16xf32>
    %532 = arith.addf %530, %531 : vector<3x16xf32>
    %cst_532 = arith.constant 0.000000e+00 : f32
    %533 = vector.broadcast %cst_532 : f32 to vector<3x16xf32>
    %534 = arith.cmpf oge, %532, %533 : vector<3x16xf32>
    %cst_533 = arith.constant 0.00999999977 : f32
    %535 = vector.broadcast %cst_533 : f32 to vector<3x16xf32>
    %536 = arith.mulf %535, %532 : vector<3x16xf32>
    %537 = arith.select %534, %532, %536 : vector<3x16xi1>, vector<3x16xf32>
    %c16_534 = arith.constant 16 : index
    %c0_535 = arith.constant 0 : index
    %538 = vector.load %arg15[%c16_534, %c0_535] : memref<25x16xf32, #tpu.memory_space<vmem>>, vector<3x16xf32>
    tpu.vector_store %arg15[%c16_534, %c0_535], %537 {strides = array<i32>} : memref<25x16xf32, #tpu.memory_space<vmem>>, vector<3x16xf32>,
    %c0_536 = arith.constant 0 : index
    %c0_537 = arith.constant 0 : index
    %539 = vector.load %arg9[%c0_536, %c0_537] : memref<1x32xf32, #tpu.memory_space<vmem>>, vector<1x32xf32>
    %c0_538 = arith.constant 0 : index
    %c0_539 = arith.constant 0 : index
    %540 = vector.load %arg15[%c0_538, %c0_539] : memref<25x16xf32, #tpu.memory_space<vmem>>, vector<3x16xf32>
    %c0_540 = arith.constant 0 : index
    %c0_541 = arith.constant 0 : index
    %c0_542 = arith.constant 0 : index
    %541 = vector.load %arg8[%c0_540, %c0_541, %c0_542] : memref<9x16x32xf32, #tpu.memory_space<vmem>>, vector<1x16x32xf32>
    %542 = vector.shape_cast %541 : vector<1x16x32xf32> to vector<16x32xf32>
    %cst_543 = arith.constant dense<0.000000e+00> : vector<3x32xf32>
    %543 = tpu.matmul %540, %542, %cst_543 {dimension_numbers = #tpu.dot_dimension_numbers<[1], [0], [0], [1], [0, 0, 1, 1], [], []>} : vector<3x16xf32>, vector<16x32xf32>, vector<3x32xf32> -> vector<3x32xf32>
    %c1_544 = arith.constant 1 : index
    %c0_545 = arith.constant 0 : index
    %544 = vector.load %arg15[%c1_544, %c0_545] : memref<25x16xf32, #tpu.memory_space<vmem>>, vector<3x16xf32>
    %c1_546 = arith.constant 1 : index
    %c0_547 = arith.constant 0 : index
    %c0_548 = arith.constant 0 : index
    %545 = vector.load %arg8[%c1_546, %c0_547, %c0_548] : memref<9x16x32xf32, #tpu.memory_space<vmem>>, vector<1x16x32xf32>
    %546 = vector.shape_cast %545 : vector<1x16x32xf32> to vector<16x32xf32>
    %cst_549 = arith.constant dense<0.000000e+00> : vector<3x32xf32>
    %547 = tpu.matmul %544, %546, %cst_549 {dimension_numbers = #tpu.dot_dimension_numbers<[1], [0], [0], [1], [0, 0, 1, 1], [], []>} : vector<3x16xf32>, vector<16x32xf32>, vector<3x32xf32> -> vector<3x32xf32>
    %548 = arith.addf %543, %547 : vector<3x32xf32>
    %c2_550 = arith.constant 2 : index
    %c0_551 = arith.constant 0 : index
    %549 = vector.load %arg15[%c2_550, %c0_551] : memref<25x16xf32, #tpu.memory_space<vmem>>, vector<3x16xf32>
    %c2_552 = arith.constant 2 : index
    %c0_553 = arith.constant 0 : index
    %c0_554 = arith.constant 0 : index
    %550 = vector.load %arg8[%c2_552, %c0_553, %c0_554] : memref<9x16x32xf32, #tpu.memory_space<vmem>>, vector<1x16x32xf32>
    %551 = vector.shape_cast %550 : vector<1x16x32xf32> to vector<16x32xf32>
    %cst_555 = arith.constant dense<0.000000e+00> : vector<3x32xf32>
    %552 = tpu.matmul %549, %551, %cst_555 {dimension_numbers = #tpu.dot_dimension_numbers<[1], [0], [0], [1], [0, 0, 1, 1], [], []>} : vector<3x16xf32>, vector<16x32xf32>, vector<3x32xf32> -> vector<3x32xf32>
    %553 = arith.addf %548, %552 : vector<3x32xf32>
    %c5_556 = arith.constant 5 : index
    %c0_557 = arith.constant 0 : index
    %554 = vector.load %arg15[%c5_556, %c0_557] : memref<25x16xf32, #tpu.memory_space<vmem>>, vector<3x16xf32>
    %c3_558 = arith.constant 3 : index
    %c0_559 = arith.constant 0 : index
    %c0_560 = arith.constant 0 : index
    %555 = vector.load %arg8[%c3_558, %c0_559, %c0_560] : memref<9x16x32xf32, #tpu.memory_space<vmem>>, vector<1x16x32xf32>
    %556 = vector.shape_cast %555 : vector<1x16x32xf32> to vector<16x32xf32>
    %cst_561 = arith.constant dense<0.000000e+00> : vector<3x32xf32>
    %557 = tpu.matmul %554, %556, %cst_561 {dimension_numbers = #tpu.dot_dimension_numbers<[1], [0], [0], [1], [0, 0, 1, 1], [], []>} : vector<3x16xf32>, vector<16x32xf32>, vector<3x32xf32> -> vector<3x32xf32>
    %558 = arith.addf %553, %557 : vector<3x32xf32>
    %c6_562 = arith.constant 6 : index
    %c0_563 = arith.constant 0 : index
    %559 = vector.load %arg15[%c6_562, %c0_563] : memref<25x16xf32, #tpu.memory_space<vmem>>, vector<3x16xf32>
    %c4_564 = arith.constant 4 : index
    %c0_565 = arith.constant 0 : index
    %c0_566 = arith.constant 0 : index
    %560 = vector.load %arg8[%c4_564, %c0_565, %c0_566] : memref<9x16x32xf32, #tpu.memory_space<vmem>>, vector<1x16x32xf32>
    %561 = vector.shape_cast %560 : vector<1x16x32xf32> to vector<16x32xf32>
    %cst_567 = arith.constant dense<0.000000e+00> : vector<3x32xf32>
    %562 = tpu.matmul %559, %561, %cst_567 {dimension_numbers = #tpu.dot_dimension_numbers<[1], [0], [0], [1], [0, 0, 1, 1], [], []>} : vector<3x16xf32>, vector<16x32xf32>, vector<3x32xf32> -> vector<3x32xf32>
    %563 = arith.addf %558, %562 : vector<3x32xf32>
    %c7_568 = arith.constant 7 : index
    %c0_569 = arith.constant 0 : index
    %564 = vector.load %arg15[%c7_568, %c0_569] : memref<25x16xf32, #tpu.memory_space<vmem>>, vector<3x16xf32>
    %c5_570 = arith.constant 5 : index
    %c0_571 = arith.constant 0 : index
    %c0_572 = arith.constant 0 : index
    %565 = vector.load %arg8[%c5_570, %c0_571, %c0_572] : memref<9x16x32xf32, #tpu.memory_space<vmem>>, vector<1x16x32xf32>
    %566 = vector.shape_cast %565 : vector<1x16x32xf32> to vector<16x32xf32>
    %cst_573 = arith.constant dense<0.000000e+00> : vector<3x32xf32>
    %567 = tpu.matmul %564, %566, %cst_573 {dimension_numbers = #tpu.dot_dimension_numbers<[1], [0], [0], [1], [0, 0, 1, 1], [], []>} : vector<3x16xf32>, vector<16x32xf32>, vector<3x32xf32> -> vector<3x32xf32>
    %568 = arith.addf %563, %567 : vector<3x32xf32>
    %c10 = arith.constant 10 : index
    %c0_574 = arith.constant 0 : index
    %569 = vector.load %arg15[%c10, %c0_574] : memref<25x16xf32, #tpu.memory_space<vmem>>, vector<3x16xf32>
    %c6_575 = arith.constant 6 : index
    %c0_576 = arith.constant 0 : index
    %c0_577 = arith.constant 0 : index
    %570 = vector.load %arg8[%c6_575, %c0_576, %c0_577] : memref<9x16x32xf32, #tpu.memory_space<vmem>>, vector<1x16x32xf32>
    %571 = vector.shape_cast %570 : vector<1x16x32xf32> to vector<16x32xf32>
    %cst_578 = arith.constant dense<0.000000e+00> : vector<3x32xf32>
    %572 = tpu.matmul %569, %571, %cst_578 {dimension_numbers = #tpu.dot_dimension_numbers<[1], [0], [0], [1], [0, 0, 1, 1], [], []>} : vector<3x16xf32>, vector<16x32xf32>, vector<3x32xf32> -> vector<3x32xf32>
    %573 = arith.addf %568, %572 : vector<3x32xf32>
    %c11_579 = arith.constant 11 : index
    %c0_580 = arith.constant 0 : index
    %574 = vector.load %arg15[%c11_579, %c0_580] : memref<25x16xf32, #tpu.memory_space<vmem>>, vector<3x16xf32>
    %c7_581 = arith.constant 7 : index
    %c0_582 = arith.constant 0 : index
    %c0_583 = arith.constant 0 : index
    %575 = vector.load %arg8[%c7_581, %c0_582, %c0_583] : memref<9x16x32xf32, #tpu.memory_space<vmem>>, vector<1x16x32xf32>
    %576 = vector.shape_cast %575 : vector<1x16x32xf32> to vector<16x32xf32>
    %cst_584 = arith.constant dense<0.000000e+00> : vector<3x32xf32>
    %577 = tpu.matmul %574, %576, %cst_584 {dimension_numbers = #tpu.dot_dimension_numbers<[1], [0], [0], [1], [0, 0, 1, 1], [], []>} : vector<3x16xf32>, vector<16x32xf32>, vector<3x32xf32> -> vector<3x32xf32>
    %578 = arith.addf %573, %577 : vector<3x32xf32>
    %c12 = arith.constant 12 : index
    %c0_585 = arith.constant 0 : index
    %579 = vector.load %arg15[%c12, %c0_585] : memref<25x16xf32, #tpu.memory_space<vmem>>, vector<3x16xf32>
    %c8_586 = arith.constant 8 : index
    %c0_587 = arith.constant 0 : index
    %c0_588 = arith.constant 0 : index
    %580 = vector.load %arg8[%c8_586, %c0_587, %c0_588] : memref<9x16x32xf32, #tpu.memory_space<vmem>>, vector<1x16x32xf32>
    %581 = vector.shape_cast %580 : vector<1x16x32xf32> to vector<16x32xf32>
    %cst_589 = arith.constant dense<0.000000e+00> : vector<3x32xf32>
    %582 = tpu.matmul %579, %581, %cst_589 {dimension_numbers = #tpu.dot_dimension_numbers<[1], [0], [0], [1], [0, 0, 1, 1], [], []>} : vector<3x16xf32>, vector<16x32xf32>, vector<3x32xf32> -> vector<3x32xf32>
    %583 = arith.addf %578, %582 : vector<3x32xf32>
    %584 = vector.broadcast %539 : vector<1x32xf32> to vector<3x32xf32>
    %585 = arith.addf %583, %584 : vector<3x32xf32>
    %cst_590 = arith.constant 0.000000e+00 : f32
    %586 = vector.broadcast %cst_590 : f32 to vector<3x32xf32>
    %587 = arith.cmpf oge, %585, %586 : vector<3x32xf32>
    %cst_591 = arith.constant 0.00999999977 : f32
    %588 = vector.broadcast %cst_591 : f32 to vector<3x32xf32>
    %589 = arith.mulf %588, %585 : vector<3x32xf32>
    %590 = arith.select %587, %585, %589 : vector<3x32xi1>, vector<3x32xf32>
    %c6_592 = arith.constant 6 : index
    %c0_593 = arith.constant 0 : index
    %591 = vector.load %arg16[%c6_592, %c0_593] : memref<25x32xf32, #tpu.memory_space<vmem>>, vector<3x32xf32>
    tpu.vector_store %arg16[%c6_592, %c0_593], %590 {strides = array<i32>} : memref<25x32xf32, #tpu.memory_space<vmem>>, vector<3x32xf32>,
    %c5_594 = arith.constant 5 : index
    %c0_595 = arith.constant 0 : index
    %592 = vector.load %arg15[%c5_594, %c0_595] : memref<25x16xf32, #tpu.memory_space<vmem>>, vector<3x16xf32>
    %c0_596 = arith.constant 0 : index
    %c0_597 = arith.constant 0 : index
    %c0_598 = arith.constant 0 : index
    %593 = vector.load %arg8[%c0_596, %c0_597, %c0_598] : memref<9x16x32xf32, #tpu.memory_space<vmem>>, vector<1x16x32xf32>
    %594 = vector.shape_cast %593 : vector<1x16x32xf32> to vector<16x32xf32>
    %cst_599 = arith.constant dense<0.000000e+00> : vector<3x32xf32>
    %595 = tpu.matmul %592, %594, %cst_599 {dimension_numbers = #tpu.dot_dimension_numbers<[1], [0], [0], [1], [0, 0, 1, 1], [], []>} : vector<3x16xf32>, vector<16x32xf32>, vector<3x32xf32> -> vector<3x32xf32>
    %c6_600 = arith.constant 6 : index
    %c0_601 = arith.constant 0 : index
    %596 = vector.load %arg15[%c6_600, %c0_601] : memref<25x16xf32, #tpu.memory_space<vmem>>, vector<3x16xf32>
    %c1_602 = arith.constant 1 : index
    %c0_603 = arith.constant 0 : index
    %c0_604 = arith.constant 0 : index
    %597 = vector.load %arg8[%c1_602, %c0_603, %c0_604] : memref<9x16x32xf32, #tpu.memory_space<vmem>>, vector<1x16x32xf32>
    %598 = vector.shape_cast %597 : vector<1x16x32xf32> to vector<16x32xf32>
    %cst_605 = arith.constant dense<0.000000e+00> : vector<3x32xf32>
    %599 = tpu.matmul %596, %598, %cst_605 {dimension_numbers = #tpu.dot_dimension_numbers<[1], [0], [0], [1], [0, 0, 1, 1], [], []>} : vector<3x16xf32>, vector<16x32xf32>, vector<3x32xf32> -> vector<3x32xf32>
    %600 = arith.addf %595, %599 : vector<3x32xf32>
    %c7_606 = arith.constant 7 : index
    %c0_607 = arith.constant 0 : index
    %601 = vector.load %arg15[%c7_606, %c0_607] : memref<25x16xf32, #tpu.memory_space<vmem>>, vector<3x16xf32>
    %c2_608 = arith.constant 2 : index
    %c0_609 = arith.constant 0 : index
    %c0_610 = arith.constant 0 : index
    %602 = vector.load %arg8[%c2_608, %c0_609, %c0_610] : memref<9x16x32xf32, #tpu.memory_space<vmem>>, vector<1x16x32xf32>
    %603 = vector.shape_cast %602 : vector<1x16x32xf32> to vector<16x32xf32>
    %cst_611 = arith.constant dense<0.000000e+00> : vector<3x32xf32>
    %604 = tpu.matmul %601, %603, %cst_611 {dimension_numbers = #tpu.dot_dimension_numbers<[1], [0], [0], [1], [0, 0, 1, 1], [], []>} : vector<3x16xf32>, vector<16x32xf32>, vector<3x32xf32> -> vector<3x32xf32>
    %605 = arith.addf %600, %604 : vector<3x32xf32>
    %c10_612 = arith.constant 10 : index
    %c0_613 = arith.constant 0 : index
    %606 = vector.load %arg15[%c10_612, %c0_613] : memref<25x16xf32, #tpu.memory_space<vmem>>, vector<3x16xf32>
    %c3_614 = arith.constant 3 : index
    %c0_615 = arith.constant 0 : index
    %c0_616 = arith.constant 0 : index
    %607 = vector.load %arg8[%c3_614, %c0_615, %c0_616] : memref<9x16x32xf32, #tpu.memory_space<vmem>>, vector<1x16x32xf32>
    %608 = vector.shape_cast %607 : vector<1x16x32xf32> to vector<16x32xf32>
    %cst_617 = arith.constant dense<0.000000e+00> : vector<3x32xf32>
    %609 = tpu.matmul %606, %608, %cst_617 {dimension_numbers = #tpu.dot_dimension_numbers<[1], [0], [0], [1], [0, 0, 1, 1], [], []>} : vector<3x16xf32>, vector<16x32xf32>, vector<3x32xf32> -> vector<3x32xf32>
    %610 = arith.addf %605, %609 : vector<3x32xf32>
    %c11_618 = arith.constant 11 : index
    %c0_619 = arith.constant 0 : index
    %611 = vector.load %arg15[%c11_618, %c0_619] : memref<25x16xf32, #tpu.memory_space<vmem>>, vector<3x16xf32>
    %c4_620 = arith.constant 4 : index
    %c0_621 = arith.constant 0 : index
    %c0_622 = arith.constant 0 : index
    %612 = vector.load %arg8[%c4_620, %c0_621, %c0_622] : memref<9x16x32xf32, #tpu.memory_space<vmem>>, vector<1x16x32xf32>
    %613 = vector.shape_cast %612 : vector<1x16x32xf32> to vector<16x32xf32>
    %cst_623 = arith.constant dense<0.000000e+00> : vector<3x32xf32>
    %614 = tpu.matmul %611, %613, %cst_623 {dimension_numbers = #tpu.dot_dimension_numbers<[1], [0], [0], [1], [0, 0, 1, 1], [], []>} : vector<3x16xf32>, vector<16x32xf32>, vector<3x32xf32> -> vector<3x32xf32>
    %615 = arith.addf %610, %614 : vector<3x32xf32>
    %c12_624 = arith.constant 12 : index
    %c0_625 = arith.constant 0 : index
    %616 = vector.load %arg15[%c12_624, %c0_625] : memref<25x16xf32, #tpu.memory_space<vmem>>, vector<3x16xf32>
    %c5_626 = arith.constant 5 : index
    %c0_627 = arith.constant 0 : index
    %c0_628 = arith.constant 0 : index
    %617 = vector.load %arg8[%c5_626, %c0_627, %c0_628] : memref<9x16x32xf32, #tpu.memory_space<vmem>>, vector<1x16x32xf32>
    %618 = vector.shape_cast %617 : vector<1x16x32xf32> to vector<16x32xf32>
    %cst_629 = arith.constant dense<0.000000e+00> : vector<3x32xf32>
    %619 = tpu.matmul %616, %618, %cst_629 {dimension_numbers = #tpu.dot_dimension_numbers<[1], [0], [0], [1], [0, 0, 1, 1], [], []>} : vector<3x16xf32>, vector<16x32xf32>, vector<3x32xf32> -> vector<3x32xf32>
    %620 = arith.addf %615, %619 : vector<3x32xf32>
    %c15_630 = arith.constant 15 : index
    %c0_631 = arith.constant 0 : index
    %621 = vector.load %arg15[%c15_630, %c0_631] : memref<25x16xf32, #tpu.memory_space<vmem>>, vector<3x16xf32>
    %c6_632 = arith.constant 6 : index
    %c0_633 = arith.constant 0 : index
    %c0_634 = arith.constant 0 : index
    %622 = vector.load %arg8[%c6_632, %c0_633, %c0_634] : memref<9x16x32xf32, #tpu.memory_space<vmem>>, vector<1x16x32xf32>
    %623 = vector.shape_cast %622 : vector<1x16x32xf32> to vector<16x32xf32>
    %cst_635 = arith.constant dense<0.000000e+00> : vector<3x32xf32>
    %624 = tpu.matmul %621, %623, %cst_635 {dimension_numbers = #tpu.dot_dimension_numbers<[1], [0], [0], [1], [0, 0, 1, 1], [], []>} : vector<3x16xf32>, vector<16x32xf32>, vector<3x32xf32> -> vector<3x32xf32>
    %625 = arith.addf %620, %624 : vector<3x32xf32>
    %c16_636 = arith.constant 16 : index
    %c0_637 = arith.constant 0 : index
    %626 = vector.load %arg15[%c16_636, %c0_637] : memref<25x16xf32, #tpu.memory_space<vmem>>, vector<3x16xf32>
    %c7_638 = arith.constant 7 : index
    %c0_639 = arith.constant 0 : index
    %c0_640 = arith.constant 0 : index
    %627 = vector.load %arg8[%c7_638, %c0_639, %c0_640] : memref<9x16x32xf32, #tpu.memory_space<vmem>>, vector<1x16x32xf32>
    %628 = vector.shape_cast %627 : vector<1x16x32xf32> to vector<16x32xf32>
    %cst_641 = arith.constant dense<0.000000e+00> : vector<3x32xf32>
    %629 = tpu.matmul %626, %628, %cst_641 {dimension_numbers = #tpu.dot_dimension_numbers<[1], [0], [0], [1], [0, 0, 1, 1], [], []>} : vector<3x16xf32>, vector<16x32xf32>, vector<3x32xf32> -> vector<3x32xf32>
    %630 = arith.addf %625, %629 : vector<3x32xf32>
    %c17_642 = arith.constant 17 : index
    %c0_643 = arith.constant 0 : index
    %631 = vector.load %arg15[%c17_642, %c0_643] : memref<25x16xf32, #tpu.memory_space<vmem>>, vector<3x16xf32>
    %c8_644 = arith.constant 8 : index
    %c0_645 = arith.constant 0 : index
    %c0_646 = arith.constant 0 : index
    %632 = vector.load %arg8[%c8_644, %c0_645, %c0_646] : memref<9x16x32xf32, #tpu.memory_space<vmem>>, vector<1x16x32xf32>
    %633 = vector.shape_cast %632 : vector<1x16x32xf32> to vector<16x32xf32>
    %cst_647 = arith.constant dense<0.000000e+00> : vector<3x32xf32>
    %634 = tpu.matmul %631, %633, %cst_647 {dimension_numbers = #tpu.dot_dimension_numbers<[1], [0], [0], [1], [0, 0, 1, 1], [], []>} : vector<3x16xf32>, vector<16x32xf32>, vector<3x32xf32> -> vector<3x32xf32>
    %635 = arith.addf %630, %634 : vector<3x32xf32>
    %636 = vector.broadcast %539 : vector<1x32xf32> to vector<3x32xf32>
    %637 = arith.addf %635, %636 : vector<3x32xf32>
    %cst_648 = arith.constant 0.000000e+00 : f32
    %638 = vector.broadcast %cst_648 : f32 to vector<3x32xf32>
    %639 = arith.cmpf oge, %637, %638 : vector<3x32xf32>
    %cst_649 = arith.constant 0.00999999977 : f32
    %640 = vector.broadcast %cst_649 : f32 to vector<3x32xf32>
    %641 = arith.mulf %640, %637 : vector<3x32xf32>
    %642 = arith.select %639, %637, %641 : vector<3x32xi1>, vector<3x32xf32>
    %c11_650 = arith.constant 11 : index
    %c0_651 = arith.constant 0 : index
    %643 = vector.load %arg16[%c11_650, %c0_651] : memref<25x32xf32, #tpu.memory_space<vmem>>, vector<3x32xf32>
    tpu.vector_store %arg16[%c11_650, %c0_651], %642 {strides = array<i32>} : memref<25x32xf32, #tpu.memory_space<vmem>>, vector<3x32xf32>,
    %c10_652 = arith.constant 10 : index
    %c0_653 = arith.constant 0 : index
    %644 = vector.load %arg15[%c10_652, %c0_653] : memref<25x16xf32, #tpu.memory_space<vmem>>, vector<3x16xf32>
    %c0_654 = arith.constant 0 : index
    %c0_655 = arith.constant 0 : index
    %c0_656 = arith.constant 0 : index
    %645 = vector.load %arg8[%c0_654, %c0_655, %c0_656] : memref<9x16x32xf32, #tpu.memory_space<vmem>>, vector<1x16x32xf32>
    %646 = vector.shape_cast %645 : vector<1x16x32xf32> to vector<16x32xf32>
    %cst_657 = arith.constant dense<0.000000e+00> : vector<3x32xf32>
    %647 = tpu.matmul %644, %646, %cst_657 {dimension_numbers = #tpu.dot_dimension_numbers<[1], [0], [0], [1], [0, 0, 1, 1], [], []>} : vector<3x16xf32>, vector<16x32xf32>, vector<3x32xf32> -> vector<3x32xf32>
    %c11_658 = arith.constant 11 : index
    %c0_659 = arith.constant 0 : index
    %648 = vector.load %arg15[%c11_658, %c0_659] : memref<25x16xf32, #tpu.memory_space<vmem>>, vector<3x16xf32>
    %c1_660 = arith.constant 1 : index
    %c0_661 = arith.constant 0 : index
    %c0_662 = arith.constant 0 : index
    %649 = vector.load %arg8[%c1_660, %c0_661, %c0_662] : memref<9x16x32xf32, #tpu.memory_space<vmem>>, vector<1x16x32xf32>
    %650 = vector.shape_cast %649 : vector<1x16x32xf32> to vector<16x32xf32>
    %cst_663 = arith.constant dense<0.000000e+00> : vector<3x32xf32>
    %651 = tpu.matmul %648, %650, %cst_663 {dimension_numbers = #tpu.dot_dimension_numbers<[1], [0], [0], [1], [0, 0, 1, 1], [], []>} : vector<3x16xf32>, vector<16x32xf32>, vector<3x32xf32> -> vector<3x32xf32>
    %652 = arith.addf %647, %651 : vector<3x32xf32>
    %c12_664 = arith.constant 12 : index
    %c0_665 = arith.constant 0 : index
    %653 = vector.load %arg15[%c12_664, %c0_665] : memref<25x16xf32, #tpu.memory_space<vmem>>, vector<3x16xf32>
    %c2_666 = arith.constant 2 : index
    %c0_667 = arith.constant 0 : index
    %c0_668 = arith.constant 0 : index
    %654 = vector.load %arg8[%c2_666, %c0_667, %c0_668] : memref<9x16x32xf32, #tpu.memory_space<vmem>>, vector<1x16x32xf32>
    %655 = vector.shape_cast %654 : vector<1x16x32xf32> to vector<16x32xf32>
    %cst_669 = arith.constant dense<0.000000e+00> : vector<3x32xf32>
    %656 = tpu.matmul %653, %655, %cst_669 {dimension_numbers = #tpu.dot_dimension_numbers<[1], [0], [0], [1], [0, 0, 1, 1], [], []>} : vector<3x16xf32>, vector<16x32xf32>, vector<3x32xf32> -> vector<3x32xf32>
    %657 = arith.addf %652, %656 : vector<3x32xf32>
    %c15_670 = arith.constant 15 : index
    %c0_671 = arith.constant 0 : index
    %658 = vector.load %arg15[%c15_670, %c0_671] : memref<25x16xf32, #tpu.memory_space<vmem>>, vector<3x16xf32>
    %c3_672 = arith.constant 3 : index
    %c0_673 = arith.constant 0 : index
    %c0_674 = arith.constant 0 : index
    %659 = vector.load %arg8[%c3_672, %c0_673, %c0_674] : memref<9x16x32xf32, #tpu.memory_space<vmem>>, vector<1x16x32xf32>
    %660 = vector.shape_cast %659 : vector<1x16x32xf32> to vector<16x32xf32>
    %cst_675 = arith.constant dense<0.000000e+00> : vector<3x32xf32>
    %661 = tpu.matmul %658, %660, %cst_675 {dimension_numbers = #tpu.dot_dimension_numbers<[1], [0], [0], [1], [0, 0, 1, 1], [], []>} : vector<3x16xf32>, vector<16x32xf32>, vector<3x32xf32> -> vector<3x32xf32>
    %662 = arith.addf %657, %661 : vector<3x32xf32>
    %c16_676 = arith.constant 16 : index
    %c0_677 = arith.constant 0 : index
    %663 = vector.load %arg15[%c16_676, %c0_677] : memref<25x16xf32, #tpu.memory_space<vmem>>, vector<3x16xf32>
    %c4_678 = arith.constant 4 : index
    %c0_679 = arith.constant 0 : index
    %c0_680 = arith.constant 0 : index
    %664 = vector.load %arg8[%c4_678, %c0_679, %c0_680] : memref<9x16x32xf32, #tpu.memory_space<vmem>>, vector<1x16x32xf32>
    %665 = vector.shape_cast %664 : vector<1x16x32xf32> to vector<16x32xf32>
    %cst_681 = arith.constant dense<0.000000e+00> : vector<3x32xf32>
    %666 = tpu.matmul %663, %665, %cst_681 {dimension_numbers = #tpu.dot_dimension_numbers<[1], [0], [0], [1], [0, 0, 1, 1], [], []>} : vector<3x16xf32>, vector<16x32xf32>, vector<3x32xf32> -> vector<3x32xf32>
    %667 = arith.addf %662, %666 : vector<3x32xf32>
    %c17_682 = arith.constant 17 : index
    %c0_683 = arith.constant 0 : index
    %668 = vector.load %arg15[%c17_682, %c0_683] : memref<25x16xf32, #tpu.memory_space<vmem>>, vector<3x16xf32>
    %c5_684 = arith.constant 5 : index
    %c0_685 = arith.constant 0 : index
    %c0_686 = arith.constant 0 : index
    %669 = vector.load %arg8[%c5_684, %c0_685, %c0_686] : memref<9x16x32xf32, #tpu.memory_space<vmem>>, vector<1x16x32xf32>
    %670 = vector.shape_cast %669 : vector<1x16x32xf32> to vector<16x32xf32>
    %cst_687 = arith.constant dense<0.000000e+00> : vector<3x32xf32>
    %671 = tpu.matmul %668, %670, %cst_687 {dimension_numbers = #tpu.dot_dimension_numbers<[1], [0], [0], [1], [0, 0, 1, 1], [], []>} : vector<3x16xf32>, vector<16x32xf32>, vector<3x32xf32> -> vector<3x32xf32>
    %672 = arith.addf %667, %671 : vector<3x32xf32>
    %c20 = arith.constant 20 : index
    %c0_688 = arith.constant 0 : index
    %673 = vector.load %arg15[%c20, %c0_688] : memref<25x16xf32, #tpu.memory_space<vmem>>, vector<3x16xf32>
    %c6_689 = arith.constant 6 : index
    %c0_690 = arith.constant 0 : index
    %c0_691 = arith.constant 0 : index
    %674 = vector.load %arg8[%c6_689, %c0_690, %c0_691] : memref<9x16x32xf32, #tpu.memory_space<vmem>>, vector<1x16x32xf32>
    %675 = vector.shape_cast %674 : vector<1x16x32xf32> to vector<16x32xf32>
    %cst_692 = arith.constant dense<0.000000e+00> : vector<3x32xf32>
    %676 = tpu.matmul %673, %675, %cst_692 {dimension_numbers = #tpu.dot_dimension_numbers<[1], [0], [0], [1], [0, 0, 1, 1], [], []>} : vector<3x16xf32>, vector<16x32xf32>, vector<3x32xf32> -> vector<3x32xf32>
    %677 = arith.addf %672, %676 : vector<3x32xf32>
    %c21_693 = arith.constant 21 : index
    %c0_694 = arith.constant 0 : index
    %678 = vector.load %arg15[%c21_693, %c0_694] : memref<25x16xf32, #tpu.memory_space<vmem>>, vector<3x16xf32>
    %c7_695 = arith.constant 7 : index
    %c0_696 = arith.constant 0 : index
    %c0_697 = arith.constant 0 : index
    %679 = vector.load %arg8[%c7_695, %c0_696, %c0_697] : memref<9x16x32xf32, #tpu.memory_space<vmem>>, vector<1x16x32xf32>
    %680 = vector.shape_cast %679 : vector<1x16x32xf32> to vector<16x32xf32>
    %cst_698 = arith.constant dense<0.000000e+00> : vector<3x32xf32>
    %681 = tpu.matmul %678, %680, %cst_698 {dimension_numbers = #tpu.dot_dimension_numbers<[1], [0], [0], [1], [0, 0, 1, 1], [], []>} : vector<3x16xf32>, vector<16x32xf32>, vector<3x32xf32> -> vector<3x32xf32>
    %682 = arith.addf %677, %681 : vector<3x32xf32>
    %c22_699 = arith.constant 22 : index
    %c0_700 = arith.constant 0 : index
    %683 = vector.load %arg15[%c22_699, %c0_700] : memref<25x16xf32, #tpu.memory_space<vmem>>, vector<3x16xf32>
    %c8_701 = arith.constant 8 : index
    %c0_702 = arith.constant 0 : index
    %c0_703 = arith.constant 0 : index
    %684 = vector.load %arg8[%c8_701, %c0_702, %c0_703] : memref<9x16x32xf32, #tpu.memory_space<vmem>>, vector<1x16x32xf32>
    %685 = vector.shape_cast %684 : vector<1x16x32xf32> to vector<16x32xf32>
    %cst_704 = arith.constant dense<0.000000e+00> : vector<3x32xf32>
    %686 = tpu.matmul %683, %685, %cst_704 {dimension_numbers = #tpu.dot_dimension_numbers<[1], [0], [0], [1], [0, 0, 1, 1], [], []>} : vector<3x16xf32>, vector<16x32xf32>, vector<3x32xf32> -> vector<3x32xf32>
    %687 = arith.addf %682, %686 : vector<3x32xf32>
    %688 = vector.broadcast %539 : vector<1x32xf32> to vector<3x32xf32>
    %689 = arith.addf %687, %688 : vector<3x32xf32>
    %cst_705 = arith.constant 0.000000e+00 : f32
    %690 = vector.broadcast %cst_705 : f32 to vector<3x32xf32>
    %691 = arith.cmpf oge, %689, %690 : vector<3x32xf32>
    %cst_706 = arith.constant 0.00999999977 : f32
    %692 = vector.broadcast %cst_706 : f32 to vector<3x32xf32>
    %693 = arith.mulf %692, %689 : vector<3x32xf32>
    %694 = arith.select %691, %689, %693 : vector<3x32xi1>, vector<3x32xf32>
    %c16_707 = arith.constant 16 : index
    %c0_708 = arith.constant 0 : index
    %695 = vector.load %arg16[%c16_707, %c0_708] : memref<25x32xf32, #tpu.memory_space<vmem>>, vector<3x32xf32>
    tpu.vector_store %arg16[%c16_707, %c0_708], %694 {strides = array<i32>} : memref<25x32xf32, #tpu.memory_space<vmem>>, vector<3x32xf32>,
    %c0_709 = arith.constant 0 : index
    %c0_710 = arith.constant 0 : index
    %696 = vector.load %arg11[%c0_709, %c0_710] : memref<1x1xf32, #tpu.memory_space<vmem>>, vector<1x1xf32>
    %c0_711 = arith.constant 0 : index
    %c0_712 = arith.constant 0 : index
    %697 = vector.load %arg16[%c0_711, %c0_712] : memref<25x32xf32, #tpu.memory_space<vmem>>, vector<3x32xf32>
    %c0_713 = arith.constant 0 : index
    %c0_714 = arith.constant 0 : index
    %c0_715 = arith.constant 0 : index
    %698 = vector.load %arg10[%c0_713, %c0_714, %c0_715] : memref<9x32x1xf32, #tpu.memory_space<vmem>>, vector<1x32x1xf32>
    %699 = vector.shape_cast %698 : vector<1x32x1xf32> to vector<32x1xf32>
    %cst_716 = arith.constant dense<0.000000e+00> : vector<3x1xf32>
    %700 = tpu.matmul %697, %699, %cst_716 {dimension_numbers = #tpu.dot_dimension_numbers<[1], [0], [0], [1], [0, 0, 1, 1], [], []>} : vector<3x32xf32>, vector<32x1xf32>, vector<3x1xf32> -> vector<3x1xf32>
    %c1_717 = arith.constant 1 : index
    %c0_718 = arith.constant 0 : index
    %701 = vector.load %arg16[%c1_717, %c0_718] : memref<25x32xf32, #tpu.memory_space<vmem>>, vector<3x32xf32>
    %c1_719 = arith.constant 1 : index
    %c0_720 = arith.constant 0 : index
    %c0_721 = arith.constant 0 : index
    %702 = vector.load %arg10[%c1_719, %c0_720, %c0_721] : memref<9x32x1xf32, #tpu.memory_space<vmem>>, vector<1x32x1xf32>
    %703 = vector.shape_cast %702 : vector<1x32x1xf32> to vector<32x1xf32>
    %cst_722 = arith.constant dense<0.000000e+00> : vector<3x1xf32>
    %704 = tpu.matmul %701, %703, %cst_722 {dimension_numbers = #tpu.dot_dimension_numbers<[1], [0], [0], [1], [0, 0, 1, 1], [], []>} : vector<3x32xf32>, vector<32x1xf32>, vector<3x1xf32> -> vector<3x1xf32>
    %705 = arith.addf %700, %704 : vector<3x1xf32>
    %c2_723 = arith.constant 2 : index
    %c0_724 = arith.constant 0 : index
    %706 = vector.load %arg16[%c2_723, %c0_724] : memref<25x32xf32, #tpu.memory_space<vmem>>, vector<3x32xf32>
    %c2_725 = arith.constant 2 : index
    %c0_726 = arith.constant 0 : index
    %c0_727 = arith.constant 0 : index
    %707 = vector.load %arg10[%c2_725, %c0_726, %c0_727] : memref<9x32x1xf32, #tpu.memory_space<vmem>>, vector<1x32x1xf32>
    %708 = vector.shape_cast %707 : vector<1x32x1xf32> to vector<32x1xf32>
    %cst_728 = arith.constant dense<0.000000e+00> : vector<3x1xf32>
    %709 = tpu.matmul %706, %708, %cst_728 {dimension_numbers = #tpu.dot_dimension_numbers<[1], [0], [0], [1], [0, 0, 1, 1], [], []>} : vector<3x32xf32>, vector<32x1xf32>, vector<3x1xf32> -> vector<3x1xf32>
    %710 = arith.addf %705, %709 : vector<3x1xf32>
    %c5_729 = arith.constant 5 : index
    %c0_730 = arith.constant 0 : index
    %711 = vector.load %arg16[%c5_729, %c0_730] : memref<25x32xf32, #tpu.memory_space<vmem>>, vector<3x32xf32>
    %c3_731 = arith.constant 3 : index
    %c0_732 = arith.constant 0 : index
    %c0_733 = arith.constant 0 : index
    %712 = vector.load %arg10[%c3_731, %c0_732, %c0_733] : memref<9x32x1xf32, #tpu.memory_space<vmem>>, vector<1x32x1xf32>
    %713 = vector.shape_cast %712 : vector<1x32x1xf32> to vector<32x1xf32>
    %cst_734 = arith.constant dense<0.000000e+00> : vector<3x1xf32>
    %714 = tpu.matmul %711, %713, %cst_734 {dimension_numbers = #tpu.dot_dimension_numbers<[1], [0], [0], [1], [0, 0, 1, 1], [], []>} : vector<3x32xf32>, vector<32x1xf32>, vector<3x1xf32> -> vector<3x1xf32>
    %715 = arith.addf %710, %714 : vector<3x1xf32>
    %c6_735 = arith.constant 6 : index
    %c0_736 = arith.constant 0 : index
    %716 = vector.load %arg16[%c6_735, %c0_736] : memref<25x32xf32, #tpu.memory_space<vmem>>, vector<3x32xf32>
    %c4_737 = arith.constant 4 : index
    %c0_738 = arith.constant 0 : index
    %c0_739 = arith.constant 0 : index
    %717 = vector.load %arg10[%c4_737, %c0_738, %c0_739] : memref<9x32x1xf32, #tpu.memory_space<vmem>>, vector<1x32x1xf32>
    %718 = vector.shape_cast %717 : vector<1x32x1xf32> to vector<32x1xf32>
    %cst_740 = arith.constant dense<0.000000e+00> : vector<3x1xf32>
    %719 = tpu.matmul %716, %718, %cst_740 {dimension_numbers = #tpu.dot_dimension_numbers<[1], [0], [0], [1], [0, 0, 1, 1], [], []>} : vector<3x32xf32>, vector<32x1xf32>, vector<3x1xf32> -> vector<3x1xf32>
    %720 = arith.addf %715, %719 : vector<3x1xf32>
    %c7_741 = arith.constant 7 : index
    %c0_742 = arith.constant 0 : index
    %721 = vector.load %arg16[%c7_741, %c0_742] : memref<25x32xf32, #tpu.memory_space<vmem>>, vector<3x32xf32>
    %c5_743 = arith.constant 5 : index
    %c0_744 = arith.constant 0 : index
    %c0_745 = arith.constant 0 : index
    %722 = vector.load %arg10[%c5_743, %c0_744, %c0_745] : memref<9x32x1xf32, #tpu.memory_space<vmem>>, vector<1x32x1xf32>
    %723 = vector.shape_cast %722 : vector<1x32x1xf32> to vector<32x1xf32>
    %cst_746 = arith.constant dense<0.000000e+00> : vector<3x1xf32>
    %724 = tpu.matmul %721, %723, %cst_746 {dimension_numbers = #tpu.dot_dimension_numbers<[1], [0], [0], [1], [0, 0, 1, 1], [], []>} : vector<3x32xf32>, vector<32x1xf32>, vector<3x1xf32> -> vector<3x1xf32>
    %725 = arith.addf %720, %724 : vector<3x1xf32>
    %c10_747 = arith.constant 10 : index
    %c0_748 = arith.constant 0 : index
    %726 = vector.load %arg16[%c10_747, %c0_748] : memref<25x32xf32, #tpu.memory_space<vmem>>, vector<3x32xf32>
    %c6_749 = arith.constant 6 : index
    %c0_750 = arith.constant 0 : index
    %c0_751 = arith.constant 0 : index
    %727 = vector.load %arg10[%c6_749, %c0_750, %c0_751] : memref<9x32x1xf32, #tpu.memory_space<vmem>>, vector<1x32x1xf32>
    %728 = vector.shape_cast %727 : vector<1x32x1xf32> to vector<32x1xf32>
    %cst_752 = arith.constant dense<0.000000e+00> : vector<3x1xf32>
    %729 = tpu.matmul %726, %728, %cst_752 {dimension_numbers = #tpu.dot_dimension_numbers<[1], [0], [0], [1], [0, 0, 1, 1], [], []>} : vector<3x32xf32>, vector<32x1xf32>, vector<3x1xf32> -> vector<3x1xf32>
    %730 = arith.addf %725, %729 : vector<3x1xf32>
    %c11_753 = arith.constant 11 : index
    %c0_754 = arith.constant 0 : index
    %731 = vector.load %arg16[%c11_753, %c0_754] : memref<25x32xf32, #tpu.memory_space<vmem>>, vector<3x32xf32>
    %c7_755 = arith.constant 7 : index
    %c0_756 = arith.constant 0 : index
    %c0_757 = arith.constant 0 : index
    %732 = vector.load %arg10[%c7_755, %c0_756, %c0_757] : memref<9x32x1xf32, #tpu.memory_space<vmem>>, vector<1x32x1xf32>
    %733 = vector.shape_cast %732 : vector<1x32x1xf32> to vector<32x1xf32>
    %cst_758 = arith.constant dense<0.000000e+00> : vector<3x1xf32>
    %734 = tpu.matmul %731, %733, %cst_758 {dimension_numbers = #tpu.dot_dimension_numbers<[1], [0], [0], [1], [0, 0, 1, 1], [], []>} : vector<3x32xf32>, vector<32x1xf32>, vector<3x1xf32> -> vector<3x1xf32>
    %735 = arith.addf %730, %734 : vector<3x1xf32>
    %c12_759 = arith.constant 12 : index
    %c0_760 = arith.constant 0 : index
    %736 = vector.load %arg16[%c12_759, %c0_760] : memref<25x32xf32, #tpu.memory_space<vmem>>, vector<3x32xf32>
    %c8_761 = arith.constant 8 : index
    %c0_762 = arith.constant 0 : index
    %c0_763 = arith.constant 0 : index
    %737 = vector.load %arg10[%c8_761, %c0_762, %c0_763] : memref<9x32x1xf32, #tpu.memory_space<vmem>>, vector<1x32x1xf32>
    %738 = vector.shape_cast %737 : vector<1x32x1xf32> to vector<32x1xf32>
    %cst_764 = arith.constant dense<0.000000e+00> : vector<3x1xf32>
    %739 = tpu.matmul %736, %738, %cst_764 {dimension_numbers = #tpu.dot_dimension_numbers<[1], [0], [0], [1], [0, 0, 1, 1], [], []>} : vector<3x32xf32>, vector<32x1xf32>, vector<3x1xf32> -> vector<3x1xf32>
    %740 = arith.addf %735, %739 : vector<3x1xf32>
    %741 = vector.broadcast %696 : vector<1x1xf32> to vector<3x1xf32>
    %742 = arith.addf %740, %741 : vector<3x1xf32>
    %743 = math.absf %742 : vector<3x1xf32>
    %cst_765 = arith.constant 0.000000e+00 : f32
    %744 = vector.broadcast %cst_765 : f32 to vector<3x1xf32>
    %745 = arith.subf %744, %743 : vector<3x1xf32>
    %746 = math.exp %745 : vector<3x1xf32>
    %cst_766 = arith.constant 0.000000e+00 : f32
    %747 = vector.broadcast %cst_766 : f32 to vector<3x1xf32>
    %748 = arith.cmpf oge, %742, %747 : vector<3x1xf32>
    %cst_767 = arith.constant 1.000000e+00 : f32
    %749 = vector.broadcast %cst_767 : f32 to vector<3x1xf32>
    %750 = arith.addf %749, %746 : vector<3x1xf32>
    %cst_768 = arith.constant 1.000000e+00 : f32
    %751 = vector.broadcast %cst_768 : f32 to vector<3x1xf32>
    %752 = arith.divf %751, %750 : vector<3x1xf32>
    %cst_769 = arith.constant 1.000000e+00 : f32
    %753 = vector.broadcast %cst_769 : f32 to vector<3x1xf32>
    %754 = arith.addf %753, %746 : vector<3x1xf32>
    %755 = arith.divf %746, %754 : vector<3x1xf32>
    %756 = arith.select %748, %752, %755 : vector<3x1xi1>, vector<3x1xf32>
    %c0_770 = arith.constant 0 : index
    %c0_771 = arith.constant 0 : index
    %c0_772 = arith.constant 0 : index
    %757 = vector.load %arg12[%c0_770, %c0_771, %c0_772] : memref<1x9x1xf32, #tpu.memory_space<vmem>>, vector<1x3x1xf32>
    %758 = vector.shape_cast %757 : vector<1x3x1xf32> to vector<3x1xf32>
    %759 = vector.shape_cast %756 : vector<3x1xf32> to vector<1x3x1xf32>
    tpu.vector_store %arg12[%c0_770, %c0_771, %c0_772], %759 {strides = array<i32>} : memref<1x9x1xf32, #tpu.memory_space<vmem>>, vector<1x3x1xf32>,
    %c5_773 = arith.constant 5 : index
    %c0_774 = arith.constant 0 : index
    %760 = vector.load %arg16[%c5_773, %c0_774] : memref<25x32xf32, #tpu.memory_space<vmem>>, vector<3x32xf32>
    %c0_775 = arith.constant 0 : index
    %c0_776 = arith.constant 0 : index
    %c0_777 = arith.constant 0 : index
    %761 = vector.load %arg10[%c0_775, %c0_776, %c0_777] : memref<9x32x1xf32, #tpu.memory_space<vmem>>, vector<1x32x1xf32>
    %762 = vector.shape_cast %761 : vector<1x32x1xf32> to vector<32x1xf32>
    %cst_778 = arith.constant dense<0.000000e+00> : vector<3x1xf32>
    %763 = tpu.matmul %760, %762, %cst_778 {dimension_numbers = #tpu.dot_dimension_numbers<[1], [0], [0], [1], [0, 0, 1, 1], [], []>} : vector<3x32xf32>, vector<32x1xf32>, vector<3x1xf32> -> vector<3x1xf32>
    %c6_779 = arith.constant 6 : index
    %c0_780 = arith.constant 0 : index
    %764 = vector.load %arg16[%c6_779, %c0_780] : memref<25x32xf32, #tpu.memory_space<vmem>>, vector<3x32xf32>
    %c1_781 = arith.constant 1 : index
    %c0_782 = arith.constant 0 : index
    %c0_783 = arith.constant 0 : index
    %765 = vector.load %arg10[%c1_781, %c0_782, %c0_783] : memref<9x32x1xf32, #tpu.memory_space<vmem>>, vector<1x32x1xf32>
    %766 = vector.shape_cast %765 : vector<1x32x1xf32> to vector<32x1xf32>
    %cst_784 = arith.constant dense<0.000000e+00> : vector<3x1xf32>
    %767 = tpu.matmul %764, %766, %cst_784 {dimension_numbers = #tpu.dot_dimension_numbers<[1], [0], [0], [1], [0, 0, 1, 1], [], []>} : vector<3x32xf32>, vector<32x1xf32>, vector<3x1xf32> -> vector<3x1xf32>
    %768 = arith.addf %763, %767 : vector<3x1xf32>
    %c7_785 = arith.constant 7 : index
    %c0_786 = arith.constant 0 : index
    %769 = vector.load %arg16[%c7_785, %c0_786] : memref<25x32xf32, #tpu.memory_space<vmem>>, vector<3x32xf32>
    %c2_787 = arith.constant 2 : index
    %c0_788 = arith.constant 0 : index
    %c0_789 = arith.constant 0 : index
    %770 = vector.load %arg10[%c2_787, %c0_788, %c0_789] : memref<9x32x1xf32, #tpu.memory_space<vmem>>, vector<1x32x1xf32>
    %771 = vector.shape_cast %770 : vector<1x32x1xf32> to vector<32x1xf32>
    %cst_790 = arith.constant dense<0.000000e+00> : vector<3x1xf32>
    %772 = tpu.matmul %769, %771, %cst_790 {dimension_numbers = #tpu.dot_dimension_numbers<[1], [0], [0], [1], [0, 0, 1, 1], [], []>} : vector<3x32xf32>, vector<32x1xf32>, vector<3x1xf32> -> vector<3x1xf32>
    %773 = arith.addf %768, %772 : vector<3x1xf32>
    %c10_791 = arith.constant 10 : index
    %c0_792 = arith.constant 0 : index
    %774 = vector.load %arg16[%c10_791, %c0_792] : memref<25x32xf32, #tpu.memory_space<vmem>>, vector<3x32xf32>
    %c3_793 = arith.constant 3 : index
    %c0_794 = arith.constant 0 : index
    %c0_795 = arith.constant 0 : index
    %775 = vector.load %arg10[%c3_793, %c0_794, %c0_795] : memref<9x32x1xf32, #tpu.memory_space<vmem>>, vector<1x32x1xf32>
    %776 = vector.shape_cast %775 : vector<1x32x1xf32> to vector<32x1xf32>
    %cst_796 = arith.constant dense<0.000000e+00> : vector<3x1xf32>
    %777 = tpu.matmul %774, %776, %cst_796 {dimension_numbers = #tpu.dot_dimension_numbers<[1], [0], [0], [1], [0, 0, 1, 1], [], []>} : vector<3x32xf32>, vector<32x1xf32>, vector<3x1xf32> -> vector<3x1xf32>
    %778 = arith.addf %773, %777 : vector<3x1xf32>
    %c11_797 = arith.constant 11 : index
    %c0_798 = arith.constant 0 : index
    %779 = vector.load %arg16[%c11_797, %c0_798] : memref<25x32xf32, #tpu.memory_space<vmem>>, vector<3x32xf32>
    %c4_799 = arith.constant 4 : index
    %c0_800 = arith.constant 0 : index
    %c0_801 = arith.constant 0 : index
    %780 = vector.load %arg10[%c4_799, %c0_800, %c0_801] : memref<9x32x1xf32, #tpu.memory_space<vmem>>, vector<1x32x1xf32>
    %781 = vector.shape_cast %780 : vector<1x32x1xf32> to vector<32x1xf32>
    %cst_802 = arith.constant dense<0.000000e+00> : vector<3x1xf32>
    %782 = tpu.matmul %779, %781, %cst_802 {dimension_numbers = #tpu.dot_dimension_numbers<[1], [0], [0], [1], [0, 0, 1, 1], [], []>} : vector<3x32xf32>, vector<32x1xf32>, vector<3x1xf32> -> vector<3x1xf32>
    %783 = arith.addf %778, %782 : vector<3x1xf32>
    %c12_803 = arith.constant 12 : index
    %c0_804 = arith.constant 0 : index
    %784 = vector.load %arg16[%c12_803, %c0_804] : memref<25x32xf32, #tpu.memory_space<vmem>>, vector<3x32xf32>
    %c5_805 = arith.constant 5 : index
    %c0_806 = arith.constant 0 : index
    %c0_807 = arith.constant 0 : index
    %785 = vector.load %arg10[%c5_805, %c0_806, %c0_807] : memref<9x32x1xf32, #tpu.memory_space<vmem>>, vector<1x32x1xf32>
    %786 = vector.shape_cast %785 : vector<1x32x1xf32> to vector<32x1xf32>
    %cst_808 = arith.constant dense<0.000000e+00> : vector<3x1xf32>
    %787 = tpu.matmul %784, %786, %cst_808 {dimension_numbers = #tpu.dot_dimension_numbers<[1], [0], [0], [1], [0, 0, 1, 1], [], []>} : vector<3x32xf32>, vector<32x1xf32>, vector<3x1xf32> -> vector<3x1xf32>
    %788 = arith.addf %783, %787 : vector<3x1xf32>
    %c15_809 = arith.constant 15 : index
    %c0_810 = arith.constant 0 : index
    %789 = vector.load %arg16[%c15_809, %c0_810] : memref<25x32xf32, #tpu.memory_space<vmem>>, vector<3x32xf32>
    %c6_811 = arith.constant 6 : index
    %c0_812 = arith.constant 0 : index
    %c0_813 = arith.constant 0 : index
    %790 = vector.load %arg10[%c6_811, %c0_812, %c0_813] : memref<9x32x1xf32, #tpu.memory_space<vmem>>, vector<1x32x1xf32>
    %791 = vector.shape_cast %790 : vector<1x32x1xf32> to vector<32x1xf32>
    %cst_814 = arith.constant dense<0.000000e+00> : vector<3x1xf32>
    %792 = tpu.matmul %789, %791, %cst_814 {dimension_numbers = #tpu.dot_dimension_numbers<[1], [0], [0], [1], [0, 0, 1, 1], [], []>} : vector<3x32xf32>, vector<32x1xf32>, vector<3x1xf32> -> vector<3x1xf32>
    %793 = arith.addf %788, %792 : vector<3x1xf32>
    %c16_815 = arith.constant 16 : index
    %c0_816 = arith.constant 0 : index
    %794 = vector.load %arg16[%c16_815, %c0_816] : memref<25x32xf32, #tpu.memory_space<vmem>>, vector<3x32xf32>
    %c7_817 = arith.constant 7 : index
    %c0_818 = arith.constant 0 : index
    %c0_819 = arith.constant 0 : index
    %795 = vector.load %arg10[%c7_817, %c0_818, %c0_819] : memref<9x32x1xf32, #tpu.memory_space<vmem>>, vector<1x32x1xf32>
    %796 = vector.shape_cast %795 : vector<1x32x1xf32> to vector<32x1xf32>
    %cst_820 = arith.constant dense<0.000000e+00> : vector<3x1xf32>
    %797 = tpu.matmul %794, %796, %cst_820 {dimension_numbers = #tpu.dot_dimension_numbers<[1], [0], [0], [1], [0, 0, 1, 1], [], []>} : vector<3x32xf32>, vector<32x1xf32>, vector<3x1xf32> -> vector<3x1xf32>
    %798 = arith.addf %793, %797 : vector<3x1xf32>
    %c17_821 = arith.constant 17 : index
    %c0_822 = arith.constant 0 : index
    %799 = vector.load %arg16[%c17_821, %c0_822] : memref<25x32xf32, #tpu.memory_space<vmem>>, vector<3x32xf32>
    %c8_823 = arith.constant 8 : index
    %c0_824 = arith.constant 0 : index
    %c0_825 = arith.constant 0 : index
    %800 = vector.load %arg10[%c8_823, %c0_824, %c0_825] : memref<9x32x1xf32, #tpu.memory_space<vmem>>, vector<1x32x1xf32>
    %801 = vector.shape_cast %800 : vector<1x32x1xf32> to vector<32x1xf32>
    %cst_826 = arith.constant dense<0.000000e+00> : vector<3x1xf32>
    %802 = tpu.matmul %799, %801, %cst_826 {dimension_numbers = #tpu.dot_dimension_numbers<[1], [0], [0], [1], [0, 0, 1, 1], [], []>} : vector<3x32xf32>, vector<32x1xf32>, vector<3x1xf32> -> vector<3x1xf32>
    %803 = arith.addf %798, %802 : vector<3x1xf32>
    %804 = vector.broadcast %696 : vector<1x1xf32> to vector<3x1xf32>
    %805 = arith.addf %803, %804 : vector<3x1xf32>
    %806 = math.absf %805 : vector<3x1xf32>
    %cst_827 = arith.constant 0.000000e+00 : f32
    %807 = vector.broadcast %cst_827 : f32 to vector<3x1xf32>
    %808 = arith.subf %807, %806 : vector<3x1xf32>
    %809 = math.exp %808 : vector<3x1xf32>
    %cst_828 = arith.constant 0.000000e+00 : f32
    %810 = vector.broadcast %cst_828 : f32 to vector<3x1xf32>
    %811 = arith.cmpf oge, %805, %810 : vector<3x1xf32>
    %cst_829 = arith.constant 1.000000e+00 : f32
    %812 = vector.broadcast %cst_829 : f32 to vector<3x1xf32>
    %813 = arith.addf %812, %809 : vector<3x1xf32>
    %cst_830 = arith.constant 1.000000e+00 : f32
    %814 = vector.broadcast %cst_830 : f32 to vector<3x1xf32>
    %815 = arith.divf %814, %813 : vector<3x1xf32>
    %cst_831 = arith.constant 1.000000e+00 : f32
    %816 = vector.broadcast %cst_831 : f32 to vector<3x1xf32>
    %817 = arith.addf %816, %809 : vector<3x1xf32>
    %818 = arith.divf %809, %817 : vector<3x1xf32>
    %819 = arith.select %811, %815, %818 : vector<3x1xi1>, vector<3x1xf32>
    %c0_832 = arith.constant 0 : index
    %c3_833 = arith.constant 3 : index
    %c0_834 = arith.constant 0 : index
    %820 = vector.load %arg12[%c0_832, %c3_833, %c0_834] : memref<1x9x1xf32, #tpu.memory_space<vmem>>, vector<1x3x1xf32>
    %821 = vector.shape_cast %820 : vector<1x3x1xf32> to vector<3x1xf32>
    %822 = vector.shape_cast %819 : vector<3x1xf32> to vector<1x3x1xf32>
    tpu.vector_store %arg12[%c0_832, %c3_833, %c0_834], %822 {strides = array<i32>} : memref<1x9x1xf32, #tpu.memory_space<vmem>>, vector<1x3x1xf32>,
    %c10_835 = arith.constant 10 : index
    %c0_836 = arith.constant 0 : index
    %823 = vector.load %arg16[%c10_835, %c0_836] : memref<25x32xf32, #tpu.memory_space<vmem>>, vector<3x32xf32>
    %c0_837 = arith.constant 0 : index
    %c0_838 = arith.constant 0 : index
    %c0_839 = arith.constant 0 : index
    %824 = vector.load %arg10[%c0_837, %c0_838, %c0_839] : memref<9x32x1xf32, #tpu.memory_space<vmem>>, vector<1x32x1xf32>
    %825 = vector.shape_cast %824 : vector<1x32x1xf32> to vector<32x1xf32>
    %cst_840 = arith.constant dense<0.000000e+00> : vector<3x1xf32>
    %826 = tpu.matmul %823, %825, %cst_840 {dimension_numbers = #tpu.dot_dimension_numbers<[1], [0], [0], [1], [0, 0, 1, 1], [], []>} : vector<3x32xf32>, vector<32x1xf32>, vector<3x1xf32> -> vector<3x1xf32>
    %c11_841 = arith.constant 11 : index
    %c0_842 = arith.constant 0 : index
    %827 = vector.load %arg16[%c11_841, %c0_842] : memref<25x32xf32, #tpu.memory_space<vmem>>, vector<3x32xf32>
    %c1_843 = arith.constant 1 : index
    %c0_844 = arith.constant 0 : index
    %c0_845 = arith.constant 0 : index
    %828 = vector.load %arg10[%c1_843, %c0_844, %c0_845] : memref<9x32x1xf32, #tpu.memory_space<vmem>>, vector<1x32x1xf32>
    %829 = vector.shape_cast %828 : vector<1x32x1xf32> to vector<32x1xf32>
    %cst_846 = arith.constant dense<0.000000e+00> : vector<3x1xf32>
    %830 = tpu.matmul %827, %829, %cst_846 {dimension_numbers = #tpu.dot_dimension_numbers<[1], [0], [0], [1], [0, 0, 1, 1], [], []>} : vector<3x32xf32>, vector<32x1xf32>, vector<3x1xf32> -> vector<3x1xf32>
    %831 = arith.addf %826, %830 : vector<3x1xf32>
    %c12_847 = arith.constant 12 : index
    %c0_848 = arith.constant 0 : index
    %832 = vector.load %arg16[%c12_847, %c0_848] : memref<25x32xf32, #tpu.memory_space<vmem>>, vector<3x32xf32>
    %c2_849 = arith.constant 2 : index
    %c0_850 = arith.constant 0 : index
    %c0_851 = arith.constant 0 : index
    %833 = vector.load %arg10[%c2_849, %c0_850, %c0_851] : memref<9x32x1xf32, #tpu.memory_space<vmem>>, vector<1x32x1xf32>
    %834 = vector.shape_cast %833 : vector<1x32x1xf32> to vector<32x1xf32>
    %cst_852 = arith.constant dense<0.000000e+00> : vector<3x1xf32>
    %835 = tpu.matmul %832, %834, %cst_852 {dimension_numbers = #tpu.dot_dimension_numbers<[1], [0], [0], [1], [0, 0, 1, 1], [], []>} : vector<3x32xf32>, vector<32x1xf32>, vector<3x1xf32> -> vector<3x1xf32>
    %836 = arith.addf %831, %835 : vector<3x1xf32>
    %c15_853 = arith.constant 15 : index
    %c0_854 = arith.constant 0 : index
    %837 = vector.load %arg16[%c15_853, %c0_854] : memref<25x32xf32, #tpu.memory_space<vmem>>, vector<3x32xf32>
    %c3_855 = arith.constant 3 : index
    %c0_856 = arith.constant 0 : index
    %c0_857 = arith.constant 0 : index
    %838 = vector.load %arg10[%c3_855, %c0_856, %c0_857] : memref<9x32x1xf32, #tpu.memory_space<vmem>>, vector<1x32x1xf32>
    %839 = vector.shape_cast %838 : vector<1x32x1xf32> to vector<32x1xf32>
    %cst_858 = arith.constant dense<0.000000e+00> : vector<3x1xf32>
    %840 = tpu.matmul %837, %839, %cst_858 {dimension_numbers = #tpu.dot_dimension_numbers<[1], [0], [0], [1], [0, 0, 1, 1], [], []>} : vector<3x32xf32>, vector<32x1xf32>, vector<3x1xf32> -> vector<3x1xf32>
    %841 = arith.addf %836, %840 : vector<3x1xf32>
    %c16_859 = arith.constant 16 : index
    %c0_860 = arith.constant 0 : index
    %842 = vector.load %arg16[%c16_859, %c0_860] : memref<25x32xf32, #tpu.memory_space<vmem>>, vector<3x32xf32>
    %c4_861 = arith.constant 4 : index
    %c0_862 = arith.constant 0 : index
    %c0_863 = arith.constant 0 : index
    %843 = vector.load %arg10[%c4_861, %c0_862, %c0_863] : memref<9x32x1xf32, #tpu.memory_space<vmem>>, vector<1x32x1xf32>
    %844 = vector.shape_cast %843 : vector<1x32x1xf32> to vector<32x1xf32>
    %cst_864 = arith.constant dense<0.000000e+00> : vector<3x1xf32>
    %845 = tpu.matmul %842, %844, %cst_864 {dimension_numbers = #tpu.dot_dimension_numbers<[1], [0], [0], [1], [0, 0, 1, 1], [], []>} : vector<3x32xf32>, vector<32x1xf32>, vector<3x1xf32> -> vector<3x1xf32>
    %846 = arith.addf %841, %845 : vector<3x1xf32>
    %c17_865 = arith.constant 17 : index
    %c0_866 = arith.constant 0 : index
    %847 = vector.load %arg16[%c17_865, %c0_866] : memref<25x32xf32, #tpu.memory_space<vmem>>, vector<3x32xf32>
    %c5_867 = arith.constant 5 : index
    %c0_868 = arith.constant 0 : index
    %c0_869 = arith.constant 0 : index
    %848 = vector.load %arg10[%c5_867, %c0_868, %c0_869] : memref<9x32x1xf32, #tpu.memory_space<vmem>>, vector<1x32x1xf32>
    %849 = vector.shape_cast %848 : vector<1x32x1xf32> to vector<32x1xf32>
    %cst_870 = arith.constant dense<0.000000e+00> : vector<3x1xf32>
    %850 = tpu.matmul %847, %849, %cst_870 {dimension_numbers = #tpu.dot_dimension_numbers<[1], [0], [0], [1], [0, 0, 1, 1], [], []>} : vector<3x32xf32>, vector<32x1xf32>, vector<3x1xf32> -> vector<3x1xf32>
    %851 = arith.addf %846, %850 : vector<3x1xf32>
    %c20_871 = arith.constant 20 : index
    %c0_872 = arith.constant 0 : index
    %852 = vector.load %arg16[%c20_871, %c0_872] : memref<25x32xf32, #tpu.memory_space<vmem>>, vector<3x32xf32>
    %c6_873 = arith.constant 6 : index
    %c0_874 = arith.constant 0 : index
    %c0_875 = arith.constant 0 : index
    %853 = vector.load %arg10[%c6_873, %c0_874, %c0_875] : memref<9x32x1xf32, #tpu.memory_space<vmem>>, vector<1x32x1xf32>
    %854 = vector.shape_cast %853 : vector<1x32x1xf32> to vector<32x1xf32>
    %cst_876 = arith.constant dense<0.000000e+00> : vector<3x1xf32>
    %855 = tpu.matmul %852, %854, %cst_876 {dimension_numbers = #tpu.dot_dimension_numbers<[1], [0], [0], [1], [0, 0, 1, 1], [], []>} : vector<3x32xf32>, vector<32x1xf32>, vector<3x1xf32> -> vector<3x1xf32>
    %856 = arith.addf %851, %855 : vector<3x1xf32>
    %c21_877 = arith.constant 21 : index
    %c0_878 = arith.constant 0 : index
    %857 = vector.load %arg16[%c21_877, %c0_878] : memref<25x32xf32, #tpu.memory_space<vmem>>, vector<3x32xf32>
    %c7_879 = arith.constant 7 : index
    %c0_880 = arith.constant 0 : index
    %c0_881 = arith.constant 0 : index
    %858 = vector.load %arg10[%c7_879, %c0_880, %c0_881] : memref<9x32x1xf32, #tpu.memory_space<vmem>>, vector<1x32x1xf32>
    %859 = vector.shape_cast %858 : vector<1x32x1xf32> to vector<32x1xf32>
    %cst_882 = arith.constant dense<0.000000e+00> : vector<3x1xf32>
    %860 = tpu.matmul %857, %859, %cst_882 {dimension_numbers = #tpu.dot_dimension_numbers<[1], [0], [0], [1], [0, 0, 1, 1], [], []>} : vector<3x32xf32>, vector<32x1xf32>, vector<3x1xf32> -> vector<3x1xf32>
    %861 = arith.addf %856, %860 : vector<3x1xf32>
    %c22_883 = arith.constant 22 : index
    %c0_884 = arith.constant 0 : index
    %862 = vector.load %arg16[%c22_883, %c0_884] : memref<25x32xf32, #tpu.memory_space<vmem>>, vector<3x32xf32>
    %c8_885 = arith.constant 8 : index
    %c0_886 = arith.constant 0 : index
    %c0_887 = arith.constant 0 : index
    %863 = vector.load %arg10[%c8_885, %c0_886, %c0_887] : memref<9x32x1xf32, #tpu.memory_space<vmem>>, vector<1x32x1xf32>
    %864 = vector.shape_cast %863 : vector<1x32x1xf32> to vector<32x1xf32>
    %cst_888 = arith.constant dense<0.000000e+00> : vector<3x1xf32>
    %865 = tpu.matmul %862, %864, %cst_888 {dimension_numbers = #tpu.dot_dimension_numbers<[1], [0], [0], [1], [0, 0, 1, 1], [], []>} : vector<3x32xf32>, vector<32x1xf32>, vector<3x1xf32> -> vector<3x1xf32>
    %866 = arith.addf %861, %865 : vector<3x1xf32>
    %867 = vector.broadcast %696 : vector<1x1xf32> to vector<3x1xf32>
    %868 = arith.addf %866, %867 : vector<3x1xf32>
    %869 = math.absf %868 : vector<3x1xf32>
    %cst_889 = arith.constant 0.000000e+00 : f32
    %870 = vector.broadcast %cst_889 : f32 to vector<3x1xf32>
    %871 = arith.subf %870, %869 : vector<3x1xf32>
    %872 = math.exp %871 : vector<3x1xf32>
    %cst_890 = arith.constant 0.000000e+00 : f32
    %873 = vector.broadcast %cst_890 : f32 to vector<3x1xf32>
    %874 = arith.cmpf oge, %868, %873 : vector<3x1xf32>
    %cst_891 = arith.constant 1.000000e+00 : f32
    %875 = vector.broadcast %cst_891 : f32 to vector<3x1xf32>
    %876 = arith.addf %875, %872 : vector<3x1xf32>
    %cst_892 = arith.constant 1.000000e+00 : f32
    %877 = vector.broadcast %cst_892 : f32 to vector<3x1xf32>
    %878 = arith.divf %877, %876 : vector<3x1xf32>
    %cst_893 = arith.constant 1.000000e+00 : f32
    %879 = vector.broadcast %cst_893 : f32 to vector<3x1xf32>
    %880 = arith.addf %879, %872 : vector<3x1xf32>
    %881 = arith.divf %872, %880 : vector<3x1xf32>
    %882 = arith.select %874, %878, %881 : vector<3x1xi1>, vector<3x1xf32>
    %c0_894 = arith.constant 0 : index
    %c6_895 = arith.constant 6 : index
    %c0_896 = arith.constant 0 : index
    %883 = vector.load %arg12[%c0_894, %c6_895, %c0_896] : memref<1x9x1xf32, #tpu.memory_space<vmem>>, vector<1x3x1xf32>
    %884 = vector.shape_cast %883 : vector<1x3x1xf32> to vector<3x1xf32>
    %885 = vector.shape_cast %882 : vector<3x1xf32> to vector<1x3x1xf32>
    tpu.vector_store %arg12[%c0_894, %c6_895, %c0_896], %885 {strides = array<i32>} : memref<1x9x1xf32, #tpu.memory_space<vmem>>, vector<1x3x1xf32>,
    return
  }
  func.func @transform_0(%arg0: i32) -> (i32, i32, i32) {
    %c0_i32 = arith.constant 0 : i32
    %c0_i32_0 = arith.constant 0 : i32
    %c0_i32_1 = arith.constant 0 : i32
    return %arg0, %c0_i32, %c0_i32_0 : i32, i32, i32
  }
  func.func @transform_1(%arg0: i32) -> (i32, i32) {
    %c0_i32 = arith.constant 0 : i32
    %c0_i32_0 = arith.constant 0 : i32
    %c0_i32_1 = arith.constant 0 : i32
    return %c0_i32, %c0_i32_0 : i32, i32
  }
  func.func @transform_2(%arg0: i32) -> (i32, i32) {
    %c0_i32 = arith.constant 0 : i32
    %c0_i32_0 = arith.constant 0 : i32
    %c0_i32_1 = arith.constant 0 : i32
    return %c0_i32, %c0_i32_0 : i32, i32
  }
  func.func @transform_3(%arg0: i32) -> (i32, i32, i32) {
    %c0_i32 = arith.constant 0 : i32
    %c0_i32_0 = arith.constant 0 : i32
    %c0_i32_1 = arith.constant 0 : i32
    %c0_i32_2 = arith.constant 0 : i32
    return %c0_i32, %c0_i32_0, %c0_i32_1 : i32, i32, i32
  }
  func.func @transform_4(%arg0: i32) -> (i32, i32) {
    %c0_i32 = arith.constant 0 : i32
    %c0_i32_0 = arith.constant 0 : i32
    %c0_i32_1 = arith.constant 0 : i32
    return %c0_i32, %c0_i32_0 : i32, i32
  }
  func.func @transform_5(%arg0: i32) -> (i32, i32, i32) {
    %c0_i32 = arith.constant 0 : i32
    %c0_i32_0 = arith.constant 0 : i32
    %c0_i32_1 = arith.constant 0 : i32
    %c0_i32_2 = arith.constant 0 : i32
    return %c0_i32, %c0_i32_0, %c0_i32_1 : i32, i32, i32
  }
  func.func @transform_6(%arg0: i32) -> (i32, i32) {
    %c0_i32 = arith.constant 0 : i32
    %c0_i32_0 = arith.constant 0 : i32
    %c0_i32_1 = arith.constant 0 : i32
    return %c0_i32, %c0_i32_0 : i32, i32
  }
  func.func @transform_7(%arg0: i32) -> (i32, i32, i32) {
    %c0_i32 = arith.constant 0 : i32
    %c0_i32_0 = arith.constant 0 : i32
    %c0_i32_1 = arith.constant 0 : i32
    %c0_i32_2 = arith.constant 0 : i32
    return %c0_i32, %c0_i32_0, %c0_i32_1 : i32, i32, i32
  }
  func.func @transform_8(%arg0: i32) -> (i32, i32) {
    %c0_i32 = arith.constant 0 : i32
    %c0_i32_0 = arith.constant 0 : i32
    %c0_i32_1 = arith.constant 0 : i32
    return %c0_i32, %c0_i32_0 : i32, i32
  }
  func.func @transform_9(%arg0: i32) -> (i32, i32, i32) {
    %c0_i32 = arith.constant 0 : i32
    %c0_i32_0 = arith.constant 0 : i32
    %c0_i32_1 = arith.constant 0 : i32
    %c0_i32_2 = arith.constant 0 : i32
    return %c0_i32, %c0_i32_0, %c0_i32_1 : i32, i32, i32
  }
  func.func @transform_10(%arg0: i32) -> (i32, i32) {
    %c0_i32 = arith.constant 0 : i32
    %c0_i32_0 = arith.constant 0 : i32
    %c0_i32_1 = arith.constant 0 : i32
    return %c0_i32, %c0_i32_0 : i32, i32
  }
  func.func @transform_11(%arg0: i32) -> (i32, i32, i32) {
    %c0_i32 = arith.constant 0 : i32
    %c0_i32_0 = arith.constant 0 : i32
    %c0_i32_1 = arith.constant 0 : i32
    return %arg0, %c0_i32, %c0_i32_0 : i32, i32, i32
  }
}

</mosaic_0001>

<llo_original>
// kernel: discriminator_a_forward.1
$region0: #{discriminator_a_forward.1}
  #allocation0 [shape = 'u32[]', space=smem, size = 0x4, offset = 0x4, fixed_abs, tag = 'smem constant byte address 0x4 - core index']
  #allocation1 [shape = 'u32[72,128]{1,0:T(1,128)}', space=vmem, size = 0x9000, scoped, tag = 'internal scratch']
  #allocation2 [shape = 'f32[225,4]{1,0:T(8,128)}', space=vmem, size = 0x1d000, scoped, tag = 'scratch operand']
  #allocation3 [shape = 'f32[49,8]{1,0:T(8,128)}', space=vmem, size = 0x7000, scoped, tag = 'scratch operand']
  #allocation4 [shape = 'f32[25,16]{1,0:T(8,128)}', space=vmem, size = 0x4000, scoped, tag = 'scratch operand']
  #allocation5 [shape = 'f32[25,32]{1,0:T(8,128)}', space=vmem, size = 0x4000, scoped, tag = 'scratch operand']
  #allocation6 [shape = 'f32[1,1]{1,0:T(1,128)S(1)}', space=vmem, size = 0x200, scoped, tag = 'scoped memory for discriminator_a_forward.1']
  %s0 = inlined_call_operand.vmem [shape: f32[2,225,9], index: 0, kind: input, shape index: {}]
  %s1 = inlined_call_operand.vmem [shape: f32[9,4], index: 1, kind: input, shape index: {}]
  %s2 = inlined_call_operand.vmem [shape: f32[1,4], index: 2, kind: input, shape index: {}]
  %s3 = inlined_call_operand.vmem [shape: f32[9,4,8], index: 3, kind: input, shape index: {}]
  %s4 = inlined_call_operand.vmem [shape: f32[1,8], index: 4, kind: input, shape index: {}]
  %s5 = inlined_call_operand.vmem [shape: f32[9,8,16], index: 5, kind: input, shape index: {}]
  %s6 = inlined_call_operand.vmem [shape: f32[1,16], index: 6, kind: input, shape index: {}]
  %s7 = inlined_call_operand.vmem [shape: f32[9,16,32], index: 7, kind: input, shape index: {}]
  %s8 = inlined_call_operand.vmem [shape: f32[1,32], index: 8, kind: input, shape index: {}]
  %s9 = inlined_call_operand.vmem [shape: f32[9,32,1], index: 9, kind: input, shape index: {}]
  %s10 = inlined_call_operand.<no memory space> [shape: f32[1,1], index: 10, kind: input, shape index: {}]
  %s11 = inlined_call_operand.vmem [shape: f32[2,9,1], index: 11, kind: output, shape index: {}]
  %s12 = sld [smem:[#allocation0]]
  $region77: #{discriminator_a_forward.1} parent=0
    _
  %s14 = ssub.s32 1, %s12
  %s15 = scalar_select 0, %s14, %s12
  %v16 = vstv %s10
  %17 = vst [vmem:[#allocation6] sm:$0x1] %v16
  loop: start=0, step=1, limit=4
  $region2: #{discriminator_a_forward.1} parent=0 // loop_pre_header
    _
  $region3: #{discriminator_a_forward.1} parent=0 // loop_header
    %s19 = sphi 0, %s23
    %p20 = scmp.ge.s32.totalorder %s19, 4
    %s29 = sphi 0, %s31
    %s32 = sphi 0, %s29
    %s33 = sphi 0, %s32
    %s49 = sphi 0, %s33
    %s53 = sphi 0, %s53
    %s55 = sphi 0, %s53
    %s56 = sphi 0, %s55
    %s70 = sphi 0, %s56
    %s74 = sphi 0, %s74
    %s76 = sphi 0, %s74
    %s77 = sphi 0, %s76
    %s91 = sphi 0, %s77
    %s95 = sphi 0, %s95
    %s97 = sphi 0, %s95
    %s98 = sphi 0, %s97
    %s112 = sphi 0, %s98
    %s116 = sphi 0, %s116
    %s118 = sphi 0, %s116
    %s119 = sphi 0, %s118
    %s133 = sphi 0, %s119
    %s137 = sphi 0, %s137
    %s139 = sphi 0, %s137
    %s140 = sphi 0, %s139
    %s154 = sphi 0, %s140
    %s158 = sphi 0, %s158
    %s160 = sphi 0, %s158
    %s161 = sphi 0, %s160
    %s175 = sphi 0, %s161
    %s179 = sphi 0, %s179
    %s181 = sphi 0, %s179
    %s182 = sphi 0, %s181
    %s196 = sphi 0, %s182
    %s200 = sphi 0, %s200
    %s202 = sphi 0, %s200
    %s203 = sphi 0, %s202
    %s217 = sphi 0, %s203
    %s221 = sphi 0, %s221
    %s223 = sphi 0, %s221
    %s224 = sphi 0, %s223
    %s238 = sphi 0, %s224
    %s242 = sphi 0, %s242
    %s244 = sphi 0, %s242
    %s245 = sphi 0, %s244
    %s259 = sphi 0, %s245
    %s265 = sphi 0, %s267
    %s268 = sphi 0, %s265
    %s269 = sphi 0, %s268
    %s285 = sphi 0, %s269
  $region4: #{discriminator_a_forward.1} parent=0 // loop_header_branch
    %22 = sbr.rel (%p20) target = $region8
  $region5: #{discriminator_a_forward.1} parent=0 // loop_body
    %s24 = ssub.s32 %s19, 1
    %s25 = ssub.s32 %s19, 2
    %s26 = sadd.s32 %s19, 1
    %s27 = ssub.s32 %s19, %s26
    %p28 = scmp.eq.s32.totalorder %s27, 0
    %s30 = sadd.s32 %s29, 1
    %s31 = scalar_select %p28, %s29, %s30
    %p34 = pneg %p28
    %p35 = scmp.eq.s32.totalorder %s19, 1
    %p36 = por %p34, %p35
    %p37 = scmp.ne.s32.totalorder %s29, %s32
    %p38 = scmp.eq.s32.totalorder %s19, 0
    %p39 = por %p37, %p38
    %p40 = scmp.ne.s32.totalorder %s29, %s32
    %p41 = scmp.eq.s32.totalorder %s24, 1
    %p42 = por %p40, %p41
    %p43 = scmp.ne.s32.totalorder %s32, %s33
    %p44 = scmp.eq.s32.totalorder %s24, 0
    %p45 = por %p43, %p44
    %p46 = scmp.ne.s32.totalorder %s32, %s33
    %p47 = scmp.eq.s32.totalorder %s25, 1
    %p48 = por %p46, %p47
    %p50 = scmp.ne.s32.totalorder %s33, %s49
    %p51 = scmp.eq.s32.totalorder %s25, 0
    %p52 = por %p50, %p51
    %s54 = sadd.s32 %s53, 1
    %p57 = scmp.eq.s32.totalorder %s19, 1
    %p58 = scmp.ne.s32.totalorder %s53, %s55
    %p59 = scmp.eq.s32.totalorder %s19, 0
    %p60 = por %p58, %p59
    %p61 = scmp.ne.s32.totalorder %s53, %s55
    %p62 = scmp.eq.s32.totalorder %s24, 1
    %p63 = por %p61, %p62
    %p64 = scmp.ne.s32.totalorder %s55, %s56
    %p65 = scmp.eq.s32.totalorder %s24, 0
    %p66 = por %p64, %p65
    %p67 = scmp.ne.s32.totalorder %s55, %s56
    %p68 = scmp.eq.s32.totalorder %s25, 1
    %p69 = por %p67, %p68
    %p71 = scmp.ne.s32.totalorder %s56, %s70
    %p72 = scmp.eq.s32.totalorder %s25, 0
    %p73 = por %p71, %p72
    %s75 = sadd.s32 %s74, 1
    %p78 = scmp.eq.s32.totalorder %s19, 1
    %p79 = scmp.ne.s32.totalorder %s74, %s76
    %p80 = scmp.eq.s32.totalorder %s19, 0
    %p81 = por %p79, %p80
    %p82 = scmp.ne.s32.totalorder %s74, %s76
    %p83 = scmp.eq.s32.totalorder %s24, 1
    %p84 = por %p82, %p83
    %p85 = scmp.ne.s32.totalorder %s76, %s77
    %p86 = scmp.eq.s32.totalorder %s24, 0
    %p87 = por %p85, %p86
    %p88 = scmp.ne.s32.totalorder %s76, %s77
    %p89 = scmp.eq.s32.totalorder %s25, 1
    %p90 = por %p88, %p89
    %p92 = scmp.ne.s32.totalorder %s77, %s91
    %p93 = scmp.eq.s32.totalorder %s25, 0
    %p94 = por %p92, %p93
    %s96 = sadd.s32 %s95, 1
    %p99 = scmp.eq.s32.totalorder %s19, 1
    %p100 = scmp.ne.s32.totalorder %s95, %s97
    %p101 = scmp.eq.s32.totalorder %s19, 0
    %p102 = por %p100, %p101
    %p103 = scmp.ne.s32.totalorder %s95, %s97
    %p104 = scmp.eq.s32.totalorder %s24, 1
    %p105 = por %p103, %p104
    %p106 = scmp.ne.s32.totalorder %s97, %s98
    %p107 = scmp.eq.s32.totalorder %s24, 0
    %p108 = por %p106, %p107
    %p109 = scmp.ne.s32.totalorder %s97, %s98
    %p110 = scmp.eq.s32.totalorder %s25, 1
    %p111 = por %p109, %p110
    %p113 = scmp.ne.s32.totalorder %s98, %s112
    %p114 = scmp.eq.s32.totalorder %s25, 0
    %p115 = por %p113, %p114
    %s117 = sadd.s32 %s116, 1
    %p120 = scmp.eq.s32.totalorder %s19, 1
    %p121 = scmp.ne.s32.totalorder %s116, %s118
    %p122 = scmp.eq.s32.totalorder %s19, 0
    %p123 = por %p121, %p122
    %p124 = scmp.ne.s32.totalorder %s116, %s118
    %p125 = scmp.eq.s32.totalorder %s24, 1
    %p126 = por %p124, %p125
    %p127 = scmp.ne.s32.totalorder %s118, %s119
    %p128 = scmp.eq.s32.totalorder %s24, 0
    %p129 = por %p127, %p128
    %p130 = scmp.ne.s32.totalorder %s118, %s119
    %p131 = scmp.eq.s32.totalorder %s25, 1
    %p132 = por %p130, %p131
    %p134 = scmp.ne.s32.totalorder %s119, %s133
    %p135 = scmp.eq.s32.totalorder %s25, 0
    %p136 = por %p134, %p135
    %s138 = sadd.s32 %s137, 1
    %p141 = scmp.eq.s32.totalorder %s19, 1
    %p142 = scmp.ne.s32.totalorder %s137, %s139
    %p143 = scmp.eq.s32.totalorder %s19, 0
    %p144 = por %p142, %p143
    %p145 = scmp.ne.s32.totalorder %s137, %s139
    %p146 = scmp.eq.s32.totalorder %s24, 1
    %p147 = por %p145, %p146
    %p148 = scmp.ne.s32.totalorder %s139, %s140
    %p149 = scmp.eq.s32.totalorder %s24, 0
    %p150 = por %p148, %p149
    %p151 = scmp.ne.s32.totalorder %s139, %s140
    %p152 = scmp.eq.s32.totalorder %s25, 1
    %p153 = por %p151, %p152
    %p155 = scmp.ne.s32.totalorder %s140, %s154
    %p156 = scmp.eq.s32.totalorder %s25, 0
    %p157 = por %p155, %p156
    %s159 = sadd.s32 %s158, 1
    %p162 = scmp.eq.s32.totalorder %s19, 1
    %p163 = scmp.ne.s32.totalorder %s158, %s160
    %p164 = scmp.eq.s32.totalorder %s19, 0
    %p165 = por %p163, %p164
    %p166 = scmp.ne.s32.totalorder %s158, %s160
    %p167 = scmp.eq.s32.totalorder %s24, 1
    %p168 = por %p166, %p167
    %p169 = scmp.ne.s32.totalorder %s160, %s161
    %p170 = scmp.eq.s32.totalorder %s24, 0
    %p171 = por %p169, %p170
    %p172 = scmp.ne.s32.totalorder %s160, %s161
    %p173 = scmp.eq.s32.totalorder %s25, 1
    %p174 = por %p172, %p173
    %p176 = scmp.ne.s32.totalorder %s161, %s175
    %p177 = scmp.eq.s32.totalorder %s25, 0
    %p178 = por %p176, %p177
    %s180 = sadd.s32 %s179, 1
    %p183 = scmp.eq.s32.totalorder %s19, 1
    %p184 = scmp.ne.s32.totalorder %s179, %s181
    %p185 = scmp.eq.s32.totalorder %s19, 0
    %p186 = por %p184, %p185
    %p187 = scmp.ne.s32.totalorder %s179, %s181
    %p188 = scmp.eq.s32.totalorder %s24, 1
    %p189 = por %p187, %p188
    %p190 = scmp.ne.s32.totalorder %s181, %s182
    %p191 = scmp.eq.s32.totalorder %s24, 0
    %p192 = por %p190, %p191
    %p193 = scmp.ne.s32.totalorder %s181, %s182
    %p194 = scmp.eq.s32.totalorder %s25, 1
    %p195 = por %p193, %p194
    %p197 = scmp.ne.s32.totalorder %s182, %s196
    %p198 = scmp.eq.s32.totalorder %s25, 0
    %p199 = por %p197, %p198
    %s201 = sadd.s32 %s200, 1
    %p204 = scmp.eq.s32.totalorder %s19, 1
    %p205 = scmp.ne.s32.totalorder %s200, %s202
    %p206 = scmp.eq.s32.totalorder %s19, 0
    %p207 = por %p205, %p206
    %p208 = scmp.ne.s32.totalorder %s200, %s202
    %p209 = scmp.eq.s32.totalorder %s24, 1
    %p210 = por %p208, %p209
    %p211 = scmp.ne.s32.totalorder %s202, %s203
    %p212 = scmp.eq.s32.totalorder %s24, 0
    %p213 = por %p211, %p212
    %p214 = scmp.ne.s32.totalorder %s202, %s203
    %p215 = scmp.eq.s32.totalorder %s25, 1
    %p216 = por %p214, %p215
    %p218 = scmp.ne.s32.totalorder %s203, %s217
    %p219 = scmp.eq.s32.totalorder %s25, 0
    %p220 = por %p218, %p219
    %s222 = sadd.s32 %s221, 1
    %p225 = scmp.eq.s32.totalorder %s19, 1
    %p226 = scmp.ne.s32.totalorder %s221, %s223
    %p227 = scmp.eq.s32.totalorder %s19, 0
    %p228 = por %p226, %p227
    %p229 = scmp.ne.s32.totalorder %s221, %s223
    %p230 = scmp.eq.s32.totalorder %s24, 1
    %p231 = por %p229, %p230
    %p232 = scmp.ne.s32.totalorder %s223, %s224
    %p233 = scmp.eq.s32.totalorder %s24, 0
    %p234 = por %p232, %p233
    %p235 = scmp.ne.s32.totalorder %s223, %s224
    %p236 = scmp.eq.s32.totalorder %s25, 1
    %p237 = por %p235, %p236
    %p239 = scmp.ne.s32.totalorder %s224, %s238
    %p240 = scmp.eq.s32.totalorder %s25, 0
    %p241 = por %p239, %p240
    %s243 = sadd.s32 %s242, 1
    %p246 = scmp.eq.s32.totalorder %s19, 1
    %p247 = scmp.ne.s32.totalorder %s242, %s244
    %p248 = scmp.eq.s32.totalorder %s19, 0
    %p249 = por %p247, %p248
    %p250 = scmp.ne.s32.totalorder %s242, %s244
    %p251 = scmp.eq.s32.totalorder %s24, 1
    %p252 = por %p250, %p251
    %p253 = scmp.ne.s32.totalorder %s244, %s245
    %p254 = scmp.eq.s32.totalorder %s24, 0
    %p255 = por %p253, %p254
    %p256 = scmp.ne.s32.totalorder %s244, %s245
    %p257 = scmp.eq.s32.totalorder %s25, 1
    %p258 = por %p256, %p257
    %p260 = scmp.ne.s32.totalorder %s245, %s259
    %p261 = scmp.eq.s32.totalorder %s25, 0
    %p262 = por %p260, %p261
    %s263 = ssub.s32 %s19, %s26
    %p264 = scmp.eq.s32.totalorder %s263, 0
    %s266 = sadd.s32 %s265, 1
    %s267 = scalar_select %p264, %s265, %s266
    %p270 = pneg %p264
    %p271 = scmp.eq.s32.totalorder %s19, 1
    %p272 = por %p270, %p271
    %p273 = scmp.ne.s32.totalorder %s265, %s268
    %p274 = scmp.eq.s32.totalorder %s19, 0
    %p275 = por %p273, %p274
    %p276 = scmp.ne.s32.totalorder %s265, %s268
    %p277 = scmp.eq.s32.totalorder %s24, 1
    %p278 = por %p276, %p277
    %p279 = scmp.ne.s32.totalorder %s268, %s269
    %p280 = scmp.eq.s32.totalorder %s24, 0
    %p281 = por %p279, %p280
    %p282 = scmp.ne.s32.totalorder %s268, %s269
    %p283 = scmp.eq.s32.totalorder %s25, 1
    %p284 = por %p282, %p283
    %p286 = scmp.ne.s32.totalorder %s269, %s285
    %p287 = scmp.eq.s32.totalorder %s25, 0
    %p288 = por %p286, %p287
    %p289 = scmp.le.s32.totalorder 1, %s19
    %p290 = scmp.lt.s32.totalorder %s19, 3
    %p291 = pnand %p289, %p290
    %p292 = pneg %p291
    // Predicated region
    $region9: #{discriminator_a_forward.1} parent=5 // pred_check
      _
    $region10: #{discriminator_a_forward.1} parent=5 // pred_check_branch
      %294 = sbr.rel (%p291) target = $region12
    $region11: #{discriminator_a_forward.1} parent=5 // pred_region
      %s295 = ssub.s32 %s19, 1
      // Predicated region
      $region13: #{discriminator_a_forward.1} parent=11 // pred_check
        %p296 = pneg %p66
      $region14: #{discriminator_a_forward.1} parent=11 // pred_check_branch
        %298 = sbr.rel (%p296) target = $region16
      $region15: #{discriminator_a_forward.1} parent=11 // pred_region
        _
      $region16: #{discriminator_a_forward.1} parent=11 // pred_fallthru
        _
      // Predicated region
      $region17: #{discriminator_a_forward.1} parent=11 // pred_check
        %p299 = pneg %p87
      $region18: #{discriminator_a_forward.1} parent=11 // pred_check_branch
        %301 = sbr.rel (%p299) target = $region20
      $region19: #{discriminator_a_forward.1} parent=11 // pred_region
        _
      $region20: #{discriminator_a_forward.1} parent=11 // pred_fallthru
        _
      // Predicated region
      $region21: #{discriminator_a_forward.1} parent=11 // pred_check
        %p302 = pneg %p108
      $region22: #{discriminator_a_forward.1} parent=11 // pred_check_branch
        %304 = sbr.rel (%p302) target = $region24
      $region23: #{discriminator_a_forward.1} parent=11 // pred_region
        _
      $region24: #{discriminator_a_forward.1} parent=11 // pred_fallthru
        _
      // Predicated region
      $region25: #{discriminator_a_forward.1} parent=11 // pred_check
        %p305 = pneg %p129
      $region26: #{discriminator_a_forward.1} parent=11 // pred_check_branch
        %307 = sbr.rel (%p305) target = $region28
      $region27: #{discriminator_a_forward.1} parent=11 // pred_region
        _
      $region28: #{discriminator_a_forward.1} parent=11 // pred_fallthru
        _
      // Predicated region
      $region29: #{discriminator_a_forward.1} parent=11 // pred_check
        %p308 = pneg %p150
      $region30: #{discriminator_a_forward.1} parent=11 // pred_check_branch
        %310 = sbr.rel (%p308) target = $region32
      $region31: #{discriminator_a_forward.1} parent=11 // pred_region
        _
      $region32: #{discriminator_a_forward.1} parent=11 // pred_fallthru
        _
      // Predicated region
      $region33: #{discriminator_a_forward.1} parent=11 // pred_check
        %p311 = pneg %p171
      $region34: #{discriminator_a_forward.1} parent=11 // pred_check_branch
        %313 = sbr.rel (%p311) target = $region36
      $region35: #{discriminator_a_forward.1} parent=11 // pred_region
        _
      $region36: #{discriminator_a_forward.1} parent=11 // pred_fallthru
        _
      // Predicated region
      $region37: #{discriminator_a_forward.1} parent=11 // pred_check
        %p314 = pneg %p192
      $region38: #{discriminator_a_forward.1} parent=11 // pred_check_branch
        %316 = sbr.rel (%p314) target = $region40
      $region39: #{discriminator_a_forward.1} parent=11 // pred_region
        _
      $region40: #{discriminator_a_forward.1} parent=11 // pred_fallthru
        _
      // Predicated region
      $region41: #{discriminator_a_forward.1} parent=11 // pred_check
        %p317 = pneg %p213
      $region42: #{discriminator_a_forward.1} parent=11 // pred_check_branch
        %319 = sbr.rel (%p317) target = $region44
      $region43: #{discriminator_a_forward.1} parent=11 // pred_region
        _
      $region44: #{discriminator_a_forward.1} parent=11 // pred_fallthru
        _
      // Predicated region
      $region45: #{discriminator_a_forward.1} parent=11 // pred_check
        %p320 = pneg %p234
      $region46: #{discriminator_a_forward.1} parent=11 // pred_check_branch
        %322 = sbr.rel (%p320) target = $region48
      $region47: #{discriminator_a_forward.1} parent=11 // pred_region
        _
      $region48: #{discriminator_a_forward.1} parent=11 // pred_fallthru
        _
      // Predicated region
      $region49: #{discriminator_a_forward.1} parent=11 // pred_check
        %p323 = pneg %p255
      $region50: #{discriminator_a_forward.1} parent=11 // pred_check_branch
        %325 = sbr.rel (%p323) target = $region52
      $region51: #{discriminator_a_forward.1} parent=11 // pred_region
        _
      $region52: #{discriminator_a_forward.1} parent=11 // pred_fallthru
        _
    $region12: #{discriminator_a_forward.1} parent=5 // pred_fallthru
      _
    %p326 = scmp.lt.s32.totalorder %s19, 2
    // Predicated region
    $region53: #{discriminator_a_forward.1} parent=5 // pred_check
      %p327 = pneg %p326
    $region54: #{discriminator_a_forward.1} parent=5 // pred_check_branch
      %329 = sbr.rel (%p327) target = $region56
    $region55: #{discriminator_a_forward.1} parent=5 // pred_region
      // Predicated region
      $region57: #{discriminator_a_forward.1} parent=55 // pred_check
        %p330 = pneg %p39
      $region58: #{discriminator_a_forward.1} parent=55 // pred_check_branch
        %332 = sbr.rel (%p330) target = $region60
      $region59: #{discriminator_a_forward.1} parent=55 // pred_region
        %p333 = scmp.lt.s32.totalorder %s19, 1
        %s334 = scalar_select %p333, %s19, 1
        %s335 = smul.addr %s334, 29
        %s336 = smul.addr %s335, 8
        %s337 = scalar_lea.vmem %s0, %s336
      $region60: #{discriminator_a_forward.1} parent=55 // pred_fallthru
        _
    $region56: #{discriminator_a_forward.1} parent=5 // pred_fallthru
      _
    %p338 = scmp.le.s32.totalorder 1, %s19
    %p339 = scmp.lt.s32.totalorder %s19, 3
    %p340 = pnand %p338, %p339
    %p341 = pneg %p340
    // Predicated region
    $region61: #{discriminator_a_forward.1} parent=5 // pred_check
      _
    $region62: #{discriminator_a_forward.1} parent=5 // pred_check_branch
      %343 = sbr.rel (%p340) target = $region64
    $region63: #{discriminator_a_forward.1} parent=5 // pred_region
      %s344 = ssub.s32 %s19, 1
      %p345 = scmp.lt.s32.totalorder %s24, 1
      %s346 = scalar_select %p345, %s24, 1
      %s347 = smul.addr %s346, 29
      %s348 = smul.addr %s347, 8
      %s349 = scalar_lea.vmem %s0, %s348
      %p350 = pneg %p45
      %p351 = pneg %p42
      %p352 = pneg %p66
      %p353 = pneg %p63
      %p354 = pneg %p87
      %p355 = pneg %p84
      %p356 = pneg %p108
      %p357 = pneg %p105
      %p358 = pneg %p129
      %p359 = pneg %p126
      %p360 = pneg %p150
      %p361 = pneg %p147
      %p362 = pneg %p171
      %p363 = pneg %p168
      %p364 = pneg %p192
      %p365 = pneg %p189
      %p366 = pneg %p213
      %p367 = pneg %p210
      %p368 = pneg %p234
      %p369 = pneg %p231
      %p370 = pneg %p255
      %p371 = pneg %p252
      %p372 = pneg %p281
      %p373 = pneg %p278
      %p374 = scmp.lt.s32.totalorder %s24, 1
      %s375 = scalar_select %p374, %s24, 1
      %s376 = smul.addr %s375, 2
      %s377 = smul.addr %s376, 8
      %s378 = scalar_lea.vmem %s11, %s377
      %p379 = scmp.lt.s32.totalorder %s24, 1
      %s380 = scalar_select %p379, %s24, 1
      %s381 = smul.addr %s380, 29
      %s382 = smul.addr %s381, 8
      %s383 = scalar_lea.vmem %s0, %s382
      %p384 = scmp.lt.s32.totalorder %s24, 1
      %s385 = scalar_select %p384, %s24, 1
      %s386 = smul.addr %s385, 2
      %s387 = smul.addr %s386, 8
      %s388 = scalar_lea.vmem %s11, %s387
      %vm389 = vcmask 130048
      %390 = vst.msk [vmem:[#allocation4] sm:$0xff] %vm389, 0.0
      %391 = vst.msk [vmem:[#allocation4 + $0x8] sm:$0xff] %vm389, 0.0
      %392 = vst.msk [vmem:[#allocation4 + $0x10] sm:$0xff] %vm389, 0.0
      %vm393 = vcmask 122880
      %394 = vst.msk [vmem:[#allocation4 + $0x18] sm:$0x1] %vm393, 0.0
      %vm395 = vcmask 261120
      %396 = vst.msk [vmem:[#allocation5] sm:$0xff] %vm395, 0.0
      %397 = vst.msk [vmem:[#allocation5 + $0x8] sm:$0xff] %vm395, 0.0
      %398 = vst.msk [vmem:[#allocation5 + $0x10] sm:$0xff] %vm395, 0.0
      %vm399 = vcmask 253952
      %400 = vst.msk [vmem:[#allocation5 + $0x18] sm:$0x1] %vm399, 0.0
      %v401 = vld [vmem:[%s1] sm:$0xff]
      %v402 = vld [vmem:[%s1 + $0x8] sm:$0x1]
      %v403 = vld [vmem:[%s2] sm:$0x1]
      %v404 = vld [vmem:[%s383] sm:$0xff]
      %v405 = vld [vmem:[%s383 + $0x8] sm:$0xff]
      %v406 = vld [vmem:[%s383 + $0x10] sm:$0xff]
      %v407 = vld [vmem:[%s383 + $0x18] sm:$0xff]
      %v408 = vld [vmem:[%s383 + $0x20] sm:$0xff]
      %v409 = vld [vmem:[%s383 + $0x28] sm:$0xff]
      %v410 = vld [vmem:[%s383 + $0x30] sm:$0xff]
      %v411 = vld [vmem:[%s383 + $0x38] sm:$0xff]
      %v412 = vld [vmem:[%s383 + $0x40] sm:$0xff]
      %v413 = vld [vmem:[%s383 + $0x48] sm:$0xff]
      %v414 = vld [vmem:[%s383 + $0x50] sm:$0xff]
      %v415 = vld [vmem:[%s383 + $0x58] sm:$0xff]
      %v416 = vld [vmem:[%s383 + $0x60] sm:$0xff]
      %v417 = vld [vmem:[%s383 + $0x68] sm:$0xff]
      %v418 = vld [vmem:[%s383 + $0x70] sm:$0xff]
      %v419 = vld [vmem:[%s383 + $0x78] sm:$0xff]
      %v420 = vld [vmem:[%s383 + $0x80] sm:$0xff]
      %v421 = vld [vmem:[%s383 + $0x88] sm:$0xff]
      %v422 = vld [vmem:[%s383 + $0x90] sm:$0xff]
      %v423 = vld [vmem:[%s383 + $0x98] sm:$0xff]
      %v424 = vld [vmem:[%s383 + $0xa0] sm:$0xff]
      %v425 = vld [vmem:[%s383 + $0xa8] sm:$0xff]
      %v426 = vld [vmem:[%s383 + $0xb0] sm:$0xff]
      %v427 = vld [vmem:[%s383 + $0xb8] sm:$0xff]
      %v428 = vld [vmem:[%s383 + $0xc0] sm:$0xff]
      %v429 = vld [vmem:[%s383 + $0xc8] sm:$0xff]
      %v430 = vld [vmem:[%s383 + $0xd0] sm:$0xff]
      %v431 = vld [vmem:[%s383 + $0xd8] sm:$0xff]
      %v432 = vld [vmem:[%s383 + $0xe0] sm:$0x1]
      %v434 = vperm.slane %v403, 0
      %vm436 = vcmask 72704
      %v438 = vsel %vm436, %v404, 0
      %v441 = vsel %vm436, %v405, 0
      %v444 = vsel %vm436, %v406, 0
      %v447 = vsel %vm436, %v407, 0
      %v450 = vsel %vm436, %v408, 0
      %v453 = vsel %vm436, %v409, 0
      %v456 = vsel %vm436, %v410, 0
      %v459 = vsel %vm436, %v411, 0
      %v462 = vsel %vm436, %v412, 0
      %v465 = vsel %vm436, %v413, 0
      %v468 = vsel %vm436, %v414, 0
      %v471 = vsel %vm436, %v415, 0
      %v474 = vsel %vm436, %v416, 0
      %v477 = vsel %vm436, %v417, 0
      %v480 = vsel %vm436, %v418, 0
      %v483 = vsel %vm436, %v419, 0
      %v486 = vsel %vm436, %v420, 0
      %v489 = vsel %vm436, %v421, 0
      %v492 = vsel %vm436, %v422, 0
      %v495 = vsel %vm436, %v423, 0
      %v498 = vsel %vm436, %v424, 0
      %v501 = vsel %vm436, %v425, 0
      %v504 = vsel %vm436, %v426, 0
      %v507 = vsel %vm436, %v427, 0
      %v510 = vsel %vm436, %v428, 0
      %v513 = vsel %vm436, %v429, 0
      %v516 = vsel %vm436, %v430, 0
      %v519 = vsel %vm436, %v431, 0
      %v522 = vsel %vm436, %v432, 0
      %vm524 = vcmask 1040384
      %v526 = vsel %vm524, %v402, 0
      %528 = vmatpush.msra.mxu0 0.0
      %529 = vmatpush.msra.mxu0 0.0
      %530 = vmatpush.msra.mxu0 0.0
      %531 = vmatpush.msra.mxu0 0.0
      %532 = vmatpush.msra.mxu0 0.0
      %533 = vmatpush.msra.mxu0 0.0
      %534 = vmatpush.msra.mxu0 0.0
      %535 = vmatpush.msra.mxu0 0.0
      %536 = vmatpush.msra.mxu0 0.0
      %537 = vmatpush.msra.mxu0 0.0
      %538 = vmatpush.msra.mxu0 0.0
      %539 = vmatpush.msra.mxu0 0.0
      %540 = vmatpush.msra.mxu0 0.0
      %541 = vmatpush.msra.mxu0 0.0
      %542 = vmatpush.msra.mxu0 %v526
      %543 = vmatpush.msra.mxu0 %v401
      %544 = vmatmul.f32.gmra.mxu0 %v438
      %v545 = vpop.f32.mrf.mxu0
      %v546 = vadd.f32 %v434, %v545
      %547 = vmatmul.f32.gmra.mxu0 %v441
      %v548 = vpop.f32.mrf.mxu0
      %v549 = vadd.f32 %v434, %v548
      %550 = vmatmul.f32.gmra.mxu0 %v444
      %v551 = vpop.f32.mrf.mxu0
      %v552 = vadd.f32 %v434, %v551
      %553 = vmatmul.f32.gmra.mxu0 %v447
      %v554 = vpop.f32.mrf.mxu0
      %v555 = vadd.f32 %v434, %v554
      %556 = vmatmul.f32.gmra.mxu0 %v450
      %v557 = vpop.f32.mrf.mxu0
      %v558 = vadd.f32 %v434, %v557
      %559 = vmatmul.f32.gmra.mxu0 %v453
      %v560 = vpop.f32.mrf.mxu0
      %v561 = vadd.f32 %v434, %v560
      %562 = vmatmul.f32.gmra.mxu0 %v456
      %v563 = vpop.f32.mrf.mxu0
      %v564 = vadd.f32 %v434, %v563
      %565 = vmatmul.f32.gmra.mxu0 %v459
      %v566 = vpop.f32.mrf.mxu0
      %v567 = vadd.f32 %v434, %v566
      %568 = vmatmul.f32.gmra.mxu0 %v462
      %v569 = vpop.f32.mrf.mxu0
      %v570 = vadd.f32 %v434, %v569
      %571 = vmatmul.f32.gmra.mxu0 %v465
      %v572 = vpop.f32.mrf.mxu0
      %v573 = vadd.f32 %v434, %v572
      %574 = vmatmul.f32.gmra.mxu0 %v468
      %v575 = vpop.f32.mrf.mxu0
      %v576 = vadd.f32 %v434, %v575
      %577 = vmatmul.f32.gmra.mxu0 %v471
      %v578 = vpop.f32.mrf.mxu0
      %v579 = vadd.f32 %v434, %v578
      %580 = vmatmul.f32.gmra.mxu0 %v474
      %v581 = vpop.f32.mrf.mxu0
      %v582 = vadd.f32 %v434, %v581
      %583 = vmatmul.f32.gmra.mxu0 %v477
      %v584 = vpop.f32.mrf.mxu0
      %v585 = vadd.f32 %v434, %v584
      %586 = vmatmul.f32.gmra.mxu0 %v480
      %v587 = vpop.f32.mrf.mxu0
      %v588 = vadd.f32 %v434, %v587
      %589 = vmatmul.f32.gmra.mxu0 %v483
      %v590 = vpop.f32.mrf.mxu0
      %v591 = vadd.f32 %v434, %v590
      %592 = vmatmul.f32.gmra.mxu0 %v486
      %v593 = vpop.f32.mrf.mxu0
      %v594 = vadd.f32 %v434, %v593
      %595 = vmatmul.f32.gmra.mxu0 %v489
      %v596 = vpop.f32.mrf.mxu0
      %v597 = vadd.f32 %v434, %v596
      %598 = vmatmul.f32.gmra.mxu0 %v492
      %v599 = vpop.f32.mrf.mxu0
      %v600 = vadd.f32 %v434, %v599
      %601 = vmatmul.f32.gmra.mxu0 %v495
      %v602 = vpop.f32.mrf.mxu0
      %v603 = vadd.f32 %v434, %v602
      %604 = vmatmul.f32.gmra.mxu0 %v498
      %v605 = vpop.f32.mrf.mxu0
      %v606 = vadd.f32 %v434, %v605
      %607 = vmatmul.f32.gmra.mxu0 %v501
      %v608 = vpop.f32.mrf.mxu0
      %v609 = vadd.f32 %v434, %v608
      %610 = vmatmul.f32.gmra.mxu0 %v504
      %v611 = vpop.f32.mrf.mxu0
      %v612 = vadd.f32 %v434, %v611
      %613 = vmatmul.f32.gmra.mxu0 %v507
      %v614 = vpop.f32.mrf.mxu0
      %v615 = vadd.f32 %v434, %v614
      %616 = vmatmul.f32.gmra.mxu0 %v510
      %v617 = vpop.f32.mrf.mxu0
      %v618 = vadd.f32 %v434, %v617
      %619 = vmatmul.f32.gmra.mxu0 %v513
      %v620 = vpop.f32.mrf.mxu0
      %v621 = vadd.f32 %v434, %v620
      %622 = vmatmul.f32.gmra.mxu0 %v516
      %v623 = vpop.f32.mrf.mxu0
      %v624 = vadd.f32 %v434, %v623
      %625 = vmatmul.f32.gmra.mxu0 %v519
      %v626 = vpop.f32.mrf.mxu0
      %v627 = vadd.f32 %v434, %v626
      %628 = vmatmul.f32.gmra.mxu0 %v522
      %v629 = vpop.f32.mrf.mxu0
      %v630 = vadd.f32 %v434, %v629
      %631 = vdwg.mxu0
      %vm632 = vcmp.ge.f32.partialorder %v546, 0.0
      %vm633 = vcmp.ge.f32.partialorder %v549, 0.0
      %vm634 = vcmp.ge.f32.partialorder %v552, 0.0
      %vm635 = vcmp.ge.f32.partialorder %v555, 0.0
      %vm636 = vcmp.ge.f32.partialorder %v558, 0.0
      %vm637 = vcmp.ge.f32.partialorder %v561, 0.0
      %vm638 = vcmp.ge.f32.partialorder %v564, 0.0
      %vm639 = vcmp.ge.f32.partialorder %v567, 0.0
      %vm640 = vcmp.ge.f32.partialorder %v570, 0.0
      %vm641 = vcmp.ge.f32.partialorder %v573, 0.0
      %vm642 = vcmp.ge.f32.partialorder %v576, 0.0
      %vm643 = vcmp.ge.f32.partialorder %v579, 0.0
      %vm644 = vcmp.ge.f32.partialorder %v582, 0.0
      %vm645 = vcmp.ge.f32.partialorder %v585, 0.0
      %vm646 = vcmp.ge.f32.partialorder %v588, 0.0
      %vm647 = vcmp.ge.f32.partialorder %v591, 0.0
      %vm648 = vcmp.ge.f32.partialorder %v594, 0.0
      %vm649 = vcmp.ge.f32.partialorder %v597, 0.0
      %vm650 = vcmp.ge.f32.partialorder %v600, 0.0
      %vm651 = vcmp.ge.f32.partialorder %v603, 0.0
      %vm652 = vcmp.ge.f32.partialorder %v606, 0.0
      %vm653 = vcmp.ge.f32.partialorder %v609, 0.0
      %vm654 = vcmp.ge.f32.partialorder %v612, 0.0
      %vm655 = vcmp.ge.f32.partialorder %v615, 0.0
      %vm656 = vcmp.ge.f32.partialorder %v618, 0.0
      %vm657 = vcmp.ge.f32.partialorder %v621, 0.0
      %vm658 = vcmp.ge.f32.partialorder %v624, 0.0
      %vm659 = vcmp.ge.f32.partialorder %v627, 0.0
      %vm660 = vcmp.ge.f32.partialorder %v630, 0.0
      %v661 = vmul.f32 %v546, 0.01
      %v662 = vmul.f32 %v549, 0.01
      %v663 = vmul.f32 %v552, 0.01
      %v664 = vmul.f32 %v555, 0.01
      %v665 = vmul.f32 %v558, 0.01
      %v666 = vmul.f32 %v561, 0.01
      %v667 = vmul.f32 %v564, 0.01
      %v668 = vmul.f32 %v567, 0.01
      %v669 = vmul.f32 %v570, 0.01
      %v670 = vmul.f32 %v573, 0.01
      %v671 = vmul.f32 %v576, 0.01
      %v672 = vmul.f32 %v579, 0.01
      %v673 = vmul.f32 %v582, 0.01
      %v674 = vmul.f32 %v585, 0.01
      %v675 = vmul.f32 %v588, 0.01
      %v676 = vmul.f32 %v591, 0.01
      %v677 = vmul.f32 %v594, 0.01
      %v678 = vmul.f32 %v597, 0.01
      %v679 = vmul.f32 %v600, 0.01
      %v680 = vmul.f32 %v603, 0.01
      %v681 = vmul.f32 %v606, 0.01
      %v682 = vmul.f32 %v609, 0.01
      %v683 = vmul.f32 %v612, 0.01
      %v684 = vmul.f32 %v615, 0.01
      %v685 = vmul.f32 %v618, 0.01
      %v686 = vmul.f32 %v621, 0.01
      %v687 = vmul.f32 %v624, 0.01
      %v688 = vmul.f32 %v627, 0.01
      %v689 = vmul.f32 %v630, 0.01
      %v690 = vsel %vm632, %v546, %v661
      %v691 = vsel %vm633, %v549, %v662
      %v692 = vsel %vm634, %v552, %v663
      %v693 = vsel %vm635, %v555, %v664
      %v694 = vsel %vm636, %v558, %v665
      %v695 = vsel %vm637, %v561, %v666
      %v696 = vsel %vm638, %v564, %v667
      %v697 = vsel %vm639, %v567, %v668
      %v698 = vsel %vm640, %v570, %v669
      %v699 = vsel %vm641, %v573, %v670
      %v700 = vsel %vm642, %v576, %v671
      %v701 = vsel %vm643, %v579, %v672
      %v702 = vsel %vm644, %v582, %v673
      %v703 = vsel %vm645, %v585, %v674
      %v704 = vsel %vm646, %v588, %v675
      %v705 = vsel %vm647, %v591, %v676
      %v706 = vsel %vm648, %v594, %v677
      %v707 = vsel %vm649, %v597, %v678
      %v708 = vsel %vm650, %v600, %v679
      %v709 = vsel %vm651, %v603, %v680
      %v710 = vsel %vm652, %v606, %v681
      %v711 = vsel %vm653, %v609, %v682
      %v712 = vsel %vm654, %v612, %v683
      %v713 = vsel %vm655, %v615, %v684
      %v714 = vsel %vm656, %v618, %v685
      %v715 = vsel %vm657, %v621, %v686
      %v716 = vsel %vm658, %v624, %v687
      %v717 = vsel %vm659, %v627, %v688
      %v718 = vsel %vm660, %v630, %v689
      %vm719 = vcmask 31744
      %720 = vst.msk [vmem:[#allocation2] sm:$0xff] %vm719, %v690
      %721 = vst.msk [vmem:[#allocation2 + $0x8] sm:$0xff] %vm719, %v691
      %722 = vst.msk [vmem:[#allocation2 + $0x10] sm:$0xff] %vm719, %v692
      %723 = vst.msk [vmem:[#allocation2 + $0x18] sm:$0xff] %vm719, %v693
      %724 = vst.msk [vmem:[#allocation2 + $0x20] sm:$0xff] %vm719, %v694
      %725 = vst.msk [vmem:[#allocation2 + $0x28] sm:$0xff] %vm719, %v695
      %726 = vst.msk [vmem:[#allocation2 + $0x30] sm:$0xff] %vm719, %v696
      %727 = vst.msk [vmem:[#allocation2 + $0x38] sm:$0xff] %vm719, %v697
      %728 = vst.msk [vmem:[#allocation2 + $0x40] sm:$0xff] %vm719, %v698
      %729 = vst.msk [vmem:[#allocation2 + $0x48] sm:$0xff] %vm719, %v699
      %730 = vst.msk [vmem:[#allocation2 + $0x50] sm:$0xff] %vm719, %v700
      %731 = vst.msk [vmem:[#allocation2 + $0x58] sm:$0xff] %vm719, %v701
      %732 = vst.msk [vmem:[#allocation2 + $0x60] sm:$0xff] %vm719, %v702
      %733 = vst.msk [vmem:[#allocation2 + $0x68] sm:$0xff] %vm719, %v703
      %734 = vst.msk [vmem:[#allocation2 + $0x70] sm:$0xff] %vm719, %v704
      %735 = vst.msk [vmem:[#allocation2 + $0x78] sm:$0xff] %vm719, %v705
      %736 = vst.msk [vmem:[#allocation2 + $0x80] sm:$0xff] %vm719, %v706
      %737 = vst.msk [vmem:[#allocation2 + $0x88] sm:$0xff] %vm719, %v707
      %738 = vst.msk [vmem:[#allocation2 + $0x90] sm:$0xff] %vm719, %v708
      %739 = vst.msk [vmem:[#allocation2 + $0x98] sm:$0xff] %vm719, %v709
      %740 = vst.msk [vmem:[#allocation2 + $0xa0] sm:$0xff] %vm719, %v710
      %741 = vst.msk [vmem:[#allocation2 + $0xa8] sm:$0xff] %vm719, %v711
      %742 = vst.msk [vmem:[#allocation2 + $0xb0] sm:$0xff] %vm719, %v712
      %743 = vst.msk [vmem:[#allocation2 + $0xb8] sm:$0xff] %vm719, %v713
      %744 = vst.msk [vmem:[#allocation2 + $0xc0] sm:$0xff] %vm719, %v714
      %745 = vst.msk [vmem:[#allocation2 + $0xc8] sm:$0xff] %vm719, %v715
      %746 = vst.msk [vmem:[#allocation2 + $0xd0] sm:$0xff] %vm719, %v716
      %747 = vst.msk [vmem:[#allocation2 + $0xd8] sm:$0xff] %vm719, %v717
      %vm748 = vcmask 24576
      %749 = vst.msk [vmem:[#allocation2 + $0xe0] sm:$0x1] %vm748, %v718
      %v750 = vld [vmem:[%s4] sm:$0x1]
      %v751 = vld [vmem:[#allocation2] ss:$2 sm:$0x7f]
      %v752 = vld [vmem:[%s3] sm:$0xf]
      %s753 = scalar_lea.vmem [#allocation2], 1
      %v754 = vld [vmem:[%s753] ss:$2 sm:$0x7f]
      %s755 = scalar_lea.vmem %s3, 4
      %v756 = vld [vmem:[%s755] sm:$0xf]
      %v758 = vsel %vm719, %v754, 0
      %vm760 = vcmask 1043456
      %v762 = vsel %vm760, %v756, 0
      %764 = vmatpush.msra.mxu0 0.0
      %765 = vmatpush.msra.mxu0 0.0
      %766 = vmatpush.msra.mxu0 0.0
      %767 = vmatpush.msra.mxu0 0.0
      %768 = vmatpush.msra.mxu0 0.0
      %769 = vmatpush.msra.mxu0 0.0
      %770 = vmatpush.msra.mxu0 0.0
      %771 = vmatpush.msra.mxu0 0.0
      %772 = vmatpush.msra.mxu0 0.0
      %773 = vmatpush.msra.mxu0 0.0
      %774 = vmatpush.msra.mxu0 0.0
      %775 = vmatpush.msra.mxu0 0.0
      %776 = vmatpush.msra.mxu0 0.0
      %777 = vmatpush.msra.mxu0 0.0
      %778 = vmatpush.msra.mxu0 0.0
      %779 = vmatpush.msra.mxu0 %v762
      %780 = vmatmul.f32.gmra.mxu0 %v758
      %v781 = vpop.f32.mrf.mxu0
      %v782 = vadd.f32 0.0, %v781
      %783 = vdwg.mxu0
      %v785 = vsel %vm719, %v751, 0
      %v788 = vsel %vm760, %v752, 0
      %790 = vmatpush.msra.mxu0 0.0
      %791 = vmatpush.msra.mxu0 0.0
      %792 = vmatpush.msra.mxu0 0.0
      %793 = vmatpush.msra.mxu0 0.0
      %794 = vmatpush.msra.mxu0 0.0
      %795 = vmatpush.msra.mxu0 0.0
      %796 = vmatpush.msra.mxu0 0.0
      %797 = vmatpush.msra.mxu0 0.0
      %798 = vmatpush.msra.mxu0 0.0
      %799 = vmatpush.msra.mxu0 0.0
      %800 = vmatpush.msra.mxu0 0.0
      %801 = vmatpush.msra.mxu0 0.0
      %802 = vmatpush.msra.mxu0 0.0
      %803 = vmatpush.msra.mxu0 0.0
      %804 = vmatpush.msra.mxu0 0.0
      %805 = vmatpush.msra.mxu0 %v788
      %806 = vmatmul.f32.gmra.mxu0 %v785
      %v807 = vpop.f32.mrf.mxu0
      %v808 = vadd.f32 %v782, %v807
      %809 = vdwg.mxu0
      %s810 = scalar_lea.vmem [#allocation2], 2
      %v811 = vld [vmem:[%s810] ss:$2 sm:$0x7f]
      %s812 = scalar_lea.vmem %s3, 8
      %v813 = vld [vmem:[%s812] sm:$0xf]
      %v815 = vsel %vm719, %v811, 0
      %v818 = vsel %vm760, %v813, 0
      %820 = vmatpush.msra.mxu0 0.0
      %821 = vmatpush.msra.mxu0 0.0
      %822 = vmatpush.msra.mxu0 0.0
      %823 = vmatpush.msra.mxu0 0.0
      %824 = vmatpush.msra.mxu0 0.0
      %825 = vmatpush.msra.mxu0 0.0
      %826 = vmatpush.msra.mxu0 0.0
      %827 = vmatpush.msra.mxu0 0.0
      %828 = vmatpush.msra.mxu0 0.0
      %829 = vmatpush.msra.mxu0 0.0
      %830 = vmatpush.msra.mxu0 0.0
      %831 = vmatpush.msra.mxu0 0.0
      %832 = vmatpush.msra.mxu0 0.0
      %833 = vmatpush.msra.mxu0 0.0
      %834 = vmatpush.msra.mxu0 0.0
      %835 = vmatpush.msra.mxu0 %v818
      %836 = vmatmul.f32.gmra.mxu0 %v815
      %v837 = vpop.f32.mrf.mxu0
      %v838 = vadd.f32 0.0, %v837
      %839 = vdwg.mxu0
      %v840 = vadd.f32 %v808, %v838
      %s841 = scalar_lea.vmem [#allocation2], 15
      %v842 = vld [vmem:[%s841] ss:$2 sm:$0x7f]
      %s843 = scalar_lea.vmem %s3, 12
      %v844 = vld [vmem:[%s843] sm:$0xf]
      %v846 = vsel %vm719, %v842, 0
      %v849 = vsel %vm760, %v844, 0
      %851 = vmatpush.msra.mxu0 0.0
      %852 = vmatpush.msra.mxu0 0.0
      %853 = vmatpush.msra.mxu0 0.0
      %854 = vmatpush.msra.mxu0 0.0
      %855 = vmatpush.msra.mxu0 0.0
      %856 = vmatpush.msra.mxu0 0.0
      %857 = vmatpush.msra.mxu0 0.0
      %858 = vmatpush.msra.mxu0 0.0
      %859 = vmatpush.msra.mxu0 0.0
      %860 = vmatpush.msra.mxu0 0.0
      %861 = vmatpush.msra.mxu0 0.0
      %862 = vmatpush.msra.mxu0 0.0
      %863 = vmatpush.msra.mxu0 0.0
      %864 = vmatpush.msra.mxu0 0.0
      %865 = vmatpush.msra.mxu0 0.0
      %866 = vmatpush.msra.mxu0 %v849
      %867 = vmatmul.f32.gmra.mxu0 %v846
      %v868 = vpop.f32.mrf.mxu0
      %v869 = vadd.f32 0.0, %v868
      %870 = vdwg.mxu0
      %v871 = vadd.f32 %v840, %v869
      %s872 = scalar_lea.vmem [#allocation2], 16
      %v873 = vld [vmem:[%s872] ss:$2 sm:$0x7f]
      %s874 = scalar_lea.vmem %s3, 16
      %v875 = vld [vmem:[%s874] sm:$0xf]
      %v877 = vsel %vm719, %v873, 0
      %v880 = vsel %vm760, %v875, 0
      %882 = vmatpush.msra.mxu0 0.0
      %883 = vmatpush.msra.mxu0 0.0
      %884 = vmatpush.msra.mxu0 0.0
      %885 = vmatpush.msra.mxu0 0.0
      %886 = vmatpush.msra.mxu0 0.0
      %887 = vmatpush.msra.mxu0 0.0
      %888 = vmatpush.msra.mxu0 0.0
      %889 = vmatpush.msra.mxu0 0.0
      %890 = vmatpush.msra.mxu0 0.0
      %891 = vmatpush.msra.mxu0 0.0
      %892 = vmatpush.msra.mxu0 0.0
      %893 = vmatpush.msra.mxu0 0.0
      %894 = vmatpush.msra.mxu0 0.0
      %895 = vmatpush.msra.mxu0 0.0
      %896 = vmatpush.msra.mxu0 0.0
      %897 = vmatpush.msra.mxu0 %v880
      %898 = vmatmul.f32.gmra.mxu0 %v877
      %v899 = vpop.f32.mrf.mxu0
      %v900 = vadd.f32 0.0, %v899
      %901 = vdwg.mxu0
      %v902 = vadd.f32 %v871, %v900
      %s903 = scalar_lea.vmem [#allocation2], 17
      %v904 = vld [vmem:[%s903] ss:$2 sm:$0x7f]
      %s905 = scalar_lea.vmem %s3, 20
      %v906 = vld [vmem:[%s905] sm:$0xf]
      %v908 = vsel %vm719, %v904, 0
      %v911 = vsel %vm760, %v906, 0
      %913 = vmatpush.msra.mxu0 0.0
      %914 = vmatpush.msra.mxu0 0.0
      %915 = vmatpush.msra.mxu0 0.0
      %916 = vmatpush.msra.mxu0 0.0
      %917 = vmatpush.msra.mxu0 0.0
      %918 = vmatpush.msra.mxu0 0.0
      %919 = vmatpush.msra.mxu0 0.0
      %920 = vmatpush.msra.mxu0 0.0
      %921 = vmatpush.msra.mxu0 0.0
      %922 = vmatpush.msra.mxu0 0.0
      %923 = vmatpush.msra.mxu0 0.0
      %924 = vmatpush.msra.mxu0 0.0
      %925 = vmatpush.msra.mxu0 0.0
      %926 = vmatpush.msra.mxu0 0.0
      %927 = vmatpush.msra.mxu0 0.0
      %928 = vmatpush.msra.mxu0 %v911
      %929 = vmatmul.f32.gmra.mxu0 %v908
      %v930 = vpop.f32.mrf.mxu0
      %v931 = vadd.f32 0.0, %v930
      %932 = vdwg.mxu0
      %v933 = vadd.f32 %v902, %v931
      %s934 = scalar_lea.vmem [#allocation2], 30
      %v935 = vld [vmem:[%s934] ss:$2 sm:$0x7f]
      %s936 = scalar_lea.vmem %s3, 24
      %v937 = vld [vmem:[%s936] sm:$0xf]
      %v939 = vsel %vm719, %v935, 0
      %v942 = vsel %vm760, %v937, 0
      %944 = vmatpush.msra.mxu0 0.0
      %945 = vmatpush.msra.mxu0 0.0
      %946 = vmatpush.msra.mxu0 0.0
      %947 = vmatpush.msra.mxu0 0.0
      %948 = vmatpush.msra.mxu0 0.0
      %949 = vmatpush.msra.mxu0 0.0
      %950 = vmatpush.msra.mxu0 0.0
      %951 = vmatpush.msra.mxu0 0.0
      %952 = vmatpush.msra.mxu0 0.0
      %953 = vmatpush.msra.mxu0 0.0
      %954 = vmatpush.msra.mxu0 0.0
      %955 = vmatpush.msra.mxu0 0.0
      %956 = vmatpush.msra.mxu0 0.0
      %957 = vmatpush.msra.mxu0 0.0
      %958 = vmatpush.msra.mxu0 0.0
      %959 = vmatpush.msra.mxu0 %v942
      %960 = vmatmul.f32.gmra.mxu0 %v939
      %v961 = vpop.f32.mrf.mxu0
      %v962 = vadd.f32 0.0, %v961
      %963 = vdwg.mxu0
      %v964 = vadd.f32 %v933, %v962
      %s965 = scalar_lea.vmem [#allocation2], 31
      %v966 = vld [vmem:[%s965] ss:$2 sm:$0x7f]
      %s967 = scalar_lea.vmem %s3, 28
      %v968 = vld [vmem:[%s967] sm:$0xf]
      %v970 = vsel %vm719, %v966, 0
      %v973 = vsel %vm760, %v968, 0
      %975 = vmatpush.msra.mxu0 0.0
      %976 = vmatpush.msra.mxu0 0.0
      %977 = vmatpush.msra.mxu0 0.0
      %978 = vmatpush.msra.mxu0 0.0
      %979 = vmatpush.msra.mxu0 0.0
      %980 = vmatpush.msra.mxu0 0.0
      %981 = vmatpush.msra.mxu0 0.0
      %982 = vmatpush.msra.mxu0 0.0
      %983 = vmatpush.msra.mxu0 0.0
      %984 = vmatpush.msra.mxu0 0.0
      %985 = vmatpush.msra.mxu0 0.0
      %986 = vmatpush.msra.mxu0 0.0
      %987 = vmatpush.msra.mxu0 0.0
      %988 = vmatpush.msra.mxu0 0.0
      %989 = vmatpush.msra.mxu0 0.0
      %990 = vmatpush.msra.mxu0 %v973
      %991 = vmatmul.f32.gmra.mxu0 %v970
      %v992 = vpop.f32.mrf.mxu0
      %v993 = vadd.f32 0.0, %v992
      %994 = vdwg.mxu0
      %v995 = vadd.f32 %v964, %v993
      %s996 = scalar_lea.vmem [#allocation2], 32
      %v997 = vld [vmem:[%s996] ss:$2 sm:$0x7f]
      %s998 = scalar_lea.vmem %s3, 32
      %v999 = vld [vmem:[%s998] sm:$0xf]
      %v1001 = vsel %vm719, %v997, 0
      %v1004 = vsel %vm760, %v999, 0
      %1006 = vmatpush.msra.mxu0 0.0
      %1007 = vmatpush.msra.mxu0 0.0
      %1008 = vmatpush.msra.mxu0 0.0
      %1009 = vmatpush.msra.mxu0 0.0
      %1010 = vmatpush.msra.mxu0 0.0
      %1011 = vmatpush.msra.mxu0 0.0
      %1012 = vmatpush.msra.mxu0 0.0
      %1013 = vmatpush.msra.mxu0 0.0
      %1014 = vmatpush.msra.mxu0 0.0
      %1015 = vmatpush.msra.mxu0 0.0
      %1016 = vmatpush.msra.mxu0 0.0
      %1017 = vmatpush.msra.mxu0 0.0
      %1018 = vmatpush.msra.mxu0 0.0
      %1019 = vmatpush.msra.mxu0 0.0
      %1020 = vmatpush.msra.mxu0 0.0
      %1021 = vmatpush.msra.mxu0 %v1004
      %1022 = vmatmul.f32.gmra.mxu0 %v1001
      %v1023 = vpop.f32.mrf.mxu0
      %v1024 = vadd.f32 0.0, %v1023
      %1025 = vdwg.mxu0
      %v1026 = vadd.f32 %v995, %v1024
      %v1028 = vperm.slane %v750, 0
      %v1030 = vadd.f32 %v1026, %v1028
      %vm1031 = vcmp.ge.f32.partialorder %v1030, 0.0
      %v1032 = vmul.f32 %v1030, 0.01
      %v1033 = vsel %vm1031, %v1030, %v1032
      %vm1034 = vcmask 63488
      %1035 = vst.msk [vmem:[#allocation3] sm:$0x7f] %vm1034, %v1033
      %v1036 = vld [vmem:[%s934] ss:$2 sm:$0x7f]
      %v1037 = vld [vmem:[%s3] sm:$0xf]
      %v1038 = vld [vmem:[%s965] ss:$2 sm:$0x7f]
      %v1039 = vld [vmem:[%s755] sm:$0xf]
      %v1041 = vsel %vm719, %v1038, 0
      %v1044 = vsel %vm760, %v1039, 0
      %1046 = vmatpush.msra.mxu0 0.0
      %1047 = vmatpush.msra.mxu0 0.0
      %1048 = vmatpush.msra.mxu0 0.0
      %1049 = vmatpush.msra.mxu0 0.0
      %1050 = vmatpush.msra.mxu0 0.0
      %1051 = vmatpush.msra.mxu0 0.0
      %1052 = vmatpush.msra.mxu0 0.0
      %1053 = vmatpush.msra.mxu0 0.0
      %1054 = vmatpush.msra.mxu0 0.0
      %1055 = vmatpush.msra.mxu0 0.0
      %1056 = vmatpush.msra.mxu0 0.0
      %1057 = vmatpush.msra.mxu0 0.0
      %1058 = vmatpush.msra.mxu0 0.0
      %1059 = vmatpush.msra.mxu0 0.0
      %1060 = vmatpush.msra.mxu0 0.0
      %1061 = vmatpush.msra.mxu0 %v1044
      %1062 = vmatmul.f32.gmra.mxu0 %v1041
      %v1063 = vpop.f32.mrf.mxu0
      %v1064 = vadd.f32 0.0, %v1063
      %1065 = vdwg.mxu0
      %v1067 = vsel %vm719, %v1036, 0
      %v1070 = vsel %vm760, %v1037, 0
      %1072 = vmatpush.msra.mxu0 0.0
      %1073 = vmatpush.msra.mxu0 0.0
      %1074 = vmatpush.msra.mxu0 0.0
      %1075 = vmatpush.msra.mxu0 0.0
      %1076 = vmatpush.msra.mxu0 0.0
      %1077 = vmatpush.msra.mxu0 0.0
      %1078 = vmatpush.msra.mxu0 0.0
      %1079 = vmatpush.msra.mxu0 0.0
      %1080 = vmatpush.msra.mxu0 0.0
      %1081 = vmatpush.msra.mxu0 0.0
      %1082 = vmatpush.msra.mxu0 0.0
      %1083 = vmatpush.msra.mxu0 0.0
      %1084 = vmatpush.msra.mxu0 0.0
      %1085 = vmatpush.msra.mxu0 0.0
      %1086 = vmatpush.msra.mxu0 0.0
      %1087 = vmatpush.msra.mxu0 %v1070
      %1088 = vmatmul.f32.gmra.mxu0 %v1067
      %v1089 = vpop.f32.mrf.mxu0
      %v1090 = vadd.f32 %v1064, %v1089
      %1091 = vdwg.mxu0
      %v1092 = vld [vmem:[%s996] ss:$2 sm:$0x7f]
      %v1093 = vld [vmem:[%s812] sm:$0xf]
      %v1095 = vsel %vm719, %v1092, 0
      %v1098 = vsel %vm760, %v1093, 0
      %1100 = vmatpush.msra.mxu0 0.0
      %1101 = vmatpush.msra.mxu0 0.0
      %1102 = vmatpush.msra.mxu0 0.0
      %1103 = vmatpush.msra.mxu0 0.0
      %1104 = vmatpush.msra.mxu0 0.0
      %1105 = vmatpush.msra.mxu0 0.0
      %1106 = vmatpush.msra.mxu0 0.0
      %1107 = vmatpush.msra.mxu0 0.0
      %1108 = vmatpush.msra.mxu0 0.0
      %1109 = vmatpush.msra.mxu0 0.0
      %1110 = vmatpush.msra.mxu0 0.0
      %1111 = vmatpush.msra.mxu0 0.0
      %1112 = vmatpush.msra.mxu0 0.0
      %1113 = vmatpush.msra.mxu0 0.0
      %1114 = vmatpush.msra.mxu0 0.0
      %1115 = vmatpush.msra.mxu0 %v1098
      %1116 = vmatmul.f32.gmra.mxu0 %v1095
      %v1117 = vpop.f32.mrf.mxu0
      %v1118 = vadd.f32 0.0, %v1117
      %1119 = vdwg.mxu0
      %v1120 = vadd.f32 %v1090, %v1118
      %s1121 = scalar_lea.vmem [#allocation2], 45
      %v1122 = vld [vmem:[%s1121] ss:$2 sm:$0x7f]
      %v1123 = vld [vmem:[%s843] sm:$0xf]
      %v1125 = vsel %vm719, %v1122, 0
      %v1128 = vsel %vm760, %v1123, 0
      %1130 = vmatpush.msra.mxu0 0.0
      %1131 = vmatpush.msra.mxu0 0.0
      %1132 = vmatpush.msra.mxu0 0.0
      %1133 = vmatpush.msra.mxu0 0.0
      %1134 = vmatpush.msra.mxu0 0.0
      %1135 = vmatpush.msra.mxu0 0.0
      %1136 = vmatpush.msra.mxu0 0.0
      %1137 = vmatpush.msra.mxu0 0.0
      %1138 = vmatpush.msra.mxu0 0.0
      %1139 = vmatpush.msra.mxu0 0.0
      %1140 = vmatpush.msra.mxu0 0.0
      %1141 = vmatpush.msra.mxu0 0.0
      %1142 = vmatpush.msra.mxu0 0.0
      %1143 = vmatpush.msra.mxu0 0.0
      %1144 = vmatpush.msra.mxu0 0.0
      %1145 = vmatpush.msra.mxu0 %v1128
      %1146 = vmatmul.f32.gmra.mxu0 %v1125
      %v1147 = vpop.f32.mrf.mxu0
      %v1148 = vadd.f32 0.0, %v1147
      %1149 = vdwg.mxu0
      %v1150 = vadd.f32 %v1120, %v1148
      %s1151 = scalar_lea.vmem [#allocation2], 46
      %v1152 = vld [vmem:[%s1151] ss:$2 sm:$0x7f]
      %v1153 = vld [vmem:[%s874] sm:$0xf]
      %v1155 = vsel %vm719, %v1152, 0
      %v1158 = vsel %vm760, %v1153, 0
      %1160 = vmatpush.msra.mxu0 0.0
      %1161 = vmatpush.msra.mxu0 0.0
      %1162 = vmatpush.msra.mxu0 0.0
      %1163 = vmatpush.msra.mxu0 0.0
      %1164 = vmatpush.msra.mxu0 0.0
      %1165 = vmatpush.msra.mxu0 0.0
      %1166 = vmatpush.msra.mxu0 0.0
      %1167 = vmatpush.msra.mxu0 0.0
      %1168 = vmatpush.msra.mxu0 0.0
      %1169 = vmatpush.msra.mxu0 0.0
      %1170 = vmatpush.msra.mxu0 0.0
      %1171 = vmatpush.msra.mxu0 0.0
      %1172 = vmatpush.msra.mxu0 0.0
      %1173 = vmatpush.msra.mxu0 0.0
      %1174 = vmatpush.msra.mxu0 0.0
      %1175 = vmatpush.msra.mxu0 %v1158
      %1176 = vmatmul.f32.gmra.mxu0 %v1155
      %v1177 = vpop.f32.mrf.mxu0
      %v1178 = vadd.f32 0.0, %v1177
      %1179 = vdwg.mxu0
      %v1180 = vadd.f32 %v1150, %v1178
      %s1181 = scalar_lea.vmem [#allocation2], 47
      %v1182 = vld [vmem:[%s1181] ss:$2 sm:$0x7f]
      %v1183 = vld [vmem:[%s905] sm:$0xf]
      %v1185 = vsel %vm719, %v1182, 0
      %v1188 = vsel %vm760, %v1183, 0
      %1190 = vmatpush.msra.mxu0 0.0
      %1191 = vmatpush.msra.mxu0 0.0
      %1192 = vmatpush.msra.mxu0 0.0
      %1193 = vmatpush.msra.mxu0 0.0
      %1194 = vmatpush.msra.mxu0 0.0
      %1195 = vmatpush.msra.mxu0 0.0
      %1196 = vmatpush.msra.mxu0 0.0
      %1197 = vmatpush.msra.mxu0 0.0
      %1198 = vmatpush.msra.mxu0 0.0
      %1199 = vmatpush.msra.mxu0 0.0
      %1200 = vmatpush.msra.mxu0 0.0
      %1201 = vmatpush.msra.mxu0 0.0
      %1202 = vmatpush.msra.mxu0 0.0
      %1203 = vmatpush.msra.mxu0 0.0
      %1204 = vmatpush.msra.mxu0 0.0
      %1205 = vmatpush.msra.mxu0 %v1188
      %1206 = vmatmul.f32.gmra.mxu0 %v1185
      %v1207 = vpop.f32.mrf.mxu0
      %v1208 = vadd.f32 0.0, %v1207
      %1209 = vdwg.mxu0
      %v1210 = vadd.f32 %v1180, %v1208
      %s1211 = scalar_lea.vmem [#allocation2], 60
      %v1212 = vld [vmem:[%s1211] ss:$2 sm:$0x7f]
      %v1213 = vld [vmem:[%s936] sm:$0xf]
      %v1215 = vsel %vm719, %v1212, 0
      %v1218 = vsel %vm760, %v1213, 0
      %1220 = vmatpush.msra.mxu0 0.0
      %1221 = vmatpush.msra.mxu0 0.0
      %1222 = vmatpush.msra.mxu0 0.0
      %1223 = vmatpush.msra.mxu0 0.0
      %1224 = vmatpush.msra.mxu0 0.0
      %1225 = vmatpush.msra.mxu0 0.0
      %1226 = vmatpush.msra.mxu0 0.0
      %1227 = vmatpush.msra.mxu0 0.0
      %1228 = vmatpush.msra.mxu0 0.0
      %1229 = vmatpush.msra.mxu0 0.0
      %1230 = vmatpush.msra.mxu0 0.0
      %1231 = vmatpush.msra.mxu0 0.0
      %1232 = vmatpush.msra.mxu0 0.0
      %1233 = vmatpush.msra.mxu0 0.0
      %1234 = vmatpush.msra.mxu0 0.0
      %1235 = vmatpush.msra.mxu0 %v1218
      %1236 = vmatmul.f32.gmra.mxu0 %v1215
      %v1237 = vpop.f32.mrf.mxu0
      %v1238 = vadd.f32 0.0, %v1237
      %1239 = vdwg.mxu0
      %v1240 = vadd.f32 %v1210, %v1238
      %s1241 = scalar_lea.vmem [#allocation2], 61
      %v1242 = vld [vmem:[%s1241] ss:$2 sm:$0x7f]
      %v1243 = vld [vmem:[%s967] sm:$0xf]
      %v1245 = vsel %vm719, %v1242, 0
      %v1248 = vsel %vm760, %v1243, 0
      %1250 = vmatpush.msra.mxu0 0.0
      %1251 = vmatpush.msra.mxu0 0.0
      %1252 = vmatpush.msra.mxu0 0.0
      %1253 = vmatpush.msra.mxu0 0.0
      %1254 = vmatpush.msra.mxu0 0.0
      %1255 = vmatpush.msra.mxu0 0.0
      %1256 = vmatpush.msra.mxu0 0.0
      %1257 = vmatpush.msra.mxu0 0.0
      %1258 = vmatpush.msra.mxu0 0.0
      %1259 = vmatpush.msra.mxu0 0.0
      %1260 = vmatpush.msra.mxu0 0.0
      %1261 = vmatpush.msra.mxu0 0.0
      %1262 = vmatpush.msra.mxu0 0.0
      %1263 = vmatpush.msra.mxu0 0.0
      %1264 = vmatpush.msra.mxu0 0.0
      %1265 = vmatpush.msra.mxu0 %v1248
      %1266 = vmatmul.f32.gmra.mxu0 %v1245
      %v1267 = vpop.f32.mrf.mxu0
      %v1268 = vadd.f32 0.0, %v1267
      %1269 = vdwg.mxu0
      %v1270 = vadd.f32 %v1240, %v1268
      %s1271 = scalar_lea.vmem [#allocation2], 62
      %v1272 = vld [vmem:[%s1271] ss:$2 sm:$0x7f]
      %v1273 = vld [vmem:[%s998] sm:$0xf]
      %v1275 = vsel %vm719, %v1272, 0
      %v1278 = vsel %vm760, %v1273, 0
      %1280 = vmatpush.msra.mxu0 0.0
      %1281 = vmatpush.msra.mxu0 0.0
      %1282 = vmatpush.msra.mxu0 0.0
      %1283 = vmatpush.msra.mxu0 0.0
      %1284 = vmatpush.msra.mxu0 0.0
      %1285 = vmatpush.msra.mxu0 0.0
      %1286 = vmatpush.msra.mxu0 0.0
      %1287 = vmatpush.msra.mxu0 0.0
      %1288 = vmatpush.msra.mxu0 0.0
      %1289 = vmatpush.msra.mxu0 0.0
      %1290 = vmatpush.msra.mxu0 0.0
      %1291 = vmatpush.msra.mxu0 0.0
      %1292 = vmatpush.msra.mxu0 0.0
      %1293 = vmatpush.msra.mxu0 0.0
      %1294 = vmatpush.msra.mxu0 0.0
      %1295 = vmatpush.msra.mxu0 %v1278
      %1296 = vmatmul.f32.gmra.mxu0 %v1275
      %v1297 = vpop.f32.mrf.mxu0
      %v1298 = vadd.f32 0.0, %v1297
      %1299 = vdwg.mxu0
      %v1300 = vadd.f32 %v1270, %v1298
      %v1301 = vadd.f32 %v1300, %v1028
      %vm1302 = vcmp.ge.f32.partialorder %v1301, 0.0
      %v1303 = vmul.f32 %v1301, 0.01
      %v1304 = vsel %vm1302, %v1301, %v1303
      %1305 = vst.msk [vmem:[#allocation3 + $0x7] sm:$0x7f] %vm1034, %v1304
      %v1306 = vld [vmem:[%s1211] ss:$2 sm:$0x7f]
      %v1307 = vld [vmem:[%s3] sm:$0xf]
      %v1308 = vld [vmem:[%s1241] ss:$2 sm:$0x7f]
      %v1309 = vld [vmem:[%s755] sm:$0xf]
      %v1311 = vsel %vm719, %v1308, 0
      %v1314 = vsel %vm760, %v1309, 0
      %1316 = vmatpush.msra.mxu0 0.0
      %1317 = vmatpush.msra.mxu0 0.0
      %1318 = vmatpush.msra.mxu0 0.0
      %1319 = vmatpush.msra.mxu0 0.0
      %1320 = vmatpush.msra.mxu0 0.0
      %1321 = vmatpush.msra.mxu0 0.0
      %1322 = vmatpush.msra.mxu0 0.0
      %1323 = vmatpush.msra.mxu0 0.0
      %1324 = vmatpush.msra.mxu0 0.0
      %1325 = vmatpush.msra.mxu0 0.0
      %1326 = vmatpush.msra.mxu0 0.0
      %1327 = vmatpush.msra.mxu0 0.0
      %1328 = vmatpush.msra.mxu0 0.0
      %1329 = vmatpush.msra.mxu0 0.0
      %1330 = vmatpush.msra.mxu0 0.0
      %1331 = vmatpush.msra.mxu0 %v1314
      %1332 = vmatmul.f32.gmra.mxu0 %v1311
      %v1333 = vpop.f32.mrf.mxu0
      %v1334 = vadd.f32 0.0, %v1333
      %1335 = vdwg.mxu0
      %v1337 = vsel %vm719, %v1306, 0
      %v1340 = vsel %vm760, %v1307, 0
      %1342 = vmatpush.msra.mxu0 0.0
      %1343 = vmatpush.msra.mxu0 0.0
      %1344 = vmatpush.msra.mxu0 0.0
      %1345 = vmatpush.msra.mxu0 0.0
      %1346 = vmatpush.msra.mxu0 0.0
      %1347 = vmatpush.msra.mxu0 0.0
      %1348 = vmatpush.msra.mxu0 0.0
      %1349 = vmatpush.msra.mxu0 0.0
      %1350 = vmatpush.msra.mxu0 0.0
      %1351 = vmatpush.msra.mxu0 0.0
      %1352 = vmatpush.msra.mxu0 0.0
      %1353 = vmatpush.msra.mxu0 0.0
      %1354 = vmatpush.msra.mxu0 0.0
      %1355 = vmatpush.msra.mxu0 0.0
      %1356 = vmatpush.msra.mxu0 0.0
      %1357 = vmatpush.msra.mxu0 %v1340
      %1358 = vmatmul.f32.gmra.mxu0 %v1337
      %v1359 = vpop.f32.mrf.mxu0
      %v1360 = vadd.f32 %v1334, %v1359
      %1361 = vdwg.mxu0
      %v1362 = vld [vmem:[%s1271] ss:$2 sm:$0x7f]
      %v1363 = vld [vmem:[%s812] sm:$0xf]
      %v1365 = vsel %vm719, %v1362, 0
      %v1368 = vsel %vm760, %v1363, 0
      %1370 = vmatpush.msra.mxu0 0.0
      %1371 = vmatpush.msra.mxu0 0.0
      %1372 = vmatpush.msra.mxu0 0.0
      %1373 = vmatpush.msra.mxu0 0.0
      %1374 = vmatpush.msra.mxu0 0.0
      %1375 = vmatpush.msra.mxu0 0.0
      %1376 = vmatpush.msra.mxu0 0.0
      %1377 = vmatpush.msra.mxu0 0.0
      %1378 = vmatpush.msra.mxu0 0.0
      %1379 = vmatpush.msra.mxu0 0.0
      %1380 = vmatpush.msra.mxu0 0.0
      %1381 = vmatpush.msra.mxu0 0.0
      %1382 = vmatpush.msra.mxu0 0.0
      %1383 = vmatpush.msra.mxu0 0.0
      %1384 = vmatpush.msra.mxu0 0.0
      %1385 = vmatpush.msra.mxu0 %v1368
      %1386 = vmatmul.f32.gmra.mxu0 %v1365
      %v1387 = vpop.f32.mrf.mxu0
      %v1388 = vadd.f32 0.0, %v1387
      %1389 = vdwg.mxu0
      %v1390 = vadd.f32 %v1360, %v1388
      %s1391 = scalar_lea.vmem [#allocation2], 75
      %v1392 = vld [vmem:[%s1391] ss:$2 sm:$0x7f]
      %v1393 = vld [vmem:[%s843] sm:$0xf]
      %v1395 = vsel %vm719, %v1392, 0
      %v1398 = vsel %vm760, %v1393, 0
      %1400 = vmatpush.msra.mxu0 0.0
      %1401 = vmatpush.msra.mxu0 0.0
      %1402 = vmatpush.msra.mxu0 0.0
      %1403 = vmatpush.msra.mxu0 0.0
      %1404 = vmatpush.msra.mxu0 0.0
      %1405 = vmatpush.msra.mxu0 0.0
      %1406 = vmatpush.msra.mxu0 0.0
      %1407 = vmatpush.msra.mxu0 0.0
      %1408 = vmatpush.msra.mxu0 0.0
      %1409 = vmatpush.msra.mxu0 0.0
      %1410 = vmatpush.msra.mxu0 0.0
      %1411 = vmatpush.msra.mxu0 0.0
      %1412 = vmatpush.msra.mxu0 0.0
      %1413 = vmatpush.msra.mxu0 0.0
      %1414 = vmatpush.msra.mxu0 0.0
      %1415 = vmatpush.msra.mxu0 %v1398
      %1416 = vmatmul.f32.gmra.mxu0 %v1395
      %v1417 = vpop.f32.mrf.mxu0
      %v1418 = vadd.f32 0.0, %v1417
      %1419 = vdwg.mxu0
      %v1420 = vadd.f32 %v1390, %v1418
      %s1421 = scalar_lea.vmem [#allocation2], 76
      %v1422 = vld [vmem:[%s1421] ss:$2 sm:$0x7f]
      %v1423 = vld [vmem:[%s874] sm:$0xf]
      %v1425 = vsel %vm719, %v1422, 0
      %v1428 = vsel %vm760, %v1423, 0
      %1430 = vmatpush.msra.mxu0 0.0
      %1431 = vmatpush.msra.mxu0 0.0
      %1432 = vmatpush.msra.mxu0 0.0
      %1433 = vmatpush.msra.mxu0 0.0
      %1434 = vmatpush.msra.mxu0 0.0
      %1435 = vmatpush.msra.mxu0 0.0
      %1436 = vmatpush.msra.mxu0 0.0
      %1437 = vmatpush.msra.mxu0 0.0
      %1438 = vmatpush.msra.mxu0 0.0
      %1439 = vmatpush.msra.mxu0 0.0
      %1440 = vmatpush.msra.mxu0 0.0
      %1441 = vmatpush.msra.mxu0 0.0
      %1442 = vmatpush.msra.mxu0 0.0
      %1443 = vmatpush.msra.mxu0 0.0
      %1444 = vmatpush.msra.mxu0 0.0
      %1445 = vmatpush.msra.mxu0 %v1428
      %1446 = vmatmul.f32.gmra.mxu0 %v1425
      %v1447 = vpop.f32.mrf.mxu0
      %v1448 = vadd.f32 0.0, %v1447
      %1449 = vdwg.mxu0
      %v1450 = vadd.f32 %v1420, %v1448
      %s1451 = scalar_lea.vmem [#allocation2], 77
      %v1452 = vld [vmem:[%s1451] ss:$2 sm:$0x7f]
      %v1453 = vld [vmem:[%s905] sm:$0xf]
      %v1455 = vsel %vm719, %v1452, 0
      %v1458 = vsel %vm760, %v1453, 0
      %1460 = vmatpush.msra.mxu0 0.0
      %1461 = vmatpush.msra.mxu0 0.0
      %1462 = vmatpush.msra.mxu0 0.0
      %1463 = vmatpush.msra.mxu0 0.0
      %1464 = vmatpush.msra.mxu0 0.0
      %1465 = vmatpush.msra.mxu0 0.0
      %1466 = vmatpush.msra.mxu0 0.0
      %1467 = vmatpush.msra.mxu0 0.0
      %1468 = vmatpush.msra.mxu0 0.0
      %1469 = vmatpush.msra.mxu0 0.0
      %1470 = vmatpush.msra.mxu0 0.0
      %1471 = vmatpush.msra.mxu0 0.0
      %1472 = vmatpush.msra.mxu0 0.0
      %1473 = vmatpush.msra.mxu0 0.0
      %1474 = vmatpush.msra.mxu0 0.0
      %1475 = vmatpush.msra.mxu0 %v1458
      %1476 = vmatmul.f32.gmra.mxu0 %v1455
      %v1477 = vpop.f32.mrf.mxu0
      %v1478 = vadd.f32 0.0, %v1477
      %1479 = vdwg.mxu0
      %v1480 = vadd.f32 %v1450, %v1478
      %s1481 = scalar_lea.vmem [#allocation2], 90
      %v1482 = vld [vmem:[%s1481] ss:$2 sm:$0x7f]
      %v1483 = vld [vmem:[%s936] sm:$0xf]
      %v1485 = vsel %vm719, %v1482, 0
      %v1488 = vsel %vm760, %v1483, 0
      %1490 = vmatpush.msra.mxu0 0.0
      %1491 = vmatpush.msra.mxu0 0.0
      %1492 = vmatpush.msra.mxu0 0.0
      %1493 = vmatpush.msra.mxu0 0.0
      %1494 = vmatpush.msra.mxu0 0.0
      %1495 = vmatpush.msra.mxu0 0.0
      %1496 = vmatpush.msra.mxu0 0.0
      %1497 = vmatpush.msra.mxu0 0.0
      %1498 = vmatpush.msra.mxu0 0.0
      %1499 = vmatpush.msra.mxu0 0.0
      %1500 = vmatpush.msra.mxu0 0.0
      %1501 = vmatpush.msra.mxu0 0.0
      %1502 = vmatpush.msra.mxu0 0.0
      %1503 = vmatpush.msra.mxu0 0.0
      %1504 = vmatpush.msra.mxu0 0.0
      %1505 = vmatpush.msra.mxu0 %v1488
      %1506 = vmatmul.f32.gmra.mxu0 %v1485
      %v1507 = vpop.f32.mrf.mxu0
      %v1508 = vadd.f32 0.0, %v1507
      %1509 = vdwg.mxu0
      %v1510 = vadd.f32 %v1480, %v1508
      %s1511 = scalar_lea.vmem [#allocation2], 91
      %v1512 = vld [vmem:[%s1511] ss:$2 sm:$0x7f]
      %v1513 = vld [vmem:[%s967] sm:$0xf]
      %v1515 = vsel %vm719, %v1512, 0
      %v1518 = vsel %vm760, %v1513, 0
      %1520 = vmatpush.msra.mxu0 0.0
      %1521 = vmatpush.msra.mxu0 0.0
      %1522 = vmatpush.msra.mxu0 0.0
      %1523 = vmatpush.msra.mxu0 0.0
      %1524 = vmatpush.msra.mxu0 0.0
      %1525 = vmatpush.msra.mxu0 0.0
      %1526 = vmatpush.msra.mxu0 0.0
      %1527 = vmatpush.msra.mxu0 0.0
      %1528 = vmatpush.msra.mxu0 0.0
      %1529 = vmatpush.msra.mxu0 0.0
      %1530 = vmatpush.msra.mxu0 0.0
      %1531 = vmatpush.msra.mxu0 0.0
      %1532 = vmatpush.msra.mxu0 0.0
      %1533 = vmatpush.msra.mxu0 0.0
      %1534 = vmatpush.msra.mxu0 0.0
      %1535 = vmatpush.msra.mxu0 %v1518
      %1536 = vmatmul.f32.gmra.mxu0 %v1515
      %v1537 = vpop.f32.mrf.mxu0
      %v1538 = vadd.f32 0.0, %v1537
      %1539 = vdwg.mxu0
      %v1540 = vadd.f32 %v1510, %v1538
      %s1541 = scalar_lea.vmem [#allocation2], 92
      %v1542 = vld [vmem:[%s1541] ss:$2 sm:$0x7f]
      %v1543 = vld [vmem:[%s998] sm:$0xf]
      %v1545 = vsel %vm719, %v1542, 0
      %v1548 = vsel %vm760, %v1543, 0
      %1550 = vmatpush.msra.mxu0 0.0
      %1551 = vmatpush.msra.mxu0 0.0
      %1552 = vmatpush.msra.mxu0 0.0
      %1553 = vmatpush.msra.mxu0 0.0
      %1554 = vmatpush.msra.mxu0 0.0
      %1555 = vmatpush.msra.mxu0 0.0
      %1556 = vmatpush.msra.mxu0 0.0
      %1557 = vmatpush.msra.mxu0 0.0
      %1558 = vmatpush.msra.mxu0 0.0
      %1559 = vmatpush.msra.mxu0 0.0
      %1560 = vmatpush.msra.mxu0 0.0
      %1561 = vmatpush.msra.mxu0 0.0
      %1562 = vmatpush.msra.mxu0 0.0
      %1563 = vmatpush.msra.mxu0 0.0
      %1564 = vmatpush.msra.mxu0 0.0
      %1565 = vmatpush.msra.mxu0 %v1548
      %1566 = vmatmul.f32.gmra.mxu0 %v1545
      %v1567 = vpop.f32.mrf.mxu0
      %v1568 = vadd.f32 0.0, %v1567
      %1569 = vdwg.mxu0
      %v1570 = vadd.f32 %v1540, %v1568
      %v1571 = vadd.f32 %v1570, %v1028
      %vm1572 = vcmp.ge.f32.partialorder %v1571, 0.0
      %v1573 = vmul.f32 %v1571, 0.01
      %v1574 = vsel %vm1572, %v1571, %v1573
      %1575 = vst.msk [vmem:[#allocation3 + $0xe] sm:$0x7f] %vm1034, %v1574
      %v1576 = vld [vmem:[%s1481] ss:$2 sm:$0x7f]
      %v1577 = vld [vmem:[%s3] sm:$0xf]
      %v1578 = vld [vmem:[%s1511] ss:$2 sm:$0x7f]
      %v1579 = vld [vmem:[%s755] sm:$0xf]
      %v1581 = vsel %vm719, %v1578, 0
      %v1584 = vsel %vm760, %v1579, 0
      %1586 = vmatpush.msra.mxu0 0.0
      %1587 = vmatpush.msra.mxu0 0.0
      %1588 = vmatpush.msra.mxu0 0.0
      %1589 = vmatpush.msra.mxu0 0.0
      %1590 = vmatpush.msra.mxu0 0.0
      %1591 = vmatpush.msra.mxu0 0.0
      %1592 = vmatpush.msra.mxu0 0.0
      %1593 = vmatpush.msra.mxu0 0.0
      %1594 = vmatpush.msra.mxu0 0.0
      %1595 = vmatpush.msra.mxu0 0.0
      %1596 = vmatpush.msra.mxu0 0.0
      %1597 = vmatpush.msra.mxu0 0.0
      %1598 = vmatpush.msra.mxu0 0.0
      %1599 = vmatpush.msra.mxu0 0.0
      %1600 = vmatpush.msra.mxu0 0.0
      %1601 = vmatpush.msra.mxu0 %v1584
      %1602 = vmatmul.f32.gmra.mxu0 %v1581
      %v1603 = vpop.f32.mrf.mxu0
      %v1604 = vadd.f32 0.0, %v1603
      %1605 = vdwg.mxu0
      %v1607 = vsel %vm719, %v1576, 0
      %v1610 = vsel %vm760, %v1577, 0
      %1612 = vmatpush.msra.mxu0 0.0
      %1613 = vmatpush.msra.mxu0 0.0
      %1614 = vmatpush.msra.mxu0 0.0
      %1615 = vmatpush.msra.mxu0 0.0
      %1616 = vmatpush.msra.mxu0 0.0
      %1617 = vmatpush.msra.mxu0 0.0
      %1618 = vmatpush.msra.mxu0 0.0
      %1619 = vmatpush.msra.mxu0 0.0
      %1620 = vmatpush.msra.mxu0 0.0
      %1621 = vmatpush.msra.mxu0 0.0
      %1622 = vmatpush.msra.mxu0 0.0
      %1623 = vmatpush.msra.mxu0 0.0
      %1624 = vmatpush.msra.mxu0 0.0
      %1625 = vmatpush.msra.mxu0 0.0
      %1626 = vmatpush.msra.mxu0 0.0
      %1627 = vmatpush.msra.mxu0 %v1610
      %1628 = vmatmul.f32.gmra.mxu0 %v1607
      %v1629 = vpop.f32.mrf.mxu0
      %v1630 = vadd.f32 %v1604, %v1629
      %1631 = vdwg.mxu0
      %v1632 = vld [vmem:[%s1541] ss:$2 sm:$0x7f]
      %v1633 = vld [vmem:[%s812] sm:$0xf]
      %v1635 = vsel %vm719, %v1632, 0
      %v1638 = vsel %vm760, %v1633, 0
      %1640 = vmatpush.msra.mxu0 0.0
      %1641 = vmatpush.msra.mxu0 0.0
      %1642 = vmatpush.msra.mxu0 0.0
      %1643 = vmatpush.msra.mxu0 0.0
      %1644 = vmatpush.msra.mxu0 0.0
      %1645 = vmatpush.msra.mxu0 0.0
      %1646 = vmatpush.msra.mxu0 0.0
      %1647 = vmatpush.msra.mxu0 0.0
      %1648 = vmatpush.msra.mxu0 0.0
      %1649 = vmatpush.msra.mxu0 0.0
      %1650 = vmatpush.msra.mxu0 0.0
      %1651 = vmatpush.msra.mxu0 0.0
      %1652 = vmatpush.msra.mxu0 0.0
      %1653 = vmatpush.msra.mxu0 0.0
      %1654 = vmatpush.msra.mxu0 0.0
      %1655 = vmatpush.msra.mxu0 %v1638
      %1656 = vmatmul.f32.gmra.mxu0 %v1635
      %v1657 = vpop.f32.mrf.mxu0
      %v1658 = vadd.f32 0.0, %v1657
      %1659 = vdwg.mxu0
      %v1660 = vadd.f32 %v1630, %v1658
      %s1661 = scalar_lea.vmem [#allocation2], 105
      %v1662 = vld [vmem:[%s1661] ss:$2 sm:$0x7f]
      %v1663 = vld [vmem:[%s843] sm:$0xf]
      %v1665 = vsel %vm719, %v1662, 0
      %v1668 = vsel %vm760, %v1663, 0
      %1670 = vmatpush.msra.mxu0 0.0
      %1671 = vmatpush.msra.mxu0 0.0
      %1672 = vmatpush.msra.mxu0 0.0
      %1673 = vmatpush.msra.mxu0 0.0
      %1674 = vmatpush.msra.mxu0 0.0
      %1675 = vmatpush.msra.mxu0 0.0
      %1676 = vmatpush.msra.mxu0 0.0
      %1677 = vmatpush.msra.mxu0 0.0
      %1678 = vmatpush.msra.mxu0 0.0
      %1679 = vmatpush.msra.mxu0 0.0
      %1680 = vmatpush.msra.mxu0 0.0
      %1681 = vmatpush.msra.mxu0 0.0
      %1682 = vmatpush.msra.mxu0 0.0
      %1683 = vmatpush.msra.mxu0 0.0
      %1684 = vmatpush.msra.mxu0 0.0
      %1685 = vmatpush.msra.mxu0 %v1668
      %1686 = vmatmul.f32.gmra.mxu0 %v1665
      %v1687 = vpop.f32.mrf.mxu0
      %v1688 = vadd.f32 0.0, %v1687
      %1689 = vdwg.mxu0
      %v1690 = vadd.f32 %v1660, %v1688
      %s1691 = scalar_lea.vmem [#allocation2], 106
      %v1692 = vld [vmem:[%s1691] ss:$2 sm:$0x7f]
      %v1693 = vld [vmem:[%s874] sm:$0xf]
      %v1695 = vsel %vm719, %v1692, 0
      %v1698 = vsel %vm760, %v1693, 0
      %1700 = vmatpush.msra.mxu0 0.0
      %1701 = vmatpush.msra.mxu0 0.0
      %1702 = vmatpush.msra.mxu0 0.0
      %1703 = vmatpush.msra.mxu0 0.0
      %1704 = vmatpush.msra.mxu0 0.0
      %1705 = vmatpush.msra.mxu0 0.0
      %1706 = vmatpush.msra.mxu0 0.0
      %1707 = vmatpush.msra.mxu0 0.0
      %1708 = vmatpush.msra.mxu0 0.0
      %1709 = vmatpush.msra.mxu0 0.0
      %1710 = vmatpush.msra.mxu0 0.0
      %1711 = vmatpush.msra.mxu0 0.0
      %1712 = vmatpush.msra.mxu0 0.0
      %1713 = vmatpush.msra.mxu0 0.0
      %1714 = vmatpush.msra.mxu0 0.0
      %1715 = vmatpush.msra.mxu0 %v1698
      %1716 = vmatmul.f32.gmra.mxu0 %v1695
      %v1717 = vpop.f32.mrf.mxu0
      %v1718 = vadd.f32 0.0, %v1717
      %1719 = vdwg.mxu0
      %v1720 = vadd.f32 %v1690, %v1718
      %s1721 = scalar_lea.vmem [#allocation2], 107
      %v1722 = vld [vmem:[%s1721] ss:$2 sm:$0x7f]
      %v1723 = vld [vmem:[%s905] sm:$0xf]
      %v1725 = vsel %vm719, %v1722, 0
      %v1728 = vsel %vm760, %v1723, 0
      %1730 = vmatpush.msra.mxu0 0.0
      %1731 = vmatpush.msra.mxu0 0.0
      %1732 = vmatpush.msra.mxu0 0.0
      %1733 = vmatpush.msra.mxu0 0.0
      %1734 = vmatpush.msra.mxu0 0.0
      %1735 = vmatpush.msra.mxu0 0.0
      %1736 = vmatpush.msra.mxu0 0.0
      %1737 = vmatpush.msra.mxu0 0.0
      %1738 = vmatpush.msra.mxu0 0.0
      %1739 = vmatpush.msra.mxu0 0.0
      %1740 = vmatpush.msra.mxu0 0.0
      %1741 = vmatpush.msra.mxu0 0.0
      %1742 = vmatpush.msra.mxu0 0.0
      %1743 = vmatpush.msra.mxu0 0.0
      %1744 = vmatpush.msra.mxu0 0.0
      %1745 = vmatpush.msra.mxu0 %v1728
      %1746 = vmatmul.f32.gmra.mxu0 %v1725
      %v1747 = vpop.f32.mrf.mxu0
      %v1748 = vadd.f32 0.0, %v1747
      %1749 = vdwg.mxu0
      %v1750 = vadd.f32 %v1720, %v1748
      %s1751 = scalar_lea.vmem [#allocation2], 120
      %v1752 = vld [vmem:[%s1751] ss:$2 sm:$0x7f]
      %v1753 = vld [vmem:[%s936] sm:$0xf]
      %v1755 = vsel %vm719, %v1752, 0
      %v1758 = vsel %vm760, %v1753, 0
      %1760 = vmatpush.msra.mxu0 0.0
      %1761 = vmatpush.msra.mxu0 0.0
      %1762 = vmatpush.msra.mxu0 0.0
      %1763 = vmatpush.msra.mxu0 0.0
      %1764 = vmatpush.msra.mxu0 0.0
      %1765 = vmatpush.msra.mxu0 0.0
      %1766 = vmatpush.msra.mxu0 0.0
      %1767 = vmatpush.msra.mxu0 0.0
      %1768 = vmatpush.msra.mxu0 0.0
      %1769 = vmatpush.msra.mxu0 0.0
      %1770 = vmatpush.msra.mxu0 0.0
      %1771 = vmatpush.msra.mxu0 0.0
      %1772 = vmatpush.msra.mxu0 0.0
      %1773 = vmatpush.msra.mxu0 0.0
      %1774 = vmatpush.msra.mxu0 0.0
      %1775 = vmatpush.msra.mxu0 %v1758
      %1776 = vmatmul.f32.gmra.mxu0 %v1755
      %v1777 = vpop.f32.mrf.mxu0
      %v1778 = vadd.f32 0.0, %v1777
      %1779 = vdwg.mxu0
      %v1780 = vadd.f32 %v1750, %v1778
      %s1781 = scalar_lea.vmem [#allocation2], 121
      %v1782 = vld [vmem:[%s1781] ss:$2 sm:$0x7f]
      %v1783 = vld [vmem:[%s967] sm:$0xf]
      %v1785 = vsel %vm719, %v1782, 0
      %v1788 = vsel %vm760, %v1783, 0
      %1790 = vmatpush.msra.mxu0 0.0
      %1791 = vmatpush.msra.mxu0 0.0
      %1792 = vmatpush.msra.mxu0 0.0
      %1793 = vmatpush.msra.mxu0 0.0
      %1794 = vmatpush.msra.mxu0 0.0
      %1795 = vmatpush.msra.mxu0 0.0
      %1796 = vmatpush.msra.mxu0 0.0
      %1797 = vmatpush.msra.mxu0 0.0
      %1798 = vmatpush.msra.mxu0 0.0
      %1799 = vmatpush.msra.mxu0 0.0
      %1800 = vmatpush.msra.mxu0 0.0
      %1801 = vmatpush.msra.mxu0 0.0
      %1802 = vmatpush.msra.mxu0 0.0
      %1803 = vmatpush.msra.mxu0 0.0
      %1804 = vmatpush.msra.mxu0 0.0
      %1805 = vmatpush.msra.mxu0 %v1788
      %1806 = vmatmul.f32.gmra.mxu0 %v1785
      %v1807 = vpop.f32.mrf.mxu0
      %v1808 = vadd.f32 0.0, %v1807
      %1809 = vdwg.mxu0
      %v1810 = vadd.f32 %v1780, %v1808
      %s1811 = scalar_lea.vmem [#allocation2], 122
      %v1812 = vld [vmem:[%s1811] ss:$2 sm:$0x7f]
      %v1813 = vld [vmem:[%s998] sm:$0xf]
      %v1815 = vsel %vm719, %v1812, 0
      %v1818 = vsel %vm760, %v1813, 0
      %1820 = vmatpush.msra.mxu0 0.0
      %1821 = vmatpush.msra.mxu0 0.0
      %1822 = vmatpush.msra.mxu0 0.0
      %1823 = vmatpush.msra.mxu0 0.0
      %1824 = vmatpush.msra.mxu0 0.0
      %1825 = vmatpush.msra.mxu0 0.0
      %1826 = vmatpush.msra.mxu0 0.0
      %1827 = vmatpush.msra.mxu0 0.0
      %1828 = vmatpush.msra.mxu0 0.0
      %1829 = vmatpush.msra.mxu0 0.0
      %1830 = vmatpush.msra.mxu0 0.0
      %1831 = vmatpush.msra.mxu0 0.0
      %1832 = vmatpush.msra.mxu0 0.0
      %1833 = vmatpush.msra.mxu0 0.0
      %1834 = vmatpush.msra.mxu0 0.0
      %1835 = vmatpush.msra.mxu0 %v1818
      %1836 = vmatmul.f32.gmra.mxu0 %v1815
      %v1837 = vpop.f32.mrf.mxu0
      %v1838 = vadd.f32 0.0, %v1837
      %1839 = vdwg.mxu0
      %v1840 = vadd.f32 %v1810, %v1838
      %v1841 = vadd.f32 %v1840, %v1028
      %vm1842 = vcmp.ge.f32.partialorder %v1841, 0.0
      %v1843 = vmul.f32 %v1841, 0.01
      %v1844 = vsel %vm1842, %v1841, %v1843
      %1845 = vst.msk [vmem:[#allocation3 + $0x15] sm:$0x7f] %vm1034, %v1844
      %v1846 = vld [vmem:[%s1751] ss:$2 sm:$0x7f]
      %v1847 = vld [vmem:[%s3] sm:$0xf]
      %v1848 = vld [vmem:[%s1781] ss:$2 sm:$0x7f]
      %v1849 = vld [vmem:[%s755] sm:$0xf]
      %v1851 = vsel %vm719, %v1848, 0
      %v1854 = vsel %vm760, %v1849, 0
      %1856 = vmatpush.msra.mxu0 0.0
      %1857 = vmatpush.msra.mxu0 0.0
      %1858 = vmatpush.msra.mxu0 0.0
      %1859 = vmatpush.msra.mxu0 0.0
      %1860 = vmatpush.msra.mxu0 0.0
      %1861 = vmatpush.msra.mxu0 0.0
      %1862 = vmatpush.msra.mxu0 0.0
      %1863 = vmatpush.msra.mxu0 0.0
      %1864 = vmatpush.msra.mxu0 0.0
      %1865 = vmatpush.msra.mxu0 0.0
      %1866 = vmatpush.msra.mxu0 0.0
      %1867 = vmatpush.msra.mxu0 0.0
      %1868 = vmatpush.msra.mxu0 0.0
      %1869 = vmatpush.msra.mxu0 0.0
      %1870 = vmatpush.msra.mxu0 0.0
      %1871 = vmatpush.msra.mxu0 %v1854
      %1872 = vmatmul.f32.gmra.mxu0 %v1851
      %v1873 = vpop.f32.mrf.mxu0
      %v1874 = vadd.f32 0.0, %v1873
      %1875 = vdwg.mxu0
      %v1877 = vsel %vm719, %v1846, 0
      %v1880 = vsel %vm760, %v1847, 0
      %1882 = vmatpush.msra.mxu0 0.0
      %1883 = vmatpush.msra.mxu0 0.0
      %1884 = vmatpush.msra.mxu0 0.0
      %1885 = vmatpush.msra.mxu0 0.0
      %1886 = vmatpush.msra.mxu0 0.0
      %1887 = vmatpush.msra.mxu0 0.0
      %1888 = vmatpush.msra.mxu0 0.0
      %1889 = vmatpush.msra.mxu0 0.0
      %1890 = vmatpush.msra.mxu0 0.0
      %1891 = vmatpush.msra.mxu0 0.0
      %1892 = vmatpush.msra.mxu0 0.0
      %1893 = vmatpush.msra.mxu0 0.0
      %1894 = vmatpush.msra.mxu0 0.0
      %1895 = vmatpush.msra.mxu0 0.0
      %1896 = vmatpush.msra.mxu0 0.0
      %1897 = vmatpush.msra.mxu0 %v1880
      %1898 = vmatmul.f32.gmra.mxu0 %v1877
      %v1899 = vpop.f32.mrf.mxu0
      %v1900 = vadd.f32 %v1874, %v1899
      %1901 = vdwg.mxu0
      %v1902 = vld [vmem:[%s1811] ss:$2 sm:$0x7f]
      %v1903 = vld [vmem:[%s812] sm:$0xf]
      %v1905 = vsel %vm719, %v1902, 0
      %v1908 = vsel %vm760, %v1903, 0
      %1910 = vmatpush.msra.mxu0 0.0
      %1911 = vmatpush.msra.mxu0 0.0
      %1912 = vmatpush.msra.mxu0 0.0
      %1913 = vmatpush.msra.mxu0 0.0
      %1914 = vmatpush.msra.mxu0 0.0
      %1915 = vmatpush.msra.mxu0 0.0
      %1916 = vmatpush.msra.mxu0 0.0
      %1917 = vmatpush.msra.mxu0 0.0
      %1918 = vmatpush.msra.mxu0 0.0
      %1919 = vmatpush.msra.mxu0 0.0
      %1920 = vmatpush.msra.mxu0 0.0
      %1921 = vmatpush.msra.mxu0 0.0
      %1922 = vmatpush.msra.mxu0 0.0
      %1923 = vmatpush.msra.mxu0 0.0
      %1924 = vmatpush.msra.mxu0 0.0
      %1925 = vmatpush.msra.mxu0 %v1908
      %1926 = vmatmul.f32.gmra.mxu0 %v1905
      %v1927 = vpop.f32.mrf.mxu0
      %v1928 = vadd.f32 0.0, %v1927
      %1929 = vdwg.mxu0
      %v1930 = vadd.f32 %v1900, %v1928
      %s1931 = scalar_lea.vmem [#allocation2], 135
      %v1932 = vld [vmem:[%s1931] ss:$2 sm:$0x7f]
      %v1933 = vld [vmem:[%s843] sm:$0xf]
      %v1935 = vsel %vm719, %v1932, 0
      %v1938 = vsel %vm760, %v1933, 0
      %1940 = vmatpush.msra.mxu0 0.0
      %1941 = vmatpush.msra.mxu0 0.0
      %1942 = vmatpush.msra.mxu0 0.0
      %1943 = vmatpush.msra.mxu0 0.0
      %1944 = vmatpush.msra.mxu0 0.0
      %1945 = vmatpush.msra.mxu0 0.0
      %1946 = vmatpush.msra.mxu0 0.0
      %1947 = vmatpush.msra.mxu0 0.0
      %1948 = vmatpush.msra.mxu0 0.0
      %1949 = vmatpush.msra.mxu0 0.0
      %1950 = vmatpush.msra.mxu0 0.0
      %1951 = vmatpush.msra.mxu0 0.0
      %1952 = vmatpush.msra.mxu0 0.0
      %1953 = vmatpush.msra.mxu0 0.0
      %1954 = vmatpush.msra.mxu0 0.0
      %1955 = vmatpush.msra.mxu0 %v1938
      %1956 = vmatmul.f32.gmra.mxu0 %v1935
      %v1957 = vpop.f32.mrf.mxu0
      %v1958 = vadd.f32 0.0, %v1957
      %1959 = vdwg.mxu0
      %v1960 = vadd.f32 %v1930, %v1958
      %s1961 = scalar_lea.vmem [#allocation2], 136
      %v1962 = vld [vmem:[%s1961] ss:$2 sm:$0x7f]
      %v1963 = vld [vmem:[%s874] sm:$0xf]
      %v1965 = vsel %vm719, %v1962, 0
      %v1968 = vsel %vm760, %v1963, 0
      %1970 = vmatpush.msra.mxu0 0.0
      %1971 = vmatpush.msra.mxu0 0.0
      %1972 = vmatpush.msra.mxu0 0.0
      %1973 = vmatpush.msra.mxu0 0.0
      %1974 = vmatpush.msra.mxu0 0.0
      %1975 = vmatpush.msra.mxu0 0.0
      %1976 = vmatpush.msra.mxu0 0.0
      %1977 = vmatpush.msra.mxu0 0.0
      %1978 = vmatpush.msra.mxu0 0.0
      %1979 = vmatpush.msra.mxu0 0.0
      %1980 = vmatpush.msra.mxu0 0.0
      %1981 = vmatpush.msra.mxu0 0.0
      %1982 = vmatpush.msra.mxu0 0.0
      %1983 = vmatpush.msra.mxu0 0.0
      %1984 = vmatpush.msra.mxu0 0.0
      %1985 = vmatpush.msra.mxu0 %v1968
      %1986 = vmatmul.f32.gmra.mxu0 %v1965
      %v1987 = vpop.f32.mrf.mxu0
      %v1988 = vadd.f32 0.0, %v1987
      %1989 = vdwg.mxu0
      %v1990 = vadd.f32 %v1960, %v1988
      %s1991 = scalar_lea.vmem [#allocation2], 137
      %v1992 = vld [vmem:[%s1991] ss:$2 sm:$0x7f]
      %v1993 = vld [vmem:[%s905] sm:$0xf]
      %v1995 = vsel %vm719, %v1992, 0
      %v1998 = vsel %vm760, %v1993, 0
      %2000 = vmatpush.msra.mxu0 0.0
      %2001 = vmatpush.msra.mxu0 0.0
      %2002 = vmatpush.msra.mxu0 0.0
      %2003 = vmatpush.msra.mxu0 0.0
      %2004 = vmatpush.msra.mxu0 0.0
      %2005 = vmatpush.msra.mxu0 0.0
      %2006 = vmatpush.msra.mxu0 0.0
      %2007 = vmatpush.msra.mxu0 0.0
      %2008 = vmatpush.msra.mxu0 0.0
      %2009 = vmatpush.msra.mxu0 0.0
      %2010 = vmatpush.msra.mxu0 0.0
      %2011 = vmatpush.msra.mxu0 0.0
      %2012 = vmatpush.msra.mxu0 0.0
      %2013 = vmatpush.msra.mxu0 0.0
      %2014 = vmatpush.msra.mxu0 0.0
      %2015 = vmatpush.msra.mxu0 %v1998
      %2016 = vmatmul.f32.gmra.mxu0 %v1995
      %v2017 = vpop.f32.mrf.mxu0
      %v2018 = vadd.f32 0.0, %v2017
      %2019 = vdwg.mxu0
      %v2020 = vadd.f32 %v1990, %v2018
      %s2021 = scalar_lea.vmem [#allocation2], 150
      %v2022 = vld [vmem:[%s2021] ss:$2 sm:$0x7f]
      %v2023 = vld [vmem:[%s936] sm:$0xf]
      %v2025 = vsel %vm719, %v2022, 0
      %v2028 = vsel %vm760, %v2023, 0
      %2030 = vmatpush.msra.mxu0 0.0
      %2031 = vmatpush.msra.mxu0 0.0
      %2032 = vmatpush.msra.mxu0 0.0
      %2033 = vmatpush.msra.mxu0 0.0
      %2034 = vmatpush.msra.mxu0 0.0
      %2035 = vmatpush.msra.mxu0 0.0
      %2036 = vmatpush.msra.mxu0 0.0
      %2037 = vmatpush.msra.mxu0 0.0
      %2038 = vmatpush.msra.mxu0 0.0
      %2039 = vmatpush.msra.mxu0 0.0
      %2040 = vmatpush.msra.mxu0 0.0
      %2041 = vmatpush.msra.mxu0 0.0
      %2042 = vmatpush.msra.mxu0 0.0
      %2043 = vmatpush.msra.mxu0 0.0
      %2044 = vmatpush.msra.mxu0 0.0
      %2045 = vmatpush.msra.mxu0 %v2028
      %2046 = vmatmul.f32.gmra.mxu0 %v2025
      %v2047 = vpop.f32.mrf.mxu0
      %v2048 = vadd.f32 0.0, %v2047
      %2049 = vdwg.mxu0
      %v2050 = vadd.f32 %v2020, %v2048
      %s2051 = scalar_lea.vmem [#allocation2], 151
      %v2052 = vld [vmem:[%s2051] ss:$2 sm:$0x7f]
      %v2053 = vld [vmem:[%s967] sm:$0xf]
      %v2055 = vsel %vm719, %v2052, 0
      %v2058 = vsel %vm760, %v2053, 0
      %2060 = vmatpush.msra.mxu0 0.0
      %2061 = vmatpush.msra.mxu0 0.0
      %2062 = vmatpush.msra.mxu0 0.0
      %2063 = vmatpush.msra.mxu0 0.0
      %2064 = vmatpush.msra.mxu0 0.0
      %2065 = vmatpush.msra.mxu0 0.0
      %2066 = vmatpush.msra.mxu0 0.0
      %2067 = vmatpush.msra.mxu0 0.0
      %2068 = vmatpush.msra.mxu0 0.0
      %2069 = vmatpush.msra.mxu0 0.0
      %2070 = vmatpush.msra.mxu0 0.0
      %2071 = vmatpush.msra.mxu0 0.0
      %2072 = vmatpush.msra.mxu0 0.0
      %2073 = vmatpush.msra.mxu0 0.0
      %2074 = vmatpush.msra.mxu0 0.0
      %2075 = vmatpush.msra.mxu0 %v2058
      %2076 = vmatmul.f32.gmra.mxu0 %v2055
      %v2077 = vpop.f32.mrf.mxu0
      %v2078 = vadd.f32 0.0, %v2077
      %2079 = vdwg.mxu0
      %v2080 = vadd.f32 %v2050, %v2078
      %s2081 = scalar_lea.vmem [#allocation2], 152
      %v2082 = vld [vmem:[%s2081] ss:$2 sm:$0x7f]
      %v2083 = vld [vmem:[%s998] sm:$0xf]
      %v2085 = vsel %vm719, %v2082, 0
      %v2088 = vsel %vm760, %v2083, 0
      %2090 = vmatpush.msra.mxu0 0.0
      %2091 = vmatpush.msra.mxu0 0.0
      %2092 = vmatpush.msra.mxu0 0.0
      %2093 = vmatpush.msra.mxu0 0.0
      %2094 = vmatpush.msra.mxu0 0.0
      %2095 = vmatpush.msra.mxu0 0.0
      %2096 = vmatpush.msra.mxu0 0.0
      %2097 = vmatpush.msra.mxu0 0.0
      %2098 = vmatpush.msra.mxu0 0.0
      %2099 = vmatpush.msra.mxu0 0.0
      %2100 = vmatpush.msra.mxu0 0.0
      %2101 = vmatpush.msra.mxu0 0.0
      %2102 = vmatpush.msra.mxu0 0.0
      %2103 = vmatpush.msra.mxu0 0.0
      %2104 = vmatpush.msra.mxu0 0.0
      %2105 = vmatpush.msra.mxu0 %v2088
      %2106 = vmatmul.f32.gmra.mxu0 %v2085
      %v2107 = vpop.f32.mrf.mxu0
      %v2108 = vadd.f32 0.0, %v2107
      %2109 = vdwg.mxu0
      %v2110 = vadd.f32 %v2080, %v2108
      %v2111 = vadd.f32 %v2110, %v1028
      %vm2112 = vcmp.ge.f32.partialorder %v2111, 0.0
      %v2113 = vmul.f32 %v2111, 0.01
      %v2114 = vsel %vm2112, %v2111, %v2113
      %2115 = vst.msk [vmem:[#allocation3 + $0x1c] sm:$0x7f] %vm1034, %v2114
      %v2116 = vld [vmem:[%s2021] ss:$2 sm:$0x7f]
      %v2117 = vld [vmem:[%s3] sm:$0xf]
      %v2118 = vld [vmem:[%s2051] ss:$2 sm:$0x7f]
      %v2119 = vld [vmem:[%s755] sm:$0xf]
      %v2121 = vsel %vm719, %v2118, 0
      %v2124 = vsel %vm760, %v2119, 0
      %2126 = vmatpush.msra.mxu0 0.0
      %2127 = vmatpush.msra.mxu0 0.0
      %2128 = vmatpush.msra.mxu0 0.0
      %2129 = vmatpush.msra.mxu0 0.0
      %2130 = vmatpush.msra.mxu0 0.0
      %2131 = vmatpush.msra.mxu0 0.0
      %2132 = vmatpush.msra.mxu0 0.0
      %2133 = vmatpush.msra.mxu0 0.0
      %2134 = vmatpush.msra.mxu0 0.0
      %2135 = vmatpush.msra.mxu0 0.0
      %2136 = vmatpush.msra.mxu0 0.0
      %2137 = vmatpush.msra.mxu0 0.0
      %2138 = vmatpush.msra.mxu0 0.0
      %2139 = vmatpush.msra.mxu0 0.0
      %2140 = vmatpush.msra.mxu0 0.0
      %2141 = vmatpush.msra.mxu0 %v2124
      %2142 = vmatmul.f32.gmra.mxu0 %v2121
      %v2143 = vpop.f32.mrf.mxu0
      %v2144 = vadd.f32 0.0, %v2143
      %2145 = vdwg.mxu0
      %v2147 = vsel %vm719, %v2116, 0
      %v2150 = vsel %vm760, %v2117, 0
      %2152 = vmatpush.msra.mxu0 0.0
      %2153 = vmatpush.msra.mxu0 0.0
      %2154 = vmatpush.msra.mxu0 0.0
      %2155 = vmatpush.msra.mxu0 0.0
      %2156 = vmatpush.msra.mxu0 0.0
      %2157 = vmatpush.msra.mxu0 0.0
      %2158 = vmatpush.msra.mxu0 0.0
      %2159 = vmatpush.msra.mxu0 0.0
      %2160 = vmatpush.msra.mxu0 0.0
      %2161 = vmatpush.msra.mxu0 0.0
      %2162 = vmatpush.msra.mxu0 0.0
      %2163 = vmatpush.msra.mxu0 0.0
      %2164 = vmatpush.msra.mxu0 0.0
      %2165 = vmatpush.msra.mxu0 0.0
      %2166 = vmatpush.msra.mxu0 0.0
      %2167 = vmatpush.msra.mxu0 %v2150
      %2168 = vmatmul.f32.gmra.mxu0 %v2147
      %v2169 = vpop.f32.mrf.mxu0
      %v2170 = vadd.f32 %v2144, %v2169
      %2171 = vdwg.mxu0
      %v2172 = vld [vmem:[%s2081] ss:$2 sm:$0x7f]
      %v2173 = vld [vmem:[%s812] sm:$0xf]
      %v2175 = vsel %vm719, %v2172, 0
      %v2178 = vsel %vm760, %v2173, 0
      %2180 = vmatpush.msra.mxu0 0.0
      %2181 = vmatpush.msra.mxu0 0.0
      %2182 = vmatpush.msra.mxu0 0.0
      %2183 = vmatpush.msra.mxu0 0.0
      %2184 = vmatpush.msra.mxu0 0.0
      %2185 = vmatpush.msra.mxu0 0.0
      %2186 = vmatpush.msra.mxu0 0.0
      %2187 = vmatpush.msra.mxu0 0.0
      %2188 = vmatpush.msra.mxu0 0.0
      %2189 = vmatpush.msra.mxu0 0.0
      %2190 = vmatpush.msra.mxu0 0.0
      %2191 = vmatpush.msra.mxu0 0.0
      %2192 = vmatpush.msra.mxu0 0.0
      %2193 = vmatpush.msra.mxu0 0.0
      %2194 = vmatpush.msra.mxu0 0.0
      %2195 = vmatpush.msra.mxu0 %v2178
      %2196 = vmatmul.f32.gmra.mxu0 %v2175
      %v2197 = vpop.f32.mrf.mxu0
      %v2198 = vadd.f32 0.0, %v2197
      %2199 = vdwg.mxu0
      %v2200 = vadd.f32 %v2170, %v2198
      %s2201 = scalar_lea.vmem [#allocation2], 165
      %v2202 = vld [vmem:[%s2201] ss:$2 sm:$0x7f]
      %v2203 = vld [vmem:[%s843] sm:$0xf]
      %v2205 = vsel %vm719, %v2202, 0
      %v2208 = vsel %vm760, %v2203, 0
      %2210 = vmatpush.msra.mxu0 0.0
      %2211 = vmatpush.msra.mxu0 0.0
      %2212 = vmatpush.msra.mxu0 0.0
      %2213 = vmatpush.msra.mxu0 0.0
      %2214 = vmatpush.msra.mxu0 0.0
      %2215 = vmatpush.msra.mxu0 0.0
      %2216 = vmatpush.msra.mxu0 0.0
      %2217 = vmatpush.msra.mxu0 0.0
      %2218 = vmatpush.msra.mxu0 0.0
      %2219 = vmatpush.msra.mxu0 0.0
      %2220 = vmatpush.msra.mxu0 0.0
      %2221 = vmatpush.msra.mxu0 0.0
      %2222 = vmatpush.msra.mxu0 0.0
      %2223 = vmatpush.msra.mxu0 0.0
      %2224 = vmatpush.msra.mxu0 0.0
      %2225 = vmatpush.msra.mxu0 %v2208
      %2226 = vmatmul.f32.gmra.mxu0 %v2205
      %v2227 = vpop.f32.mrf.mxu0
      %v2228 = vadd.f32 0.0, %v2227
      %2229 = vdwg.mxu0
      %v2230 = vadd.f32 %v2200, %v2228
      %s2231 = scalar_lea.vmem [#allocation2], 166
      %v2232 = vld [vmem:[%s2231] ss:$2 sm:$0x7f]
      %v2233 = vld [vmem:[%s874] sm:$0xf]
      %v2235 = vsel %vm719, %v2232, 0
      %v2238 = vsel %vm760, %v2233, 0
      %2240 = vmatpush.msra.mxu0 0.0
      %2241 = vmatpush.msra.mxu0 0.0
      %2242 = vmatpush.msra.mxu0 0.0
      %2243 = vmatpush.msra.mxu0 0.0
      %2244 = vmatpush.msra.mxu0 0.0
      %2245 = vmatpush.msra.mxu0 0.0
      %2246 = vmatpush.msra.mxu0 0.0
      %2247 = vmatpush.msra.mxu0 0.0
      %2248 = vmatpush.msra.mxu0 0.0
      %2249 = vmatpush.msra.mxu0 0.0
      %2250 = vmatpush.msra.mxu0 0.0
      %2251 = vmatpush.msra.mxu0 0.0
      %2252 = vmatpush.msra.mxu0 0.0
      %2253 = vmatpush.msra.mxu0 0.0
      %2254 = vmatpush.msra.mxu0 0.0
      %2255 = vmatpush.msra.mxu0 %v2238
      %2256 = vmatmul.f32.gmra.mxu0 %v2235
      %v2257 = vpop.f32.mrf.mxu0
      %v2258 = vadd.f32 0.0, %v2257
      %2259 = vdwg.mxu0
      %v2260 = vadd.f32 %v2230, %v2258
      %s2261 = scalar_lea.vmem [#allocation2], 167
      %v2262 = vld [vmem:[%s2261] ss:$2 sm:$0x7f]
      %v2263 = vld [vmem:[%s905] sm:$0xf]
      %v2265 = vsel %vm719, %v2262, 0
      %v2268 = vsel %vm760, %v2263, 0
      %2270 = vmatpush.msra.mxu0 0.0
      %2271 = vmatpush.msra.mxu0 0.0
      %2272 = vmatpush.msra.mxu0 0.0
      %2273 = vmatpush.msra.mxu0 0.0
      %2274 = vmatpush.msra.mxu0 0.0
      %2275 = vmatpush.msra.mxu0 0.0
      %2276 = vmatpush.msra.mxu0 0.0
      %2277 = vmatpush.msra.mxu0 0.0
      %2278 = vmatpush.msra.mxu0 0.0
      %2279 = vmatpush.msra.mxu0 0.0
      %2280 = vmatpush.msra.mxu0 0.0
      %2281 = vmatpush.msra.mxu0 0.0
      %2282 = vmatpush.msra.mxu0 0.0
      %2283 = vmatpush.msra.mxu0 0.0
      %2284 = vmatpush.msra.mxu0 0.0
      %2285 = vmatpush.msra.mxu0 %v2268
      %2286 = vmatmul.f32.gmra.mxu0 %v2265
      %v2287 = vpop.f32.mrf.mxu0
      %v2288 = vadd.f32 0.0, %v2287
      %2289 = vdwg.mxu0
      %v2290 = vadd.f32 %v2260, %v2288
      %s2291 = scalar_lea.vmem [#allocation2], 180
      %v2292 = vld [vmem:[%s2291] ss:$2 sm:$0x7f]
      %v2293 = vld [vmem:[%s936] sm:$0xf]
      %v2295 = vsel %vm719, %v2292, 0
      %v2298 = vsel %vm760, %v2293, 0
      %2300 = vmatpush.msra.mxu0 0.0
      %2301 = vmatpush.msra.mxu0 0.0
      %2302 = vmatpush.msra.mxu0 0.0
      %2303 = vmatpush.msra.mxu0 0.0
      %2304 = vmatpush.msra.mxu0 0.0
      %2305 = vmatpush.msra.mxu0 0.0
      %2306 = vmatpush.msra.mxu0 0.0
      %2307 = vmatpush.msra.mxu0 0.0
      %2308 = vmatpush.msra.mxu0 0.0
      %2309 = vmatpush.msra.mxu0 0.0
      %2310 = vmatpush.msra.mxu0 0.0
      %2311 = vmatpush.msra.mxu0 0.0
      %2312 = vmatpush.msra.mxu0 0.0
      %2313 = vmatpush.msra.mxu0 0.0
      %2314 = vmatpush.msra.mxu0 0.0
      %2315 = vmatpush.msra.mxu0 %v2298
      %2316 = vmatmul.f32.gmra.mxu0 %v2295
      %v2317 = vpop.f32.mrf.mxu0
      %v2318 = vadd.f32 0.0, %v2317
      %2319 = vdwg.mxu0
      %v2320 = vadd.f32 %v2290, %v2318
      %s2321 = scalar_lea.vmem [#allocation2], 181
      %v2322 = vld [vmem:[%s2321] ss:$2 sm:$0x7f]
      %v2323 = vld [vmem:[%s967] sm:$0xf]
      %v2325 = vsel %vm719, %v2322, 0
      %v2328 = vsel %vm760, %v2323, 0
      %2330 = vmatpush.msra.mxu0 0.0
      %2331 = vmatpush.msra.mxu0 0.0
      %2332 = vmatpush.msra.mxu0 0.0
      %2333 = vmatpush.msra.mxu0 0.0
      %2334 = vmatpush.msra.mxu0 0.0
      %2335 = vmatpush.msra.mxu0 0.0
      %2336 = vmatpush.msra.mxu0 0.0
      %2337 = vmatpush.msra.mxu0 0.0
      %2338 = vmatpush.msra.mxu0 0.0
      %2339 = vmatpush.msra.mxu0 0.0
      %2340 = vmatpush.msra.mxu0 0.0
      %2341 = vmatpush.msra.mxu0 0.0
      %2342 = vmatpush.msra.mxu0 0.0
      %2343 = vmatpush.msra.mxu0 0.0
      %2344 = vmatpush.msra.mxu0 0.0
      %2345 = vmatpush.msra.mxu0 %v2328
      %2346 = vmatmul.f32.gmra.mxu0 %v2325
      %v2347 = vpop.f32.mrf.mxu0
      %v2348 = vadd.f32 0.0, %v2347
      %2349 = vdwg.mxu0
      %v2350 = vadd.f32 %v2320, %v2348
      %s2351 = scalar_lea.vmem [#allocation2], 182
      %v2352 = vld [vmem:[%s2351] ss:$2 sm:$0x7f]
      %v2353 = vld [vmem:[%s998] sm:$0xf]
      %v2355 = vsel %vm719, %v2352, 0
      %v2358 = vsel %vm760, %v2353, 0
      %2360 = vmatpush.msra.mxu0 0.0
      %2361 = vmatpush.msra.mxu0 0.0
      %2362 = vmatpush.msra.mxu0 0.0
      %2363 = vmatpush.msra.mxu0 0.0
      %2364 = vmatpush.msra.mxu0 0.0
      %2365 = vmatpush.msra.mxu0 0.0
      %2366 = vmatpush.msra.mxu0 0.0
      %2367 = vmatpush.msra.mxu0 0.0
      %2368 = vmatpush.msra.mxu0 0.0
      %2369 = vmatpush.msra.mxu0 0.0
      %2370 = vmatpush.msra.mxu0 0.0
      %2371 = vmatpush.msra.mxu0 0.0
      %2372 = vmatpush.msra.mxu0 0.0
      %2373 = vmatpush.msra.mxu0 0.0
      %2374 = vmatpush.msra.mxu0 0.0
      %2375 = vmatpush.msra.mxu0 %v2358
      %2376 = vmatmul.f32.gmra.mxu0 %v2355
      %v2377 = vpop.f32.mrf.mxu0
      %v2378 = vadd.f32 0.0, %v2377
      %2379 = vdwg.mxu0
      %v2380 = vadd.f32 %v2350, %v2378
      %v2381 = vadd.f32 %v2380, %v1028
      %vm2382 = vcmp.ge.f32.partialorder %v2381, 0.0
      %v2383 = vmul.f32 %v2381, 0.01
      %v2384 = vsel %vm2382, %v2381, %v2383
      %2385 = vst.msk [vmem:[#allocation3 + $0x23] sm:$0x7f] %vm1034, %v2384
      %v2386 = vld [vmem:[%s2291] ss:$2 sm:$0x7f]
      %v2387 = vld [vmem:[%s3] sm:$0xf]
      %v2388 = vld [vmem:[%s2321] ss:$2 sm:$0x7f]
      %v2389 = vld [vmem:[%s755] sm:$0xf]
      %v2391 = vsel %vm719, %v2388, 0
      %v2394 = vsel %vm760, %v2389, 0
      %2396 = vmatpush.msra.mxu0 0.0
      %2397 = vmatpush.msra.mxu0 0.0
      %2398 = vmatpush.msra.mxu0 0.0
      %2399 = vmatpush.msra.mxu0 0.0
      %2400 = vmatpush.msra.mxu0 0.0
      %2401 = vmatpush.msra.mxu0 0.0
      %2402 = vmatpush.msra.mxu0 0.0
      %2403 = vmatpush.msra.mxu0 0.0
      %2404 = vmatpush.msra.mxu0 0.0
      %2405 = vmatpush.msra.mxu0 0.0
      %2406 = vmatpush.msra.mxu0 0.0
      %2407 = vmatpush.msra.mxu0 0.0
      %2408 = vmatpush.msra.mxu0 0.0
      %2409 = vmatpush.msra.mxu0 0.0
      %2410 = vmatpush.msra.mxu0 0.0
      %2411 = vmatpush.msra.mxu0 %v2394
      %2412 = vmatmul.f32.gmra.mxu0 %v2391
      %v2413 = vpop.f32.mrf.mxu0
      %v2414 = vadd.f32 0.0, %v2413
      %2415 = vdwg.mxu0
      %v2417 = vsel %vm719, %v2386, 0
      %v2420 = vsel %vm760, %v2387, 0
      %2422 = vmatpush.msra.mxu0 0.0
      %2423 = vmatpush.msra.mxu0 0.0
      %2424 = vmatpush.msra.mxu0 0.0
      %2425 = vmatpush.msra.mxu0 0.0
      %2426 = vmatpush.msra.mxu0 0.0
      %2427 = vmatpush.msra.mxu0 0.0
      %2428 = vmatpush.msra.mxu0 0.0
      %2429 = vmatpush.msra.mxu0 0.0
      %2430 = vmatpush.msra.mxu0 0.0
      %2431 = vmatpush.msra.mxu0 0.0
      %2432 = vmatpush.msra.mxu0 0.0
      %2433 = vmatpush.msra.mxu0 0.0
      %2434 = vmatpush.msra.mxu0 0.0
      %2435 = vmatpush.msra.mxu0 0.0
      %2436 = vmatpush.msra.mxu0 0.0
      %2437 = vmatpush.msra.mxu0 %v2420
      %2438 = vmatmul.f32.gmra.mxu0 %v2417
      %v2439 = vpop.f32.mrf.mxu0
      %v2440 = vadd.f32 %v2414, %v2439
      %2441 = vdwg.mxu0
      %v2442 = vld [vmem:[%s2351] ss:$2 sm:$0x7f]
      %v2443 = vld [vmem:[%s812] sm:$0xf]
      %v2445 = vsel %vm719, %v2442, 0
      %v2448 = vsel %vm760, %v2443, 0
      %2450 = vmatpush.msra.mxu0 0.0
      %2451 = vmatpush.msra.mxu0 0.0
      %2452 = vmatpush.msra.mxu0 0.0
      %2453 = vmatpush.msra.mxu0 0.0
      %2454 = vmatpush.msra.mxu0 0.0
      %2455 = vmatpush.msra.mxu0 0.0
      %2456 = vmatpush.msra.mxu0 0.0
      %2457 = vmatpush.msra.mxu0 0.0
      %2458 = vmatpush.msra.mxu0 0.0
      %2459 = vmatpush.msra.mxu0 0.0
      %2460 = vmatpush.msra.mxu0 0.0
      %2461 = vmatpush.msra.mxu0 0.0
      %2462 = vmatpush.msra.mxu0 0.0
      %2463 = vmatpush.msra.mxu0 0.0
      %2464 = vmatpush.msra.mxu0 0.0
      %2465 = vmatpush.msra.mxu0 %v2448
      %2466 = vmatmul.f32.gmra.mxu0 %v2445
      %v2467 = vpop.f32.mrf.mxu0
      %v2468 = vadd.f32 0.0, %v2467
      %2469 = vdwg.mxu0
      %v2470 = vadd.f32 %v2440, %v2468
      %s2471 = scalar_lea.vmem [#allocation2], 195
      %v2472 = vld [vmem:[%s2471] ss:$2 sm:$0x7f]
      %v2473 = vld [vmem:[%s843] sm:$0xf]
      %v2475 = vsel %vm719, %v2472, 0
      %v2478 = vsel %vm760, %v2473, 0
      %2480 = vmatpush.msra.mxu0 0.0
      %2481 = vmatpush.msra.mxu0 0.0
      %2482 = vmatpush.msra.mxu0 0.0
      %2483 = vmatpush.msra.mxu0 0.0
      %2484 = vmatpush.msra.mxu0 0.0
      %2485 = vmatpush.msra.mxu0 0.0
      %2486 = vmatpush.msra.mxu0 0.0
      %2487 = vmatpush.msra.mxu0 0.0
      %2488 = vmatpush.msra.mxu0 0.0
      %2489 = vmatpush.msra.mxu0 0.0
      %2490 = vmatpush.msra.mxu0 0.0
      %2491 = vmatpush.msra.mxu0 0.0
      %2492 = vmatpush.msra.mxu0 0.0
      %2493 = vmatpush.msra.mxu0 0.0
      %2494 = vmatpush.msra.mxu0 0.0
      %2495 = vmatpush.msra.mxu0 %v2478
      %2496 = vmatmul.f32.gmra.mxu0 %v2475
      %v2497 = vpop.f32.mrf.mxu0
      %v2498 = vadd.f32 0.0, %v2497
      %2499 = vdwg.mxu0
      %v2500 = vadd.f32 %v2470, %v2498
      %s2501 = scalar_lea.vmem [#allocation2], 196
      %v2502 = vld [vmem:[%s2501] ss:$2 sm:$0x7f]
      %v2503 = vld [vmem:[%s874] sm:$0xf]
      %v2505 = vsel %vm719, %v2502, 0
      %v2508 = vsel %vm760, %v2503, 0
      %2510 = vmatpush.msra.mxu0 0.0
      %2511 = vmatpush.msra.mxu0 0.0
      %2512 = vmatpush.msra.mxu0 0.0
      %2513 = vmatpush.msra.mxu0 0.0
      %2514 = vmatpush.msra.mxu0 0.0
      %2515 = vmatpush.msra.mxu0 0.0
      %2516 = vmatpush.msra.mxu0 0.0
      %2517 = vmatpush.msra.mxu0 0.0
      %2518 = vmatpush.msra.mxu0 0.0
      %2519 = vmatpush.msra.mxu0 0.0
      %2520 = vmatpush.msra.mxu0 0.0
      %2521 = vmatpush.msra.mxu0 0.0
      %2522 = vmatpush.msra.mxu0 0.0
      %2523 = vmatpush.msra.mxu0 0.0
      %2524 = vmatpush.msra.mxu0 0.0
      %2525 = vmatpush.msra.mxu0 %v2508
      %2526 = vmatmul.f32.gmra.mxu0 %v2505
      %v2527 = vpop.f32.mrf.mxu0
      %v2528 = vadd.f32 0.0, %v2527
      %2529 = vdwg.mxu0
      %v2530 = vadd.f32 %v2500, %v2528
      %s2531 = scalar_lea.vmem [#allocation2], 197
      %v2532 = vld [vmem:[%s2531] ss:$2 sm:$0x7f]
      %v2533 = vld [vmem:[%s905] sm:$0xf]
      %v2535 = vsel %vm719, %v2532, 0
      %v2538 = vsel %vm760, %v2533, 0
      %2540 = vmatpush.msra.mxu0 0.0
      %2541 = vmatpush.msra.mxu0 0.0
      %2542 = vmatpush.msra.mxu0 0.0
      %2543 = vmatpush.msra.mxu0 0.0
      %2544 = vmatpush.msra.mxu0 0.0
      %2545 = vmatpush.msra.mxu0 0.0
      %2546 = vmatpush.msra.mxu0 0.0
      %2547 = vmatpush.msra.mxu0 0.0
      %2548 = vmatpush.msra.mxu0 0.0
      %2549 = vmatpush.msra.mxu0 0.0
      %2550 = vmatpush.msra.mxu0 0.0
      %2551 = vmatpush.msra.mxu0 0.0
      %2552 = vmatpush.msra.mxu0 0.0
      %2553 = vmatpush.msra.mxu0 0.0
      %2554 = vmatpush.msra.mxu0 0.0
      %2555 = vmatpush.msra.mxu0 %v2538
      %2556 = vmatmul.f32.gmra.mxu0 %v2535
      %v2557 = vpop.f32.mrf.mxu0
      %v2558 = vadd.f32 0.0, %v2557
      %2559 = vdwg.mxu0
      %v2560 = vadd.f32 %v2530, %v2558
      %s2561 = scalar_lea.vmem [#allocation2], 210
      %v2562 = vld [vmem:[%s2561] ss:$2 sm:$0x7f]
      %v2563 = vld [vmem:[%s936] sm:$0xf]
      %v2565 = vsel %vm719, %v2562, 0
      %v2568 = vsel %vm760, %v2563, 0
      %2570 = vmatpush.msra.mxu0 0.0
      %2571 = vmatpush.msra.mxu0 0.0
      %2572 = vmatpush.msra.mxu0 0.0
      %2573 = vmatpush.msra.mxu0 0.0
      %2574 = vmatpush.msra.mxu0 0.0
      %2575 = vmatpush.msra.mxu0 0.0
      %2576 = vmatpush.msra.mxu0 0.0
      %2577 = vmatpush.msra.mxu0 0.0
      %2578 = vmatpush.msra.mxu0 0.0
      %2579 = vmatpush.msra.mxu0 0.0
      %2580 = vmatpush.msra.mxu0 0.0
      %2581 = vmatpush.msra.mxu0 0.0
      %2582 = vmatpush.msra.mxu0 0.0
      %2583 = vmatpush.msra.mxu0 0.0
      %2584 = vmatpush.msra.mxu0 0.0
      %2585 = vmatpush.msra.mxu0 %v2568
      %2586 = vmatmul.f32.gmra.mxu0 %v2565
      %v2587 = vpop.f32.mrf.mxu0
      %v2588 = vadd.f32 0.0, %v2587
      %2589 = vdwg.mxu0
      %v2590 = vadd.f32 %v2560, %v2588
      %s2591 = scalar_lea.vmem [#allocation2], 211
      %v2592 = vld [vmem:[%s2591] ss:$2 sm:$0x7f]
      %v2593 = vld [vmem:[%s967] sm:$0xf]
      %v2595 = vsel %vm719, %v2592, 0
      %v2598 = vsel %vm760, %v2593, 0
      %2600 = vmatpush.msra.mxu0 0.0
      %2601 = vmatpush.msra.mxu0 0.0
      %2602 = vmatpush.msra.mxu0 0.0
      %2603 = vmatpush.msra.mxu0 0.0
      %2604 = vmatpush.msra.mxu0 0.0
      %2605 = vmatpush.msra.mxu0 0.0
      %2606 = vmatpush.msra.mxu0 0.0
      %2607 = vmatpush.msra.mxu0 0.0
      %2608 = vmatpush.msra.mxu0 0.0
      %2609 = vmatpush.msra.mxu0 0.0
      %2610 = vmatpush.msra.mxu0 0.0
      %2611 = vmatpush.msra.mxu0 0.0
      %2612 = vmatpush.msra.mxu0 0.0
      %2613 = vmatpush.msra.mxu0 0.0
      %2614 = vmatpush.msra.mxu0 0.0
      %2615 = vmatpush.msra.mxu0 %v2598
      %2616 = vmatmul.f32.gmra.mxu0 %v2595
      %v2617 = vpop.f32.mrf.mxu0
      %v2618 = vadd.f32 0.0, %v2617
      %2619 = vdwg.mxu0
      %v2620 = vadd.f32 %v2590, %v2618
      %s2621 = scalar_lea.vmem [#allocation2], 212
      %v2622 = vld [vmem:[%s2621] ss:$2 sm:$0x7f]
      %v2623 = vld [vmem:[%s998] sm:$0xf]
      %v2625 = vsel %vm719, %v2622, 0
      %v2628 = vsel %vm760, %v2623, 0
      %2630 = vmatpush.msra.mxu0 0.0
      %2631 = vmatpush.msra.mxu0 0.0
      %2632 = vmatpush.msra.mxu0 0.0
      %2633 = vmatpush.msra.mxu0 0.0
      %2634 = vmatpush.msra.mxu0 0.0
      %2635 = vmatpush.msra.mxu0 0.0
      %2636 = vmatpush.msra.mxu0 0.0
      %2637 = vmatpush.msra.mxu0 0.0
      %2638 = vmatpush.msra.mxu0 0.0
      %2639 = vmatpush.msra.mxu0 0.0
      %2640 = vmatpush.msra.mxu0 0.0
      %2641 = vmatpush.msra.mxu0 0.0
      %2642 = vmatpush.msra.mxu0 0.0
      %2643 = vmatpush.msra.mxu0 0.0
      %2644 = vmatpush.msra.mxu0 0.0
      %2645 = vmatpush.msra.mxu0 %v2628
      %2646 = vmatmul.f32.gmra.mxu0 %v2625
      %v2647 = vpop.f32.mrf.mxu0
      %v2648 = vadd.f32 0.0, %v2647
      %2649 = vdwg.mxu0
      %v2650 = vadd.f32 %v2620, %v2648
      %v2651 = vadd.f32 %v2650, %v1028
      %vm2652 = vcmp.ge.f32.partialorder %v2651, 0.0
      %v2653 = vmul.f32 %v2651, 0.01
      %v2654 = vsel %vm2652, %v2651, %v2653
      %2655 = vst.msk [vmem:[#allocation3 + $0x2a] sm:$0x7f] %vm1034, %v2654
      %v2656 = vld [vmem:[%s6] sm:$0x1]
      %v2657 = vld [vmem:[#allocation3] ss:$2 sm:$0x7]
      %v2658 = vld [vmem:[%s5] sm:$0xff]
      %s2659 = scalar_lea.vmem [#allocation3], 1
      %v2660 = vld [vmem:[%s2659] ss:$2 sm:$0x7]
      %s2661 = scalar_lea.vmem %s5, 8
      %v2662 = vld [vmem:[%s2661] sm:$0xff]
      %vm2663 = vcmask 64512
      %v2665 = vsel %vm2663, %v2660, 0
      %2667 = vmatpush.msra.mxu0 0.0
      %2668 = vmatpush.msra.mxu0 0.0
      %2669 = vmatpush.msra.mxu0 0.0
      %2670 = vmatpush.msra.mxu0 0.0
      %2671 = vmatpush.msra.mxu0 0.0
      %2672 = vmatpush.msra.mxu0 0.0
      %2673 = vmatpush.msra.mxu0 0.0
      %2674 = vmatpush.msra.mxu0 0.0
      %2675 = vmatpush.msra.mxu0 0.0
      %2676 = vmatpush.msra.mxu0 0.0
      %2677 = vmatpush.msra.mxu0 0.0
      %2678 = vmatpush.msra.mxu0 0.0
      %2679 = vmatpush.msra.mxu0 0.0
      %2680 = vmatpush.msra.mxu0 0.0
      %2681 = vmatpush.msra.mxu0 0.0
      %2682 = vmatpush.msra.mxu0 %v2662
      %2683 = vmatmul.f32.gmra.mxu0 %v2665
      %v2684 = vpop.f32.mrf.mxu0
      %v2685 = vadd.f32 0.0, %v2684
      %2686 = vdwg.mxu0
      %v2688 = vsel %vm2663, %v2657, 0
      %2690 = vmatpush.msra.mxu0 0.0
      %2691 = vmatpush.msra.mxu0 0.0
      %2692 = vmatpush.msra.mxu0 0.0
      %2693 = vmatpush.msra.mxu0 0.0
      %2694 = vmatpush.msra.mxu0 0.0
      %2695 = vmatpush.msra.mxu0 0.0
      %2696 = vmatpush.msra.mxu0 0.0
      %2697 = vmatpush.msra.mxu0 0.0
      %2698 = vmatpush.msra.mxu0 0.0
      %2699 = vmatpush.msra.mxu0 0.0
      %2700 = vmatpush.msra.mxu0 0.0
      %2701 = vmatpush.msra.mxu0 0.0
      %2702 = vmatpush.msra.mxu0 0.0
      %2703 = vmatpush.msra.mxu0 0.0
      %2704 = vmatpush.msra.mxu0 0.0
      %2705 = vmatpush.msra.mxu0 %v2658
      %2706 = vmatmul.f32.gmra.mxu0 %v2688
      %v2707 = vpop.f32.mrf.mxu0
      %v2708 = vadd.f32 %v2685, %v2707
      %2709 = vdwg.mxu0
      %s2710 = scalar_lea.vmem [#allocation3], 2
      %v2711 = vld [vmem:[%s2710] ss:$2 sm:$0x7]
      %s2712 = scalar_lea.vmem %s5, 16
      %v2713 = vld [vmem:[%s2712] sm:$0xff]
      %v2715 = vsel %vm2663, %v2711, 0
      %2717 = vmatpush.msra.mxu0 0.0
      %2718 = vmatpush.msra.mxu0 0.0
      %2719 = vmatpush.msra.mxu0 0.0
      %2720 = vmatpush.msra.mxu0 0.0
      %2721 = vmatpush.msra.mxu0 0.0
      %2722 = vmatpush.msra.mxu0 0.0
      %2723 = vmatpush.msra.mxu0 0.0
      %2724 = vmatpush.msra.mxu0 0.0
      %2725 = vmatpush.msra.mxu0 0.0
      %2726 = vmatpush.msra.mxu0 0.0
      %2727 = vmatpush.msra.mxu0 0.0
      %2728 = vmatpush.msra.mxu0 0.0
      %2729 = vmatpush.msra.mxu0 0.0
      %2730 = vmatpush.msra.mxu0 0.0
      %2731 = vmatpush.msra.mxu0 0.0
      %2732 = vmatpush.msra.mxu0 %v2713
      %2733 = vmatmul.f32.gmra.mxu0 %v2715
      %v2734 = vpop.f32.mrf.mxu0
      %v2735 = vadd.f32 0.0, %v2734
      %2736 = vdwg.mxu0
      %v2737 = vadd.f32 %v2708, %v2735
      %s2738 = scalar_lea.vmem [#allocation3], 7
      %v2739 = vld [vmem:[%s2738] ss:$2 sm:$0x7]
      %s2740 = scalar_lea.vmem %s5, 24
      %v2741 = vld [vmem:[%s2740] sm:$0xff]
      %v2743 = vsel %vm2663, %v2739, 0
      %2745 = vmatpush.msra.mxu0 0.0
      %2746 = vmatpush.msra.mxu0 0.0
      %2747 = vmatpush.msra.mxu0 0.0
      %2748 = vmatpush.msra.mxu0 0.0
      %2749 = vmatpush.msra.mxu0 0.0
      %2750 = vmatpush.msra.mxu0 0.0
      %2751 = vmatpush.msra.mxu0 0.0
      %2752 = vmatpush.msra.mxu0 0.0
      %2753 = vmatpush.msra.mxu0 0.0
      %2754 = vmatpush.msra.mxu0 0.0
      %2755 = vmatpush.msra.mxu0 0.0
      %2756 = vmatpush.msra.mxu0 0.0
      %2757 = vmatpush.msra.mxu0 0.0
      %2758 = vmatpush.msra.mxu0 0.0
      %2759 = vmatpush.msra.mxu0 0.0
      %2760 = vmatpush.msra.mxu0 %v2741
      %2761 = vmatmul.f32.gmra.mxu0 %v2743
      %v2762 = vpop.f32.mrf.mxu0
      %v2763 = vadd.f32 0.0, %v2762
      %2764 = vdwg.mxu0
      %v2765 = vadd.f32 %v2737, %v2763
      %s2766 = scalar_lea.vmem [#allocation3], 8
      %v2767 = vld [vmem:[%s2766] ss:$2 sm:$0x7]
      %s2768 = scalar_lea.vmem %s5, 32
      %v2769 = vld [vmem:[%s2768] sm:$0xff]
      %v2771 = vsel %vm2663, %v2767, 0
      %2773 = vmatpush.msra.mxu0 0.0
      %2774 = vmatpush.msra.mxu0 0.0
      %2775 = vmatpush.msra.mxu0 0.0
      %2776 = vmatpush.msra.mxu0 0.0
      %2777 = vmatpush.msra.mxu0 0.0
      %2778 = vmatpush.msra.mxu0 0.0
      %2779 = vmatpush.msra.mxu0 0.0
      %2780 = vmatpush.msra.mxu0 0.0
      %2781 = vmatpush.msra.mxu0 0.0
      %2782 = vmatpush.msra.mxu0 0.0
      %2783 = vmatpush.msra.mxu0 0.0
      %2784 = vmatpush.msra.mxu0 0.0
      %2785 = vmatpush.msra.mxu0 0.0
      %2786 = vmatpush.msra.mxu0 0.0
      %2787 = vmatpush.msra.mxu0 0.0
      %2788 = vmatpush.msra.mxu0 %v2769
      %2789 = vmatmul.f32.gmra.mxu0 %v2771
      %v2790 = vpop.f32.mrf.mxu0
      %v2791 = vadd.f32 0.0, %v2790
      %2792 = vdwg.mxu0
      %v2793 = vadd.f32 %v2765, %v2791
      %s2794 = scalar_lea.vmem [#allocation3], 9
      %v2795 = vld [vmem:[%s2794] ss:$2 sm:$0x7]
      %s2796 = scalar_lea.vmem %s5, 40
      %v2797 = vld [vmem:[%s2796] sm:$0xff]
      %v2799 = vsel %vm2663, %v2795, 0
      %2801 = vmatpush.msra.mxu0 0.0
      %2802 = vmatpush.msra.mxu0 0.0
      %2803 = vmatpush.msra.mxu0 0.0
      %2804 = vmatpush.msra.mxu0 0.0
      %2805 = vmatpush.msra.mxu0 0.0
      %2806 = vmatpush.msra.mxu0 0.0
      %2807 = vmatpush.msra.mxu0 0.0
      %2808 = vmatpush.msra.mxu0 0.0
      %2809 = vmatpush.msra.mxu0 0.0
      %2810 = vmatpush.msra.mxu0 0.0
      %2811 = vmatpush.msra.mxu0 0.0
      %2812 = vmatpush.msra.mxu0 0.0
      %2813 = vmatpush.msra.mxu0 0.0
      %2814 = vmatpush.msra.mxu0 0.0
      %2815 = vmatpush.msra.mxu0 0.0
      %2816 = vmatpush.msra.mxu0 %v2797
      %2817 = vmatmul.f32.gmra.mxu0 %v2799
      %v2818 = vpop.f32.mrf.mxu0
      %v2819 = vadd.f32 0.0, %v2818
      %2820 = vdwg.mxu0
      %v2821 = vadd.f32 %v2793, %v2819
      %s2822 = scalar_lea.vmem [#allocation3], 14
      %v2823 = vld [vmem:[%s2822] ss:$2 sm:$0x7]
      %s2824 = scalar_lea.vmem %s5, 48
      %v2825 = vld [vmem:[%s2824] sm:$0xff]
      %v2827 = vsel %vm2663, %v2823, 0
      %2829 = vmatpush.msra.mxu0 0.0
      %2830 = vmatpush.msra.mxu0 0.0
      %2831 = vmatpush.msra.mxu0 0.0
      %2832 = vmatpush.msra.mxu0 0.0
      %2833 = vmatpush.msra.mxu0 0.0
      %2834 = vmatpush.msra.mxu0 0.0
      %2835 = vmatpush.msra.mxu0 0.0
      %2836 = vmatpush.msra.mxu0 0.0
      %2837 = vmatpush.msra.mxu0 0.0
      %2838 = vmatpush.msra.mxu0 0.0
      %2839 = vmatpush.msra.mxu0 0.0
      %2840 = vmatpush.msra.mxu0 0.0
      %2841 = vmatpush.msra.mxu0 0.0
      %2842 = vmatpush.msra.mxu0 0.0
      %2843 = vmatpush.msra.mxu0 0.0
      %2844 = vmatpush.msra.mxu0 %v2825
      %2845 = vmatmul.f32.gmra.mxu0 %v2827
      %v2846 = vpop.f32.mrf.mxu0
      %v2847 = vadd.f32 0.0, %v2846
      %2848 = vdwg.mxu0
      %v2849 = vadd.f32 %v2821, %v2847
      %s2850 = scalar_lea.vmem [#allocation3], 15
      %v2851 = vld [vmem:[%s2850] ss:$2 sm:$0x7]
      %s2852 = scalar_lea.vmem %s5, 56
      %v2853 = vld [vmem:[%s2852] sm:$0xff]
      %v2855 = vsel %vm2663, %v2851, 0
      %2857 = vmatpush.msra.mxu0 0.0
      %2858 = vmatpush.msra.mxu0 0.0
      %2859 = vmatpush.msra.mxu0 0.0
      %2860 = vmatpush.msra.mxu0 0.0
      %2861 = vmatpush.msra.mxu0 0.0
      %2862 = vmatpush.msra.mxu0 0.0
      %2863 = vmatpush.msra.mxu0 0.0
      %2864 = vmatpush.msra.mxu0 0.0
      %2865 = vmatpush.msra.mxu0 0.0
      %2866 = vmatpush.msra.mxu0 0.0
      %2867 = vmatpush.msra.mxu0 0.0
      %2868 = vmatpush.msra.mxu0 0.0
      %2869 = vmatpush.msra.mxu0 0.0
      %2870 = vmatpush.msra.mxu0 0.0
      %2871 = vmatpush.msra.mxu0 0.0
      %2872 = vmatpush.msra.mxu0 %v2853
      %2873 = vmatmul.f32.gmra.mxu0 %v2855
      %v2874 = vpop.f32.mrf.mxu0
      %v2875 = vadd.f32 0.0, %v2874
      %2876 = vdwg.mxu0
      %v2877 = vadd.f32 %v2849, %v2875
      %s2878 = scalar_lea.vmem [#allocation3], 16
      %v2879 = vld [vmem:[%s2878] ss:$2 sm:$0x7]
      %s2880 = scalar_lea.vmem %s5, 64
      %v2881 = vld [vmem:[%s2880] sm:$0xff]
      %v2883 = vsel %vm2663, %v2879, 0
      %2885 = vmatpush.msra.mxu0 0.0
      %2886 = vmatpush.msra.mxu0 0.0
      %2887 = vmatpush.msra.mxu0 0.0
      %2888 = vmatpush.msra.mxu0 0.0
      %2889 = vmatpush.msra.mxu0 0.0
      %2890 = vmatpush.msra.mxu0 0.0
      %2891 = vmatpush.msra.mxu0 0.0
      %2892 = vmatpush.msra.mxu0 0.0
      %2893 = vmatpush.msra.mxu0 0.0
      %2894 = vmatpush.msra.mxu0 0.0
      %2895 = vmatpush.msra.mxu0 0.0
      %2896 = vmatpush.msra.mxu0 0.0
      %2897 = vmatpush.msra.mxu0 0.0
      %2898 = vmatpush.msra.mxu0 0.0
      %2899 = vmatpush.msra.mxu0 0.0
      %2900 = vmatpush.msra.mxu0 %v2881
      %2901 = vmatmul.f32.gmra.mxu0 %v2883
      %v2902 = vpop.f32.mrf.mxu0
      %v2903 = vadd.f32 0.0, %v2902
      %2904 = vdwg.mxu0
      %v2905 = vadd.f32 %v2877, %v2903
      %v2907 = vperm.slane %v2656, 0
      %v2909 = vadd.f32 %v2905, %v2907
      %vm2910 = vcmp.ge.f32.partialorder %v2909, 0.0
      %v2911 = vmul.f32 %v2909, 0.01
      %v2912 = vsel %vm2910, %v2909, %v2911
      %vm2913 = vcmask 124928
      %2914 = vst.msk [vmem:[#allocation4 + $0x6] sm:$0x7] %vm2913, %v2912
      %v2915 = vld [vmem:[%s2822] ss:$2 sm:$0x7]
      %v2916 = vld [vmem:[%s5] sm:$0xff]
      %v2917 = vld [vmem:[%s2850] ss:$2 sm:$0x7]
      %v2918 = vld [vmem:[%s2661] sm:$0xff]
      %v2920 = vsel %vm2663, %v2917, 0
      %2922 = vmatpush.msra.mxu0 0.0
      %2923 = vmatpush.msra.mxu0 0.0
      %2924 = vmatpush.msra.mxu0 0.0
      %2925 = vmatpush.msra.mxu0 0.0
      %2926 = vmatpush.msra.mxu0 0.0
      %2927 = vmatpush.msra.mxu0 0.0
      %2928 = vmatpush.msra.mxu0 0.0
      %2929 = vmatpush.msra.mxu0 0.0
      %2930 = vmatpush.msra.mxu0 0.0
      %2931 = vmatpush.msra.mxu0 0.0
      %2932 = vmatpush.msra.mxu0 0.0
      %2933 = vmatpush.msra.mxu0 0.0
      %2934 = vmatpush.msra.mxu0 0.0
      %2935 = vmatpush.msra.mxu0 0.0
      %2936 = vmatpush.msra.mxu0 0.0
      %2937 = vmatpush.msra.mxu0 %v2918
      %2938 = vmatmul.f32.gmra.mxu0 %v2920
      %v2939 = vpop.f32.mrf.mxu0
      %v2940 = vadd.f32 0.0, %v2939
      %2941 = vdwg.mxu0
      %v2943 = vsel %vm2663, %v2915, 0
      %2945 = vmatpush.msra.mxu0 0.0
      %2946 = vmatpush.msra.mxu0 0.0
      %2947 = vmatpush.msra.mxu0 0.0
      %2948 = vmatpush.msra.mxu0 0.0
      %2949 = vmatpush.msra.mxu0 0.0
      %2950 = vmatpush.msra.mxu0 0.0
      %2951 = vmatpush.msra.mxu0 0.0
      %2952 = vmatpush.msra.mxu0 0.0
      %2953 = vmatpush.msra.mxu0 0.0
      %2954 = vmatpush.msra.mxu0 0.0
      %2955 = vmatpush.msra.mxu0 0.0
      %2956 = vmatpush.msra.mxu0 0.0
      %2957 = vmatpush.msra.mxu0 0.0
      %2958 = vmatpush.msra.mxu0 0.0
      %2959 = vmatpush.msra.mxu0 0.0
      %2960 = vmatpush.msra.mxu0 %v2916
      %2961 = vmatmul.f32.gmra.mxu0 %v2943
      %v2962 = vpop.f32.mrf.mxu0
      %v2963 = vadd.f32 %v2940, %v2962
      %2964 = vdwg.mxu0
      %v2965 = vld [vmem:[%s2878] ss:$2 sm:$0x7]
      %v2966 = vld [vmem:[%s2712] sm:$0xff]
      %v2968 = vsel %vm2663, %v2965, 0
      %2970 = vmatpush.msra.mxu0 0.0
      %2971 = vmatpush.msra.mxu0 0.0
      %2972 = vmatpush.msra.mxu0 0.0
      %2973 = vmatpush.msra.mxu0 0.0
      %2974 = vmatpush.msra.mxu0 0.0
      %2975 = vmatpush.msra.mxu0 0.0
      %2976 = vmatpush.msra.mxu0 0.0
      %2977 = vmatpush.msra.mxu0 0.0
      %2978 = vmatpush.msra.mxu0 0.0
      %2979 = vmatpush.msra.mxu0 0.0
      %2980 = vmatpush.msra.mxu0 0.0
      %2981 = vmatpush.msra.mxu0 0.0
      %2982 = vmatpush.msra.mxu0 0.0
      %2983 = vmatpush.msra.mxu0 0.0
      %2984 = vmatpush.msra.mxu0 0.0
      %2985 = vmatpush.msra.mxu0 %v2966
      %2986 = vmatmul.f32.gmra.mxu0 %v2968
      %v2987 = vpop.f32.mrf.mxu0
      %v2988 = vadd.f32 0.0, %v2987
      %2989 = vdwg.mxu0
      %v2990 = vadd.f32 %v2963, %v2988
      %s2991 = scalar_lea.vmem [#allocation3], 21
      %v2992 = vld [vmem:[%s2991] ss:$2 sm:$0x7]
      %v2993 = vld [vmem:[%s2740] sm:$0xff]
      %v2995 = vsel %vm2663, %v2992, 0
      %2997 = vmatpush.msra.mxu0 0.0
      %2998 = vmatpush.msra.mxu0 0.0
      %2999 = vmatpush.msra.mxu0 0.0
      %3000 = vmatpush.msra.mxu0 0.0
      %3001 = vmatpush.msra.mxu0 0.0
      %3002 = vmatpush.msra.mxu0 0.0
      %3003 = vmatpush.msra.mxu0 0.0
      %3004 = vmatpush.msra.mxu0 0.0
      %3005 = vmatpush.msra.mxu0 0.0
      %3006 = vmatpush.msra.mxu0 0.0
      %3007 = vmatpush.msra.mxu0 0.0
      %3008 = vmatpush.msra.mxu0 0.0
      %3009 = vmatpush.msra.mxu0 0.0
      %3010 = vmatpush.msra.mxu0 0.0
      %3011 = vmatpush.msra.mxu0 0.0
      %3012 = vmatpush.msra.mxu0 %v2993
      %3013 = vmatmul.f32.gmra.mxu0 %v2995
      %v3014 = vpop.f32.mrf.mxu0
      %v3015 = vadd.f32 0.0, %v3014
      %3016 = vdwg.mxu0
      %v3017 = vadd.f32 %v2990, %v3015
      %s3018 = scalar_lea.vmem [#allocation3], 22
      %v3019 = vld [vmem:[%s3018] ss:$2 sm:$0x7]
      %v3020 = vld [vmem:[%s2768] sm:$0xff]
      %v3022 = vsel %vm2663, %v3019, 0
      %3024 = vmatpush.msra.mxu0 0.0
      %3025 = vmatpush.msra.mxu0 0.0
      %3026 = vmatpush.msra.mxu0 0.0
      %3027 = vmatpush.msra.mxu0 0.0
      %3028 = vmatpush.msra.mxu0 0.0
      %3029 = vmatpush.msra.mxu0 0.0
      %3030 = vmatpush.msra.mxu0 0.0
      %3031 = vmatpush.msra.mxu0 0.0
      %3032 = vmatpush.msra.mxu0 0.0
      %3033 = vmatpush.msra.mxu0 0.0
      %3034 = vmatpush.msra.mxu0 0.0
      %3035 = vmatpush.msra.mxu0 0.0
      %3036 = vmatpush.msra.mxu0 0.0
      %3037 = vmatpush.msra.mxu0 0.0
      %3038 = vmatpush.msra.mxu0 0.0
      %3039 = vmatpush.msra.mxu0 %v3020
      %3040 = vmatmul.f32.gmra.mxu0 %v3022
      %v3041 = vpop.f32.mrf.mxu0
      %v3042 = vadd.f32 0.0, %v3041
      %3043 = vdwg.mxu0
      %v3044 = vadd.f32 %v3017, %v3042
      %s3045 = scalar_lea.vmem [#allocation3], 23
      %v3046 = vld [vmem:[%s3045] ss:$2 sm:$0x7]
      %v3047 = vld [vmem:[%s2796] sm:$0xff]
      %v3049 = vsel %vm2663, %v3046, 0
      %3051 = vmatpush.msra.mxu0 0.0
      %3052 = vmatpush.msra.mxu0 0.0
      %3053 = vmatpush.msra.mxu0 0.0
      %3054 = vmatpush.msra.mxu0 0.0
      %3055 = vmatpush.msra.mxu0 0.0
      %3056 = vmatpush.msra.mxu0 0.0
      %3057 = vmatpush.msra.mxu0 0.0
      %3058 = vmatpush.msra.mxu0 0.0
      %3059 = vmatpush.msra.mxu0 0.0
      %3060 = vmatpush.msra.mxu0 0.0
      %3061 = vmatpush.msra.mxu0 0.0
      %3062 = vmatpush.msra.mxu0 0.0
      %3063 = vmatpush.msra.mxu0 0.0
      %3064 = vmatpush.msra.mxu0 0.0
      %3065 = vmatpush.msra.mxu0 0.0
      %3066 = vmatpush.msra.mxu0 %v3047
      %3067 = vmatmul.f32.gmra.mxu0 %v3049
      %v3068 = vpop.f32.mrf.mxu0
      %v3069 = vadd.f32 0.0, %v3068
      %3070 = vdwg.mxu0
      %v3071 = vadd.f32 %v3044, %v3069
      %s3072 = scalar_lea.vmem [#allocation3], 28
      %v3073 = vld [vmem:[%s3072] ss:$2 sm:$0x7]
      %v3074 = vld [vmem:[%s2824] sm:$0xff]
      %v3076 = vsel %vm2663, %v3073, 0
      %3078 = vmatpush.msra.mxu0 0.0
      %3079 = vmatpush.msra.mxu0 0.0
      %3080 = vmatpush.msra.mxu0 0.0
      %3081 = vmatpush.msra.mxu0 0.0
      %3082 = vmatpush.msra.mxu0 0.0
      %3083 = vmatpush.msra.mxu0 0.0
      %3084 = vmatpush.msra.mxu0 0.0
      %3085 = vmatpush.msra.mxu0 0.0
      %3086 = vmatpush.msra.mxu0 0.0
      %3087 = vmatpush.msra.mxu0 0.0
      %3088 = vmatpush.msra.mxu0 0.0
      %3089 = vmatpush.msra.mxu0 0.0
      %3090 = vmatpush.msra.mxu0 0.0
      %3091 = vmatpush.msra.mxu0 0.0
      %3092 = vmatpush.msra.mxu0 0.0
      %3093 = vmatpush.msra.mxu0 %v3074
      %3094 = vmatmul.f32.gmra.mxu0 %v3076
      %v3095 = vpop.f32.mrf.mxu0
      %v3096 = vadd.f32 0.0, %v3095
      %3097 = vdwg.mxu0
      %v3098 = vadd.f32 %v3071, %v3096
      %s3099 = scalar_lea.vmem [#allocation3], 29
      %v3100 = vld [vmem:[%s3099] ss:$2 sm:$0x7]
      %v3101 = vld [vmem:[%s2852] sm:$0xff]
      %v3103 = vsel %vm2663, %v3100, 0
      %3105 = vmatpush.msra.mxu0 0.0
      %3106 = vmatpush.msra.mxu0 0.0
      %3107 = vmatpush.msra.mxu0 0.0
      %3108 = vmatpush.msra.mxu0 0.0
      %3109 = vmatpush.msra.mxu0 0.0
      %3110 = vmatpush.msra.mxu0 0.0
      %3111 = vmatpush.msra.mxu0 0.0
      %3112 = vmatpush.msra.mxu0 0.0
      %3113 = vmatpush.msra.mxu0 0.0
      %3114 = vmatpush.msra.mxu0 0.0
      %3115 = vmatpush.msra.mxu0 0.0
      %3116 = vmatpush.msra.mxu0 0.0
      %3117 = vmatpush.msra.mxu0 0.0
      %3118 = vmatpush.msra.mxu0 0.0
      %3119 = vmatpush.msra.mxu0 0.0
      %3120 = vmatpush.msra.mxu0 %v3101
      %3121 = vmatmul.f32.gmra.mxu0 %v3103
      %v3122 = vpop.f32.mrf.mxu0
      %v3123 = vadd.f32 0.0, %v3122
      %3124 = vdwg.mxu0
      %v3125 = vadd.f32 %v3098, %v3123
      %s3126 = scalar_lea.vmem [#allocation3], 30
      %v3127 = vld [vmem:[%s3126] ss:$2 sm:$0x7]
      %v3128 = vld [vmem:[%s2880] sm:$0xff]
      %v3130 = vsel %vm2663, %v3127, 0
      %3132 = vmatpush.msra.mxu0 0.0
      %3133 = vmatpush.msra.mxu0 0.0
      %3134 = vmatpush.msra.mxu0 0.0
      %3135 = vmatpush.msra.mxu0 0.0
      %3136 = vmatpush.msra.mxu0 0.0
      %3137 = vmatpush.msra.mxu0 0.0
      %3138 = vmatpush.msra.mxu0 0.0
      %3139 = vmatpush.msra.mxu0 0.0
      %3140 = vmatpush.msra.mxu0 0.0
      %3141 = vmatpush.msra.mxu0 0.0
      %3142 = vmatpush.msra.mxu0 0.0
      %3143 = vmatpush.msra.mxu0 0.0
      %3144 = vmatpush.msra.mxu0 0.0
      %3145 = vmatpush.msra.mxu0 0.0
      %3146 = vmatpush.msra.mxu0 0.0
      %3147 = vmatpush.msra.mxu0 %v3128
      %3148 = vmatmul.f32.gmra.mxu0 %v3130
      %v3149 = vpop.f32.mrf.mxu0
      %v3150 = vadd.f32 0.0, %v3149
      %3151 = vdwg.mxu0
      %v3152 = vadd.f32 %v3125, %v3150
      %v3153 = vadd.f32 %v3152, %v2907
      %vm3154 = vcmp.ge.f32.partialorder %v3153, 0.0
      %v3155 = vmul.f32 %v3153, 0.01
      %v3156 = vsel %vm3154, %v3153, %v3155
      %3157 = vst.msk [vmem:[#allocation4 + $0xb] sm:$0x7] %vm2913, %v3156
      %v3158 = vld [vmem:[%s3072] ss:$2 sm:$0x7]
      %v3159 = vld [vmem:[%s5] sm:$0xff]
      %v3160 = vld [vmem:[%s3099] ss:$2 sm:$0x7]
      %v3161 = vld [vmem:[%s2661] sm:$0xff]
      %v3163 = vsel %vm2663, %v3160, 0
      %3165 = vmatpush.msra.mxu0 0.0
      %3166 = vmatpush.msra.mxu0 0.0
      %3167 = vmatpush.msra.mxu0 0.0
      %3168 = vmatpush.msra.mxu0 0.0
      %3169 = vmatpush.msra.mxu0 0.0
      %3170 = vmatpush.msra.mxu0 0.0
      %3171 = vmatpush.msra.mxu0 0.0
      %3172 = vmatpush.msra.mxu0 0.0
      %3173 = vmatpush.msra.mxu0 0.0
      %3174 = vmatpush.msra.mxu0 0.0
      %3175 = vmatpush.msra.mxu0 0.0
      %3176 = vmatpush.msra.mxu0 0.0
      %3177 = vmatpush.msra.mxu0 0.0
      %3178 = vmatpush.msra.mxu0 0.0
      %3179 = vmatpush.msra.mxu0 0.0
      %3180 = vmatpush.msra.mxu0 %v3161
      %3181 = vmatmul.f32.gmra.mxu0 %v3163
      %v3182 = vpop.f32.mrf.mxu0
      %v3183 = vadd.f32 0.0, %v3182
      %3184 = vdwg.mxu0
      %v3186 = vsel %vm2663, %v3158, 0
      %3188 = vmatpush.msra.mxu0 0.0
      %3189 = vmatpush.msra.mxu0 0.0
      %3190 = vmatpush.msra.mxu0 0.0
      %3191 = vmatpush.msra.mxu0 0.0
      %3192 = vmatpush.msra.mxu0 0.0
      %3193 = vmatpush.msra.mxu0 0.0
      %3194 = vmatpush.msra.mxu0 0.0
      %3195 = vmatpush.msra.mxu0 0.0
      %3196 = vmatpush.msra.mxu0 0.0
      %3197 = vmatpush.msra.mxu0 0.0
      %3198 = vmatpush.msra.mxu0 0.0
      %3199 = vmatpush.msra.mxu0 0.0
      %3200 = vmatpush.msra.mxu0 0.0
      %3201 = vmatpush.msra.mxu0 0.0
      %3202 = vmatpush.msra.mxu0 0.0
      %3203 = vmatpush.msra.mxu0 %v3159
      %3204 = vmatmul.f32.gmra.mxu0 %v3186
      %v3205 = vpop.f32.mrf.mxu0
      %v3206 = vadd.f32 %v3183, %v3205
      %3207 = vdwg.mxu0
      %v3208 = vld [vmem:[%s3126] ss:$2 sm:$0x7]
      %v3209 = vld [vmem:[%s2712] sm:$0xff]
      %v3211 = vsel %vm2663, %v3208, 0
      %3213 = vmatpush.msra.mxu0 0.0
      %3214 = vmatpush.msra.mxu0 0.0
      %3215 = vmatpush.msra.mxu0 0.0
      %3216 = vmatpush.msra.mxu0 0.0
      %3217 = vmatpush.msra.mxu0 0.0
      %3218 = vmatpush.msra.mxu0 0.0
      %3219 = vmatpush.msra.mxu0 0.0
      %3220 = vmatpush.msra.mxu0 0.0
      %3221 = vmatpush.msra.mxu0 0.0
      %3222 = vmatpush.msra.mxu0 0.0
      %3223 = vmatpush.msra.mxu0 0.0
      %3224 = vmatpush.msra.mxu0 0.0
      %3225 = vmatpush.msra.mxu0 0.0
      %3226 = vmatpush.msra.mxu0 0.0
      %3227 = vmatpush.msra.mxu0 0.0
      %3228 = vmatpush.msra.mxu0 %v3209
      %3229 = vmatmul.f32.gmra.mxu0 %v3211
      %v3230 = vpop.f32.mrf.mxu0
      %v3231 = vadd.f32 0.0, %v3230
      %3232 = vdwg.mxu0
      %v3233 = vadd.f32 %v3206, %v3231
      %s3234 = scalar_lea.vmem [#allocation3], 35
      %v3235 = vld [vmem:[%s3234] ss:$2 sm:$0x7]
      %v3236 = vld [vmem:[%s2740] sm:$0xff]
      %v3238 = vsel %vm2663, %v3235, 0
      %3240 = vmatpush.msra.mxu0 0.0
      %3241 = vmatpush.msra.mxu0 0.0
      %3242 = vmatpush.msra.mxu0 0.0
      %3243 = vmatpush.msra.mxu0 0.0
      %3244 = vmatpush.msra.mxu0 0.0
      %3245 = vmatpush.msra.mxu0 0.0
      %3246 = vmatpush.msra.mxu0 0.0
      %3247 = vmatpush.msra.mxu0 0.0
      %3248 = vmatpush.msra.mxu0 0.0
      %3249 = vmatpush.msra.mxu0 0.0
      %3250 = vmatpush.msra.mxu0 0.0
      %3251 = vmatpush.msra.mxu0 0.0
      %3252 = vmatpush.msra.mxu0 0.0
      %3253 = vmatpush.msra.mxu0 0.0
      %3254 = vmatpush.msra.mxu0 0.0
      %3255 = vmatpush.msra.mxu0 %v3236
      %3256 = vmatmul.f32.gmra.mxu0 %v3238
      %v3257 = vpop.f32.mrf.mxu0
      %v3258 = vadd.f32 0.0, %v3257
      %3259 = vdwg.mxu0
      %v3260 = vadd.f32 %v3233, %v3258
      %s3261 = scalar_lea.vmem [#allocation3], 36
      %v3262 = vld [vmem:[%s3261] ss:$2 sm:$0x7]
      %v3263 = vld [vmem:[%s2768] sm:$0xff]
      %v3265 = vsel %vm2663, %v3262, 0
      %3267 = vmatpush.msra.mxu0 0.0
      %3268 = vmatpush.msra.mxu0 0.0
      %3269 = vmatpush.msra.mxu0 0.0
      %3270 = vmatpush.msra.mxu0 0.0
      %3271 = vmatpush.msra.mxu0 0.0
      %3272 = vmatpush.msra.mxu0 0.0
      %3273 = vmatpush.msra.mxu0 0.0
      %3274 = vmatpush.msra.mxu0 0.0
      %3275 = vmatpush.msra.mxu0 0.0
      %3276 = vmatpush.msra.mxu0 0.0
      %3277 = vmatpush.msra.mxu0 0.0
      %3278 = vmatpush.msra.mxu0 0.0
      %3279 = vmatpush.msra.mxu0 0.0
      %3280 = vmatpush.msra.mxu0 0.0
      %3281 = vmatpush.msra.mxu0 0.0
      %3282 = vmatpush.msra.mxu0 %v3263
      %3283 = vmatmul.f32.gmra.mxu0 %v3265
      %v3284 = vpop.f32.mrf.mxu0
      %v3285 = vadd.f32 0.0, %v3284
      %3286 = vdwg.mxu0
      %v3287 = vadd.f32 %v3260, %v3285
      %s3288 = scalar_lea.vmem [#allocation3], 37
      %v3289 = vld [vmem:[%s3288] ss:$2 sm:$0x7]
      %v3290 = vld [vmem:[%s2796] sm:$0xff]
      %v3292 = vsel %vm2663, %v3289, 0
      %3294 = vmatpush.msra.mxu0 0.0
      %3295 = vmatpush.msra.mxu0 0.0
      %3296 = vmatpush.msra.mxu0 0.0
      %3297 = vmatpush.msra.mxu0 0.0
      %3298 = vmatpush.msra.mxu0 0.0
      %3299 = vmatpush.msra.mxu0 0.0
      %3300 = vmatpush.msra.mxu0 0.0
      %3301 = vmatpush.msra.mxu0 0.0
      %3302 = vmatpush.msra.mxu0 0.0
      %3303 = vmatpush.msra.mxu0 0.0
      %3304 = vmatpush.msra.mxu0 0.0
      %3305 = vmatpush.msra.mxu0 0.0
      %3306 = vmatpush.msra.mxu0 0.0
      %3307 = vmatpush.msra.mxu0 0.0
      %3308 = vmatpush.msra.mxu0 0.0
      %3309 = vmatpush.msra.mxu0 %v3290
      %3310 = vmatmul.f32.gmra.mxu0 %v3292
      %v3311 = vpop.f32.mrf.mxu0
      %v3312 = vadd.f32 0.0, %v3311
      %3313 = vdwg.mxu0
      %v3314 = vadd.f32 %v3287, %v3312
      %s3315 = scalar_lea.vmem [#allocation3], 42
      %v3316 = vld [vmem:[%s3315] ss:$2 sm:$0x7]
      %v3317 = vld [vmem:[%s2824] sm:$0xff]
      %v3319 = vsel %vm2663, %v3316, 0
      %3321 = vmatpush.msra.mxu0 0.0
      %3322 = vmatpush.msra.mxu0 0.0
      %3323 = vmatpush.msra.mxu0 0.0
      %3324 = vmatpush.msra.mxu0 0.0
      %3325 = vmatpush.msra.mxu0 0.0
      %3326 = vmatpush.msra.mxu0 0.0
      %3327 = vmatpush.msra.mxu0 0.0
      %3328 = vmatpush.msra.mxu0 0.0
      %3329 = vmatpush.msra.mxu0 0.0
      %3330 = vmatpush.msra.mxu0 0.0
      %3331 = vmatpush.msra.mxu0 0.0
      %3332 = vmatpush.msra.mxu0 0.0
      %3333 = vmatpush.msra.mxu0 0.0
      %3334 = vmatpush.msra.mxu0 0.0
      %3335 = vmatpush.msra.mxu0 0.0
      %3336 = vmatpush.msra.mxu0 %v3317
      %3337 = vmatmul.f32.gmra.mxu0 %v3319
      %v3338 = vpop.f32.mrf.mxu0
      %v3339 = vadd.f32 0.0, %v3338
      %3340 = vdwg.mxu0
      %v3341 = vadd.f32 %v3314, %v3339
      %s3342 = scalar_lea.vmem [#allocation3], 43
      %v3343 = vld [vmem:[%s3342] ss:$2 sm:$0x7]
      %v3344 = vld [vmem:[%s2852] sm:$0xff]
      %v3346 = vsel %vm2663, %v3343, 0
      %3348 = vmatpush.msra.mxu0 0.0
      %3349 = vmatpush.msra.mxu0 0.0
      %3350 = vmatpush.msra.mxu0 0.0
      %3351 = vmatpush.msra.mxu0 0.0
      %3352 = vmatpush.msra.mxu0 0.0
      %3353 = vmatpush.msra.mxu0 0.0
      %3354 = vmatpush.msra.mxu0 0.0
      %3355 = vmatpush.msra.mxu0 0.0
      %3356 = vmatpush.msra.mxu0 0.0
      %3357 = vmatpush.msra.mxu0 0.0
      %3358 = vmatpush.msra.mxu0 0.0
      %3359 = vmatpush.msra.mxu0 0.0
      %3360 = vmatpush.msra.mxu0 0.0
      %3361 = vmatpush.msra.mxu0 0.0
      %3362 = vmatpush.msra.mxu0 0.0
      %3363 = vmatpush.msra.mxu0 %v3344
      %3364 = vmatmul.f32.gmra.mxu0 %v3346
      %v3365 = vpop.f32.mrf.mxu0
      %v3366 = vadd.f32 0.0, %v3365
      %3367 = vdwg.mxu0
      %v3368 = vadd.f32 %v3341, %v3366
      %s3369 = scalar_lea.vmem [#allocation3], 44
      %v3370 = vld [vmem:[%s3369] ss:$2 sm:$0x7]
      %v3371 = vld [vmem:[%s2880] sm:$0xff]
      %v3373 = vsel %vm2663, %v3370, 0
      %3375 = vmatpush.msra.mxu0 0.0
      %3376 = vmatpush.msra.mxu0 0.0
      %3377 = vmatpush.msra.mxu0 0.0
      %3378 = vmatpush.msra.mxu0 0.0
      %3379 = vmatpush.msra.mxu0 0.0
      %3380 = vmatpush.msra.mxu0 0.0
      %3381 = vmatpush.msra.mxu0 0.0
      %3382 = vmatpush.msra.mxu0 0.0
      %3383 = vmatpush.msra.mxu0 0.0
      %3384 = vmatpush.msra.mxu0 0.0
      %3385 = vmatpush.msra.mxu0 0.0
      %3386 = vmatpush.msra.mxu0 0.0
      %3387 = vmatpush.msra.mxu0 0.0
      %3388 = vmatpush.msra.mxu0 0.0
      %3389 = vmatpush.msra.mxu0 0.0
      %3390 = vmatpush.msra.mxu0 %v3371
      %3391 = vmatmul.f32.gmra.mxu0 %v3373
      %v3392 = vpop.f32.mrf.mxu0
      %v3393 = vadd.f32 0.0, %v3392
      %3394 = vdwg.mxu0
      %v3395 = vadd.f32 %v3368, %v3393
      %v3396 = vadd.f32 %v3395, %v2907
      %vm3397 = vcmp.ge.f32.partialorder %v3396, 0.0
      %v3398 = vmul.f32 %v3396, 0.01
      %v3399 = vsel %vm3397, %v3396, %v3398
      %3400 = vst.msk [vmem:[#allocation4 + $0x10] sm:$0x7] %vm2913, %v3399
      %v3401 = vld [vmem:[%s8] sm:$0x1]
      %v3402 = vld [vmem:[#allocation4] sm:$0x7]
      %v3403 = vld [vmem:[%s7] sm:$0xff]
      %v3404 = vld [vmem:[%s7 + $0x8] sm:$0xff]
      %v3405 = vld [vmem:[#allocation4 + $0x1] sm:$0x7]
      %s3406 = scalar_lea.vmem %s7, 16
      %v3407 = vld [vmem:[%s3406] sm:$0xff]
      %v3408 = vld [vmem:[%s3406 + $0x8] sm:$0xff]
      %v3410 = vsel %vm389, %v3405, 0
      %3412 = vmatpush.msra.mxu0 0.0
      %3413 = vmatpush.msra.mxu0 0.0
      %3414 = vmatpush.msra.mxu0 0.0
      %3415 = vmatpush.msra.mxu0 0.0
      %3416 = vmatpush.msra.mxu0 0.0
      %3417 = vmatpush.msra.mxu0 0.0
      %3418 = vmatpush.msra.mxu0 0.0
      %3419 = vmatpush.msra.mxu0 0.0
      %3420 = vmatpush.msra.mxu0 0.0
      %3421 = vmatpush.msra.mxu0 0.0
      %3422 = vmatpush.msra.mxu0 0.0
      %3423 = vmatpush.msra.mxu0 0.0
      %3424 = vmatpush.msra.mxu0 0.0
      %3425 = vmatpush.msra.mxu0 0.0
      %3426 = vmatpush.msra.mxu0 %v3408
      %3427 = vmatpush.msra.mxu0 %v3407
      %3428 = vmatmul.f32.gmra.mxu0 %v3410
      %v3429 = vpop.f32.mrf.mxu0
      %v3430 = vadd.f32 0.0, %v3429
      %3431 = vdwg.mxu0
      %v3433 = vsel %vm389, %v3402, 0
      %3435 = vmatpush.msra.mxu0 0.0
      %3436 = vmatpush.msra.mxu0 0.0
      %3437 = vmatpush.msra.mxu0 0.0
      %3438 = vmatpush.msra.mxu0 0.0
      %3439 = vmatpush.msra.mxu0 0.0
      %3440 = vmatpush.msra.mxu0 0.0
      %3441 = vmatpush.msra.mxu0 0.0
      %3442 = vmatpush.msra.mxu0 0.0
      %3443 = vmatpush.msra.mxu0 0.0
      %3444 = vmatpush.msra.mxu0 0.0
      %3445 = vmatpush.msra.mxu0 0.0
      %3446 = vmatpush.msra.mxu0 0.0
      %3447 = vmatpush.msra.mxu0 0.0
      %3448 = vmatpush.msra.mxu0 0.0
      %3449 = vmatpush.msra.mxu0 %v3404
      %3450 = vmatpush.msra.mxu0 %v3403
      %3451 = vmatmul.f32.gmra.mxu0 %v3433
      %v3452 = vpop.f32.mrf.mxu0
      %v3453 = vadd.f32 %v3430, %v3452
      %3454 = vdwg.mxu0
      %v3455 = vld [vmem:[#allocation4 + $0x2] sm:$0x7]
      %s3456 = scalar_lea.vmem %s7, 32
      %v3457 = vld [vmem:[%s3456] sm:$0xff]
      %v3458 = vld [vmem:[%s3456 + $0x8] sm:$0xff]
      %v3460 = vsel %vm389, %v3455, 0
      %3462 = vmatpush.msra.mxu0 0.0
      %3463 = vmatpush.msra.mxu0 0.0
      %3464 = vmatpush.msra.mxu0 0.0
      %3465 = vmatpush.msra.mxu0 0.0
      %3466 = vmatpush.msra.mxu0 0.0
      %3467 = vmatpush.msra.mxu0 0.0
      %3468 = vmatpush.msra.mxu0 0.0
      %3469 = vmatpush.msra.mxu0 0.0
      %3470 = vmatpush.msra.mxu0 0.0
      %3471 = vmatpush.msra.mxu0 0.0
      %3472 = vmatpush.msra.mxu0 0.0
      %3473 = vmatpush.msra.mxu0 0.0
      %3474 = vmatpush.msra.mxu0 0.0
      %3475 = vmatpush.msra.mxu0 0.0
      %3476 = vmatpush.msra.mxu0 %v3458
      %3477 = vmatpush.msra.mxu0 %v3457
      %3478 = vmatmul.f32.gmra.mxu0 %v3460
      %v3479 = vpop.f32.mrf.mxu0
      %v3480 = vadd.f32 0.0, %v3479
      %3481 = vdwg.mxu0
      %v3482 = vadd.f32 %v3453, %v3480
      %v3483 = vld [vmem:[#allocation4 + $0x5] sm:$0x7]
      %s3484 = scalar_lea.vmem %s7, 48
      %v3485 = vld [vmem:[%s3484] sm:$0xff]
      %v3486 = vld [vmem:[%s3484 + $0x8] sm:$0xff]
      %v3488 = vsel %vm389, %v3483, 0
      %3490 = vmatpush.msra.mxu0 0.0
      %3491 = vmatpush.msra.mxu0 0.0
      %3492 = vmatpush.msra.mxu0 0.0
      %3493 = vmatpush.msra.mxu0 0.0
      %3494 = vmatpush.msra.mxu0 0.0
      %3495 = vmatpush.msra.mxu0 0.0
      %3496 = vmatpush.msra.mxu0 0.0
      %3497 = vmatpush.msra.mxu0 0.0
      %3498 = vmatpush.msra.mxu0 0.0
      %3499 = vmatpush.msra.mxu0 0.0
      %3500 = vmatpush.msra.mxu0 0.0
      %3501 = vmatpush.msra.mxu0 0.0
      %3502 = vmatpush.msra.mxu0 0.0
      %3503 = vmatpush.msra.mxu0 0.0
      %3504 = vmatpush.msra.mxu0 %v3486
      %3505 = vmatpush.msra.mxu0 %v3485
      %3506 = vmatmul.f32.gmra.mxu0 %v3488
      %v3507 = vpop.f32.mrf.mxu0
      %v3508 = vadd.f32 0.0, %v3507
      %3509 = vdwg.mxu0
      %v3510 = vadd.f32 %v3482, %v3508
      %v3511 = vld [vmem:[#allocation4 + $0x6] sm:$0x7]
      %s3512 = scalar_lea.vmem %s7, 64
      %v3513 = vld [vmem:[%s3512] sm:$0xff]
      %v3514 = vld [vmem:[%s3512 + $0x8] sm:$0xff]
      %v3516 = vsel %vm389, %v3511, 0
      %3518 = vmatpush.msra.mxu0 0.0
      %3519 = vmatpush.msra.mxu0 0.0
      %3520 = vmatpush.msra.mxu0 0.0
      %3521 = vmatpush.msra.mxu0 0.0
      %3522 = vmatpush.msra.mxu0 0.0
      %3523 = vmatpush.msra.mxu0 0.0
      %3524 = vmatpush.msra.mxu0 0.0
      %3525 = vmatpush.msra.mxu0 0.0
      %3526 = vmatpush.msra.mxu0 0.0
      %3527 = vmatpush.msra.mxu0 0.0
      %3528 = vmatpush.msra.mxu0 0.0
      %3529 = vmatpush.msra.mxu0 0.0
      %3530 = vmatpush.msra.mxu0 0.0
      %3531 = vmatpush.msra.mxu0 0.0
      %3532 = vmatpush.msra.mxu0 %v3514
      %3533 = vmatpush.msra.mxu0 %v3513
      %3534 = vmatmul.f32.gmra.mxu0 %v3516
      %v3535 = vpop.f32.mrf.mxu0
      %v3536 = vadd.f32 0.0, %v3535
      %3537 = vdwg.mxu0
      %v3538 = vadd.f32 %v3510, %v3536
      %v3539 = vld [vmem:[#allocation4 + $0x7] sm:$0x7]
      %s3540 = scalar_lea.vmem %s7, 80
      %v3541 = vld [vmem:[%s3540] sm:$0xff]
      %v3542 = vld [vmem:[%s3540 + $0x8] sm:$0xff]
      %v3544 = vsel %vm389, %v3539, 0
      %3546 = vmatpush.msra.mxu0 0.0
      %3547 = vmatpush.msra.mxu0 0.0
      %3548 = vmatpush.msra.mxu0 0.0
      %3549 = vmatpush.msra.mxu0 0.0
      %3550 = vmatpush.msra.mxu0 0.0
      %3551 = vmatpush.msra.mxu0 0.0
      %3552 = vmatpush.msra.mxu0 0.0
      %3553 = vmatpush.msra.mxu0 0.0
      %3554 = vmatpush.msra.mxu0 0.0
      %3555 = vmatpush.msra.mxu0 0.0
      %3556 = vmatpush.msra.mxu0 0.0
      %3557 = vmatpush.msra.mxu0 0.0
      %3558 = vmatpush.msra.mxu0 0.0
      %3559 = vmatpush.msra.mxu0 0.0
      %3560 = vmatpush.msra.mxu0 %v3542
      %3561 = vmatpush.msra.mxu0 %v3541
      %3562 = vmatmul.f32.gmra.mxu0 %v3544
      %v3563 = vpop.f32.mrf.mxu0
      %v3564 = vadd.f32 0.0, %v3563
      %3565 = vdwg.mxu0
      %v3566 = vadd.f32 %v3538, %v3564
      %v3567 = vld [vmem:[#allocation4 + $0xa] sm:$0x7]
      %s3568 = scalar_lea.vmem %s7, 96
      %v3569 = vld [vmem:[%s3568] sm:$0xff]
      %v3570 = vld [vmem:[%s3568 + $0x8] sm:$0xff]
      %v3572 = vsel %vm389, %v3567, 0
      %3574 = vmatpush.msra.mxu0 0.0
      %3575 = vmatpush.msra.mxu0 0.0
      %3576 = vmatpush.msra.mxu0 0.0
      %3577 = vmatpush.msra.mxu0 0.0
      %3578 = vmatpush.msra.mxu0 0.0
      %3579 = vmatpush.msra.mxu0 0.0
      %3580 = vmatpush.msra.mxu0 0.0
      %3581 = vmatpush.msra.mxu0 0.0
      %3582 = vmatpush.msra.mxu0 0.0
      %3583 = vmatpush.msra.mxu0 0.0
      %3584 = vmatpush.msra.mxu0 0.0
      %3585 = vmatpush.msra.mxu0 0.0
      %3586 = vmatpush.msra.mxu0 0.0
      %3587 = vmatpush.msra.mxu0 0.0
      %3588 = vmatpush.msra.mxu0 %v3570
      %3589 = vmatpush.msra.mxu0 %v3569
      %3590 = vmatmul.f32.gmra.mxu0 %v3572
      %v3591 = vpop.f32.mrf.mxu0
      %v3592 = vadd.f32 0.0, %v3591
      %3593 = vdwg.mxu0
      %v3594 = vadd.f32 %v3566, %v3592
      %v3595 = vld [vmem:[#allocation4 + $0xb] sm:$0x7]
      %s3596 = scalar_lea.vmem %s7, 112
      %v3597 = vld [vmem:[%s3596] sm:$0xff]
      %v3598 = vld [vmem:[%s3596 + $0x8] sm:$0xff]
      %v3600 = vsel %vm389, %v3595, 0
      %3602 = vmatpush.msra.mxu0 0.0
      %3603 = vmatpush.msra.mxu0 0.0
      %3604 = vmatpush.msra.mxu0 0.0
      %3605 = vmatpush.msra.mxu0 0.0
      %3606 = vmatpush.msra.mxu0 0.0
      %3607 = vmatpush.msra.mxu0 0.0
      %3608 = vmatpush.msra.mxu0 0.0
      %3609 = vmatpush.msra.mxu0 0.0
      %3610 = vmatpush.msra.mxu0 0.0
      %3611 = vmatpush.msra.mxu0 0.0
      %3612 = vmatpush.msra.mxu0 0.0
      %3613 = vmatpush.msra.mxu0 0.0
      %3614 = vmatpush.msra.mxu0 0.0
      %3615 = vmatpush.msra.mxu0 0.0
      %3616 = vmatpush.msra.mxu0 %v3598
      %3617 = vmatpush.msra.mxu0 %v3597
      %3618 = vmatmul.f32.gmra.mxu0 %v3600
      %v3619 = vpop.f32.mrf.mxu0
      %v3620 = vadd.f32 0.0, %v3619
      %3621 = vdwg.mxu0
      %v3622 = vadd.f32 %v3594, %v3620
      %v3623 = vld [vmem:[#allocation4 + $0xc] sm:$0x7]
      %s3624 = scalar_lea.vmem %s7, 128
      %v3625 = vld [vmem:[%s3624] sm:$0xff]
      %v3626 = vld [vmem:[%s3624 + $0x8] sm:$0xff]
      %v3628 = vsel %vm389, %v3623, 0
      %3630 = vmatpush.msra.mxu0 0.0
      %3631 = vmatpush.msra.mxu0 0.0
      %3632 = vmatpush.msra.mxu0 0.0
      %3633 = vmatpush.msra.mxu0 0.0
      %3634 = vmatpush.msra.mxu0 0.0
      %3635 = vmatpush.msra.mxu0 0.0
      %3636 = vmatpush.msra.mxu0 0.0
      %3637 = vmatpush.msra.mxu0 0.0
      %3638 = vmatpush.msra.mxu0 0.0
      %3639 = vmatpush.msra.mxu0 0.0
      %3640 = vmatpush.msra.mxu0 0.0
      %3641 = vmatpush.msra.mxu0 0.0
      %3642 = vmatpush.msra.mxu0 0.0
      %3643 = vmatpush.msra.mxu0 0.0
      %3644 = vmatpush.msra.mxu0 %v3626
      %3645 = vmatpush.msra.mxu0 %v3625
      %3646 = vmatmul.f32.gmra.mxu0 %v3628
      %v3647 = vpop.f32.mrf.mxu0
      %v3648 = vadd.f32 0.0, %v3647
      %3649 = vdwg.mxu0
      %v3650 = vadd.f32 %v3622, %v3648
      %v3652 = vperm.slane %v3401, 0
      %v3654 = vadd.f32 %v3650, %v3652
      %vm3655 = vcmp.ge.f32.partialorder %v3654, 0.0
      %v3656 = vmul.f32 %v3654, 0.01
      %v3657 = vsel %vm3655, %v3654, %v3656
      %vm3658 = vcmask 256000
      %3659 = vst.msk [vmem:[#allocation5 + $0x6] sm:$0x7] %vm3658, %v3657
      %v3660 = vld [vmem:[#allocation4 + $0x5] sm:$0x7]
      %v3661 = vld [vmem:[%s7] sm:$0xff]
      %v3662 = vld [vmem:[%s7 + $0x8] sm:$0xff]
      %v3663 = vld [vmem:[#allocation4 + $0x6] sm:$0x7]
      %v3664 = vld [vmem:[%s3406] sm:$0xff]
      %v3665 = vld [vmem:[%s3406 + $0x8] sm:$0xff]
      %v3667 = vsel %vm389, %v3663, 0
      %3669 = vmatpush.msra.mxu0 0.0
      %3670 = vmatpush.msra.mxu0 0.0
      %3671 = vmatpush.msra.mxu0 0.0
      %3672 = vmatpush.msra.mxu0 0.0
      %3673 = vmatpush.msra.mxu0 0.0
      %3674 = vmatpush.msra.mxu0 0.0
      %3675 = vmatpush.msra.mxu0 0.0
      %3676 = vmatpush.msra.mxu0 0.0
      %3677 = vmatpush.msra.mxu0 0.0
      %3678 = vmatpush.msra.mxu0 0.0
      %3679 = vmatpush.msra.mxu0 0.0
      %3680 = vmatpush.msra.mxu0 0.0
      %3681 = vmatpush.msra.mxu0 0.0
      %3682 = vmatpush.msra.mxu0 0.0
      %3683 = vmatpush.msra.mxu0 %v3665
      %3684 = vmatpush.msra.mxu0 %v3664
      %3685 = vmatmul.f32.gmra.mxu0 %v3667
      %v3686 = vpop.f32.mrf.mxu0
      %v3687 = vadd.f32 0.0, %v3686
      %3688 = vdwg.mxu0
      %v3690 = vsel %vm389, %v3660, 0
      %3692 = vmatpush.msra.mxu0 0.0
      %3693 = vmatpush.msra.mxu0 0.0
      %3694 = vmatpush.msra.mxu0 0.0
      %3695 = vmatpush.msra.mxu0 0.0
      %3696 = vmatpush.msra.mxu0 0.0
      %3697 = vmatpush.msra.mxu0 0.0
      %3698 = vmatpush.msra.mxu0 0.0
      %3699 = vmatpush.msra.mxu0 0.0
      %3700 = vmatpush.msra.mxu0 0.0
      %3701 = vmatpush.msra.mxu0 0.0
      %3702 = vmatpush.msra.mxu0 0.0
      %3703 = vmatpush.msra.mxu0 0.0
      %3704 = vmatpush.msra.mxu0 0.0
      %3705 = vmatpush.msra.mxu0 0.0
      %3706 = vmatpush.msra.mxu0 %v3662
      %3707 = vmatpush.msra.mxu0 %v3661
      %3708 = vmatmul.f32.gmra.mxu0 %v3690
      %v3709 = vpop.f32.mrf.mxu0
      %v3710 = vadd.f32 %v3687, %v3709
      %3711 = vdwg.mxu0
      %v3712 = vld [vmem:[#allocation4 + $0x7] sm:$0x7]
      %v3713 = vld [vmem:[%s3456] sm:$0xff]
      %v3714 = vld [vmem:[%s3456 + $0x8] sm:$0xff]
      %v3716 = vsel %vm389, %v3712, 0
      %3718 = vmatpush.msra.mxu0 0.0
      %3719 = vmatpush.msra.mxu0 0.0
      %3720 = vmatpush.msra.mxu0 0.0
      %3721 = vmatpush.msra.mxu0 0.0
      %3722 = vmatpush.msra.mxu0 0.0
      %3723 = vmatpush.msra.mxu0 0.0
      %3724 = vmatpush.msra.mxu0 0.0
      %3725 = vmatpush.msra.mxu0 0.0
      %3726 = vmatpush.msra.mxu0 0.0
      %3727 = vmatpush.msra.mxu0 0.0
      %3728 = vmatpush.msra.mxu0 0.0
      %3729 = vmatpush.msra.mxu0 0.0
      %3730 = vmatpush.msra.mxu0 0.0
      %3731 = vmatpush.msra.mxu0 0.0
      %3732 = vmatpush.msra.mxu0 %v3714
      %3733 = vmatpush.msra.mxu0 %v3713
      %3734 = vmatmul.f32.gmra.mxu0 %v3716
      %v3735 = vpop.f32.mrf.mxu0
      %v3736 = vadd.f32 0.0, %v3735
      %3737 = vdwg.mxu0
      %v3738 = vadd.f32 %v3710, %v3736
      %v3739 = vld [vmem:[#allocation4 + $0xa] sm:$0x7]
      %v3740 = vld [vmem:[%s3484] sm:$0xff]
      %v3741 = vld [vmem:[%s3484 + $0x8] sm:$0xff]
      %v3743 = vsel %vm389, %v3739, 0
      %3745 = vmatpush.msra.mxu0 0.0
      %3746 = vmatpush.msra.mxu0 0.0
      %3747 = vmatpush.msra.mxu0 0.0
      %3748 = vmatpush.msra.mxu0 0.0
      %3749 = vmatpush.msra.mxu0 0.0
      %3750 = vmatpush.msra.mxu0 0.0
      %3751 = vmatpush.msra.mxu0 0.0
      %3752 = vmatpush.msra.mxu0 0.0
      %3753 = vmatpush.msra.mxu0 0.0
      %3754 = vmatpush.msra.mxu0 0.0
      %3755 = vmatpush.msra.mxu0 0.0
      %3756 = vmatpush.msra.mxu0 0.0
      %3757 = vmatpush.msra.mxu0 0.0
      %3758 = vmatpush.msra.mxu0 0.0
      %3759 = vmatpush.msra.mxu0 %v3741
      %3760 = vmatpush.msra.mxu0 %v3740
      %3761 = vmatmul.f32.gmra.mxu0 %v3743
      %v3762 = vpop.f32.mrf.mxu0
      %v3763 = vadd.f32 0.0, %v3762
      %3764 = vdwg.mxu0
      %v3765 = vadd.f32 %v3738, %v3763
      %v3766 = vld [vmem:[#allocation4 + $0xb] sm:$0x7]
      %v3767 = vld [vmem:[%s3512] sm:$0xff]
      %v3768 = vld [vmem:[%s3512 + $0x8] sm:$0xff]
      %v3770 = vsel %vm389, %v3766, 0
      %3772 = vmatpush.msra.mxu0 0.0
      %3773 = vmatpush.msra.mxu0 0.0
      %3774 = vmatpush.msra.mxu0 0.0
      %3775 = vmatpush.msra.mxu0 0.0
      %3776 = vmatpush.msra.mxu0 0.0
      %3777 = vmatpush.msra.mxu0 0.0
      %3778 = vmatpush.msra.mxu0 0.0
      %3779 = vmatpush.msra.mxu0 0.0
      %3780 = vmatpush.msra.mxu0 0.0
      %3781 = vmatpush.msra.mxu0 0.0
      %3782 = vmatpush.msra.mxu0 0.0
      %3783 = vmatpush.msra.mxu0 0.0
      %3784 = vmatpush.msra.mxu0 0.0
      %3785 = vmatpush.msra.mxu0 0.0
      %3786 = vmatpush.msra.mxu0 %v3768
      %3787 = vmatpush.msra.mxu0 %v3767
      %3788 = vmatmul.f32.gmra.mxu0 %v3770
      %v3789 = vpop.f32.mrf.mxu0
      %v3790 = vadd.f32 0.0, %v3789
      %3791 = vdwg.mxu0
      %v3792 = vadd.f32 %v3765, %v3790
      %v3793 = vld [vmem:[#allocation4 + $0xc] sm:$0x7]
      %v3794 = vld [vmem:[%s3540] sm:$0xff]
      %v3795 = vld [vmem:[%s3540 + $0x8] sm:$0xff]
      %v3797 = vsel %vm389, %v3793, 0
      %3799 = vmatpush.msra.mxu0 0.0
      %3800 = vmatpush.msra.mxu0 0.0
      %3801 = vmatpush.msra.mxu0 0.0
      %3802 = vmatpush.msra.mxu0 0.0
      %3803 = vmatpush.msra.mxu0 0.0
      %3804 = vmatpush.msra.mxu0 0.0
      %3805 = vmatpush.msra.mxu0 0.0
      %3806 = vmatpush.msra.mxu0 0.0
      %3807 = vmatpush.msra.mxu0 0.0
      %3808 = vmatpush.msra.mxu0 0.0
      %3809 = vmatpush.msra.mxu0 0.0
      %3810 = vmatpush.msra.mxu0 0.0
      %3811 = vmatpush.msra.mxu0 0.0
      %3812 = vmatpush.msra.mxu0 0.0
      %3813 = vmatpush.msra.mxu0 %v3795
      %3814 = vmatpush.msra.mxu0 %v3794
      %3815 = vmatmul.f32.gmra.mxu0 %v3797
      %v3816 = vpop.f32.mrf.mxu0
      %v3817 = vadd.f32 0.0, %v3816
      %3818 = vdwg.mxu0
      %v3819 = vadd.f32 %v3792, %v3817
      %v3820 = vld [vmem:[#allocation4 + $0xf] sm:$0x7]
      %v3821 = vld [vmem:[%s3568] sm:$0xff]
      %v3822 = vld [vmem:[%s3568 + $0x8] sm:$0xff]
      %v3824 = vsel %vm389, %v3820, 0
      %3826 = vmatpush.msra.mxu0 0.0
      %3827 = vmatpush.msra.mxu0 0.0
      %3828 = vmatpush.msra.mxu0 0.0
      %3829 = vmatpush.msra.mxu0 0.0
      %3830 = vmatpush.msra.mxu0 0.0
      %3831 = vmatpush.msra.mxu0 0.0
      %3832 = vmatpush.msra.mxu0 0.0
      %3833 = vmatpush.msra.mxu0 0.0
      %3834 = vmatpush.msra.mxu0 0.0
      %3835 = vmatpush.msra.mxu0 0.0
      %3836 = vmatpush.msra.mxu0 0.0
      %3837 = vmatpush.msra.mxu0 0.0
      %3838 = vmatpush.msra.mxu0 0.0
      %3839 = vmatpush.msra.mxu0 0.0
      %3840 = vmatpush.msra.mxu0 %v3822
      %3841 = vmatpush.msra.mxu0 %v3821
      %3842 = vmatmul.f32.gmra.mxu0 %v3824
      %v3843 = vpop.f32.mrf.mxu0
      %v3844 = vadd.f32 0.0, %v3843
      %3845 = vdwg.mxu0
      %v3846 = vadd.f32 %v3819, %v3844
      %v3847 = vld [vmem:[#allocation4 + $0x10] sm:$0x7]
      %v3848 = vld [vmem:[%s3596] sm:$0xff]
      %v3849 = vld [vmem:[%s3596 + $0x8] sm:$0xff]
      %v3851 = vsel %vm389, %v3847, 0
      %3853 = vmatpush.msra.mxu0 0.0
      %3854 = vmatpush.msra.mxu0 0.0
      %3855 = vmatpush.msra.mxu0 0.0
      %3856 = vmatpush.msra.mxu0 0.0
      %3857 = vmatpush.msra.mxu0 0.0
      %3858 = vmatpush.msra.mxu0 0.0
      %3859 = vmatpush.msra.mxu0 0.0
      %3860 = vmatpush.msra.mxu0 0.0
      %3861 = vmatpush.msra.mxu0 0.0
      %3862 = vmatpush.msra.mxu0 0.0
      %3863 = vmatpush.msra.mxu0 0.0
      %3864 = vmatpush.msra.mxu0 0.0
      %3865 = vmatpush.msra.mxu0 0.0
      %3866 = vmatpush.msra.mxu0 0.0
      %3867 = vmatpush.msra.mxu0 %v3849
      %3868 = vmatpush.msra.mxu0 %v3848
      %3869 = vmatmul.f32.gmra.mxu0 %v3851
      %v3870 = vpop.f32.mrf.mxu0
      %v3871 = vadd.f32 0.0, %v3870
      %3872 = vdwg.mxu0
      %v3873 = vadd.f32 %v3846, %v3871
      %v3874 = vld [vmem:[#allocation4 + $0x11] sm:$0x7]
      %v3875 = vld [vmem:[%s3624] sm:$0xff]
      %v3876 = vld [vmem:[%s3624 + $0x8] sm:$0xff]
      %v3878 = vsel %vm389, %v3874, 0
      %3880 = vmatpush.msra.mxu0 0.0
      %3881 = vmatpush.msra.mxu0 0.0
      %3882 = vmatpush.msra.mxu0 0.0
      %3883 = vmatpush.msra.mxu0 0.0
      %3884 = vmatpush.msra.mxu0 0.0
      %3885 = vmatpush.msra.mxu0 0.0
      %3886 = vmatpush.msra.mxu0 0.0
      %3887 = vmatpush.msra.mxu0 0.0
      %3888 = vmatpush.msra.mxu0 0.0
      %3889 = vmatpush.msra.mxu0 0.0
      %3890 = vmatpush.msra.mxu0 0.0
      %3891 = vmatpush.msra.mxu0 0.0
      %3892 = vmatpush.msra.mxu0 0.0
      %3893 = vmatpush.msra.mxu0 0.0
      %3894 = vmatpush.msra.mxu0 %v3876
      %3895 = vmatpush.msra.mxu0 %v3875
      %3896 = vmatmul.f32.gmra.mxu0 %v3878
      %v3897 = vpop.f32.mrf.mxu0
      %v3898 = vadd.f32 0.0, %v3897
      %3899 = vdwg.mxu0
      %v3900 = vadd.f32 %v3873, %v3898
      %v3901 = vadd.f32 %v3900, %v3652
      %vm3902 = vcmp.ge.f32.partialorder %v3901, 0.0
      %v3903 = vmul.f32 %v3901, 0.01
      %v3904 = vsel %vm3902, %v3901, %v3903
      %3905 = vst.msk [vmem:[#allocation5 + $0xb] sm:$0x7] %vm3658, %v3904
      %v3906 = vld [vmem:[#allocation4 + $0xa] sm:$0x7]
      %v3907 = vld [vmem:[%s7] sm:$0xff]
      %v3908 = vld [vmem:[%s7 + $0x8] sm:$0xff]
      %v3909 = vld [vmem:[#allocation4 + $0xb] sm:$0x7]
      %v3910 = vld [vmem:[%s3406] sm:$0xff]
      %v3911 = vld [vmem:[%s3406 + $0x8] sm:$0xff]
      %v3913 = vsel %vm389, %v3909, 0
      %3915 = vmatpush.msra.mxu0 0.0
      %3916 = vmatpush.msra.mxu0 0.0
      %3917 = vmatpush.msra.mxu0 0.0
      %3918 = vmatpush.msra.mxu0 0.0
      %3919 = vmatpush.msra.mxu0 0.0
      %3920 = vmatpush.msra.mxu0 0.0
      %3921 = vmatpush.msra.mxu0 0.0
      %3922 = vmatpush.msra.mxu0 0.0
      %3923 = vmatpush.msra.mxu0 0.0
      %3924 = vmatpush.msra.mxu0 0.0
      %3925 = vmatpush.msra.mxu0 0.0
      %3926 = vmatpush.msra.mxu0 0.0
      %3927 = vmatpush.msra.mxu0 0.0
      %3928 = vmatpush.msra.mxu0 0.0
      %3929 = vmatpush.msra.mxu0 %v3911
      %3930 = vmatpush.msra.mxu0 %v3910
      %3931 = vmatmul.f32.gmra.mxu0 %v3913
      %v3932 = vpop.f32.mrf.mxu0
      %v3933 = vadd.f32 0.0, %v3932
      %3934 = vdwg.mxu0
      %v3936 = vsel %vm389, %v3906, 0
      %3938 = vmatpush.msra.mxu0 0.0
      %3939 = vmatpush.msra.mxu0 0.0
      %3940 = vmatpush.msra.mxu0 0.0
      %3941 = vmatpush.msra.mxu0 0.0
      %3942 = vmatpush.msra.mxu0 0.0
      %3943 = vmatpush.msra.mxu0 0.0
      %3944 = vmatpush.msra.mxu0 0.0
      %3945 = vmatpush.msra.mxu0 0.0
      %3946 = vmatpush.msra.mxu0 0.0
      %3947 = vmatpush.msra.mxu0 0.0
      %3948 = vmatpush.msra.mxu0 0.0
      %3949 = vmatpush.msra.mxu0 0.0
      %3950 = vmatpush.msra.mxu0 0.0
      %3951 = vmatpush.msra.mxu0 0.0
      %3952 = vmatpush.msra.mxu0 %v3908
      %3953 = vmatpush.msra.mxu0 %v3907
      %3954 = vmatmul.f32.gmra.mxu0 %v3936
      %v3955 = vpop.f32.mrf.mxu0
      %v3956 = vadd.f32 %v3933, %v3955
      %3957 = vdwg.mxu0
      %v3958 = vld [vmem:[#allocation4 + $0xc] sm:$0x7]
      %v3959 = vld [vmem:[%s3456] sm:$0xff]
      %v3960 = vld [vmem:[%s3456 + $0x8] sm:$0xff]
      %v3962 = vsel %vm389, %v3958, 0
      %3964 = vmatpush.msra.mxu0 0.0
      %3965 = vmatpush.msra.mxu0 0.0
      %3966 = vmatpush.msra.mxu0 0.0
      %3967 = vmatpush.msra.mxu0 0.0
      %3968 = vmatpush.msra.mxu0 0.0
      %3969 = vmatpush.msra.mxu0 0.0
      %3970 = vmatpush.msra.mxu0 0.0
      %3971 = vmatpush.msra.mxu0 0.0
      %3972 = vmatpush.msra.mxu0 0.0
      %3973 = vmatpush.msra.mxu0 0.0
      %3974 = vmatpush.msra.mxu0 0.0
      %3975 = vmatpush.msra.mxu0 0.0
      %3976 = vmatpush.msra.mxu0 0.0
      %3977 = vmatpush.msra.mxu0 0.0
      %3978 = vmatpush.msra.mxu0 %v3960
      %3979 = vmatpush.msra.mxu0 %v3959
      %3980 = vmatmul.f32.gmra.mxu0 %v3962
      %v3981 = vpop.f32.mrf.mxu0
      %v3982 = vadd.f32 0.0, %v3981
      %3983 = vdwg.mxu0
      %v3984 = vadd.f32 %v3956, %v3982
      %v3985 = vld [vmem:[#allocation4 + $0xf] sm:$0x7]
      %v3986 = vld [vmem:[%s3484] sm:$0xff]
      %v3987 = vld [vmem:[%s3484 + $0x8] sm:$0xff]
      %v3989 = vsel %vm389, %v3985, 0
      %3991 = vmatpush.msra.mxu0 0.0
      %3992 = vmatpush.msra.mxu0 0.0
      %3993 = vmatpush.msra.mxu0 0.0
      %3994 = vmatpush.msra.mxu0 0.0
      %3995 = vmatpush.msra.mxu0 0.0
      %3996 = vmatpush.msra.mxu0 0.0
      %3997 = vmatpush.msra.mxu0 0.0
      %3998 = vmatpush.msra.mxu0 0.0
      %3999 = vmatpush.msra.mxu0 0.0
      %4000 = vmatpush.msra.mxu0 0.0
      %4001 = vmatpush.msra.mxu0 0.0
      %4002 = vmatpush.msra.mxu0 0.0
      %4003 = vmatpush.msra.mxu0 0.0
      %4004 = vmatpush.msra.mxu0 0.0
      %4005 = vmatpush.msra.mxu0 %v3987
      %4006 = vmatpush.msra.mxu0 %v3986
      %4007 = vmatmul.f32.gmra.mxu0 %v3989
      %v4008 = vpop.f32.mrf.mxu0
      %v4009 = vadd.f32 0.0, %v4008
      %4010 = vdwg.mxu0
      %v4011 = vadd.f32 %v3984, %v4009
      %v4012 = vld [vmem:[#allocation4 + $0x10] sm:$0x7]
      %v4013 = vld [vmem:[%s3512] sm:$0xff]
      %v4014 = vld [vmem:[%s3512 + $0x8] sm:$0xff]
      %v4016 = vsel %vm389, %v4012, 0
      %4018 = vmatpush.msra.mxu0 0.0
      %4019 = vmatpush.msra.mxu0 0.0
      %4020 = vmatpush.msra.mxu0 0.0
      %4021 = vmatpush.msra.mxu0 0.0
      %4022 = vmatpush.msra.mxu0 0.0
      %4023 = vmatpush.msra.mxu0 0.0
      %4024 = vmatpush.msra.mxu0 0.0
      %4025 = vmatpush.msra.mxu0 0.0
      %4026 = vmatpush.msra.mxu0 0.0
      %4027 = vmatpush.msra.mxu0 0.0
      %4028 = vmatpush.msra.mxu0 0.0
      %4029 = vmatpush.msra.mxu0 0.0
      %4030 = vmatpush.msra.mxu0 0.0
      %4031 = vmatpush.msra.mxu0 0.0
      %4032 = vmatpush.msra.mxu0 %v4014
      %4033 = vmatpush.msra.mxu0 %v4013
      %4034 = vmatmul.f32.gmra.mxu0 %v4016
      %v4035 = vpop.f32.mrf.mxu0
      %v4036 = vadd.f32 0.0, %v4035
      %4037 = vdwg.mxu0
      %v4038 = vadd.f32 %v4011, %v4036
      %v4039 = vld [vmem:[#allocation4 + $0x11] sm:$0x7]
      %v4040 = vld [vmem:[%s3540] sm:$0xff]
      %v4041 = vld [vmem:[%s3540 + $0x8] sm:$0xff]
      %v4043 = vsel %vm389, %v4039, 0
      %4045 = vmatpush.msra.mxu0 0.0
      %4046 = vmatpush.msra.mxu0 0.0
      %4047 = vmatpush.msra.mxu0 0.0
      %4048 = vmatpush.msra.mxu0 0.0
      %4049 = vmatpush.msra.mxu0 0.0
      %4050 = vmatpush.msra.mxu0 0.0
      %4051 = vmatpush.msra.mxu0 0.0
      %4052 = vmatpush.msra.mxu0 0.0
      %4053 = vmatpush.msra.mxu0 0.0
      %4054 = vmatpush.msra.mxu0 0.0
      %4055 = vmatpush.msra.mxu0 0.0
      %4056 = vmatpush.msra.mxu0 0.0
      %4057 = vmatpush.msra.mxu0 0.0
      %4058 = vmatpush.msra.mxu0 0.0
      %4059 = vmatpush.msra.mxu0 %v4041
      %4060 = vmatpush.msra.mxu0 %v4040
      %4061 = vmatmul.f32.gmra.mxu0 %v4043
      %v4062 = vpop.f32.mrf.mxu0
      %v4063 = vadd.f32 0.0, %v4062
      %4064 = vdwg.mxu0
      %v4065 = vadd.f32 %v4038, %v4063
      %v4066 = vld [vmem:[#allocation4 + $0x14] sm:$0x7]
      %v4067 = vld [vmem:[%s3568] sm:$0xff]
      %v4068 = vld [vmem:[%s3568 + $0x8] sm:$0xff]
      %v4070 = vsel %vm389, %v4066, 0
      %4072 = vmatpush.msra.mxu0 0.0
      %4073 = vmatpush.msra.mxu0 0.0
      %4074 = vmatpush.msra.mxu0 0.0
      %4075 = vmatpush.msra.mxu0 0.0
      %4076 = vmatpush.msra.mxu0 0.0
      %4077 = vmatpush.msra.mxu0 0.0
      %4078 = vmatpush.msra.mxu0 0.0
      %4079 = vmatpush.msra.mxu0 0.0
      %4080 = vmatpush.msra.mxu0 0.0
      %4081 = vmatpush.msra.mxu0 0.0
      %4082 = vmatpush.msra.mxu0 0.0
      %4083 = vmatpush.msra.mxu0 0.0
      %4084 = vmatpush.msra.mxu0 0.0
      %4085 = vmatpush.msra.mxu0 0.0
      %4086 = vmatpush.msra.mxu0 %v4068
      %4087 = vmatpush.msra.mxu0 %v4067
      %4088 = vmatmul.f32.gmra.mxu0 %v4070
      %v4089 = vpop.f32.mrf.mxu0
      %v4090 = vadd.f32 0.0, %v4089
      %4091 = vdwg.mxu0
      %v4092 = vadd.f32 %v4065, %v4090
      %v4093 = vld [vmem:[#allocation4 + $0x15] sm:$0x7]
      %v4094 = vld [vmem:[%s3596] sm:$0xff]
      %v4095 = vld [vmem:[%s3596 + $0x8] sm:$0xff]
      %v4097 = vsel %vm389, %v4093, 0
      %4099 = vmatpush.msra.mxu0 0.0
      %4100 = vmatpush.msra.mxu0 0.0
      %4101 = vmatpush.msra.mxu0 0.0
      %4102 = vmatpush.msra.mxu0 0.0
      %4103 = vmatpush.msra.mxu0 0.0
      %4104 = vmatpush.msra.mxu0 0.0
      %4105 = vmatpush.msra.mxu0 0.0
      %4106 = vmatpush.msra.mxu0 0.0
      %4107 = vmatpush.msra.mxu0 0.0
      %4108 = vmatpush.msra.mxu0 0.0
      %4109 = vmatpush.msra.mxu0 0.0
      %4110 = vmatpush.msra.mxu0 0.0
      %4111 = vmatpush.msra.mxu0 0.0
      %4112 = vmatpush.msra.mxu0 0.0
      %4113 = vmatpush.msra.mxu0 %v4095
      %4114 = vmatpush.msra.mxu0 %v4094
      %4115 = vmatmul.f32.gmra.mxu0 %v4097
      %v4116 = vpop.f32.mrf.mxu0
      %v4117 = vadd.f32 0.0, %v4116
      %4118 = vdwg.mxu0
      %v4119 = vadd.f32 %v4092, %v4117
      %v4120 = vld [vmem:[#allocation4 + $0x16] sm:$0x7]
      %v4121 = vld [vmem:[%s3624] sm:$0xff]
      %v4122 = vld [vmem:[%s3624 + $0x8] sm:$0xff]
      %v4124 = vsel %vm389, %v4120, 0
      %4126 = vmatpush.msra.mxu0 0.0
      %4127 = vmatpush.msra.mxu0 0.0
      %4128 = vmatpush.msra.mxu0 0.0
      %4129 = vmatpush.msra.mxu0 0.0
      %4130 = vmatpush.msra.mxu0 0.0
      %4131 = vmatpush.msra.mxu0 0.0
      %4132 = vmatpush.msra.mxu0 0.0
      %4133 = vmatpush.msra.mxu0 0.0
      %4134 = vmatpush.msra.mxu0 0.0
      %4135 = vmatpush.msra.mxu0 0.0
      %4136 = vmatpush.msra.mxu0 0.0
      %4137 = vmatpush.msra.mxu0 0.0
      %4138 = vmatpush.msra.mxu0 0.0
      %4139 = vmatpush.msra.mxu0 0.0
      %4140 = vmatpush.msra.mxu0 %v4122
      %4141 = vmatpush.msra.mxu0 %v4121
      %4142 = vmatmul.f32.gmra.mxu0 %v4124
      %v4143 = vpop.f32.mrf.mxu0
      %v4144 = vadd.f32 0.0, %v4143
      %4145 = vdwg.mxu0
      %v4146 = vadd.f32 %v4119, %v4144
      %v4147 = vadd.f32 %v4146, %v3652
      %vm4148 = vcmp.ge.f32.partialorder %v4147, 0.0
      %v4149 = vmul.f32 %v4147, 0.01
      %v4150 = vsel %vm4148, %v4147, %v4149
      %4151 = vst.msk [vmem:[#allocation5 + $0x10] sm:$0x7] %vm3658, %v4150
      %v4152 = vld [vmem:[#allocation6] sm:$0x1]
      %v4153 = vld [vmem:[#allocation5] sm:$0x7]
      %v4154 = vld [vmem:[%s9] sm:$0xff]
      %v4155 = vld [vmem:[%s9 + $0x8] sm:$0xff]
      %v4156 = vld [vmem:[%s9 + $0x10] sm:$0xff]
      %v4157 = vld [vmem:[%s9 + $0x18] sm:$0xff]
      %v4158 = vld [vmem:[#allocation5 + $0x1] sm:$0x7]
      %s4159 = scalar_lea.vmem %s9, 32
      %v4160 = vld [vmem:[%s4159] sm:$0xff]
      %v4161 = vld [vmem:[%s4159 + $0x8] sm:$0xff]
      %v4162 = vld [vmem:[%s4159 + $0x10] sm:$0xff]
      %v4163 = vld [vmem:[%s4159 + $0x18] sm:$0xff]
      %v4165 = vsel %vm395, %v4158, 0
      %4167 = vmatpush.msra.mxu0 0.0
      %4168 = vmatpush.msra.mxu0 0.0
      %4169 = vmatpush.msra.mxu0 0.0
      %4170 = vmatpush.msra.mxu0 0.0
      %4171 = vmatpush.msra.mxu0 0.0
      %4172 = vmatpush.msra.mxu0 0.0
      %4173 = vmatpush.msra.mxu0 0.0
      %4174 = vmatpush.msra.mxu0 0.0
      %4175 = vmatpush.msra.mxu0 0.0
      %4176 = vmatpush.msra.mxu0 0.0
      %4177 = vmatpush.msra.mxu0 0.0
      %4178 = vmatpush.msra.mxu0 0.0
      %4179 = vmatpush.msra.mxu0 %v4163
      %4180 = vmatpush.msra.mxu0 %v4162
      %4181 = vmatpush.msra.mxu0 %v4161
      %4182 = vmatpush.msra.mxu0 %v4160
      %4183 = vmatmul.f32.gmra.mxu0 %v4165
      %v4184 = vpop.f32.mrf.mxu0
      %v4185 = vadd.f32 0.0, %v4184
      %4186 = vdwg.mxu0
      %v4188 = vsel %vm395, %v4153, 0
      %4190 = vmatpush.msra.mxu0 0.0
      %4191 = vmatpush.msra.mxu0 0.0
      %4192 = vmatpush.msra.mxu0 0.0
      %4193 = vmatpush.msra.mxu0 0.0
      %4194 = vmatpush.msra.mxu0 0.0
      %4195 = vmatpush.msra.mxu0 0.0
      %4196 = vmatpush.msra.mxu0 0.0
      %4197 = vmatpush.msra.mxu0 0.0
      %4198 = vmatpush.msra.mxu0 0.0
      %4199 = vmatpush.msra.mxu0 0.0
      %4200 = vmatpush.msra.mxu0 0.0
      %4201 = vmatpush.msra.mxu0 0.0
      %4202 = vmatpush.msra.mxu0 %v4157
      %4203 = vmatpush.msra.mxu0 %v4156
      %4204 = vmatpush.msra.mxu0 %v4155
      %4205 = vmatpush.msra.mxu0 %v4154
      %4206 = vmatmul.f32.gmra.mxu0 %v4188
      %v4207 = vpop.f32.mrf.mxu0
      %v4208 = vadd.f32 %v4185, %v4207
      %4209 = vdwg.mxu0
      %v4210 = vld [vmem:[#allocation5 + $0x2] sm:$0x7]
      %s4211 = scalar_lea.vmem %s9, 64
      %v4212 = vld [vmem:[%s4211] sm:$0xff]
      %v4213 = vld [vmem:[%s4211 + $0x8] sm:$0xff]
      %v4214 = vld [vmem:[%s4211 + $0x10] sm:$0xff]
      %v4215 = vld [vmem:[%s4211 + $0x18] sm:$0xff]
      %v4217 = vsel %vm395, %v4210, 0
      %4219 = vmatpush.msra.mxu0 0.0
      %4220 = vmatpush.msra.mxu0 0.0
      %4221 = vmatpush.msra.mxu0 0.0
      %4222 = vmatpush.msra.mxu0 0.0
      %4223 = vmatpush.msra.mxu0 0.0
      %4224 = vmatpush.msra.mxu0 0.0
      %4225 = vmatpush.msra.mxu0 0.0
      %4226 = vmatpush.msra.mxu0 0.0
      %4227 = vmatpush.msra.mxu0 0.0
      %4228 = vmatpush.msra.mxu0 0.0
      %4229 = vmatpush.msra.mxu0 0.0
      %4230 = vmatpush.msra.mxu0 0.0
      %4231 = vmatpush.msra.mxu0 %v4215
      %4232 = vmatpush.msra.mxu0 %v4214
      %4233 = vmatpush.msra.mxu0 %v4213
      %4234 = vmatpush.msra.mxu0 %v4212
      %4235 = vmatmul.f32.gmra.mxu0 %v4217
      %v4236 = vpop.f32.mrf.mxu0
      %v4237 = vadd.f32 0.0, %v4236
      %4238 = vdwg.mxu0
      %v4239 = vadd.f32 %v4208, %v4237
      %v4240 = vld [vmem:[#allocation5 + $0x5] sm:$0x7]
      %s4241 = scalar_lea.vmem %s9, 96
      %v4242 = vld [vmem:[%s4241] sm:$0xff]
      %v4243 = vld [vmem:[%s4241 + $0x8] sm:$0xff]
      %v4244 = vld [vmem:[%s4241 + $0x10] sm:$0xff]
      %v4245 = vld [vmem:[%s4241 + $0x18] sm:$0xff]
      %v4247 = vsel %vm395, %v4240, 0
      %4249 = vmatpush.msra.mxu0 0.0
      %4250 = vmatpush.msra.mxu0 0.0
      %4251 = vmatpush.msra.mxu0 0.0
      %4252 = vmatpush.msra.mxu0 0.0
      %4253 = vmatpush.msra.mxu0 0.0
      %4254 = vmatpush.msra.mxu0 0.0
      %4255 = vmatpush.msra.mxu0 0.0
      %4256 = vmatpush.msra.mxu0 0.0
      %4257 = vmatpush.msra.mxu0 0.0
      %4258 = vmatpush.msra.mxu0 0.0
      %4259 = vmatpush.msra.mxu0 0.0
      %4260 = vmatpush.msra.mxu0 0.0
      %4261 = vmatpush.msra.mxu0 %v4245
      %4262 = vmatpush.msra.mxu0 %v4244
      %4263 = vmatpush.msra.mxu0 %v4243
      %4264 = vmatpush.msra.mxu0 %v4242
      %4265 = vmatmul.f32.gmra.mxu0 %v4247
      %v4266 = vpop.f32.mrf.mxu0
      %v4267 = vadd.f32 0.0, %v4266
      %4268 = vdwg.mxu0
      %v4269 = vadd.f32 %v4239, %v4267
      %v4270 = vld [vmem:[#allocation5 + $0x6] sm:$0x7]
      %s4271 = scalar_lea.vmem %s9, 128
      %v4272 = vld [vmem:[%s4271] sm:$0xff]
      %v4273 = vld [vmem:[%s4271 + $0x8] sm:$0xff]
      %v4274 = vld [vmem:[%s4271 + $0x10] sm:$0xff]
      %v4275 = vld [vmem:[%s4271 + $0x18] sm:$0xff]
      %v4277 = vsel %vm395, %v4270, 0
      %4279 = vmatpush.msra.mxu0 0.0
      %4280 = vmatpush.msra.mxu0 0.0
      %4281 = vmatpush.msra.mxu0 0.0
      %4282 = vmatpush.msra.mxu0 0.0
      %4283 = vmatpush.msra.mxu0 0.0
      %4284 = vmatpush.msra.mxu0 0.0
      %4285 = vmatpush.msra.mxu0 0.0
      %4286 = vmatpush.msra.mxu0 0.0
      %4287 = vmatpush.msra.mxu0 0.0
      %4288 = vmatpush.msra.mxu0 0.0
      %4289 = vmatpush.msra.mxu0 0.0
      %4290 = vmatpush.msra.mxu0 0.0
      %4291 = vmatpush.msra.mxu0 %v4275
      %4292 = vmatpush.msra.mxu0 %v4274
      %4293 = vmatpush.msra.mxu0 %v4273
      %4294 = vmatpush.msra.mxu0 %v4272
      %4295 = vmatmul.f32.gmra.mxu0 %v4277
      %v4296 = vpop.f32.mrf.mxu0
      %v4297 = vadd.f32 0.0, %v4296
      %4298 = vdwg.mxu0
      %v4299 = vadd.f32 %v4269, %v4297
      %v4300 = vld [vmem:[#allocation5 + $0x7] sm:$0x7]
      %s4301 = scalar_lea.vmem %s9, 160
      %v4302 = vld [vmem:[%s4301] sm:$0xff]
      %v4303 = vld [vmem:[%s4301 + $0x8] sm:$0xff]
      %v4304 = vld [vmem:[%s4301 + $0x10] sm:$0xff]
      %v4305 = vld [vmem:[%s4301 + $0x18] sm:$0xff]
      %v4307 = vsel %vm395, %v4300, 0
      %4309 = vmatpush.msra.mxu0 0.0
      %4310 = vmatpush.msra.mxu0 0.0
      %4311 = vmatpush.msra.mxu0 0.0
      %4312 = vmatpush.msra.mxu0 0.0
      %4313 = vmatpush.msra.mxu0 0.0
      %4314 = vmatpush.msra.mxu0 0.0
      %4315 = vmatpush.msra.mxu0 0.0
      %4316 = vmatpush.msra.mxu0 0.0
      %4317 = vmatpush.msra.mxu0 0.0
      %4318 = vmatpush.msra.mxu0 0.0
      %4319 = vmatpush.msra.mxu0 0.0
      %4320 = vmatpush.msra.mxu0 0.0
      %4321 = vmatpush.msra.mxu0 %v4305
      %4322 = vmatpush.msra.mxu0 %v4304
      %4323 = vmatpush.msra.mxu0 %v4303
      %4324 = vmatpush.msra.mxu0 %v4302
      %4325 = vmatmul.f32.gmra.mxu0 %v4307
      %v4326 = vpop.f32.mrf.mxu0
      %v4327 = vadd.f32 0.0, %v4326
      %4328 = vdwg.mxu0
      %v4329 = vadd.f32 %v4299, %v4327
      %v4330 = vld [vmem:[#allocation5 + $0xa] sm:$0x7]
      %s4331 = scalar_lea.vmem %s9, 192
      %v4332 = vld [vmem:[%s4331] sm:$0xff]
      %v4333 = vld [vmem:[%s4331 + $0x8] sm:$0xff]
      %v4334 = vld [vmem:[%s4331 + $0x10] sm:$0xff]
      %v4335 = vld [vmem:[%s4331 + $0x18] sm:$0xff]
      %v4337 = vsel %vm395, %v4330, 0
      %4339 = vmatpush.msra.mxu0 0.0
      %4340 = vmatpush.msra.mxu0 0.0
      %4341 = vmatpush.msra.mxu0 0.0
      %4342 = vmatpush.msra.mxu0 0.0
      %4343 = vmatpush.msra.mxu0 0.0
      %4344 = vmatpush.msra.mxu0 0.0
      %4345 = vmatpush.msra.mxu0 0.0
      %4346 = vmatpush.msra.mxu0 0.0
      %4347 = vmatpush.msra.mxu0 0.0
      %4348 = vmatpush.msra.mxu0 0.0
      %4349 = vmatpush.msra.mxu0 0.0
      %4350 = vmatpush.msra.mxu0 0.0
      %4351 = vmatpush.msra.mxu0 %v4335
      %4352 = vmatpush.msra.mxu0 %v4334
      %4353 = vmatpush.msra.mxu0 %v4333
      %4354 = vmatpush.msra.mxu0 %v4332
      %4355 = vmatmul.f32.gmra.mxu0 %v4337
      %v4356 = vpop.f32.mrf.mxu0
      %v4357 = vadd.f32 0.0, %v4356
      %4358 = vdwg.mxu0
      %v4359 = vadd.f32 %v4329, %v4357
      %v4360 = vld [vmem:[#allocation5 + $0xb] sm:$0x7]
      %s4361 = scalar_lea.vmem %s9, 224
      %v4362 = vld [vmem:[%s4361] sm:$0xff]
      %v4363 = vld [vmem:[%s4361 + $0x8] sm:$0xff]
      %v4364 = vld [vmem:[%s4361 + $0x10] sm:$0xff]
      %v4365 = vld [vmem:[%s4361 + $0x18] sm:$0xff]
      %v4367 = vsel %vm395, %v4360, 0
      %4369 = vmatpush.msra.mxu0 0.0
      %4370 = vmatpush.msra.mxu0 0.0
      %4371 = vmatpush.msra.mxu0 0.0
      %4372 = vmatpush.msra.mxu0 0.0
      %4373 = vmatpush.msra.mxu0 0.0
      %4374 = vmatpush.msra.mxu0 0.0
      %4375 = vmatpush.msra.mxu0 0.0
      %4376 = vmatpush.msra.mxu0 0.0
      %4377 = vmatpush.msra.mxu0 0.0
      %4378 = vmatpush.msra.mxu0 0.0
      %4379 = vmatpush.msra.mxu0 0.0
      %4380 = vmatpush.msra.mxu0 0.0
      %4381 = vmatpush.msra.mxu0 %v4365
      %4382 = vmatpush.msra.mxu0 %v4364
      %4383 = vmatpush.msra.mxu0 %v4363
      %4384 = vmatpush.msra.mxu0 %v4362
      %4385 = vmatmul.f32.gmra.mxu0 %v4367
      %v4386 = vpop.f32.mrf.mxu0
      %v4387 = vadd.f32 0.0, %v4386
      %4388 = vdwg.mxu0
      %v4389 = vadd.f32 %v4359, %v4387
      %v4390 = vld [vmem:[#allocation5 + $0xc] sm:$0x7]
      %s4391 = scalar_lea.vmem %s9, 256
      %v4392 = vld [vmem:[%s4391] sm:$0xff]
      %v4393 = vld [vmem:[%s4391 + $0x8] sm:$0xff]
      %v4394 = vld [vmem:[%s4391 + $0x10] sm:$0xff]
      %v4395 = vld [vmem:[%s4391 + $0x18] sm:$0xff]
      %v4397 = vsel %vm395, %v4390, 0
      %4399 = vmatpush.msra.mxu0 0.0
      %4400 = vmatpush.msra.mxu0 0.0
      %4401 = vmatpush.msra.mxu0 0.0
      %4402 = vmatpush.msra.mxu0 0.0
      %4403 = vmatpush.msra.mxu0 0.0
      %4404 = vmatpush.msra.mxu0 0.0
      %4405 = vmatpush.msra.mxu0 0.0
      %4406 = vmatpush.msra.mxu0 0.0
      %4407 = vmatpush.msra.mxu0 0.0
      %4408 = vmatpush.msra.mxu0 0.0
      %4409 = vmatpush.msra.mxu0 0.0
      %4410 = vmatpush.msra.mxu0 0.0
      %4411 = vmatpush.msra.mxu0 %v4395
      %4412 = vmatpush.msra.mxu0 %v4394
      %4413 = vmatpush.msra.mxu0 %v4393
      %4414 = vmatpush.msra.mxu0 %v4392
      %4415 = vmatmul.f32.gmra.mxu0 %v4397
      %v4416 = vpop.f32.mrf.mxu0
      %v4417 = vadd.f32 0.0, %v4416
      %4418 = vdwg.mxu0
      %v4419 = vadd.f32 %v4389, %v4417
      %v4421 = vperm.slane %v4152, 0
      %v4423 = vadd.f32 %v4419, %v4421
      %v4424 = vand.u32 2147483647, %v4423
      %v4425 = vsub.f32 0.0, %v4424
      %v4426 = vmul.f32 %v4425, 1.442695
      %v4427 = vpow.pop %v4426
      %vm4428 = vcmp.ge.f32.partialorder %v4423, 0.0
      %v4429 = vadd.f32 %v4427, 1.0
      %v4430 = vrcp.pop %v4429
      %v4431 = vmul.f32 %v4429, %v4430
      %v4432 = vsub.f32 1.0, %v4431
      %v4433 = vmul.f32 %v4430, %v4432
      %v4434 = vadd.f32 %v4430, %v4433
      %vm4435 = vweird.f32 %v4429
      %vm4436 = vweird.f32 %v4430
      %vm4437 = vmor %vm4435, %vm4436
      %v4438 = vsel %vm4437, %v4430, %v4434
      %v4439 = vand.u32 2147483647, %v4429
      %vm4440 = vcmp.eq.f32.partialorder %v4439, 8.507059e+37
      %v4441 = vand.u32 %v4429, 2147483648
      %v4442 = vor.u32 1.1754944e-38, %v4441
      %v4443 = vsel %vm4440, %v4442, %v4438
      %v4444 = vmul.f32 1.0, %v4443
      %v4445 = vmul.f32 %v4427, %v4443
      %v4446 = vsel %vm4428, %v4444, %v4445
      %vm4447 = vcmask 2048
      %4448 = vst.msk [vmem:[%s388] sm:$0x7] %vm4447, %v4446
      %v4449 = vld [vmem:[#allocation5 + $0x5] sm:$0x7]
      %v4450 = vld [vmem:[%s9] sm:$0xff]
      %v4451 = vld [vmem:[%s9 + $0x8] sm:$0xff]
      %v4452 = vld [vmem:[%s9 + $0x10] sm:$0xff]
      %v4453 = vld [vmem:[%s9 + $0x18] sm:$0xff]
      %v4454 = vld [vmem:[#allocation5 + $0x6] sm:$0x7]
      %v4455 = vld [vmem:[%s4159] sm:$0xff]
      %v4456 = vld [vmem:[%s4159 + $0x8] sm:$0xff]
      %v4457 = vld [vmem:[%s4159 + $0x10] sm:$0xff]
      %v4458 = vld [vmem:[%s4159 + $0x18] sm:$0xff]
      %v4460 = vsel %vm395, %v4454, 0
      %4462 = vmatpush.msra.mxu0 0.0
      %4463 = vmatpush.msra.mxu0 0.0
      %4464 = vmatpush.msra.mxu0 0.0
      %4465 = vmatpush.msra.mxu0 0.0
      %4466 = vmatpush.msra.mxu0 0.0
      %4467 = vmatpush.msra.mxu0 0.0
      %4468 = vmatpush.msra.mxu0 0.0
      %4469 = vmatpush.msra.mxu0 0.0
      %4470 = vmatpush.msra.mxu0 0.0
      %4471 = vmatpush.msra.mxu0 0.0
      %4472 = vmatpush.msra.mxu0 0.0
      %4473 = vmatpush.msra.mxu0 0.0
      %4474 = vmatpush.msra.mxu0 %v4458
      %4475 = vmatpush.msra.mxu0 %v4457
      %4476 = vmatpush.msra.mxu0 %v4456
      %4477 = vmatpush.msra.mxu0 %v4455
      %4478 = vmatmul.f32.gmra.mxu0 %v4460
      %v4479 = vpop.f32.mrf.mxu0
      %v4480 = vadd.f32 0.0, %v4479
      %4481 = vdwg.mxu0
      %v4483 = vsel %vm395, %v4449, 0
      %4485 = vmatpush.msra.mxu0 0.0
      %4486 = vmatpush.msra.mxu0 0.0
      %4487 = vmatpush.msra.mxu0 0.0
      %4488 = vmatpush.msra.mxu0 0.0
      %4489 = vmatpush.msra.mxu0 0.0
      %4490 = vmatpush.msra.mxu0 0.0
      %4491 = vmatpush.msra.mxu0 0.0
      %4492 = vmatpush.msra.mxu0 0.0
      %4493 = vmatpush.msra.mxu0 0.0
      %4494 = vmatpush.msra.mxu0 0.0
      %4495 = vmatpush.msra.mxu0 0.0
      %4496 = vmatpush.msra.mxu0 0.0
      %4497 = vmatpush.msra.mxu0 %v4453
      %4498 = vmatpush.msra.mxu0 %v4452
      %4499 = vmatpush.msra.mxu0 %v4451
      %4500 = vmatpush.msra.mxu0 %v4450
      %4501 = vmatmul.f32.gmra.mxu0 %v4483
      %v4502 = vpop.f32.mrf.mxu0
      %v4503 = vadd.f32 %v4480, %v4502
      %4504 = vdwg.mxu0
      %v4505 = vld [vmem:[#allocation5 + $0x7] sm:$0x7]
      %v4506 = vld [vmem:[%s4211] sm:$0xff]
      %v4507 = vld [vmem:[%s4211 + $0x8] sm:$0xff]
      %v4508 = vld [vmem:[%s4211 + $0x10] sm:$0xff]
      %v4509 = vld [vmem:[%s4211 + $0x18] sm:$0xff]
      %v4511 = vsel %vm395, %v4505, 0
      %4513 = vmatpush.msra.mxu0 0.0
      %4514 = vmatpush.msra.mxu0 0.0
      %4515 = vmatpush.msra.mxu0 0.0
      %4516 = vmatpush.msra.mxu0 0.0
      %4517 = vmatpush.msra.mxu0 0.0
      %4518 = vmatpush.msra.mxu0 0.0
      %4519 = vmatpush.msra.mxu0 0.0
      %4520 = vmatpush.msra.mxu0 0.0
      %4521 = vmatpush.msra.mxu0 0.0
      %4522 = vmatpush.msra.mxu0 0.0
      %4523 = vmatpush.msra.mxu0 0.0
      %4524 = vmatpush.msra.mxu0 0.0
      %4525 = vmatpush.msra.mxu0 %v4509
      %4526 = vmatpush.msra.mxu0 %v4508
      %4527 = vmatpush.msra.mxu0 %v4507
      %4528 = vmatpush.msra.mxu0 %v4506
      %4529 = vmatmul.f32.gmra.mxu0 %v4511
      %v4530 = vpop.f32.mrf.mxu0
      %v4531 = vadd.f32 0.0, %v4530
      %4532 = vdwg.mxu0
      %v4533 = vadd.f32 %v4503, %v4531
      %v4534 = vld [vmem:[#allocation5 + $0xa] sm:$0x7]
      %v4535 = vld [vmem:[%s4241] sm:$0xff]
      %v4536 = vld [vmem:[%s4241 + $0x8] sm:$0xff]
      %v4537 = vld [vmem:[%s4241 + $0x10] sm:$0xff]
      %v4538 = vld [vmem:[%s4241 + $0x18] sm:$0xff]
      %v4540 = vsel %vm395, %v4534, 0
      %4542 = vmatpush.msra.mxu0 0.0
      %4543 = vmatpush.msra.mxu0 0.0
      %4544 = vmatpush.msra.mxu0 0.0
      %4545 = vmatpush.msra.mxu0 0.0
      %4546 = vmatpush.msra.mxu0 0.0
      %4547 = vmatpush.msra.mxu0 0.0
      %4548 = vmatpush.msra.mxu0 0.0
      %4549 = vmatpush.msra.mxu0 0.0
      %4550 = vmatpush.msra.mxu0 0.0
      %4551 = vmatpush.msra.mxu0 0.0
      %4552 = vmatpush.msra.mxu0 0.0
      %4553 = vmatpush.msra.mxu0 0.0
      %4554 = vmatpush.msra.mxu0 %v4538
      %4555 = vmatpush.msra.mxu0 %v4537
      %4556 = vmatpush.msra.mxu0 %v4536
      %4557 = vmatpush.msra.mxu0 %v4535
      %4558 = vmatmul.f32.gmra.mxu0 %v4540
      %v4559 = vpop.f32.mrf.mxu0
      %v4560 = vadd.f32 0.0, %v4559
      %4561 = vdwg.mxu0
      %v4562 = vadd.f32 %v4533, %v4560
      %v4563 = vld [vmem:[#allocation5 + $0xb] sm:$0x7]
      %v4564 = vld [vmem:[%s4271] sm:$0xff]
      %v4565 = vld [vmem:[%s4271 + $0x8] sm:$0xff]
      %v4566 = vld [vmem:[%s4271 + $0x10] sm:$0xff]
      %v4567 = vld [vmem:[%s4271 + $0x18] sm:$0xff]
      %v4569 = vsel %vm395, %v4563, 0
      %4571 = vmatpush.msra.mxu0 0.0
      %4572 = vmatpush.msra.mxu0 0.0
      %4573 = vmatpush.msra.mxu0 0.0
      %4574 = vmatpush.msra.mxu0 0.0
      %4575 = vmatpush.msra.mxu0 0.0
      %4576 = vmatpush.msra.mxu0 0.0
      %4577 = vmatpush.msra.mxu0 0.0
      %4578 = vmatpush.msra.mxu0 0.0
      %4579 = vmatpush.msra.mxu0 0.0
      %4580 = vmatpush.msra.mxu0 0.0
      %4581 = vmatpush.msra.mxu0 0.0
      %4582 = vmatpush.msra.mxu0 0.0
      %4583 = vmatpush.msra.mxu0 %v4567
      %4584 = vmatpush.msra.mxu0 %v4566
      %4585 = vmatpush.msra.mxu0 %v4565
      %4586 = vmatpush.msra.mxu0 %v4564
      %4587 = vmatmul.f32.gmra.mxu0 %v4569
      %v4588 = vpop.f32.mrf.mxu0
      %v4589 = vadd.f32 0.0, %v4588
      %4590 = vdwg.mxu0
      %v4591 = vadd.f32 %v4562, %v4589
      %v4592 = vld [vmem:[#allocation5 + $0xc] sm:$0x7]
      %v4593 = vld [vmem:[%s4301] sm:$0xff]
      %v4594 = vld [vmem:[%s4301 + $0x8] sm:$0xff]
      %v4595 = vld [vmem:[%s4301 + $0x10] sm:$0xff]
      %v4596 = vld [vmem:[%s4301 + $0x18] sm:$0xff]
      %v4598 = vsel %vm395, %v4592, 0
      %4600 = vmatpush.msra.mxu0 0.0
      %4601 = vmatpush.msra.mxu0 0.0
      %4602 = vmatpush.msra.mxu0 0.0
      %4603 = vmatpush.msra.mxu0 0.0
      %4604 = vmatpush.msra.mxu0 0.0
      %4605 = vmatpush.msra.mxu0 0.0
      %4606 = vmatpush.msra.mxu0 0.0
      %4607 = vmatpush.msra.mxu0 0.0
      %4608 = vmatpush.msra.mxu0 0.0
      %4609 = vmatpush.msra.mxu0 0.0
      %4610 = vmatpush.msra.mxu0 0.0
      %4611 = vmatpush.msra.mxu0 0.0
      %4612 = vmatpush.msra.mxu0 %v4596
      %4613 = vmatpush.msra.mxu0 %v4595
      %4614 = vmatpush.msra.mxu0 %v4594
      %4615 = vmatpush.msra.mxu0 %v4593
      %4616 = vmatmul.f32.gmra.mxu0 %v4598
      %v4617 = vpop.f32.mrf.mxu0
      %v4618 = vadd.f32 0.0, %v4617
      %4619 = vdwg.mxu0
      %v4620 = vadd.f32 %v4591, %v4618
      %v4621 = vld [vmem:[#allocation5 + $0xf] sm:$0x7]
      %v4622 = vld [vmem:[%s4331] sm:$0xff]
      %v4623 = vld [vmem:[%s4331 + $0x8] sm:$0xff]
      %v4624 = vld [vmem:[%s4331 + $0x10] sm:$0xff]
      %v4625 = vld [vmem:[%s4331 + $0x18] sm:$0xff]
      %v4627 = vsel %vm395, %v4621, 0
      %4629 = vmatpush.msra.mxu0 0.0
      %4630 = vmatpush.msra.mxu0 0.0
      %4631 = vmatpush.msra.mxu0 0.0
      %4632 = vmatpush.msra.mxu0 0.0
      %4633 = vmatpush.msra.mxu0 0.0
      %4634 = vmatpush.msra.mxu0 0.0
      %4635 = vmatpush.msra.mxu0 0.0
      %4636 = vmatpush.msra.mxu0 0.0
      %4637 = vmatpush.msra.mxu0 0.0
      %4638 = vmatpush.msra.mxu0 0.0
      %4639 = vmatpush.msra.mxu0 0.0
      %4640 = vmatpush.msra.mxu0 0.0
      %4641 = vmatpush.msra.mxu0 %v4625
      %4642 = vmatpush.msra.mxu0 %v4624
      %4643 = vmatpush.msra.mxu0 %v4623
      %4644 = vmatpush.msra.mxu0 %v4622
      %4645 = vmatmul.f32.gmra.mxu0 %v4627
      %v4646 = vpop.f32.mrf.mxu0
      %v4647 = vadd.f32 0.0, %v4646
      %4648 = vdwg.mxu0
      %v4649 = vadd.f32 %v4620, %v4647
      %v4650 = vld [vmem:[#allocation5 + $0x10] sm:$0x7]
      %v4651 = vld [vmem:[%s4361] sm:$0xff]
      %v4652 = vld [vmem:[%s4361 + $0x8] sm:$0xff]
      %v4653 = vld [vmem:[%s4361 + $0x10] sm:$0xff]
      %v4654 = vld [vmem:[%s4361 + $0x18] sm:$0xff]
      %v4656 = vsel %vm395, %v4650, 0
      %4658 = vmatpush.msra.mxu0 0.0
      %4659 = vmatpush.msra.mxu0 0.0
      %4660 = vmatpush.msra.mxu0 0.0
      %4661 = vmatpush.msra.mxu0 0.0
      %4662 = vmatpush.msra.mxu0 0.0
      %4663 = vmatpush.msra.mxu0 0.0
      %4664 = vmatpush.msra.mxu0 0.0
      %4665 = vmatpush.msra.mxu0 0.0
      %4666 = vmatpush.msra.mxu0 0.0
      %4667 = vmatpush.msra.mxu0 0.0
      %4668 = vmatpush.msra.mxu0 0.0
      %4669 = vmatpush.msra.mxu0 0.0
      %4670 = vmatpush.msra.mxu0 %v4654
      %4671 = vmatpush.msra.mxu0 %v4653
      %4672 = vmatpush.msra.mxu0 %v4652
      %4673 = vmatpush.msra.mxu0 %v4651
      %4674 = vmatmul.f32.gmra.mxu0 %v4656
      %v4675 = vpop.f32.mrf.mxu0
      %v4676 = vadd.f32 0.0, %v4675
      %4677 = vdwg.mxu0
      %v4678 = vadd.f32 %v4649, %v4676
      %v4679 = vld [vmem:[#allocation5 + $0x11] sm:$0x7]
      %v4680 = vld [vmem:[%s4391] sm:$0xff]
      %v4681 = vld [vmem:[%s4391 + $0x8] sm:$0xff]
      %v4682 = vld [vmem:[%s4391 + $0x10] sm:$0xff]
      %v4683 = vld [vmem:[%s4391 + $0x18] sm:$0xff]
      %v4685 = vsel %vm395, %v4679, 0
      %4687 = vmatpush.msra.mxu0 0.0
      %4688 = vmatpush.msra.mxu0 0.0
      %4689 = vmatpush.msra.mxu0 0.0
      %4690 = vmatpush.msra.mxu0 0.0
      %4691 = vmatpush.msra.mxu0 0.0
      %4692 = vmatpush.msra.mxu0 0.0
      %4693 = vmatpush.msra.mxu0 0.0
      %4694 = vmatpush.msra.mxu0 0.0
      %4695 = vmatpush.msra.mxu0 0.0
      %4696 = vmatpush.msra.mxu0 0.0
      %4697 = vmatpush.msra.mxu0 0.0
      %4698 = vmatpush.msra.mxu0 0.0
      %4699 = vmatpush.msra.mxu0 %v4683
      %4700 = vmatpush.msra.mxu0 %v4682
      %4701 = vmatpush.msra.mxu0 %v4681
      %4702 = vmatpush.msra.mxu0 %v4680
      %4703 = vmatmul.f32.gmra.mxu0 %v4685
      %v4704 = vpop.f32.mrf.mxu0
      %v4705 = vadd.f32 0.0, %v4704
      %4706 = vdwg.mxu0
      %v4707 = vadd.f32 %v4678, %v4705
      %v4708 = vadd.f32 %v4707, %v4421
      %v4709 = vand.u32 2147483647, %v4708
      %v4710 = vsub.f32 0.0, %v4709
      %v4711 = vmul.f32 %v4710, 1.442695
      %v4712 = vpow.pop %v4711
      %vm4713 = vcmp.ge.f32.partialorder %v4708, 0.0
      %v4714 = vadd.f32 %v4712, 1.0
      %v4715 = vrcp.pop %v4714
      %v4716 = vmul.f32 %v4714, %v4715
      %v4717 = vsub.f32 1.0, %v4716
      %v4718 = vmul.f32 %v4715, %v4717
      %v4719 = vadd.f32 %v4715, %v4718
      %vm4720 = vweird.f32 %v4714
      %vm4721 = vweird.f32 %v4715
      %vm4722 = vmor %vm4720, %vm4721
      %v4723 = vsel %vm4722, %v4715, %v4719
      %v4724 = vand.u32 2147483647, %v4714
      %vm4725 = vcmp.eq.f32.partialorder %v4724, 8.507059e+37
      %v4726 = vand.u32 %v4714, 2147483648
      %v4727 = vor.u32 1.1754944e-38, %v4726
      %v4728 = vsel %vm4725, %v4727, %v4723
      %v4729 = vmul.f32 1.0, %v4728
      %v4730 = vmul.f32 %v4712, %v4728
      %v4731 = vsel %vm4713, %v4729, %v4730
      %4732 = vst.msk [vmem:[%s388 + $0x3] sm:$0x7] %vm4447, %v4731
      %v4733 = vld [vmem:[#allocation5 + $0xa] sm:$0x7]
      %v4734 = vld [vmem:[%s9] sm:$0xff]
      %v4735 = vld [vmem:[%s9 + $0x8] sm:$0xff]
      %v4736 = vld [vmem:[%s9 + $0x10] sm:$0xff]
      %v4737 = vld [vmem:[%s9 + $0x18] sm:$0xff]
      %v4738 = vld [vmem:[#allocation5 + $0xb] sm:$0x7]
      %v4739 = vld [vmem:[%s4159] sm:$0xff]
      %v4740 = vld [vmem:[%s4159 + $0x8] sm:$0xff]
      %v4741 = vld [vmem:[%s4159 + $0x10] sm:$0xff]
      %v4742 = vld [vmem:[%s4159 + $0x18] sm:$0xff]
      %v4744 = vsel %vm395, %v4738, 0
      %4746 = vmatpush.msra.mxu0 0.0
      %4747 = vmatpush.msra.mxu0 0.0
      %4748 = vmatpush.msra.mxu0 0.0
      %4749 = vmatpush.msra.mxu0 0.0
      %4750 = vmatpush.msra.mxu0 0.0
      %4751 = vmatpush.msra.mxu0 0.0
      %4752 = vmatpush.msra.mxu0 0.0
      %4753 = vmatpush.msra.mxu0 0.0
      %4754 = vmatpush.msra.mxu0 0.0
      %4755 = vmatpush.msra.mxu0 0.0
      %4756 = vmatpush.msra.mxu0 0.0
      %4757 = vmatpush.msra.mxu0 0.0
      %4758 = vmatpush.msra.mxu0 %v4742
      %4759 = vmatpush.msra.mxu0 %v4741
      %4760 = vmatpush.msra.mxu0 %v4740
      %4761 = vmatpush.msra.mxu0 %v4739
      %4762 = vmatmul.f32.gmra.mxu0 %v4744
      %v4763 = vpop.f32.mrf.mxu0
      %v4764 = vadd.f32 0.0, %v4763
      %4765 = vdwg.mxu0
      %v4767 = vsel %vm395, %v4733, 0
      %4769 = vmatpush.msra.mxu0 0.0
      %4770 = vmatpush.msra.mxu0 0.0
      %4771 = vmatpush.msra.mxu0 0.0
      %4772 = vmatpush.msra.mxu0 0.0
      %4773 = vmatpush.msra.mxu0 0.0
      %4774 = vmatpush.msra.mxu0 0.0
      %4775 = vmatpush.msra.mxu0 0.0
      %4776 = vmatpush.msra.mxu0 0.0
      %4777 = vmatpush.msra.mxu0 0.0
      %4778 = vmatpush.msra.mxu0 0.0
      %4779 = vmatpush.msra.mxu0 0.0
      %4780 = vmatpush.msra.mxu0 0.0
      %4781 = vmatpush.msra.mxu0 %v4737
      %4782 = vmatpush.msra.mxu0 %v4736
      %4783 = vmatpush.msra.mxu0 %v4735
      %4784 = vmatpush.msra.mxu0 %v4734
      %4785 = vmatmul.f32.gmra.mxu0 %v4767
      %v4786 = vpop.f32.mrf.mxu0
      %v4787 = vadd.f32 %v4764, %v4786
      %4788 = vdwg.mxu0
      %v4789 = vld [vmem:[#allocation5 + $0xc] sm:$0x7]
      %v4790 = vld [vmem:[%s4211] sm:$0xff]
      %v4791 = vld [vmem:[%s4211 + $0x8] sm:$0xff]
      %v4792 = vld [vmem:[%s4211 + $0x10] sm:$0xff]
      %v4793 = vld [vmem:[%s4211 + $0x18] sm:$0xff]
      %v4795 = vsel %vm395, %v4789, 0
      %4797 = vmatpush.msra.mxu0 0.0
      %4798 = vmatpush.msra.mxu0 0.0
      %4799 = vmatpush.msra.mxu0 0.0
      %4800 = vmatpush.msra.mxu0 0.0
      %4801 = vmatpush.msra.mxu0 0.0
      %4802 = vmatpush.msra.mxu0 0.0
      %4803 = vmatpush.msra.mxu0 0.0
      %4804 = vmatpush.msra.mxu0 0.0
      %4805 = vmatpush.msra.mxu0 0.0
      %4806 = vmatpush.msra.mxu0 0.0
      %4807 = vmatpush.msra.mxu0 0.0
      %4808 = vmatpush.msra.mxu0 0.0
      %4809 = vmatpush.msra.mxu0 %v4793
      %4810 = vmatpush.msra.mxu0 %v4792
      %4811 = vmatpush.msra.mxu0 %v4791
      %4812 = vmatpush.msra.mxu0 %v4790
      %4813 = vmatmul.f32.gmra.mxu0 %v4795
      %v4814 = vpop.f32.mrf.mxu0
      %v4815 = vadd.f32 0.0, %v4814
      %4816 = vdwg.mxu0
      %v4817 = vadd.f32 %v4787, %v4815
      %v4818 = vld [vmem:[#allocation5 + $0xf] sm:$0x7]
      %v4819 = vld [vmem:[%s4241] sm:$0xff]
      %v4820 = vld [vmem:[%s4241 + $0x8] sm:$0xff]
      %v4821 = vld [vmem:[%s4241 + $0x10] sm:$0xff]
      %v4822 = vld [vmem:[%s4241 + $0x18] sm:$0xff]
      %v4824 = vsel %vm395, %v4818, 0
      %4826 = vmatpush.msra.mxu0 0.0
      %4827 = vmatpush.msra.mxu0 0.0
      %4828 = vmatpush.msra.mxu0 0.0
      %4829 = vmatpush.msra.mxu0 0.0
      %4830 = vmatpush.msra.mxu0 0.0
      %4831 = vmatpush.msra.mxu0 0.0
      %4832 = vmatpush.msra.mxu0 0.0
      %4833 = vmatpush.msra.mxu0 0.0
      %4834 = vmatpush.msra.mxu0 0.0
      %4835 = vmatpush.msra.mxu0 0.0
      %4836 = vmatpush.msra.mxu0 0.0
      %4837 = vmatpush.msra.mxu0 0.0
      %4838 = vmatpush.msra.mxu0 %v4822
      %4839 = vmatpush.msra.mxu0 %v4821
      %4840 = vmatpush.msra.mxu0 %v4820
      %4841 = vmatpush.msra.mxu0 %v4819
      %4842 = vmatmul.f32.gmra.mxu0 %v4824
      %v4843 = vpop.f32.mrf.mxu0
      %v4844 = vadd.f32 0.0, %v4843
      %4845 = vdwg.mxu0
      %v4846 = vadd.f32 %v4817, %v4844
      %v4847 = vld [vmem:[#allocation5 + $0x10] sm:$0x7]
      %v4848 = vld [vmem:[%s4271] sm:$0xff]
      %v4849 = vld [vmem:[%s4271 + $0x8] sm:$0xff]
      %v4850 = vld [vmem:[%s4271 + $0x10] sm:$0xff]
      %v4851 = vld [vmem:[%s4271 + $0x18] sm:$0xff]
      %v4853 = vsel %vm395, %v4847, 0
      %4855 = vmatpush.msra.mxu0 0.0
      %4856 = vmatpush.msra.mxu0 0.0
      %4857 = vmatpush.msra.mxu0 0.0
      %4858 = vmatpush.msra.mxu0 0.0
      %4859 = vmatpush.msra.mxu0 0.0
      %4860 = vmatpush.msra.mxu0 0.0
      %4861 = vmatpush.msra.mxu0 0.0
      %4862 = vmatpush.msra.mxu0 0.0
      %4863 = vmatpush.msra.mxu0 0.0
      %4864 = vmatpush.msra.mxu0 0.0
      %4865 = vmatpush.msra.mxu0 0.0
      %4866 = vmatpush.msra.mxu0 0.0
      %4867 = vmatpush.msra.mxu0 %v4851
      %4868 = vmatpush.msra.mxu0 %v4850
      %4869 = vmatpush.msra.mxu0 %v4849
      %4870 = vmatpush.msra.mxu0 %v4848
      %4871 = vmatmul.f32.gmra.mxu0 %v4853
      %v4872 = vpop.f32.mrf.mxu0
      %v4873 = vadd.f32 0.0, %v4872
      %4874 = vdwg.mxu0
      %v4875 = vadd.f32 %v4846, %v4873
      %v4876 = vld [vmem:[#allocation5 + $0x11] sm:$0x7]
      %v4877 = vld [vmem:[%s4301] sm:$0xff]
      %v4878 = vld [vmem:[%s4301 + $0x8] sm:$0xff]
      %v4879 = vld [vmem:[%s4301 + $0x10] sm:$0xff]
      %v4880 = vld [vmem:[%s4301 + $0x18] sm:$0xff]
      %v4882 = vsel %vm395, %v4876, 0
      %4884 = vmatpush.msra.mxu0 0.0
      %4885 = vmatpush.msra.mxu0 0.0
      %4886 = vmatpush.msra.mxu0 0.0
      %4887 = vmatpush.msra.mxu0 0.0
      %4888 = vmatpush.msra.mxu0 0.0
      %4889 = vmatpush.msra.mxu0 0.0
      %4890 = vmatpush.msra.mxu0 0.0
      %4891 = vmatpush.msra.mxu0 0.0
      %4892 = vmatpush.msra.mxu0 0.0
      %4893 = vmatpush.msra.mxu0 0.0
      %4894 = vmatpush.msra.mxu0 0.0
      %4895 = vmatpush.msra.mxu0 0.0
      %4896 = vmatpush.msra.mxu0 %v4880
      %4897 = vmatpush.msra.mxu0 %v4879
      %4898 = vmatpush.msra.mxu0 %v4878
      %4899 = vmatpush.msra.mxu0 %v4877
      %4900 = vmatmul.f32.gmra.mxu0 %v4882
      %v4901 = vpop.f32.mrf.mxu0
      %v4902 = vadd.f32 0.0, %v4901
      %4903 = vdwg.mxu0
      %v4904 = vadd.f32 %v4875, %v4902
      %v4905 = vld [vmem:[#allocation5 + $0x14] sm:$0x7]
      %v4906 = vld [vmem:[%s4331] sm:$0xff]
      %v4907 = vld [vmem:[%s4331 + $0x8] sm:$0xff]
      %v4908 = vld [vmem:[%s4331 + $0x10] sm:$0xff]
      %v4909 = vld [vmem:[%s4331 + $0x18] sm:$0xff]
      %v4911 = vsel %vm395, %v4905, 0
      %4913 = vmatpush.msra.mxu0 0.0
      %4914 = vmatpush.msra.mxu0 0.0
      %4915 = vmatpush.msra.mxu0 0.0
      %4916 = vmatpush.msra.mxu0 0.0
      %4917 = vmatpush.msra.mxu0 0.0
      %4918 = vmatpush.msra.mxu0 0.0
      %4919 = vmatpush.msra.mxu0 0.0
      %4920 = vmatpush.msra.mxu0 0.0
      %4921 = vmatpush.msra.mxu0 0.0
      %4922 = vmatpush.msra.mxu0 0.0
      %4923 = vmatpush.msra.mxu0 0.0
      %4924 = vmatpush.msra.mxu0 0.0
      %4925 = vmatpush.msra.mxu0 %v4909
      %4926 = vmatpush.msra.mxu0 %v4908
      %4927 = vmatpush.msra.mxu0 %v4907
      %4928 = vmatpush.msra.mxu0 %v4906
      %4929 = vmatmul.f32.gmra.mxu0 %v4911
      %v4930 = vpop.f32.mrf.mxu0
      %v4931 = vadd.f32 0.0, %v4930
      %4932 = vdwg.mxu0
      %v4933 = vadd.f32 %v4904, %v4931
      %v4934 = vld [vmem:[#allocation5 + $0x15] sm:$0x7]
      %v4935 = vld [vmem:[%s4361] sm:$0xff]
      %v4936 = vld [vmem:[%s4361 + $0x8] sm:$0xff]
      %v4937 = vld [vmem:[%s4361 + $0x10] sm:$0xff]
      %v4938 = vld [vmem:[%s4361 + $0x18] sm:$0xff]
      %v4940 = vsel %vm395, %v4934, 0
      %4942 = vmatpush.msra.mxu0 0.0
      %4943 = vmatpush.msra.mxu0 0.0
      %4944 = vmatpush.msra.mxu0 0.0
      %4945 = vmatpush.msra.mxu0 0.0
      %4946 = vmatpush.msra.mxu0 0.0
      %4947 = vmatpush.msra.mxu0 0.0
      %4948 = vmatpush.msra.mxu0 0.0
      %4949 = vmatpush.msra.mxu0 0.0
      %4950 = vmatpush.msra.mxu0 0.0
      %4951 = vmatpush.msra.mxu0 0.0
      %4952 = vmatpush.msra.mxu0 0.0
      %4953 = vmatpush.msra.mxu0 0.0
      %4954 = vmatpush.msra.mxu0 %v4938
      %4955 = vmatpush.msra.mxu0 %v4937
      %4956 = vmatpush.msra.mxu0 %v4936
      %4957 = vmatpush.msra.mxu0 %v4935
      %4958 = vmatmul.f32.gmra.mxu0 %v4940
      %v4959 = vpop.f32.mrf.mxu0
      %v4960 = vadd.f32 0.0, %v4959
      %4961 = vdwg.mxu0
      %v4962 = vadd.f32 %v4933, %v4960
      %v4963 = vld [vmem:[#allocation5 + $0x16] sm:$0x7]
      %v4964 = vld [vmem:[%s4391] sm:$0xff]
      %v4965 = vld [vmem:[%s4391 + $0x8] sm:$0xff]
      %v4966 = vld [vmem:[%s4391 + $0x10] sm:$0xff]
      %v4967 = vld [vmem:[%s4391 + $0x18] sm:$0xff]
      %v4969 = vsel %vm395, %v4963, 0
      %4971 = vmatpush.msra.mxu0 0.0
      %4972 = vmatpush.msra.mxu0 0.0
      %4973 = vmatpush.msra.mxu0 0.0
      %4974 = vmatpush.msra.mxu0 0.0
      %4975 = vmatpush.msra.mxu0 0.0
      %4976 = vmatpush.msra.mxu0 0.0
      %4977 = vmatpush.msra.mxu0 0.0
      %4978 = vmatpush.msra.mxu0 0.0
      %4979 = vmatpush.msra.mxu0 0.0
      %4980 = vmatpush.msra.mxu0 0.0
      %4981 = vmatpush.msra.mxu0 0.0
      %4982 = vmatpush.msra.mxu0 0.0
      %4983 = vmatpush.msra.mxu0 %v4967
      %4984 = vmatpush.msra.mxu0 %v4966
      %4985 = vmatpush.msra.mxu0 %v4965
      %4986 = vmatpush.msra.mxu0 %v4964
      %4987 = vmatmul.f32.gmra.mxu0 %v4969
      %v4988 = vpop.f32.mrf.mxu0
      %v4989 = vadd.f32 0.0, %v4988
      %4990 = vdwg.mxu0
      %v4991 = vadd.f32 %v4962, %v4989
      %v4992 = vadd.f32 %v4991, %v4421
      %v4993 = vand.u32 2147483647, %v4992
      %v4994 = vsub.f32 0.0, %v4993
      %v4995 = vmul.f32 %v4994, 1.442695
      %v4996 = vpow.pop %v4995
      %vm4997 = vcmp.ge.f32.partialorder %v4992, 0.0
      %v4998 = vadd.f32 %v4996, 1.0
      %v4999 = vrcp.pop %v4998
      %v5000 = vmul.f32 %v4998, %v4999
      %v5001 = vsub.f32 1.0, %v5000
      %v5002 = vmul.f32 %v4999, %v5001
      %v5003 = vadd.f32 %v4999, %v5002
      %vm5004 = vweird.f32 %v4998
      %vm5005 = vweird.f32 %v4999
      %vm5006 = vmor %vm5004, %vm5005
      %v5007 = vsel %vm5006, %v4999, %v5003
      %v5008 = vand.u32 2147483647, %v4998
      %vm5009 = vcmp.eq.f32.partialorder %v5008, 8.507059e+37
      %v5010 = vand.u32 %v4998, 2147483648
      %v5011 = vor.u32 1.1754944e-38, %v5010
      %v5012 = vsel %vm5009, %v5011, %v5007
      %v5013 = vmul.f32 1.0, %v5012
      %v5014 = vmul.f32 %v4996, %v5012
      %v5015 = vsel %vm4997, %v5013, %v5014
      %5016 = vst.msk [vmem:[%s388 + $0x6] sm:$0x7] %vm4447, %v5015
      %p5017 = scmp.lt.s32.totalorder %s24, 1
      %s5018 = scalar_select %p5017, %s24, 1
      %s5019 = smul.addr %s5018, 2
      %s5020 = smul.addr %s5019, 8
      %s5021 = scalar_lea.vmem %s11, %s5020
      // Predicated region
      $region65: #{discriminator_a_forward.1} parent=63 // pred_check
        %p5022 = pneg %p278
      $region66: #{discriminator_a_forward.1} parent=63 // pred_check_branch
        %5024 = sbr.rel (%p5022) target = $region68
      $region67: #{discriminator_a_forward.1} parent=63 // pred_region
        _
      $region68: #{discriminator_a_forward.1} parent=63 // pred_fallthru
        _
    $region64: #{discriminator_a_forward.1} parent=5 // pred_fallthru
      _
    %p5025 = scmp.le.s32.totalorder 2, %s19
    // Predicated region
    $region69: #{discriminator_a_forward.1} parent=5 // pred_check
      %p5026 = pneg %p5025
    $region70: #{discriminator_a_forward.1} parent=5 // pred_check_branch
      %5028 = sbr.rel (%p5026) target = $region72
    $region71: #{discriminator_a_forward.1} parent=5 // pred_region
      %s5029 = ssub.s32 %s19, 2
      // Predicated region
      $region73: #{discriminator_a_forward.1} parent=71 // pred_check
        %p5030 = pneg %p284
      $region74: #{discriminator_a_forward.1} parent=71 // pred_check_branch
        %5032 = sbr.rel (%p5030) target = $region76
      $region75: #{discriminator_a_forward.1} parent=71 // pred_region
        %p5033 = scmp.lt.s32.totalorder %s25, 1
        %s5034 = scalar_select %p5033, %s25, 1
        %s5035 = smul.addr %s5034, 2
        %s5036 = smul.addr %s5035, 8
        %s5037 = scalar_lea.vmem %s11, %s5036
      $region76: #{discriminator_a_forward.1} parent=71 // pred_fallthru
        _
    $region72: #{discriminator_a_forward.1} parent=5 // pred_fallthru
      _
  $region6: #{discriminator_a_forward.1} parent=0 // loop_footer
    %s23 = sadd.s32 1, %s19
  $region7: #{discriminator_a_forward.1} parent=0 // loop_footer_branch
    %18 = sbr.rel target = $region3
  $region8: #{discriminator_a_forward.1} parent=0 // loop_exit
    _

</llo_original>
